<compile_context>
chip_gen: v7x
topology: tpu7x:2x2x1
jax: 0.10.0
libtpu: 0.0.40
codegen_flags: <defaults>
</compile_context>

<pallas_src>
import functools
import math

import jax
import jax.numpy as jnp
from jax.experimental import pallas as pl
from jax.experimental.pallas import tpu as pltpu


def _round_up(x, m):
    return ((x + m - 1) // m) * m


def _siren_fused_kernel(w0_ref, x_ref, wtf_ref, bf_ref, *rest, n_hidden):
    """One row-tile of the full SirenNet forward (all layers fused).

    w0_ref : (L+1,)                 per-layer sine frequencies (SMEM, runtime)
    x_ref  : (tm, K_in)             input coordinate rows              (VMEM)
    wtf_ref: (K_in, H_pad)          first-layer W^T, zero padded       (VMEM, resident)
    bf_ref : (1, H_pad)             first-layer bias, zero padded      (VMEM, resident)
    [wth_ref:(n_hidden,H_pad,H_pad) hidden-layer W^T stack             (VMEM, resident)]
    [bh_ref :(n_hidden,1,H_pad)     hidden-layer bias stack            (VMEM, resident)]
    wtl_ref: (H_pad, O_pad)         last-layer W^T, zero padded        (VMEM, resident)
    bl_ref : (1, O_pad)             last-layer bias, zero padded       (VMEM, resident)
    o_ref  : (tm, O_pad)            output rows (lane dense)           (VMEM)
    """
    if n_hidden > 0:
        wth_ref, bh_ref, wtl_ref, bl_ref, o_ref = rest
    else:
        wtl_ref, bl_ref, o_ref = rest

    # Layer 0: f32 accumulate, fused sin(w0 * .) epilogue in VMEM.
    h = jnp.dot(x_ref[...], wtf_ref[...], preferred_element_type=jnp.float32)
    h = jnp.sin(w0_ref[0] * (h + bf_ref[...].astype(jnp.float32)))

    # Hidden Sine layers (statically unrolled; weights resident in VMEM).
    for l in range(n_hidden):
        hm = h.astype(wth_ref.dtype)      # native MXU operand dtype (no-op for f32)
        h = jnp.dot(hm, wth_ref[l], preferred_element_type=jnp.float32)
        h = jnp.sin(w0_ref[1 + l] * (h + bh_ref[l].astype(jnp.float32)))

    # Final layer: Identity activation.
    hm = h.astype(wtl_ref.dtype)
    out = jnp.dot(hm, wtl_ref[...], preferred_element_type=jnp.float32)
    out = out + bl_ref[...].astype(jnp.float32)
    o_ref[...] = out.astype(o_ref.dtype)


def siren_net_forward(fused, x, *, tile_rows=1024):
    """SirenNet.forward via one fused Pallas kernel.  x: (..., dim_in)."""
    lead = x.shape[:-1]
    k_in = x.shape[-1]
    xm = x.reshape(-1, k_in)
    m = xm.shape[0]

    wtf, bf = fused["wt_first"], fused["b_first"]
    wth, bh = fused["wt_hidden"], fused["b_hidden"]
    wtl, bl = fused["wt_last"], fused["b_last"]
    w0s = fused["w0s"]
    dim_out = fused["dim_out"]
    h_pad = wtf.shape[1]
    o_pad = wtl.shape[1]
    n_hidden = 0 if wth is None else wth.shape[0]

    out_dtype = x.dtype
    itemsize = jnp.dtype(out_dtype).itemsize
    sub = 8 if itemsize >= 4 else (16 if itemsize == 2 else 32)  # sublane pack

    # Row tile: as big as a conservative per-block budget allows (double-
    # buffered x/out tiles + the live f32 activation); weights are resident
    # and tiny, so everything fits the scoped VMEM on v5e/v6e/v7x.
    budget = 8 * 1024 * 1024
    per_row = 4 * (2 * k_in + 2 * o_pad + 2 * h_pad)
    tm = max(sub, min(tile_rows, (budget // per_row) // sub * sub))
    if tm >= m:
        tm = m                      # single block == full array dim (always legal)
    grid_m = pl.cdiv(m, tm)         # ragged last block handled by Pallas masking

    weight_bytes = 4 * (k_in * h_pad + n_hidden * h_pad * h_pad
                        + h_pad * o_pad + (n_hidden + 2) * h_pad)
    cost = pl.CostEstimate(
        flops=2 * m * (k_in * h_pad + n_hidden * h_pad * h_pad + h_pad * o_pad),
        transcendentals=m * h_pad * (n_hidden + 1),
        bytes_accessed=(m * k_in + m * o_pad) * itemsize + weight_bytes,
    )

    in_specs = [
        pl.BlockSpec(memory_space=pltpu.MemorySpace.SMEM),          # w0s (runtime scalars)
        pl.BlockSpec((tm, k_in), lambda i: (i, 0)),                 # x row tile
        pl.BlockSpec((k_in, h_pad), lambda i: (0, 0)),              # W0^T  resident
        pl.BlockSpec((1, h_pad), lambda i: (0, 0)),                 # b0    resident
    ]
    args = [w0s, xm, wtf, bf]
    if n_hidden > 0:
        in_specs += [
            pl.BlockSpec((n_hidden, h_pad, h_pad), lambda i: (0, 0, 0)),  # hidden W^T stack
            pl.BlockSpec((n_hidden, 1, h_pad), lambda i: (0, 0, 0)),      # hidden bias stack
        ]
        args += [wth, bh]
    in_specs += [
        pl.BlockSpec((h_pad, o_pad), lambda i: (0, 0)),             # W_last^T resident
        pl.BlockSpec((1, o_pad), lambda i: (0, 0)),                 # b_last   resident
    ]
    args += [wtl, bl]

    vmem_limit = min(100 * 1024 * 1024,
                     max(32 * 1024 * 1024, 2 * weight_bytes + 16 * 1024 * 1024))

    out = pl.pallas_call(
        functools.partial(_siren_fused_kernel, n_hidden=n_hidden),
        out_shape=jax.ShapeDtypeStruct((m, o_pad), out_dtype),
        grid_spec=pltpu.PrefetchScalarGridSpec(
            num_scalar_prefetch=0,
            grid=(grid_m,),
            in_specs=in_specs,
            out_specs=pl.BlockSpec((tm, o_pad), lambda i: (i, 0)),
        ),
        compiler_params=pltpu.CompilerParams(
            # TODO(synk): on v7x verify the row axis actually shards across both
            # TensorCores; switch to CORE_PARALLEL semantics if it does not.
            dimension_semantics=("parallel",),
            vmem_limit_bytes=vmem_limit,
        ),
        cost_estimate=cost,
    )(*args)

    # Only the first dim_out lanes are real; the rest is zero padding.
    y = out[:, :dim_out]
    return y.reshape(*lead, dim_out)


def init_siren_layers(key, dim_in, dim_hidden, dim_out, num_layers,
                      w0=1.0, w0_initial=30.0, c=6.0, use_bias=True):
    """Mirrors SirenNet.__init__ (PyTorch (dim_out, dim_in) weight layout).

    Returns a list of (weight, bias, layer_w0, apply_sine) tuples; the final
    entry is the last layer with Identity activation.
    """
    layers = []
    for ind in range(num_layers):
        is_first = ind == 0
        layer_w0 = w0_initial if is_first else w0
        d_in = dim_in if is_first else dim_hidden
        w_std = (1.0 / d_in) if is_first else (math.sqrt(c / d_in) / layer_w0)
        key, kw, kb = jax.random.split(key, 3)
        wgt = jax.random.uniform(kw, (dim_hidden, d_in), jnp.float32, -w_std, w_std)
        bias = (jax.random.uniform(kb, (dim_hidden,), jnp.float32, -w_std, w_std)
                if use_bias else None)
        layers.append((wgt, bias, layer_w0, True))
    w_std = math.sqrt(c / dim_hidden) / w0
    key, kw, kb = jax.random.split(key, 3)
    wgt = jax.random.uniform(kw, (dim_out, dim_hidden), jnp.float32, -w_std, w_std)
    bias = (jax.random.uniform(kb, (dim_out,), jnp.float32, -w_std, w_std)
            if use_bias else None)
    layers.append((wgt, bias, w0, False))
    return layers


def prepare_fused_params(layers, param_dtype=jnp.float32):
    """Pre-transpose + zero-pad all weights/biases once (lane-dense layout)."""
    n_total = len(layers)            # num_layers Sine layers + 1 Identity layer
    n_hidden = n_total - 2
    w_first, b_first, _, _ = layers[0]
    w_last, b_last, _, _ = layers[-1]
    dim_hidden, dim_in = w_first.shape
    dim_out = w_last.shape[0]
    h_pad = _round_up(dim_hidden, 128)
    o_pad = _round_up(dim_out, 128)

    def pad_t(w, rows, cols):        # (out,in) torch layout -> padded W^T (rows, cols)
        wt = jnp.transpose(w).astype(param_dtype)
        return jnp.pad(wt, ((0, rows - wt.shape[0]), (0, cols - wt.shape[1])))

    def pad_bias(b, nat, cols):
        bb = jnp.zeros((nat,), jnp.float32) if b is None else b.astype(jnp.float32)
        return jnp.pad(bb, (0, cols - nat)).reshape(1, cols)

    wt_first = pad_t(w_first, dim_in, h_pad)
    bf = pad_bias(b_first, dim_hidden, h_pad)

    if n_hidden > 0:
        wth = jnp.stack([pad_t(w, h_pad, h_pad) for (w, _, _, _) in layers[1:-1]])
        bh = jnp.stack([pad_bias(b, dim_hidden, h_pad) for (_, b, _, _) in layers[1:-1]])
    else:
        wth, bh = None, None

    wt_last = pad_t(w_last, h_pad, o_pad)
    bl = pad_bias(b_last, dim_out, o_pad)

    w0s = jnp.asarray([lw0 for (_, _, lw0, _) in layers], jnp.float32)

    return {
        "w0s": w0s,
        "wt_first": wt_first, "b_first": bf,
        "wt_hidden": wth, "b_hidden": bh,
        "wt_last": wt_last, "b_last": bl,
        "dim_out": dim_out,
    }


def siren_net_reference(layers, x):
    """Plain-JAX reference matching torch semantics (f32 math)."""
    h = x
    for (w, b, lw0, apply_sine) in layers:
        h = jnp.dot(h, w.T, precision=jax.lax.Precision.HIGHEST)
        if b is not None:
            h = h + b
        if apply_sine:
            h = jnp.sin(lw0 * h)
    return h


if __name__ == "__main__":
    key = jax.random.PRNGKey(0)
    kx, kp = jax.random.split(key)

    # Small shapes consistent with a SIREN: 256 coordinate points (flattened
    # 16x16 grid), dim_in=2, hidden=32, dim_out=3, 3 Sine layers + final layer.
    dim_in, dim_hidden, dim_out, num_layers = 2, 32, 3, 3
    n_points = 256
    x = jax.random.uniform(kx, (n_points, dim_in), jnp.float32, -1.0, 1.0)

    layers = init_siren_layers(kp, dim_in, dim_hidden, dim_out, num_layers,
                               w0=1.0, w0_initial=30.0, use_bias=True)
    fused = prepare_fused_params(layers)

    y = siren_net_forward(fused, x)
    y = jax.block_until_ready(y)

    y_ref = siren_net_reference(layers, x)
    assert y.shape == (n_points, dim_out) and y.dtype == x.dtype
    max_err = float(jnp.max(jnp.abs(y - y_ref)))
    assert jnp.allclose(y, y_ref, atol=1e-3, rtol=1e-3), max_err

    print("KERNEL_OK")
</pallas_src>

<mosaic_0001>
module attributes {stable_mosaic.version = 11 : i64} {
  func.func @_siren_fused_kernel(%arg0: i32, %arg1: memref<4xf32, #tpu.memory_space<smem>>, %arg2: memref<256x2xf32, #tpu.memory_space<vmem>>, %arg3: memref<2x128xf32, #tpu.memory_space<vmem>>, %arg4: memref<1x128xf32, #tpu.memory_space<vmem>>, %arg5: memref<2x128x128xf32, #tpu.memory_space<vmem>>, %arg6: memref<2x1x128xf32, #tpu.memory_space<vmem>>, %arg7: memref<128x128xf32, #tpu.memory_space<vmem>>, %arg8: memref<1x128xf32, #tpu.memory_space<vmem>>, %arg9: memref<256x128xf32, #tpu.memory_space<vmem>>) attributes {dimension_semantics = [#tpu.dimension_semantics<parallel>], iteration_bounds = array<i64: 1>, scalar_prefetch = 0 : i64, scratch_operands = 0 : i64, tpu.core_type = #tpu.core_type<tc>, window_params = [{transform_indices = @transform_0, window_bounds = array<i64: 4>}, {transform_indices = @transform_1, window_bounds = array<i64: 256, 2>}, {pipeline_mode = #tpu.pipeline_mode<synchronous>, transform_indices = @transform_2, window_bounds = array<i64: 2, 128>}, {pipeline_mode = #tpu.pipeline_mode<synchronous>, transform_indices = @transform_3, window_bounds = array<i64: 1, 128>}, {pipeline_mode = #tpu.pipeline_mode<synchronous>, transform_indices = @transform_4, window_bounds = array<i64: 2, 128, 128>}, {pipeline_mode = #tpu.pipeline_mode<synchronous>, transform_indices = @transform_5, window_bounds = array<i64: 2, 1, 128>}, {pipeline_mode = #tpu.pipeline_mode<synchronous>, transform_indices = @transform_6, window_bounds = array<i64: 128, 128>}, {pipeline_mode = #tpu.pipeline_mode<synchronous>, transform_indices = @transform_7, window_bounds = array<i64: 1, 128>}, {transform_indices = @transform_8, window_bounds = array<i64: 256, 128>}]} {
    %c0 = arith.constant 0 : index
    %c0_0 = arith.constant 0 : index
    %0 = vector.load %arg2[%c0, %c0_0] : memref<256x2xf32, #tpu.memory_space<vmem>>, vector<256x2xf32>
    %c0_1 = arith.constant 0 : index
    %c0_2 = arith.constant 0 : index
    %1 = vector.load %arg3[%c0_1, %c0_2] : memref<2x128xf32, #tpu.memory_space<vmem>>, vector<2x128xf32>
    %cst = arith.constant dense<0.000000e+00> : vector<256x128xf32>
    %2 = tpu.matmul %0, %1, %cst {dimension_numbers = #tpu.dot_dimension_numbers<[1], [0], [0], [1], [0, 0, 1, 1], [], []>} : vector<256x2xf32>, vector<2x128xf32>, vector<256x128xf32> -> vector<256x128xf32>
    %c0_3 = arith.constant 0 : index
    %3 = memref.load %arg1[%c0_3] : memref<4xf32, #tpu.memory_space<smem>>
    %c0_4 = arith.constant 0 : index
    %c0_5 = arith.constant 0 : index
    %4 = vector.load %arg4[%c0_4, %c0_5] : memref<1x128xf32, #tpu.memory_space<vmem>>, vector<1x128xf32>
    %5 = vector.broadcast %4 : vector<1x128xf32> to vector<256x128xf32>
    %6 = arith.addf %2, %5 : vector<256x128xf32>
    %7 = vector.broadcast %3 : f32 to vector<256x128xf32>
    %8 = arith.mulf %7, %6 : vector<256x128xf32>
    %9 = math.sin %8 : vector<256x128xf32>
    %c0_6 = arith.constant 0 : index
    %c0_7 = arith.constant 0 : index
    %c0_8 = arith.constant 0 : index
    %10 = vector.load %arg5[%c0_6, %c0_7, %c0_8] : memref<2x128x128xf32, #tpu.memory_space<vmem>>, vector<1x128x128xf32>
    %11 = vector.shape_cast %10 : vector<1x128x128xf32> to vector<128x128xf32>
    %cst_9 = arith.constant dense<0.000000e+00> : vector<256x128xf32>
    %12 = tpu.matmul %9, %11, %cst_9 {dimension_numbers = #tpu.dot_dimension_numbers<[1], [0], [0], [1], [0, 0, 1, 1], [], []>} : vector<256x128xf32>, vector<128x128xf32>, vector<256x128xf32> -> vector<256x128xf32>
    %c1 = arith.constant 1 : index
    %13 = memref.load %arg1[%c1] : memref<4xf32, #tpu.memory_space<smem>>
    %c0_10 = arith.constant 0 : index
    %c0_11 = arith.constant 0 : index
    %c0_12 = arith.constant 0 : index
    %14 = vector.load %arg6[%c0_10, %c0_11, %c0_12] : memref<2x1x128xf32, #tpu.memory_space<vmem>>, vector<1x1x128xf32>
    %15 = vector.shape_cast %14 : vector<1x1x128xf32> to vector<1x128xf32>
    %16 = vector.broadcast %15 : vector<1x128xf32> to vector<256x128xf32>
    %17 = arith.addf %12, %16 : vector<256x128xf32>
    %18 = vector.broadcast %13 : f32 to vector<256x128xf32>
    %19 = arith.mulf %18, %17 : vector<256x128xf32>
    %20 = math.sin %19 : vector<256x128xf32>
    %c1_13 = arith.constant 1 : index
    %c0_14 = arith.constant 0 : index
    %c0_15 = arith.constant 0 : index
    %21 = vector.load %arg5[%c1_13, %c0_14, %c0_15] : memref<2x128x128xf32, #tpu.memory_space<vmem>>, vector<1x128x128xf32>
    %22 = vector.shape_cast %21 : vector<1x128x128xf32> to vector<128x128xf32>
    %cst_16 = arith.constant dense<0.000000e+00> : vector<256x128xf32>
    %23 = tpu.matmul %20, %22, %cst_16 {dimension_numbers = #tpu.dot_dimension_numbers<[1], [0], [0], [1], [0, 0, 1, 1], [], []>} : vector<256x128xf32>, vector<128x128xf32>, vector<256x128xf32> -> vector<256x128xf32>
    %c2 = arith.constant 2 : index
    %24 = memref.load %arg1[%c2] : memref<4xf32, #tpu.memory_space<smem>>
    %c1_17 = arith.constant 1 : index
    %c0_18 = arith.constant 0 : index
    %c0_19 = arith.constant 0 : index
    %25 = vector.load %arg6[%c1_17, %c0_18, %c0_19] : memref<2x1x128xf32, #tpu.memory_space<vmem>>, vector<1x1x128xf32>
    %26 = vector.shape_cast %25 : vector<1x1x128xf32> to vector<1x128xf32>
    %27 = vector.broadcast %26 : vector<1x128xf32> to vector<256x128xf32>
    %28 = arith.addf %23, %27 : vector<256x128xf32>
    %29 = vector.broadcast %24 : f32 to vector<256x128xf32>
    %30 = arith.mulf %29, %28 : vector<256x128xf32>
    %31 = math.sin %30 : vector<256x128xf32>
    %c0_20 = arith.constant 0 : index
    %c0_21 = arith.constant 0 : index
    %32 = vector.load %arg7[%c0_20, %c0_21] : memref<128x128xf32, #tpu.memory_space<vmem>>, vector<128x128xf32>
    %cst_22 = arith.constant dense<0.000000e+00> : vector<256x128xf32>
    %33 = tpu.matmul %31, %32, %cst_22 {dimension_numbers = #tpu.dot_dimension_numbers<[1], [0], [0], [1], [0, 0, 1, 1], [], []>} : vector<256x128xf32>, vector<128x128xf32>, vector<256x128xf32> -> vector<256x128xf32>
    %c0_23 = arith.constant 0 : index
    %c0_24 = arith.constant 0 : index
    %34 = vector.load %arg8[%c0_23, %c0_24] : memref<1x128xf32, #tpu.memory_space<vmem>>, vector<1x128xf32>
    %35 = vector.broadcast %34 : vector<1x128xf32> to vector<256x128xf32>
    %36 = arith.addf %33, %35 : vector<256x128xf32>
    %c0_25 = arith.constant 0 : index
    %c0_26 = arith.constant 0 : index
    %37 = vector.load %arg9[%c0_25, %c0_26] : memref<256x128xf32, #tpu.memory_space<vmem>>, vector<256x128xf32>
    tpu.vector_store %arg9[%c0_25, %c0_26], %36 {strides = array<i32>} : memref<256x128xf32, #tpu.memory_space<vmem>>, vector<256x128xf32>,
    return
  }
  func.func @transform_0(%arg0: i32) -> i32 {
    %c0_i32 = arith.constant 0 : i32
    %c0_i32_0 = arith.constant 0 : i32
    return %c0_i32 : i32
  }
  func.func @transform_1(%arg0: i32) -> (i32, i32) {
    %c0_i32 = arith.constant 0 : i32
    %c0_i32_0 = arith.constant 0 : i32
    return %arg0, %c0_i32 : i32, i32
  }
  func.func @transform_2(%arg0: i32) -> (i32, i32) {
    %c0_i32 = arith.constant 0 : i32
    %c0_i32_0 = arith.constant 0 : i32
    %c0_i32_1 = arith.constant 0 : i32
    return %c0_i32, %c0_i32_0 : i32, i32
  }
  func.func @transform_3(%arg0: i32) -> (i32, i32) {
    %c0_i32 = arith.constant 0 : i32
    %c0_i32_0 = arith.constant 0 : i32
    %c0_i32_1 = arith.constant 0 : i32
    return %c0_i32, %c0_i32_0 : i32, i32
  }
  func.func @transform_4(%arg0: i32) -> (i32, i32, i32) {
    %c0_i32 = arith.constant 0 : i32
    %c0_i32_0 = arith.constant 0 : i32
    %c0_i32_1 = arith.constant 0 : i32
    %c0_i32_2 = arith.constant 0 : i32
    return %c0_i32, %c0_i32_0, %c0_i32_1 : i32, i32, i32
  }
  func.func @transform_5(%arg0: i32) -> (i32, i32, i32) {
    %c0_i32 = arith.constant 0 : i32
    %c0_i32_0 = arith.constant 0 : i32
    %c0_i32_1 = arith.constant 0 : i32
    %c0_i32_2 = arith.constant 0 : i32
    return %c0_i32, %c0_i32_0, %c0_i32_1 : i32, i32, i32
  }
  func.func @transform_6(%arg0: i32) -> (i32, i32) {
    %c0_i32 = arith.constant 0 : i32
    %c0_i32_0 = arith.constant 0 : i32
    %c0_i32_1 = arith.constant 0 : i32
    return %c0_i32, %c0_i32_0 : i32, i32
  }
  func.func @transform_7(%arg0: i32) -> (i32, i32) {
    %c0_i32 = arith.constant 0 : i32
    %c0_i32_0 = arith.constant 0 : i32
    %c0_i32_1 = arith.constant 0 : i32
    return %c0_i32, %c0_i32_0 : i32, i32
  }
  func.func @transform_8(%arg0: i32) -> (i32, i32) {
    %c0_i32 = arith.constant 0 : i32
    %c0_i32_0 = arith.constant 0 : i32
    return %arg0, %c0_i32 : i32, i32
  }
}

</mosaic_0001>

<llo_original>
// kernel: tpu_custom_call.1
$region0: #{tpu_custom_call.1}
  #allocation0 [shape = 'u32[]', space=smem, size = 0x4, offset = 0x4, fixed_abs, tag = 'smem constant byte address 0x4 - core index']
  #allocation1 [shape = 'u32[144,128]{1,0:T(1,128)}', space=vmem, size = 0x12000, scoped, tag = 'internal scratch']
  %s0 = inlined_call_operand.vmem [shape: f32[4], index: 0, kind: input, shape index: {}]
  %s1 = inlined_call_operand.vmem [shape: f32[256,2], index: 1, kind: input, shape index: {}]
  %s2 = inlined_call_operand.vmem [shape: f32[2,128], index: 2, kind: input, shape index: {}]
  %s3 = inlined_call_operand.vmem [shape: f32[1,128], index: 3, kind: input, shape index: {}]
  %s4 = inlined_call_operand.vmem [shape: f32[2,128,128], index: 4, kind: input, shape index: {}]
  %s5 = inlined_call_operand.vmem [shape: f32[2,1,128], index: 5, kind: input, shape index: {}]
  %s6 = inlined_call_operand.hbm [shape: f32[128,128], index: 6, kind: input, shape index: {}]
  %s7 = inlined_call_operand.vmem [shape: f32[1,128], index: 7, kind: input, shape index: {}]
  %s8 = inlined_call_operand.hbm [shape: f32[256,128], index: 8, kind: output, shape index: {}]
  %s9 = sld [smem:[#allocation0]]
  $region50: #{tpu_custom_call.1} parent=0
    _
  %s11 = ssub.s32 1, %s9
  %s12 = scalar_select 0, %s11, %s9
  $region1: #{tpu_custom_call.1} parent=0
    #allocation2 [shape = 'u8[512]{0}', space=smem, size = 0x200, scoped, tag = 'input window, operand 0, single buffered']
    #allocation3 [shape = 's32[1]{0}', space=sflag, size = 0x4, scoped, tag = 'scoped memory for tpu_custom_call.1']
    #allocation4 [shape = 's32[1]{0}', space=sflag, size = 0x4, scoped, tag = 'scoped memory for tpu_custom_call.1']
    #allocation5 [shape = 's32[1]{0}', space=sflag, size = 0x4, scoped, tag = 'scoped memory for tpu_custom_call.1']
    #allocation6 [shape = 'u8[65536]{0}', space=vmem, size = 0x10000, scoped, tag = 'input window, operand 6, single buffered']
    #allocation7 [shape = 'u8[131072]{0}', space=vmem, size = 0x20000, scoped, tag = 'output window, operand 0, single buffered']
    %13 = vsyncpa [#allocation5], 0
    %14 = vsyncpa [#allocation3], 0
    %15 = vsyncpa [#allocation4], 0
    // Predicated region
    $region2: #{tpu_custom_call.1} parent=1 // pred_check
      _
    $region3: #{tpu_custom_call.1} parent=1 // pred_check_branch
      %17 = sbr.rel (0) target = $region5
    $region4: #{tpu_custom_call.1} parent=1 // pred_region
      %s19 = ssub.s32 16, 16
      %20 = vsyncadd [#allocation5], %s19
      %s22 = sshll.u32 %s0, 4
      %s23 = int_to_ptr.vmem [resolvable:$true] %s22
      %25 = dma.vmem_to_smem %s23, 16, [#allocation2], [#allocation5]
    $region5: #{tpu_custom_call.1} parent=1 // pred_fallthru
      _
    // Predicated region
    $region6: #{tpu_custom_call.1} parent=1 // pred_check
      _
    $region7: #{tpu_custom_call.1} parent=1 // pred_check_branch
      %27 = sbr.rel (0) target = $region9
    $region8: #{tpu_custom_call.1} parent=1 // pred_region
      _
    $region9: #{tpu_custom_call.1} parent=1 // pred_fallthru
      _
    // Predicated region
    $region10: #{tpu_custom_call.1} parent=1 // pred_check
      _
    $region11: #{tpu_custom_call.1} parent=1 // pred_check_branch
      %29 = sbr.rel (0) target = $region13
    $region12: #{tpu_custom_call.1} parent=1 // pred_region
      _
    $region13: #{tpu_custom_call.1} parent=1 // pred_fallthru
      _
    // Predicated region
    $region14: #{tpu_custom_call.1} parent=1 // pred_check
      _
    $region15: #{tpu_custom_call.1} parent=1 // pred_check_branch
      %31 = sbr.rel (0) target = $region17
    $region16: #{tpu_custom_call.1} parent=1 // pred_region
      _
    $region17: #{tpu_custom_call.1} parent=1 // pred_fallthru
      _
    // Predicated region
    $region18: #{tpu_custom_call.1} parent=1 // pred_check
      _
    $region19: #{tpu_custom_call.1} parent=1 // pred_check_branch
      %33 = sbr.rel (0) target = $region21
    $region20: #{tpu_custom_call.1} parent=1 // pred_region
      _
    $region21: #{tpu_custom_call.1} parent=1 // pred_fallthru
      _
    // Predicated region
    $region22: #{tpu_custom_call.1} parent=1 // pred_check
      _
    $region23: #{tpu_custom_call.1} parent=1 // pred_check_branch
      %35 = sbr.rel (0) target = $region25
    $region24: #{tpu_custom_call.1} parent=1 // pred_region
      _
    $region25: #{tpu_custom_call.1} parent=1 // pred_fallthru
      _
    // Predicated region
    $region26: #{tpu_custom_call.1} parent=1 // pred_check
      _
    $region27: #{tpu_custom_call.1} parent=1 // pred_check_branch
      %37 = sbr.rel (0) target = $region29
    $region28: #{tpu_custom_call.1} parent=1 // pred_region
      %s39 = ssub.s32 2048, 2048
      %40 = vsyncadd [#allocation3], %s39
      %s41 = sshll.u32 [#allocation6], 4
      %s42 = int_to_ptr.vmem [resolvable:$true] %s41
      %47 = dma.hbm_to_vmem [thread:$0]  %s6, 2048, %s42, [#allocation3], 128, 128, 8
    $region29: #{tpu_custom_call.1} parent=1 // pred_fallthru
      _
    // Predicated region
    $region30: #{tpu_custom_call.1} parent=1 // pred_check
      _
    $region31: #{tpu_custom_call.1} parent=1 // pred_check_branch
      %49 = sbr.rel (0) target = $region33
    $region32: #{tpu_custom_call.1} parent=1 // pred_region
      _
    $region33: #{tpu_custom_call.1} parent=1 // pred_fallthru
      _
    // Predicated region
    $region34: #{tpu_custom_call.1} parent=1 // pred_check
      _
    $region35: #{tpu_custom_call.1} parent=1 // pred_check_branch
      %51 = sbr.rel (0) target = $region37
    $region36: #{tpu_custom_call.1} parent=1 // pred_region
      %52 = dma.done [#allocation5], 16
    $region37: #{tpu_custom_call.1} parent=1 // pred_fallthru
      _
    // Predicated region
    $region38: #{tpu_custom_call.1} parent=1 // pred_check
      _
    $region39: #{tpu_custom_call.1} parent=1 // pred_check_branch
      %54 = sbr.rel (0) target = $region41
    $region40: #{tpu_custom_call.1} parent=1 // pred_region
      %55 = dma.done [#allocation3], 2048
    $region41: #{tpu_custom_call.1} parent=1 // pred_fallthru
      _
    %56 = sfence
    %v57 = vld [vmem:[%s1] sm:$0xff]
    %v58 = vld [vmem:[%s1 + $0x8] sm:$0xff]
    %v59 = vld [vmem:[%s1 + $0x10] sm:$0xff]
    %v60 = vld [vmem:[%s1 + $0x18] sm:$0xff]
    %v61 = vld [vmem:[%s1 + $0x20] sm:$0xff]
    %v62 = vld [vmem:[%s1 + $0x28] sm:$0xff]
    %v63 = vld [vmem:[%s1 + $0x30] sm:$0xff]
    %v64 = vld [vmem:[%s1 + $0x38] sm:$0xff]
    %v65 = vld [vmem:[%s1 + $0x40] sm:$0xff]
    %v66 = vld [vmem:[%s1 + $0x48] sm:$0xff]
    %v67 = vld [vmem:[%s1 + $0x50] sm:$0xff]
    %v68 = vld [vmem:[%s1 + $0x58] sm:$0xff]
    %v69 = vld [vmem:[%s1 + $0x60] sm:$0xff]
    %v70 = vld [vmem:[%s1 + $0x68] sm:$0xff]
    %v71 = vld [vmem:[%s1 + $0x70] sm:$0xff]
    %v72 = vld [vmem:[%s1 + $0x78] sm:$0xff]
    %v73 = vld [vmem:[%s1 + $0x80] sm:$0xff]
    %v74 = vld [vmem:[%s1 + $0x88] sm:$0xff]
    %v75 = vld [vmem:[%s1 + $0x90] sm:$0xff]
    %v76 = vld [vmem:[%s1 + $0x98] sm:$0xff]
    %v77 = vld [vmem:[%s1 + $0xa0] sm:$0xff]
    %v78 = vld [vmem:[%s1 + $0xa8] sm:$0xff]
    %v79 = vld [vmem:[%s1 + $0xb0] sm:$0xff]
    %v80 = vld [vmem:[%s1 + $0xb8] sm:$0xff]
    %v81 = vld [vmem:[%s1 + $0xc0] sm:$0xff]
    %v82 = vld [vmem:[%s1 + $0xc8] sm:$0xff]
    %v83 = vld [vmem:[%s1 + $0xd0] sm:$0xff]
    %v84 = vld [vmem:[%s1 + $0xd8] sm:$0xff]
    %v85 = vld [vmem:[%s1 + $0xe0] sm:$0xff]
    %v86 = vld [vmem:[%s1 + $0xe8] sm:$0xff]
    %v87 = vld [vmem:[%s1 + $0xf0] sm:$0xff]
    %v88 = vld [vmem:[%s1 + $0xf8] sm:$0xff]
    %v89 = vld [vmem:[%s2] sm:$0x3]
    %s90 = sld [smem:[#allocation2]]
    %v91 = vld [vmem:[%s3] sm:$0x1]
    %v93 = vlaneseq
    %v94 = vshrl.u32 %v93, 7
    %v95 = vsub.s32 0, %v94
    %v96 = vrot.slane %v91, %v95
    %vm98 = vcmask 15360
    %v100 = vsel %vm98, %v57, 0
    %v103 = vsel %vm98, %v58, 0
    %v106 = vsel %vm98, %v59, 0
    %v109 = vsel %vm98, %v60, 0
    %v112 = vsel %vm98, %v61, 0
    %v115 = vsel %vm98, %v62, 0
    %v118 = vsel %vm98, %v63, 0
    %v121 = vsel %vm98, %v64, 0
    %v124 = vsel %vm98, %v65, 0
    %v127 = vsel %vm98, %v66, 0
    %v130 = vsel %vm98, %v67, 0
    %v133 = vsel %vm98, %v68, 0
    %v136 = vsel %vm98, %v69, 0
    %v139 = vsel %vm98, %v70, 0
    %v142 = vsel %vm98, %v71, 0
    %v145 = vsel %vm98, %v72, 0
    %v148 = vsel %vm98, %v73, 0
    %v151 = vsel %vm98, %v74, 0
    %v154 = vsel %vm98, %v75, 0
    %v157 = vsel %vm98, %v76, 0
    %v160 = vsel %vm98, %v77, 0
    %v163 = vsel %vm98, %v78, 0
    %v166 = vsel %vm98, %v79, 0
    %v169 = vsel %vm98, %v80, 0
    %v172 = vsel %vm98, %v81, 0
    %v175 = vsel %vm98, %v82, 0
    %v178 = vsel %vm98, %v83, 0
    %v181 = vsel %vm98, %v84, 0
    %v184 = vsel %vm98, %v85, 0
    %v187 = vsel %vm98, %v86, 0
    %v190 = vsel %vm98, %v87, 0
    %v193 = vsel %vm98, %v88, 0
    %vm195 = vcmask 1041408
    %v197 = vsel %vm195, %v89, 0
    %199 = vmatprep.subr.mxu0 0.0
    %200 = vmatpush1.msra.mxu0 %v197
    %201 = vmatprep.subr.mxu0 0.0
    %202 = vmatpush1.msra.mxu0 0.0
    %203 = vmatprep.subr.mxu0 0.0
    %204 = vmatpush1.msra.mxu0 0.0
    %205 = vmatprep.subr.mxu0 0.0
    %206 = vmatpush1.msra.mxu0 0.0
    %207 = vmatprep.subr.mxu0 0.0
    %208 = vmatpush1.msra.mxu0 0.0
    %209 = vmatprep.subr.mxu0 0.0
    %210 = vmatpush1.msra.mxu0 0.0
    %211 = vmatprep.subr.mxu0 0.0
    %212 = vmatpush1.msra.mxu0 0.0
    %213 = vmatprep.subr.mxu0 0.0
    %214 = vmatpush1.msra.mxu0 0.0
    %215 = vmatprep.subr.mxu0 0.0
    %216 = vmatpush1.msra.mxu0 0.0
    %217 = vmatprep.subr.mxu0 0.0
    %218 = vmatpush1.msra.mxu0 0.0
    %219 = vmatprep.subr.mxu0 0.0
    %220 = vmatpush1.msra.mxu0 0.0
    %221 = vmatprep.subr.mxu0 0.0
    %222 = vmatpush1.msra.mxu0 0.0
    %223 = vmatprep.subr.mxu0 0.0
    %224 = vmatpush1.msra.mxu0 0.0
    %225 = vmatprep.subr.mxu0 0.0
    %226 = vmatpush1.msra.mxu0 0.0
    %227 = vmatprep.subr.mxu0 0.0
    %228 = vmatpush1.msra.mxu0 0.0
    %229 = vmatprep.subr.mxu0 0.0
    %230 = vmatpush1.msra.mxu0 0.0
    %231 = vmatprep.subr.mxu0 0.0
    %232 = vmatpush1.msra.mxu0 0.0
    %233 = vmatprep.subr.mxu0 0.0
    %234 = vmatpush1.msra.mxu0 0.0
    %235 = vmatprep.subr.mxu0 0.0
    %236 = vmatpush1.msra.mxu0 0.0
    %237 = vmatprep.subr.mxu0 0.0
    %238 = vmatpush1.msra.mxu0 0.0
    %239 = vmatprep.subr.mxu0 0.0
    %240 = vmatpush1.msra.mxu0 0.0
    %241 = vmatprep.subr.mxu0 0.0
    %242 = vmatpush1.msra.mxu0 0.0
    %243 = vmatprep.subr.mxu0 0.0
    %244 = vmatpush1.msra.mxu0 0.0
    %245 = vmatprep.subr.mxu0 0.0
    %246 = vmatpush1.msra.mxu0 0.0
    %247 = vmatprep.subr.mxu0 0.0
    %248 = vmatpush1.msra.mxu0 0.0
    %249 = vmatprep.subr.mxu0 0.0
    %250 = vmatpush1.msra.mxu0 0.0
    %251 = vmatprep.subr.mxu0 0.0
    %252 = vmatpush1.msra.mxu0 0.0
    %253 = vmatprep.subr.mxu0 0.0
    %254 = vmatpush1.msra.mxu0 0.0
    %255 = vmatprep.subr.mxu0 0.0
    %256 = vmatpush1.msra.mxu0 0.0
    %257 = vmatprep.subr.mxu0 0.0
    %258 = vmatpush1.msra.mxu0 0.0
    %259 = vmatprep.subr.mxu0 0.0
    %260 = vmatpush1.msra.mxu0 0.0
    %261 = vmatprep.subr.mxu0 0.0
    %262 = vmatpush1.msra.mxu0 0.0
    %263 = vmatprep.mubr.f32.mxu0 0.0
    %264 = vmatmul.mubr.f32.gmra.mrb[0].mxu0 %v100
    %v265 = vpop.f32.mrb[0].mxu0
    %v266 = vadd.f32 %v96, %v265
    %v267 = vpop.f32.mrb[0].mxu0
    %268 = vmatprep.mubr.f32.mxu0 0.0
    %269 = vmatmul.mubr.f32.gmra.mrb[0].mxu0 %v103
    %v270 = vpop.f32.mrb[0].mxu0
    %v271 = vadd.f32 %v96, %v270
    %v272 = vpop.f32.mrb[0].mxu0
    %273 = vmatprep.mubr.f32.mxu0 0.0
    %274 = vmatmul.mubr.f32.gmra.mrb[0].mxu0 %v106
    %v275 = vpop.f32.mrb[0].mxu0
    %v276 = vadd.f32 %v96, %v275
    %v277 = vpop.f32.mrb[0].mxu0
    %278 = vmatprep.mubr.f32.mxu0 0.0
    %279 = vmatmul.mubr.f32.gmra.mrb[0].mxu0 %v109
    %v280 = vpop.f32.mrb[0].mxu0
    %v281 = vadd.f32 %v96, %v280
    %v282 = vpop.f32.mrb[0].mxu0
    %283 = vmatprep.mubr.f32.mxu0 0.0
    %284 = vmatmul.mubr.f32.gmra.mrb[0].mxu0 %v112
    %v285 = vpop.f32.mrb[0].mxu0
    %v286 = vadd.f32 %v96, %v285
    %v287 = vpop.f32.mrb[0].mxu0
    %288 = vmatprep.mubr.f32.mxu0 0.0
    %289 = vmatmul.mubr.f32.gmra.mrb[0].mxu0 %v115
    %v290 = vpop.f32.mrb[0].mxu0
    %v291 = vadd.f32 %v96, %v290
    %v292 = vpop.f32.mrb[0].mxu0
    %293 = vmatprep.mubr.f32.mxu0 0.0
    %294 = vmatmul.mubr.f32.gmra.mrb[0].mxu0 %v118
    %v295 = vpop.f32.mrb[0].mxu0
    %v296 = vadd.f32 %v96, %v295
    %v297 = vpop.f32.mrb[0].mxu0
    %298 = vmatprep.mubr.f32.mxu0 0.0
    %299 = vmatmul.mubr.f32.gmra.mrb[0].mxu0 %v121
    %v300 = vpop.f32.mrb[0].mxu0
    %v301 = vadd.f32 %v96, %v300
    %v302 = vpop.f32.mrb[0].mxu0
    %303 = vmatprep.mubr.f32.mxu0 0.0
    %304 = vmatmul.mubr.f32.gmra.mrb[0].mxu0 %v124
    %v305 = vpop.f32.mrb[0].mxu0
    %v306 = vadd.f32 %v96, %v305
    %v307 = vpop.f32.mrb[0].mxu0
    %308 = vmatprep.mubr.f32.mxu0 0.0
    %309 = vmatmul.mubr.f32.gmra.mrb[0].mxu0 %v127
    %v310 = vpop.f32.mrb[0].mxu0
    %v311 = vadd.f32 %v96, %v310
    %v312 = vpop.f32.mrb[0].mxu0
    %313 = vmatprep.mubr.f32.mxu0 0.0
    %314 = vmatmul.mubr.f32.gmra.mrb[0].mxu0 %v130
    %v315 = vpop.f32.mrb[0].mxu0
    %v316 = vadd.f32 %v96, %v315
    %v317 = vpop.f32.mrb[0].mxu0
    %318 = vmatprep.mubr.f32.mxu0 0.0
    %319 = vmatmul.mubr.f32.gmra.mrb[0].mxu0 %v133
    %v320 = vpop.f32.mrb[0].mxu0
    %v321 = vadd.f32 %v96, %v320
    %v322 = vpop.f32.mrb[0].mxu0
    %323 = vmatprep.mubr.f32.mxu0 0.0
    %324 = vmatmul.mubr.f32.gmra.mrb[0].mxu0 %v136
    %v325 = vpop.f32.mrb[0].mxu0
    %v326 = vadd.f32 %v96, %v325
    %v327 = vpop.f32.mrb[0].mxu0
    %328 = vmatprep.mubr.f32.mxu0 0.0
    %329 = vmatmul.mubr.f32.gmra.mrb[0].mxu0 %v139
    %v330 = vpop.f32.mrb[0].mxu0
    %v331 = vadd.f32 %v96, %v330
    %v332 = vpop.f32.mrb[0].mxu0
    %333 = vmatprep.mubr.f32.mxu0 0.0
    %334 = vmatmul.mubr.f32.gmra.mrb[0].mxu0 %v142
    %v335 = vpop.f32.mrb[0].mxu0
    %v336 = vadd.f32 %v96, %v335
    %v337 = vpop.f32.mrb[0].mxu0
    %338 = vmatprep.mubr.f32.mxu0 0.0
    %339 = vmatmul.mubr.f32.gmra.mrb[0].mxu0 %v145
    %v340 = vpop.f32.mrb[0].mxu0
    %v341 = vadd.f32 %v96, %v340
    %v342 = vpop.f32.mrb[0].mxu0
    %343 = vmatprep.mubr.f32.mxu0 0.0
    %344 = vmatmul.mubr.f32.gmra.mrb[0].mxu0 %v148
    %v345 = vpop.f32.mrb[0].mxu0
    %v346 = vadd.f32 %v96, %v345
    %v347 = vpop.f32.mrb[0].mxu0
    %348 = vmatprep.mubr.f32.mxu0 0.0
    %349 = vmatmul.mubr.f32.gmra.mrb[0].mxu0 %v151
    %v350 = vpop.f32.mrb[0].mxu0
    %v351 = vadd.f32 %v96, %v350
    %v352 = vpop.f32.mrb[0].mxu0
    %353 = vmatprep.mubr.f32.mxu0 0.0
    %354 = vmatmul.mubr.f32.gmra.mrb[0].mxu0 %v154
    %v355 = vpop.f32.mrb[0].mxu0
    %v356 = vadd.f32 %v96, %v355
    %v357 = vpop.f32.mrb[0].mxu0
    %358 = vmatprep.mubr.f32.mxu0 0.0
    %359 = vmatmul.mubr.f32.gmra.mrb[0].mxu0 %v157
    %v360 = vpop.f32.mrb[0].mxu0
    %v361 = vadd.f32 %v96, %v360
    %v362 = vpop.f32.mrb[0].mxu0
    %363 = vmatprep.mubr.f32.mxu0 0.0
    %364 = vmatmul.mubr.f32.gmra.mrb[0].mxu0 %v160
    %v365 = vpop.f32.mrb[0].mxu0
    %v366 = vadd.f32 %v96, %v365
    %v367 = vpop.f32.mrb[0].mxu0
    %368 = vmatprep.mubr.f32.mxu0 0.0
    %369 = vmatmul.mubr.f32.gmra.mrb[0].mxu0 %v163
    %v370 = vpop.f32.mrb[0].mxu0
    %v371 = vadd.f32 %v96, %v370
    %v372 = vpop.f32.mrb[0].mxu0
    %373 = vmatprep.mubr.f32.mxu0 0.0
    %374 = vmatmul.mubr.f32.gmra.mrb[0].mxu0 %v166
    %v375 = vpop.f32.mrb[0].mxu0
    %v376 = vadd.f32 %v96, %v375
    %v377 = vpop.f32.mrb[0].mxu0
    %378 = vmatprep.mubr.f32.mxu0 0.0
    %379 = vmatmul.mubr.f32.gmra.mrb[0].mxu0 %v169
    %v380 = vpop.f32.mrb[0].mxu0
    %v381 = vadd.f32 %v96, %v380
    %v382 = vpop.f32.mrb[0].mxu0
    %383 = vmatprep.mubr.f32.mxu0 0.0
    %384 = vmatmul.mubr.f32.gmra.mrb[0].mxu0 %v172
    %v385 = vpop.f32.mrb[0].mxu0
    %v386 = vadd.f32 %v96, %v385
    %v387 = vpop.f32.mrb[0].mxu0
    %388 = vmatprep.mubr.f32.mxu0 0.0
    %389 = vmatmul.mubr.f32.gmra.mrb[0].mxu0 %v175
    %v390 = vpop.f32.mrb[0].mxu0
    %v391 = vadd.f32 %v96, %v390
    %v392 = vpop.f32.mrb[0].mxu0
    %393 = vmatprep.mubr.f32.mxu0 0.0
    %394 = vmatmul.mubr.f32.gmra.mrb[0].mxu0 %v178
    %v395 = vpop.f32.mrb[0].mxu0
    %v396 = vadd.f32 %v96, %v395
    %v397 = vpop.f32.mrb[0].mxu0
    %398 = vmatprep.mubr.f32.mxu0 0.0
    %399 = vmatmul.mubr.f32.gmra.mrb[0].mxu0 %v181
    %v400 = vpop.f32.mrb[0].mxu0
    %v401 = vadd.f32 %v96, %v400
    %v402 = vpop.f32.mrb[0].mxu0
    %403 = vmatprep.mubr.f32.mxu0 0.0
    %404 = vmatmul.mubr.f32.gmra.mrb[0].mxu0 %v184
    %v405 = vpop.f32.mrb[0].mxu0
    %v406 = vadd.f32 %v96, %v405
    %v407 = vpop.f32.mrb[0].mxu0
    %408 = vmatprep.mubr.f32.mxu0 0.0
    %409 = vmatmul.mubr.f32.gmra.mrb[0].mxu0 %v187
    %v410 = vpop.f32.mrb[0].mxu0
    %v411 = vadd.f32 %v96, %v410
    %v412 = vpop.f32.mrb[0].mxu0
    %413 = vmatprep.mubr.f32.mxu0 0.0
    %414 = vmatmul.mubr.f32.gmra.mrb[0].mxu0 %v190
    %v415 = vpop.f32.mrb[0].mxu0
    %v416 = vadd.f32 %v96, %v415
    %v417 = vpop.f32.mrb[0].mxu0
    %418 = vmatprep.mubr.f32.mxu0 0.0
    %419 = vmatmul.mubr.f32.gmra.mrb[0].mxu0 %v193
    %v420 = vpop.f32.mrb[0].mxu0
    %v421 = vadd.f32 %v96, %v420
    %v422 = vpop.f32.mrb[0].mxu0
    %423 = vdwg.mxu0
    %v424 = vstv %s90
    %v425 = vmul.f32 %v424, %v266
    %v426 = vmul.f32 %v424, %v271
    %v427 = vmul.f32 %v424, %v276
    %v428 = vmul.f32 %v424, %v281
    %v429 = vmul.f32 %v424, %v286
    %v430 = vmul.f32 %v424, %v291
    %v431 = vmul.f32 %v424, %v296
    %v432 = vmul.f32 %v424, %v301
    %v433 = vmul.f32 %v424, %v306
    %v434 = vmul.f32 %v424, %v311
    %v435 = vmul.f32 %v424, %v316
    %v436 = vmul.f32 %v424, %v321
    %v437 = vmul.f32 %v424, %v326
    %v438 = vmul.f32 %v424, %v331
    %v439 = vmul.f32 %v424, %v336
    %v440 = vmul.f32 %v424, %v341
    %v441 = vmul.f32 %v424, %v346
    %v442 = vmul.f32 %v424, %v351
    %v443 = vmul.f32 %v424, %v356
    %v444 = vmul.f32 %v424, %v361
    %v445 = vmul.f32 %v424, %v366
    %v446 = vmul.f32 %v424, %v371
    %v447 = vmul.f32 %v424, %v376
    %v448 = vmul.f32 %v424, %v381
    %v449 = vmul.f32 %v424, %v386
    %v450 = vmul.f32 %v424, %v391
    %v451 = vmul.f32 %v424, %v396
    %v452 = vmul.f32 %v424, %v401
    %v453 = vmul.f32 %v424, %v406
    %v454 = vmul.f32 %v424, %v411
    %v455 = vmul.f32 %v424, %v416
    %v456 = vmul.f32 %v424, %v421
    %v457 = vand.u32 2147483647, %v425
    %vm458 = vcmp.le.f32.partialorder %v457, 0.7853982
    %vm459 = vcmp.lt.s32.totalorder %v425, 0
    %v460 = vand.u32 %v425, 2139095040
    %v461 = vshrl.u32 %v460, 23
    %v462 = vsub.s32 %v461, 127
    %v463 = vand.u32 2147483647, %v425
    %v464 = vand.u32 %v463, 8388607
    %v465 = vor.u32 %v464, 8388608
    %v466 = vsub.s32 0, %v465
    %v467 = vadd.s32 %v462, 1
    %vm468 = vcmp.gt.s32.totalorder %v467, 0
    %v469 = vsel %vm468, %v467, 0
    %v470 = vshrl.u32 %v469, 5
    %v471 = vand.u32 %v469, 31
    %v472 = vsub.s32 32, %v471
    %v473 = vshrl.u32 683565275, %v472
    %v474 = vshll.u32 683565275, %v471
    %v475 = vshrl.u32 2475754826, %v472
    %v476 = vor.u32 %v474, %v475
    %v477 = vshll.u32 2475754826, %v471
    %v478 = vshrl.u32 2131351028, %v472
    %v479 = vor.u32 %v477, %v478
    %v480 = vshll.u32 2131351028, %v471
    %v481 = vshrl.u32 2102212464, %v472
    %v482 = vor.u32 %v480, %v481
    %v483 = vshll.u32 2102212464, %v471
    %v484 = vshrl.u32 920167782, %v472
    %v485 = vor.u32 %v483, %v484
    %v486 = vshll.u32 920167782, %v471
    %v487 = vshrl.u32 1326507024, %v472
    %v488 = vor.u32 %v486, %v487
    %vm489 = vcmp.lt.s32.totalorder %v470, 1
    %vm490 = vcmp.lt.s32.totalorder %v470, 2
    %vm491 = vcmp.lt.s32.totalorder %v470, 3
    %vm492 = vcmp.lt.s32.totalorder %v470, 4
    %v493 = vsel %vm489, %v473, %v476
    %v494 = vsel %vm492, %v482, 2102212464
    %v495 = vsel %vm491, %v479, %v494
    %v496 = vsel %vm490, %v493, %v495
    %v497 = vsel %vm489, %v476, %v479
    %v498 = vsel %vm492, %v485, 920167782
    %v499 = vsel %vm491, %v482, %v498
    %v500 = vsel %vm490, %v497, %v499
    %v501 = vsel %vm489, %v479, %v482
    %v502 = vsel %vm492, %v488, 1326507024
    %v503 = vsel %vm491, %v485, %v502
    %v504 = vsel %vm490, %v501, %v503
    %v505 = vshll.u32 %v465, 8
    %v506 = vmul.u32.u64.compose %v505, %v504
    %v507 = vextract.low.u32 %v506
    %v508 = vextract.high.u32 %v506
    %v509 = vmul.u32.u64.compose %v505, %v500
    %v510 = vextract.low.u32 %v509
    %v511 = vextract.high.u32 %v509
    %v512 = vmul.u32 %v505, %v496
    %v513 = vadd.s32 %v508, %v510
    %vm514 = vc.u32 %v508, %v510
    %v515 = vadd.s32 %v511, 1
    %v516 = vsel %vm514, %v515, %v511
    %v517 = vadd.s32 %v512, %v516
    %v518 = vadd.s32 %v517, 536870912
    %v519 = vshrl.u32 %v518, 30
    %v520 = vshll.u32 %v519, 30
    %v521 = vsub.s32 %v517, %v520
    %vm522 = vcmp.lt.s32.totalorder %v521, 0
    %v523 = vsub.s32 0, %v521
    %v524 = vsel %vm522, %v523, %v521
    %v525 = vclz %v524
    %v526 = vsub.s32 %v525, 2
    %vm527 = vcmp.gt.s32.totalorder 0, %v526
    %v528 = vsel %vm527, 0, %v526
    %v529 = vsub.s32 32, %v528
    %v530 = vshll.u32 %v521, %v528
    %v531 = vshrl.u32 %v513, %v529
    %v532 = vor.u32 %v530, %v531
    %v533 = vsub.s32 4294967266, %v528
    %v534 = vadd.s32 %v533, 127
    %v535 = vshll.u32 %v534, 23
    %v536 = vor.u32 4788187, %v535
    %v537 = vand.u32 2147483647, %v536
    %v539 = vcvt.s32.f32 %v532
    %v540 = vmul.f32 %v539, %v537
    %v541 = vxor.u32 %v540, 2147483648
    %v542 = vsel %vm459, %v541, %v540
    %v543 = vsub.s32 4, %v519
    %v544 = vsel %vm459, %v543, %v519
    %v545 = vsel %vm458, %v425, %v542
    %v546 = vsel %vm458, 0, %v544
    %v547 = vcosq.f32.pop %v545
    %v548 = vsinq.f32.pop %v545
    %vm549 = vweird.f32 %v425
    %v550 = vadd.s32 %v546, 3
    %v551 = vand.u32 %v550, 3
    %vm552 = vcmp.lt.s32.totalorder %v551, 2
    %vm553 = vcmp.eq.s32.totalorder %v551, 0
    %v554 = vxor.u32 %v548, 2147483648
    %v555 = vsel %vm553, %v547, %v554
    %vm556 = vcmp.eq.s32.totalorder %v551, 2
    %v557 = vxor.u32 %v547, 2147483648
    %v558 = vsel %vm556, %v557, %v548
    %v559 = vsel %vm552, %v555, %v558
    %v560 = vsel %vm549, nan, %v559
    %v561 = vand.u32 2147483647, %v426
    %vm562 = vcmp.le.f32.partialorder %v561, 0.7853982
    %vm563 = vcmp.lt.s32.totalorder %v426, 0
    %v564 = vand.u32 %v426, 2139095040
    %v565 = vshrl.u32 %v564, 23
    %v566 = vsub.s32 %v565, 127
    %v567 = vand.u32 2147483647, %v426
    %v568 = vand.u32 %v567, 8388607
    %v569 = vor.u32 %v568, 8388608
    %v570 = vsub.s32 0, %v569
    %v571 = vadd.s32 %v566, 1
    %vm572 = vcmp.gt.s32.totalorder %v571, 0
    %v573 = vsel %vm572, %v571, 0
    %v574 = vshrl.u32 %v573, 5
    %v575 = vand.u32 %v573, 31
    %v576 = vsub.s32 32, %v575
    %v577 = vshrl.u32 683565275, %v576
    %v578 = vshll.u32 683565275, %v575
    %v579 = vshrl.u32 2475754826, %v576
    %v580 = vor.u32 %v578, %v579
    %v581 = vshll.u32 2475754826, %v575
    %v582 = vshrl.u32 2131351028, %v576
    %v583 = vor.u32 %v581, %v582
    %v584 = vshll.u32 2131351028, %v575
    %v585 = vshrl.u32 2102212464, %v576
    %v586 = vor.u32 %v584, %v585
    %v587 = vshll.u32 2102212464, %v575
    %v588 = vshrl.u32 920167782, %v576
    %v589 = vor.u32 %v587, %v588
    %v590 = vshll.u32 920167782, %v575
    %v591 = vshrl.u32 1326507024, %v576
    %v592 = vor.u32 %v590, %v591
    %vm593 = vcmp.lt.s32.totalorder %v574, 1
    %vm594 = vcmp.lt.s32.totalorder %v574, 2
    %vm595 = vcmp.lt.s32.totalorder %v574, 3
    %vm596 = vcmp.lt.s32.totalorder %v574, 4
    %v597 = vsel %vm593, %v577, %v580
    %v598 = vsel %vm596, %v586, 2102212464
    %v599 = vsel %vm595, %v583, %v598
    %v600 = vsel %vm594, %v597, %v599
    %v601 = vsel %vm593, %v580, %v583
    %v602 = vsel %vm596, %v589, 920167782
    %v603 = vsel %vm595, %v586, %v602
    %v604 = vsel %vm594, %v601, %v603
    %v605 = vsel %vm593, %v583, %v586
    %v606 = vsel %vm596, %v592, 1326507024
    %v607 = vsel %vm595, %v589, %v606
    %v608 = vsel %vm594, %v605, %v607
    %v609 = vshll.u32 %v569, 8
    %v610 = vmul.u32.u64.compose %v609, %v608
    %v611 = vextract.low.u32 %v610
    %v612 = vextract.high.u32 %v610
    %v613 = vmul.u32.u64.compose %v609, %v604
    %v614 = vextract.low.u32 %v613
    %v615 = vextract.high.u32 %v613
    %v616 = vmul.u32 %v609, %v600
    %v617 = vadd.s32 %v612, %v614
    %vm618 = vc.u32 %v612, %v614
    %v619 = vadd.s32 %v615, 1
    %v620 = vsel %vm618, %v619, %v615
    %v621 = vadd.s32 %v616, %v620
    %v622 = vadd.s32 %v621, 536870912
    %v623 = vshrl.u32 %v622, 30
    %v624 = vshll.u32 %v623, 30
    %v625 = vsub.s32 %v621, %v624
    %vm626 = vcmp.lt.s32.totalorder %v625, 0
    %v627 = vsub.s32 0, %v625
    %v628 = vsel %vm626, %v627, %v625
    %v629 = vclz %v628
    %v630 = vsub.s32 %v629, 2
    %vm631 = vcmp.gt.s32.totalorder 0, %v630
    %v632 = vsel %vm631, 0, %v630
    %v633 = vsub.s32 32, %v632
    %v634 = vshll.u32 %v625, %v632
    %v635 = vshrl.u32 %v617, %v633
    %v636 = vor.u32 %v634, %v635
    %v637 = vsub.s32 4294967266, %v632
    %v638 = vadd.s32 %v637, 127
    %v639 = vshll.u32 %v638, 23
    %v640 = vor.u32 4788187, %v639
    %v641 = vand.u32 2147483647, %v640
    %v643 = vcvt.s32.f32 %v636
    %v644 = vmul.f32 %v643, %v641
    %v645 = vxor.u32 %v644, 2147483648
    %v646 = vsel %vm563, %v645, %v644
    %v647 = vsub.s32 4, %v623
    %v648 = vsel %vm563, %v647, %v623
    %v649 = vsel %vm562, %v426, %v646
    %v650 = vsel %vm562, 0, %v648
    %v651 = vcosq.f32.pop %v649
    %v652 = vsinq.f32.pop %v649
    %vm653 = vweird.f32 %v426
    %v654 = vadd.s32 %v650, 3
    %v655 = vand.u32 %v654, 3
    %vm656 = vcmp.lt.s32.totalorder %v655, 2
    %vm657 = vcmp.eq.s32.totalorder %v655, 0
    %v658 = vxor.u32 %v652, 2147483648
    %v659 = vsel %vm657, %v651, %v658
    %vm660 = vcmp.eq.s32.totalorder %v655, 2
    %v661 = vxor.u32 %v651, 2147483648
    %v662 = vsel %vm660, %v661, %v652
    %v663 = vsel %vm656, %v659, %v662
    %v664 = vsel %vm653, nan, %v663
    %v665 = vand.u32 2147483647, %v427
    %vm666 = vcmp.le.f32.partialorder %v665, 0.7853982
    %vm667 = vcmp.lt.s32.totalorder %v427, 0
    %v668 = vand.u32 %v427, 2139095040
    %v669 = vshrl.u32 %v668, 23
    %v670 = vsub.s32 %v669, 127
    %v671 = vand.u32 2147483647, %v427
    %v672 = vand.u32 %v671, 8388607
    %v673 = vor.u32 %v672, 8388608
    %v674 = vsub.s32 0, %v673
    %v675 = vadd.s32 %v670, 1
    %vm676 = vcmp.gt.s32.totalorder %v675, 0
    %v677 = vsel %vm676, %v675, 0
    %v678 = vshrl.u32 %v677, 5
    %v679 = vand.u32 %v677, 31
    %v680 = vsub.s32 32, %v679
    %v681 = vshrl.u32 683565275, %v680
    %v682 = vshll.u32 683565275, %v679
    %v683 = vshrl.u32 2475754826, %v680
    %v684 = vor.u32 %v682, %v683
    %v685 = vshll.u32 2475754826, %v679
    %v686 = vshrl.u32 2131351028, %v680
    %v687 = vor.u32 %v685, %v686
    %v688 = vshll.u32 2131351028, %v679
    %v689 = vshrl.u32 2102212464, %v680
    %v690 = vor.u32 %v688, %v689
    %v691 = vshll.u32 2102212464, %v679
    %v692 = vshrl.u32 920167782, %v680
    %v693 = vor.u32 %v691, %v692
    %v694 = vshll.u32 920167782, %v679
    %v695 = vshrl.u32 1326507024, %v680
    %v696 = vor.u32 %v694, %v695
    %vm697 = vcmp.lt.s32.totalorder %v678, 1
    %vm698 = vcmp.lt.s32.totalorder %v678, 2
    %vm699 = vcmp.lt.s32.totalorder %v678, 3
    %vm700 = vcmp.lt.s32.totalorder %v678, 4
    %v701 = vsel %vm697, %v681, %v684
    %v702 = vsel %vm700, %v690, 2102212464
    %v703 = vsel %vm699, %v687, %v702
    %v704 = vsel %vm698, %v701, %v703
    %v705 = vsel %vm697, %v684, %v687
    %v706 = vsel %vm700, %v693, 920167782
    %v707 = vsel %vm699, %v690, %v706
    %v708 = vsel %vm698, %v705, %v707
    %v709 = vsel %vm697, %v687, %v690
    %v710 = vsel %vm700, %v696, 1326507024
    %v711 = vsel %vm699, %v693, %v710
    %v712 = vsel %vm698, %v709, %v711
    %v713 = vshll.u32 %v673, 8
    %v714 = vmul.u32.u64.compose %v713, %v712
    %v715 = vextract.low.u32 %v714
    %v716 = vextract.high.u32 %v714
    %v717 = vmul.u32.u64.compose %v713, %v708
    %v718 = vextract.low.u32 %v717
    %v719 = vextract.high.u32 %v717
    %v720 = vmul.u32 %v713, %v704
    %v721 = vadd.s32 %v716, %v718
    %vm722 = vc.u32 %v716, %v718
    %v723 = vadd.s32 %v719, 1
    %v724 = vsel %vm722, %v723, %v719
    %v725 = vadd.s32 %v720, %v724
    %v726 = vadd.s32 %v725, 536870912
    %v727 = vshrl.u32 %v726, 30
    %v728 = vshll.u32 %v727, 30
    %v729 = vsub.s32 %v725, %v728
    %vm730 = vcmp.lt.s32.totalorder %v729, 0
    %v731 = vsub.s32 0, %v729
    %v732 = vsel %vm730, %v731, %v729
    %v733 = vclz %v732
    %v734 = vsub.s32 %v733, 2
    %vm735 = vcmp.gt.s32.totalorder 0, %v734
    %v736 = vsel %vm735, 0, %v734
    %v737 = vsub.s32 32, %v736
    %v738 = vshll.u32 %v729, %v736
    %v739 = vshrl.u32 %v721, %v737
    %v740 = vor.u32 %v738, %v739
    %v741 = vsub.s32 4294967266, %v736
    %v742 = vadd.s32 %v741, 127
    %v743 = vshll.u32 %v742, 23
    %v744 = vor.u32 4788187, %v743
    %v745 = vand.u32 2147483647, %v744
    %v747 = vcvt.s32.f32 %v740
    %v748 = vmul.f32 %v747, %v745
    %v749 = vxor.u32 %v748, 2147483648
    %v750 = vsel %vm667, %v749, %v748
    %v751 = vsub.s32 4, %v727
    %v752 = vsel %vm667, %v751, %v727
    %v753 = vsel %vm666, %v427, %v750
    %v754 = vsel %vm666, 0, %v752
    %v755 = vcosq.f32.pop %v753
    %v756 = vsinq.f32.pop %v753
    %vm757 = vweird.f32 %v427
    %v758 = vadd.s32 %v754, 3
    %v759 = vand.u32 %v758, 3
    %vm760 = vcmp.lt.s32.totalorder %v759, 2
    %vm761 = vcmp.eq.s32.totalorder %v759, 0
    %v762 = vxor.u32 %v756, 2147483648
    %v763 = vsel %vm761, %v755, %v762
    %vm764 = vcmp.eq.s32.totalorder %v759, 2
    %v765 = vxor.u32 %v755, 2147483648
    %v766 = vsel %vm764, %v765, %v756
    %v767 = vsel %vm760, %v763, %v766
    %v768 = vsel %vm757, nan, %v767
    %v769 = vand.u32 2147483647, %v428
    %vm770 = vcmp.le.f32.partialorder %v769, 0.7853982
    %vm771 = vcmp.lt.s32.totalorder %v428, 0
    %v772 = vand.u32 %v428, 2139095040
    %v773 = vshrl.u32 %v772, 23
    %v774 = vsub.s32 %v773, 127
    %v775 = vand.u32 2147483647, %v428
    %v776 = vand.u32 %v775, 8388607
    %v777 = vor.u32 %v776, 8388608
    %v778 = vsub.s32 0, %v777
    %v779 = vadd.s32 %v774, 1
    %vm780 = vcmp.gt.s32.totalorder %v779, 0
    %v781 = vsel %vm780, %v779, 0
    %v782 = vshrl.u32 %v781, 5
    %v783 = vand.u32 %v781, 31
    %v784 = vsub.s32 32, %v783
    %v785 = vshrl.u32 683565275, %v784
    %v786 = vshll.u32 683565275, %v783
    %v787 = vshrl.u32 2475754826, %v784
    %v788 = vor.u32 %v786, %v787
    %v789 = vshll.u32 2475754826, %v783
    %v790 = vshrl.u32 2131351028, %v784
    %v791 = vor.u32 %v789, %v790
    %v792 = vshll.u32 2131351028, %v783
    %v793 = vshrl.u32 2102212464, %v784
    %v794 = vor.u32 %v792, %v793
    %v795 = vshll.u32 2102212464, %v783
    %v796 = vshrl.u32 920167782, %v784
    %v797 = vor.u32 %v795, %v796
    %v798 = vshll.u32 920167782, %v783
    %v799 = vshrl.u32 1326507024, %v784
    %v800 = vor.u32 %v798, %v799
    %vm801 = vcmp.lt.s32.totalorder %v782, 1
    %vm802 = vcmp.lt.s32.totalorder %v782, 2
    %vm803 = vcmp.lt.s32.totalorder %v782, 3
    %vm804 = vcmp.lt.s32.totalorder %v782, 4
    %v805 = vsel %vm801, %v785, %v788
    %v806 = vsel %vm804, %v794, 2102212464
    %v807 = vsel %vm803, %v791, %v806
    %v808 = vsel %vm802, %v805, %v807
    %v809 = vsel %vm801, %v788, %v791
    %v810 = vsel %vm804, %v797, 920167782
    %v811 = vsel %vm803, %v794, %v810
    %v812 = vsel %vm802, %v809, %v811
    %v813 = vsel %vm801, %v791, %v794
    %v814 = vsel %vm804, %v800, 1326507024
    %v815 = vsel %vm803, %v797, %v814
    %v816 = vsel %vm802, %v813, %v815
    %v817 = vshll.u32 %v777, 8
    %v818 = vmul.u32.u64.compose %v817, %v816
    %v819 = vextract.low.u32 %v818
    %v820 = vextract.high.u32 %v818
    %v821 = vmul.u32.u64.compose %v817, %v812
    %v822 = vextract.low.u32 %v821
    %v823 = vextract.high.u32 %v821
    %v824 = vmul.u32 %v817, %v808
    %v825 = vadd.s32 %v820, %v822
    %vm826 = vc.u32 %v820, %v822
    %v827 = vadd.s32 %v823, 1
    %v828 = vsel %vm826, %v827, %v823
    %v829 = vadd.s32 %v824, %v828
    %v830 = vadd.s32 %v829, 536870912
    %v831 = vshrl.u32 %v830, 30
    %v832 = vshll.u32 %v831, 30
    %v833 = vsub.s32 %v829, %v832
    %vm834 = vcmp.lt.s32.totalorder %v833, 0
    %v835 = vsub.s32 0, %v833
    %v836 = vsel %vm834, %v835, %v833
    %v837 = vclz %v836
    %v838 = vsub.s32 %v837, 2
    %vm839 = vcmp.gt.s32.totalorder 0, %v838
    %v840 = vsel %vm839, 0, %v838
    %v841 = vsub.s32 32, %v840
    %v842 = vshll.u32 %v833, %v840
    %v843 = vshrl.u32 %v825, %v841
    %v844 = vor.u32 %v842, %v843
    %v845 = vsub.s32 4294967266, %v840
    %v846 = vadd.s32 %v845, 127
    %v847 = vshll.u32 %v846, 23
    %v848 = vor.u32 4788187, %v847
    %v849 = vand.u32 2147483647, %v848
    %v851 = vcvt.s32.f32 %v844
    %v852 = vmul.f32 %v851, %v849
    %v853 = vxor.u32 %v852, 2147483648
    %v854 = vsel %vm771, %v853, %v852
    %v855 = vsub.s32 4, %v831
    %v856 = vsel %vm771, %v855, %v831
    %v857 = vsel %vm770, %v428, %v854
    %v858 = vsel %vm770, 0, %v856
    %v859 = vcosq.f32.pop %v857
    %v860 = vsinq.f32.pop %v857
    %vm861 = vweird.f32 %v428
    %v862 = vadd.s32 %v858, 3
    %v863 = vand.u32 %v862, 3
    %vm864 = vcmp.lt.s32.totalorder %v863, 2
    %vm865 = vcmp.eq.s32.totalorder %v863, 0
    %v866 = vxor.u32 %v860, 2147483648
    %v867 = vsel %vm865, %v859, %v866
    %vm868 = vcmp.eq.s32.totalorder %v863, 2
    %v869 = vxor.u32 %v859, 2147483648
    %v870 = vsel %vm868, %v869, %v860
    %v871 = vsel %vm864, %v867, %v870
    %v872 = vsel %vm861, nan, %v871
    %v873 = vand.u32 2147483647, %v429
    %vm874 = vcmp.le.f32.partialorder %v873, 0.7853982
    %vm875 = vcmp.lt.s32.totalorder %v429, 0
    %v876 = vand.u32 %v429, 2139095040
    %v877 = vshrl.u32 %v876, 23
    %v878 = vsub.s32 %v877, 127
    %v879 = vand.u32 2147483647, %v429
    %v880 = vand.u32 %v879, 8388607
    %v881 = vor.u32 %v880, 8388608
    %v882 = vsub.s32 0, %v881
    %v883 = vadd.s32 %v878, 1
    %vm884 = vcmp.gt.s32.totalorder %v883, 0
    %v885 = vsel %vm884, %v883, 0
    %v886 = vshrl.u32 %v885, 5
    %v887 = vand.u32 %v885, 31
    %v888 = vsub.s32 32, %v887
    %v889 = vshrl.u32 683565275, %v888
    %v890 = vshll.u32 683565275, %v887
    %v891 = vshrl.u32 2475754826, %v888
    %v892 = vor.u32 %v890, %v891
    %v893 = vshll.u32 2475754826, %v887
    %v894 = vshrl.u32 2131351028, %v888
    %v895 = vor.u32 %v893, %v894
    %v896 = vshll.u32 2131351028, %v887
    %v897 = vshrl.u32 2102212464, %v888
    %v898 = vor.u32 %v896, %v897
    %v899 = vshll.u32 2102212464, %v887
    %v900 = vshrl.u32 920167782, %v888
    %v901 = vor.u32 %v899, %v900
    %v902 = vshll.u32 920167782, %v887
    %v903 = vshrl.u32 1326507024, %v888
    %v904 = vor.u32 %v902, %v903
    %vm905 = vcmp.lt.s32.totalorder %v886, 1
    %vm906 = vcmp.lt.s32.totalorder %v886, 2
    %vm907 = vcmp.lt.s32.totalorder %v886, 3
    %vm908 = vcmp.lt.s32.totalorder %v886, 4
    %v909 = vsel %vm905, %v889, %v892
    %v910 = vsel %vm908, %v898, 2102212464
    %v911 = vsel %vm907, %v895, %v910
    %v912 = vsel %vm906, %v909, %v911
    %v913 = vsel %vm905, %v892, %v895
    %v914 = vsel %vm908, %v901, 920167782
    %v915 = vsel %vm907, %v898, %v914
    %v916 = vsel %vm906, %v913, %v915
    %v917 = vsel %vm905, %v895, %v898
    %v918 = vsel %vm908, %v904, 1326507024
    %v919 = vsel %vm907, %v901, %v918
    %v920 = vsel %vm906, %v917, %v919
    %v921 = vshll.u32 %v881, 8
    %v922 = vmul.u32.u64.compose %v921, %v920
    %v923 = vextract.low.u32 %v922
    %v924 = vextract.high.u32 %v922
    %v925 = vmul.u32.u64.compose %v921, %v916
    %v926 = vextract.low.u32 %v925
    %v927 = vextract.high.u32 %v925
    %v928 = vmul.u32 %v921, %v912
    %v929 = vadd.s32 %v924, %v926
    %vm930 = vc.u32 %v924, %v926
    %v931 = vadd.s32 %v927, 1
    %v932 = vsel %vm930, %v931, %v927
    %v933 = vadd.s32 %v928, %v932
    %v934 = vadd.s32 %v933, 536870912
    %v935 = vshrl.u32 %v934, 30
    %v936 = vshll.u32 %v935, 30
    %v937 = vsub.s32 %v933, %v936
    %vm938 = vcmp.lt.s32.totalorder %v937, 0
    %v939 = vsub.s32 0, %v937
    %v940 = vsel %vm938, %v939, %v937
    %v941 = vclz %v940
    %v942 = vsub.s32 %v941, 2
    %vm943 = vcmp.gt.s32.totalorder 0, %v942
    %v944 = vsel %vm943, 0, %v942
    %v945 = vsub.s32 32, %v944
    %v946 = vshll.u32 %v937, %v944
    %v947 = vshrl.u32 %v929, %v945
    %v948 = vor.u32 %v946, %v947
    %v949 = vsub.s32 4294967266, %v944
    %v950 = vadd.s32 %v949, 127
    %v951 = vshll.u32 %v950, 23
    %v952 = vor.u32 4788187, %v951
    %v953 = vand.u32 2147483647, %v952
    %v955 = vcvt.s32.f32 %v948
    %v956 = vmul.f32 %v955, %v953
    %v957 = vxor.u32 %v956, 2147483648
    %v958 = vsel %vm875, %v957, %v956
    %v959 = vsub.s32 4, %v935
    %v960 = vsel %vm875, %v959, %v935
    %v961 = vsel %vm874, %v429, %v958
    %v962 = vsel %vm874, 0, %v960
    %v963 = vcosq.f32.pop %v961
    %v964 = vsinq.f32.pop %v961
    %vm965 = vweird.f32 %v429
    %v966 = vadd.s32 %v962, 3
    %v967 = vand.u32 %v966, 3
    %vm968 = vcmp.lt.s32.totalorder %v967, 2
    %vm969 = vcmp.eq.s32.totalorder %v967, 0
    %v970 = vxor.u32 %v964, 2147483648
    %v971 = vsel %vm969, %v963, %v970
    %vm972 = vcmp.eq.s32.totalorder %v967, 2
    %v973 = vxor.u32 %v963, 2147483648
    %v974 = vsel %vm972, %v973, %v964
    %v975 = vsel %vm968, %v971, %v974
    %v976 = vsel %vm965, nan, %v975
    %v977 = vand.u32 2147483647, %v430
    %vm978 = vcmp.le.f32.partialorder %v977, 0.7853982
    %vm979 = vcmp.lt.s32.totalorder %v430, 0
    %v980 = vand.u32 %v430, 2139095040
    %v981 = vshrl.u32 %v980, 23
    %v982 = vsub.s32 %v981, 127
    %v983 = vand.u32 2147483647, %v430
    %v984 = vand.u32 %v983, 8388607
    %v985 = vor.u32 %v984, 8388608
    %v986 = vsub.s32 0, %v985
    %v987 = vadd.s32 %v982, 1
    %vm988 = vcmp.gt.s32.totalorder %v987, 0
    %v989 = vsel %vm988, %v987, 0
    %v990 = vshrl.u32 %v989, 5
    %v991 = vand.u32 %v989, 31
    %v992 = vsub.s32 32, %v991
    %v993 = vshrl.u32 683565275, %v992
    %v994 = vshll.u32 683565275, %v991
    %v995 = vshrl.u32 2475754826, %v992
    %v996 = vor.u32 %v994, %v995
    %v997 = vshll.u32 2475754826, %v991
    %v998 = vshrl.u32 2131351028, %v992
    %v999 = vor.u32 %v997, %v998
    %v1000 = vshll.u32 2131351028, %v991
    %v1001 = vshrl.u32 2102212464, %v992
    %v1002 = vor.u32 %v1000, %v1001
    %v1003 = vshll.u32 2102212464, %v991
    %v1004 = vshrl.u32 920167782, %v992
    %v1005 = vor.u32 %v1003, %v1004
    %v1006 = vshll.u32 920167782, %v991
    %v1007 = vshrl.u32 1326507024, %v992
    %v1008 = vor.u32 %v1006, %v1007
    %vm1009 = vcmp.lt.s32.totalorder %v990, 1
    %vm1010 = vcmp.lt.s32.totalorder %v990, 2
    %vm1011 = vcmp.lt.s32.totalorder %v990, 3
    %vm1012 = vcmp.lt.s32.totalorder %v990, 4
    %v1013 = vsel %vm1009, %v993, %v996
    %v1014 = vsel %vm1012, %v1002, 2102212464
    %v1015 = vsel %vm1011, %v999, %v1014
    %v1016 = vsel %vm1010, %v1013, %v1015
    %v1017 = vsel %vm1009, %v996, %v999
    %v1018 = vsel %vm1012, %v1005, 920167782
    %v1019 = vsel %vm1011, %v1002, %v1018
    %v1020 = vsel %vm1010, %v1017, %v1019
    %v1021 = vsel %vm1009, %v999, %v1002
    %v1022 = vsel %vm1012, %v1008, 1326507024
    %v1023 = vsel %vm1011, %v1005, %v1022
    %v1024 = vsel %vm1010, %v1021, %v1023
    %v1025 = vshll.u32 %v985, 8
    %v1026 = vmul.u32.u64.compose %v1025, %v1024
    %v1027 = vextract.low.u32 %v1026
    %v1028 = vextract.high.u32 %v1026
    %v1029 = vmul.u32.u64.compose %v1025, %v1020
    %v1030 = vextract.low.u32 %v1029
    %v1031 = vextract.high.u32 %v1029
    %v1032 = vmul.u32 %v1025, %v1016
    %v1033 = vadd.s32 %v1028, %v1030
    %vm1034 = vc.u32 %v1028, %v1030
    %v1035 = vadd.s32 %v1031, 1
    %v1036 = vsel %vm1034, %v1035, %v1031
    %v1037 = vadd.s32 %v1032, %v1036
    %v1038 = vadd.s32 %v1037, 536870912
    %v1039 = vshrl.u32 %v1038, 30
    %v1040 = vshll.u32 %v1039, 30
    %v1041 = vsub.s32 %v1037, %v1040
    %vm1042 = vcmp.lt.s32.totalorder %v1041, 0
    %v1043 = vsub.s32 0, %v1041
    %v1044 = vsel %vm1042, %v1043, %v1041
    %v1045 = vclz %v1044
    %v1046 = vsub.s32 %v1045, 2
    %vm1047 = vcmp.gt.s32.totalorder 0, %v1046
    %v1048 = vsel %vm1047, 0, %v1046
    %v1049 = vsub.s32 32, %v1048
    %v1050 = vshll.u32 %v1041, %v1048
    %v1051 = vshrl.u32 %v1033, %v1049
    %v1052 = vor.u32 %v1050, %v1051
    %v1053 = vsub.s32 4294967266, %v1048
    %v1054 = vadd.s32 %v1053, 127
    %v1055 = vshll.u32 %v1054, 23
    %v1056 = vor.u32 4788187, %v1055
    %v1057 = vand.u32 2147483647, %v1056
    %v1059 = vcvt.s32.f32 %v1052
    %v1060 = vmul.f32 %v1059, %v1057
    %v1061 = vxor.u32 %v1060, 2147483648
    %v1062 = vsel %vm979, %v1061, %v1060
    %v1063 = vsub.s32 4, %v1039
    %v1064 = vsel %vm979, %v1063, %v1039
    %v1065 = vsel %vm978, %v430, %v1062
    %v1066 = vsel %vm978, 0, %v1064
    %v1067 = vcosq.f32.pop %v1065
    %v1068 = vsinq.f32.pop %v1065
    %vm1069 = vweird.f32 %v430
    %v1070 = vadd.s32 %v1066, 3
    %v1071 = vand.u32 %v1070, 3
    %vm1072 = vcmp.lt.s32.totalorder %v1071, 2
    %vm1073 = vcmp.eq.s32.totalorder %v1071, 0
    %v1074 = vxor.u32 %v1068, 2147483648
    %v1075 = vsel %vm1073, %v1067, %v1074
    %vm1076 = vcmp.eq.s32.totalorder %v1071, 2
    %v1077 = vxor.u32 %v1067, 2147483648
    %v1078 = vsel %vm1076, %v1077, %v1068
    %v1079 = vsel %vm1072, %v1075, %v1078
    %v1080 = vsel %vm1069, nan, %v1079
    %v1081 = vand.u32 2147483647, %v431
    %vm1082 = vcmp.le.f32.partialorder %v1081, 0.7853982
    %vm1083 = vcmp.lt.s32.totalorder %v431, 0
    %v1084 = vand.u32 %v431, 2139095040
    %v1085 = vshrl.u32 %v1084, 23
    %v1086 = vsub.s32 %v1085, 127
    %v1087 = vand.u32 2147483647, %v431
    %v1088 = vand.u32 %v1087, 8388607
    %v1089 = vor.u32 %v1088, 8388608
    %v1090 = vsub.s32 0, %v1089
    %v1091 = vadd.s32 %v1086, 1
    %vm1092 = vcmp.gt.s32.totalorder %v1091, 0
    %v1093 = vsel %vm1092, %v1091, 0
    %v1094 = vshrl.u32 %v1093, 5
    %v1095 = vand.u32 %v1093, 31
    %v1096 = vsub.s32 32, %v1095
    %v1097 = vshrl.u32 683565275, %v1096
    %v1098 = vshll.u32 683565275, %v1095
    %v1099 = vshrl.u32 2475754826, %v1096
    %v1100 = vor.u32 %v1098, %v1099
    %v1101 = vshll.u32 2475754826, %v1095
    %v1102 = vshrl.u32 2131351028, %v1096
    %v1103 = vor.u32 %v1101, %v1102
    %v1104 = vshll.u32 2131351028, %v1095
    %v1105 = vshrl.u32 2102212464, %v1096
    %v1106 = vor.u32 %v1104, %v1105
    %v1107 = vshll.u32 2102212464, %v1095
    %v1108 = vshrl.u32 920167782, %v1096
    %v1109 = vor.u32 %v1107, %v1108
    %v1110 = vshll.u32 920167782, %v1095
    %v1111 = vshrl.u32 1326507024, %v1096
    %v1112 = vor.u32 %v1110, %v1111
    %vm1113 = vcmp.lt.s32.totalorder %v1094, 1
    %vm1114 = vcmp.lt.s32.totalorder %v1094, 2
    %vm1115 = vcmp.lt.s32.totalorder %v1094, 3
    %vm1116 = vcmp.lt.s32.totalorder %v1094, 4
    %v1117 = vsel %vm1113, %v1097, %v1100
    %v1118 = vsel %vm1116, %v1106, 2102212464
    %v1119 = vsel %vm1115, %v1103, %v1118
    %v1120 = vsel %vm1114, %v1117, %v1119
    %v1121 = vsel %vm1113, %v1100, %v1103
    %v1122 = vsel %vm1116, %v1109, 920167782
    %v1123 = vsel %vm1115, %v1106, %v1122
    %v1124 = vsel %vm1114, %v1121, %v1123
    %v1125 = vsel %vm1113, %v1103, %v1106
    %v1126 = vsel %vm1116, %v1112, 1326507024
    %v1127 = vsel %vm1115, %v1109, %v1126
    %v1128 = vsel %vm1114, %v1125, %v1127
    %v1129 = vshll.u32 %v1089, 8
    %v1130 = vmul.u32.u64.compose %v1129, %v1128
    %v1131 = vextract.low.u32 %v1130
    %v1132 = vextract.high.u32 %v1130
    %v1133 = vmul.u32.u64.compose %v1129, %v1124
    %v1134 = vextract.low.u32 %v1133
    %v1135 = vextract.high.u32 %v1133
    %v1136 = vmul.u32 %v1129, %v1120
    %v1137 = vadd.s32 %v1132, %v1134
    %vm1138 = vc.u32 %v1132, %v1134
    %v1139 = vadd.s32 %v1135, 1
    %v1140 = vsel %vm1138, %v1139, %v1135
    %v1141 = vadd.s32 %v1136, %v1140
    %v1142 = vadd.s32 %v1141, 536870912
    %v1143 = vshrl.u32 %v1142, 30
    %v1144 = vshll.u32 %v1143, 30
    %v1145 = vsub.s32 %v1141, %v1144
    %vm1146 = vcmp.lt.s32.totalorder %v1145, 0
    %v1147 = vsub.s32 0, %v1145
    %v1148 = vsel %vm1146, %v1147, %v1145
    %v1149 = vclz %v1148
    %v1150 = vsub.s32 %v1149, 2
    %vm1151 = vcmp.gt.s32.totalorder 0, %v1150
    %v1152 = vsel %vm1151, 0, %v1150
    %v1153 = vsub.s32 32, %v1152
    %v1154 = vshll.u32 %v1145, %v1152
    %v1155 = vshrl.u32 %v1137, %v1153
    %v1156 = vor.u32 %v1154, %v1155
    %v1157 = vsub.s32 4294967266, %v1152
    %v1158 = vadd.s32 %v1157, 127
    %v1159 = vshll.u32 %v1158, 23
    %v1160 = vor.u32 4788187, %v1159
    %v1161 = vand.u32 2147483647, %v1160
    %v1163 = vcvt.s32.f32 %v1156
    %v1164 = vmul.f32 %v1163, %v1161
    %v1165 = vxor.u32 %v1164, 2147483648
    %v1166 = vsel %vm1083, %v1165, %v1164
    %v1167 = vsub.s32 4, %v1143
    %v1168 = vsel %vm1083, %v1167, %v1143
    %v1169 = vsel %vm1082, %v431, %v1166
    %v1170 = vsel %vm1082, 0, %v1168
    %v1171 = vcosq.f32.pop %v1169
    %v1172 = vsinq.f32.pop %v1169
    %vm1173 = vweird.f32 %v431
    %v1174 = vadd.s32 %v1170, 3
    %v1175 = vand.u32 %v1174, 3
    %vm1176 = vcmp.lt.s32.totalorder %v1175, 2
    %vm1177 = vcmp.eq.s32.totalorder %v1175, 0
    %v1178 = vxor.u32 %v1172, 2147483648
    %v1179 = vsel %vm1177, %v1171, %v1178
    %vm1180 = vcmp.eq.s32.totalorder %v1175, 2
    %v1181 = vxor.u32 %v1171, 2147483648
    %v1182 = vsel %vm1180, %v1181, %v1172
    %v1183 = vsel %vm1176, %v1179, %v1182
    %v1184 = vsel %vm1173, nan, %v1183
    %v1185 = vand.u32 2147483647, %v432
    %vm1186 = vcmp.le.f32.partialorder %v1185, 0.7853982
    %vm1187 = vcmp.lt.s32.totalorder %v432, 0
    %v1188 = vand.u32 %v432, 2139095040
    %v1189 = vshrl.u32 %v1188, 23
    %v1190 = vsub.s32 %v1189, 127
    %v1191 = vand.u32 2147483647, %v432
    %v1192 = vand.u32 %v1191, 8388607
    %v1193 = vor.u32 %v1192, 8388608
    %v1194 = vsub.s32 0, %v1193
    %v1195 = vadd.s32 %v1190, 1
    %vm1196 = vcmp.gt.s32.totalorder %v1195, 0
    %v1197 = vsel %vm1196, %v1195, 0
    %v1198 = vshrl.u32 %v1197, 5
    %v1199 = vand.u32 %v1197, 31
    %v1200 = vsub.s32 32, %v1199
    %v1201 = vshrl.u32 683565275, %v1200
    %v1202 = vshll.u32 683565275, %v1199
    %v1203 = vshrl.u32 2475754826, %v1200
    %v1204 = vor.u32 %v1202, %v1203
    %v1205 = vshll.u32 2475754826, %v1199
    %v1206 = vshrl.u32 2131351028, %v1200
    %v1207 = vor.u32 %v1205, %v1206
    %v1208 = vshll.u32 2131351028, %v1199
    %v1209 = vshrl.u32 2102212464, %v1200
    %v1210 = vor.u32 %v1208, %v1209
    %v1211 = vshll.u32 2102212464, %v1199
    %v1212 = vshrl.u32 920167782, %v1200
    %v1213 = vor.u32 %v1211, %v1212
    %v1214 = vshll.u32 920167782, %v1199
    %v1215 = vshrl.u32 1326507024, %v1200
    %v1216 = vor.u32 %v1214, %v1215
    %vm1217 = vcmp.lt.s32.totalorder %v1198, 1
    %vm1218 = vcmp.lt.s32.totalorder %v1198, 2
    %vm1219 = vcmp.lt.s32.totalorder %v1198, 3
    %vm1220 = vcmp.lt.s32.totalorder %v1198, 4
    %v1221 = vsel %vm1217, %v1201, %v1204
    %v1222 = vsel %vm1220, %v1210, 2102212464
    %v1223 = vsel %vm1219, %v1207, %v1222
    %v1224 = vsel %vm1218, %v1221, %v1223
    %v1225 = vsel %vm1217, %v1204, %v1207
    %v1226 = vsel %vm1220, %v1213, 920167782
    %v1227 = vsel %vm1219, %v1210, %v1226
    %v1228 = vsel %vm1218, %v1225, %v1227
    %v1229 = vsel %vm1217, %v1207, %v1210
    %v1230 = vsel %vm1220, %v1216, 1326507024
    %v1231 = vsel %vm1219, %v1213, %v1230
    %v1232 = vsel %vm1218, %v1229, %v1231
    %v1233 = vshll.u32 %v1193, 8
    %v1234 = vmul.u32.u64.compose %v1233, %v1232
    %v1235 = vextract.low.u32 %v1234
    %v1236 = vextract.high.u32 %v1234
    %v1237 = vmul.u32.u64.compose %v1233, %v1228
    %v1238 = vextract.low.u32 %v1237
    %v1239 = vextract.high.u32 %v1237
    %v1240 = vmul.u32 %v1233, %v1224
    %v1241 = vadd.s32 %v1236, %v1238
    %vm1242 = vc.u32 %v1236, %v1238
    %v1243 = vadd.s32 %v1239, 1
    %v1244 = vsel %vm1242, %v1243, %v1239
    %v1245 = vadd.s32 %v1240, %v1244
    %v1246 = vadd.s32 %v1245, 536870912
    %v1247 = vshrl.u32 %v1246, 30
    %v1248 = vshll.u32 %v1247, 30
    %v1249 = vsub.s32 %v1245, %v1248
    %vm1250 = vcmp.lt.s32.totalorder %v1249, 0
    %v1251 = vsub.s32 0, %v1249
    %v1252 = vsel %vm1250, %v1251, %v1249
    %v1253 = vclz %v1252
    %v1254 = vsub.s32 %v1253, 2
    %vm1255 = vcmp.gt.s32.totalorder 0, %v1254
    %v1256 = vsel %vm1255, 0, %v1254
    %v1257 = vsub.s32 32, %v1256
    %v1258 = vshll.u32 %v1249, %v1256
    %v1259 = vshrl.u32 %v1241, %v1257
    %v1260 = vor.u32 %v1258, %v1259
    %v1261 = vsub.s32 4294967266, %v1256
    %v1262 = vadd.s32 %v1261, 127
    %v1263 = vshll.u32 %v1262, 23
    %v1264 = vor.u32 4788187, %v1263
    %v1265 = vand.u32 2147483647, %v1264
    %v1267 = vcvt.s32.f32 %v1260
    %v1268 = vmul.f32 %v1267, %v1265
    %v1269 = vxor.u32 %v1268, 2147483648
    %v1270 = vsel %vm1187, %v1269, %v1268
    %v1271 = vsub.s32 4, %v1247
    %v1272 = vsel %vm1187, %v1271, %v1247
    %v1273 = vsel %vm1186, %v432, %v1270
    %v1274 = vsel %vm1186, 0, %v1272
    %v1275 = vcosq.f32.pop %v1273
    %v1276 = vsinq.f32.pop %v1273
    %vm1277 = vweird.f32 %v432
    %v1278 = vadd.s32 %v1274, 3
    %v1279 = vand.u32 %v1278, 3
    %vm1280 = vcmp.lt.s32.totalorder %v1279, 2
    %vm1281 = vcmp.eq.s32.totalorder %v1279, 0
    %v1282 = vxor.u32 %v1276, 2147483648
    %v1283 = vsel %vm1281, %v1275, %v1282
    %vm1284 = vcmp.eq.s32.totalorder %v1279, 2
    %v1285 = vxor.u32 %v1275, 2147483648
    %v1286 = vsel %vm1284, %v1285, %v1276
    %v1287 = vsel %vm1280, %v1283, %v1286
    %v1288 = vsel %vm1277, nan, %v1287
    %v1289 = vand.u32 2147483647, %v433
    %vm1290 = vcmp.le.f32.partialorder %v1289, 0.7853982
    %vm1291 = vcmp.lt.s32.totalorder %v433, 0
    %v1292 = vand.u32 %v433, 2139095040
    %v1293 = vshrl.u32 %v1292, 23
    %v1294 = vsub.s32 %v1293, 127
    %v1295 = vand.u32 2147483647, %v433
    %v1296 = vand.u32 %v1295, 8388607
    %v1297 = vor.u32 %v1296, 8388608
    %v1298 = vsub.s32 0, %v1297
    %v1299 = vadd.s32 %v1294, 1
    %vm1300 = vcmp.gt.s32.totalorder %v1299, 0
    %v1301 = vsel %vm1300, %v1299, 0
    %v1302 = vshrl.u32 %v1301, 5
    %v1303 = vand.u32 %v1301, 31
    %v1304 = vsub.s32 32, %v1303
    %v1305 = vshrl.u32 683565275, %v1304
    %v1306 = vshll.u32 683565275, %v1303
    %v1307 = vshrl.u32 2475754826, %v1304
    %v1308 = vor.u32 %v1306, %v1307
    %v1309 = vshll.u32 2475754826, %v1303
    %v1310 = vshrl.u32 2131351028, %v1304
    %v1311 = vor.u32 %v1309, %v1310
    %v1312 = vshll.u32 2131351028, %v1303
    %v1313 = vshrl.u32 2102212464, %v1304
    %v1314 = vor.u32 %v1312, %v1313
    %v1315 = vshll.u32 2102212464, %v1303
    %v1316 = vshrl.u32 920167782, %v1304
    %v1317 = vor.u32 %v1315, %v1316
    %v1318 = vshll.u32 920167782, %v1303
    %v1319 = vshrl.u32 1326507024, %v1304
    %v1320 = vor.u32 %v1318, %v1319
    %vm1321 = vcmp.lt.s32.totalorder %v1302, 1
    %vm1322 = vcmp.lt.s32.totalorder %v1302, 2
    %vm1323 = vcmp.lt.s32.totalorder %v1302, 3
    %vm1324 = vcmp.lt.s32.totalorder %v1302, 4
    %v1325 = vsel %vm1321, %v1305, %v1308
    %v1326 = vsel %vm1324, %v1314, 2102212464
    %v1327 = vsel %vm1323, %v1311, %v1326
    %v1328 = vsel %vm1322, %v1325, %v1327
    %v1329 = vsel %vm1321, %v1308, %v1311
    %v1330 = vsel %vm1324, %v1317, 920167782
    %v1331 = vsel %vm1323, %v1314, %v1330
    %v1332 = vsel %vm1322, %v1329, %v1331
    %v1333 = vsel %vm1321, %v1311, %v1314
    %v1334 = vsel %vm1324, %v1320, 1326507024
    %v1335 = vsel %vm1323, %v1317, %v1334
    %v1336 = vsel %vm1322, %v1333, %v1335
    %v1337 = vshll.u32 %v1297, 8
    %v1338 = vmul.u32.u64.compose %v1337, %v1336
    %v1339 = vextract.low.u32 %v1338
    %v1340 = vextract.high.u32 %v1338
    %v1341 = vmul.u32.u64.compose %v1337, %v1332
    %v1342 = vextract.low.u32 %v1341
    %v1343 = vextract.high.u32 %v1341
    %v1344 = vmul.u32 %v1337, %v1328
    %v1345 = vadd.s32 %v1340, %v1342
    %vm1346 = vc.u32 %v1340, %v1342
    %v1347 = vadd.s32 %v1343, 1
    %v1348 = vsel %vm1346, %v1347, %v1343
    %v1349 = vadd.s32 %v1344, %v1348
    %v1350 = vadd.s32 %v1349, 536870912
    %v1351 = vshrl.u32 %v1350, 30
    %v1352 = vshll.u32 %v1351, 30
    %v1353 = vsub.s32 %v1349, %v1352
    %vm1354 = vcmp.lt.s32.totalorder %v1353, 0
    %v1355 = vsub.s32 0, %v1353
    %v1356 = vsel %vm1354, %v1355, %v1353
    %v1357 = vclz %v1356
    %v1358 = vsub.s32 %v1357, 2
    %vm1359 = vcmp.gt.s32.totalorder 0, %v1358
    %v1360 = vsel %vm1359, 0, %v1358
    %v1361 = vsub.s32 32, %v1360
    %v1362 = vshll.u32 %v1353, %v1360
    %v1363 = vshrl.u32 %v1345, %v1361
    %v1364 = vor.u32 %v1362, %v1363
    %v1365 = vsub.s32 4294967266, %v1360
    %v1366 = vadd.s32 %v1365, 127
    %v1367 = vshll.u32 %v1366, 23
    %v1368 = vor.u32 4788187, %v1367
    %v1369 = vand.u32 2147483647, %v1368
    %v1371 = vcvt.s32.f32 %v1364
    %v1372 = vmul.f32 %v1371, %v1369
    %v1373 = vxor.u32 %v1372, 2147483648
    %v1374 = vsel %vm1291, %v1373, %v1372
    %v1375 = vsub.s32 4, %v1351
    %v1376 = vsel %vm1291, %v1375, %v1351
    %v1377 = vsel %vm1290, %v433, %v1374
    %v1378 = vsel %vm1290, 0, %v1376
    %v1379 = vcosq.f32.pop %v1377
    %v1380 = vsinq.f32.pop %v1377
    %vm1381 = vweird.f32 %v433
    %v1382 = vadd.s32 %v1378, 3
    %v1383 = vand.u32 %v1382, 3
    %vm1384 = vcmp.lt.s32.totalorder %v1383, 2
    %vm1385 = vcmp.eq.s32.totalorder %v1383, 0
    %v1386 = vxor.u32 %v1380, 2147483648
    %v1387 = vsel %vm1385, %v1379, %v1386
    %vm1388 = vcmp.eq.s32.totalorder %v1383, 2
    %v1389 = vxor.u32 %v1379, 2147483648
    %v1390 = vsel %vm1388, %v1389, %v1380
    %v1391 = vsel %vm1384, %v1387, %v1390
    %v1392 = vsel %vm1381, nan, %v1391
    %v1393 = vand.u32 2147483647, %v434
    %vm1394 = vcmp.le.f32.partialorder %v1393, 0.7853982
    %vm1395 = vcmp.lt.s32.totalorder %v434, 0
    %v1396 = vand.u32 %v434, 2139095040
    %v1397 = vshrl.u32 %v1396, 23
    %v1398 = vsub.s32 %v1397, 127
    %v1399 = vand.u32 2147483647, %v434
    %v1400 = vand.u32 %v1399, 8388607
    %v1401 = vor.u32 %v1400, 8388608
    %v1402 = vsub.s32 0, %v1401
    %v1403 = vadd.s32 %v1398, 1
    %vm1404 = vcmp.gt.s32.totalorder %v1403, 0
    %v1405 = vsel %vm1404, %v1403, 0
    %v1406 = vshrl.u32 %v1405, 5
    %v1407 = vand.u32 %v1405, 31
    %v1408 = vsub.s32 32, %v1407
    %v1409 = vshrl.u32 683565275, %v1408
    %v1410 = vshll.u32 683565275, %v1407
    %v1411 = vshrl.u32 2475754826, %v1408
    %v1412 = vor.u32 %v1410, %v1411
    %v1413 = vshll.u32 2475754826, %v1407
    %v1414 = vshrl.u32 2131351028, %v1408
    %v1415 = vor.u32 %v1413, %v1414
    %v1416 = vshll.u32 2131351028, %v1407
    %v1417 = vshrl.u32 2102212464, %v1408
    %v1418 = vor.u32 %v1416, %v1417
    %v1419 = vshll.u32 2102212464, %v1407
    %v1420 = vshrl.u32 920167782, %v1408
    %v1421 = vor.u32 %v1419, %v1420
    %v1422 = vshll.u32 920167782, %v1407
    %v1423 = vshrl.u32 1326507024, %v1408
    %v1424 = vor.u32 %v1422, %v1423
    %vm1425 = vcmp.lt.s32.totalorder %v1406, 1
    %vm1426 = vcmp.lt.s32.totalorder %v1406, 2
    %vm1427 = vcmp.lt.s32.totalorder %v1406, 3
    %vm1428 = vcmp.lt.s32.totalorder %v1406, 4
    %v1429 = vsel %vm1425, %v1409, %v1412
    %v1430 = vsel %vm1428, %v1418, 2102212464
    %v1431 = vsel %vm1427, %v1415, %v1430
    %v1432 = vsel %vm1426, %v1429, %v1431
    %v1433 = vsel %vm1425, %v1412, %v1415
    %v1434 = vsel %vm1428, %v1421, 920167782
    %v1435 = vsel %vm1427, %v1418, %v1434
    %v1436 = vsel %vm1426, %v1433, %v1435
    %v1437 = vsel %vm1425, %v1415, %v1418
    %v1438 = vsel %vm1428, %v1424, 1326507024
    %v1439 = vsel %vm1427, %v1421, %v1438
    %v1440 = vsel %vm1426, %v1437, %v1439
    %v1441 = vshll.u32 %v1401, 8
    %v1442 = vmul.u32.u64.compose %v1441, %v1440
    %v1443 = vextract.low.u32 %v1442
    %v1444 = vextract.high.u32 %v1442
    %v1445 = vmul.u32.u64.compose %v1441, %v1436
    %v1446 = vextract.low.u32 %v1445
    %v1447 = vextract.high.u32 %v1445
    %v1448 = vmul.u32 %v1441, %v1432
    %v1449 = vadd.s32 %v1444, %v1446
    %vm1450 = vc.u32 %v1444, %v1446
    %v1451 = vadd.s32 %v1447, 1
    %v1452 = vsel %vm1450, %v1451, %v1447
    %v1453 = vadd.s32 %v1448, %v1452
    %v1454 = vadd.s32 %v1453, 536870912
    %v1455 = vshrl.u32 %v1454, 30
    %v1456 = vshll.u32 %v1455, 30
    %v1457 = vsub.s32 %v1453, %v1456
    %vm1458 = vcmp.lt.s32.totalorder %v1457, 0
    %v1459 = vsub.s32 0, %v1457
    %v1460 = vsel %vm1458, %v1459, %v1457
    %v1461 = vclz %v1460
    %v1462 = vsub.s32 %v1461, 2
    %vm1463 = vcmp.gt.s32.totalorder 0, %v1462
    %v1464 = vsel %vm1463, 0, %v1462
    %v1465 = vsub.s32 32, %v1464
    %v1466 = vshll.u32 %v1457, %v1464
    %v1467 = vshrl.u32 %v1449, %v1465
    %v1468 = vor.u32 %v1466, %v1467
    %v1469 = vsub.s32 4294967266, %v1464
    %v1470 = vadd.s32 %v1469, 127
    %v1471 = vshll.u32 %v1470, 23
    %v1472 = vor.u32 4788187, %v1471
    %v1473 = vand.u32 2147483647, %v1472
    %v1475 = vcvt.s32.f32 %v1468
    %v1476 = vmul.f32 %v1475, %v1473
    %v1477 = vxor.u32 %v1476, 2147483648
    %v1478 = vsel %vm1395, %v1477, %v1476
    %v1479 = vsub.s32 4, %v1455
    %v1480 = vsel %vm1395, %v1479, %v1455
    %v1481 = vsel %vm1394, %v434, %v1478
    %v1482 = vsel %vm1394, 0, %v1480
    %v1483 = vcosq.f32.pop %v1481
    %v1484 = vsinq.f32.pop %v1481
    %vm1485 = vweird.f32 %v434
    %v1486 = vadd.s32 %v1482, 3
    %v1487 = vand.u32 %v1486, 3
    %vm1488 = vcmp.lt.s32.totalorder %v1487, 2
    %vm1489 = vcmp.eq.s32.totalorder %v1487, 0
    %v1490 = vxor.u32 %v1484, 2147483648
    %v1491 = vsel %vm1489, %v1483, %v1490
    %vm1492 = vcmp.eq.s32.totalorder %v1487, 2
    %v1493 = vxor.u32 %v1483, 2147483648
    %v1494 = vsel %vm1492, %v1493, %v1484
    %v1495 = vsel %vm1488, %v1491, %v1494
    %v1496 = vsel %vm1485, nan, %v1495
    %v1497 = vand.u32 2147483647, %v435
    %vm1498 = vcmp.le.f32.partialorder %v1497, 0.7853982
    %vm1499 = vcmp.lt.s32.totalorder %v435, 0
    %v1500 = vand.u32 %v435, 2139095040
    %v1501 = vshrl.u32 %v1500, 23
    %v1502 = vsub.s32 %v1501, 127
    %v1503 = vand.u32 2147483647, %v435
    %v1504 = vand.u32 %v1503, 8388607
    %v1505 = vor.u32 %v1504, 8388608
    %v1506 = vsub.s32 0, %v1505
    %v1507 = vadd.s32 %v1502, 1
    %vm1508 = vcmp.gt.s32.totalorder %v1507, 0
    %v1509 = vsel %vm1508, %v1507, 0
    %v1510 = vshrl.u32 %v1509, 5
    %v1511 = vand.u32 %v1509, 31
    %v1512 = vsub.s32 32, %v1511
    %v1513 = vshrl.u32 683565275, %v1512
    %v1514 = vshll.u32 683565275, %v1511
    %v1515 = vshrl.u32 2475754826, %v1512
    %v1516 = vor.u32 %v1514, %v1515
    %v1517 = vshll.u32 2475754826, %v1511
    %v1518 = vshrl.u32 2131351028, %v1512
    %v1519 = vor.u32 %v1517, %v1518
    %v1520 = vshll.u32 2131351028, %v1511
    %v1521 = vshrl.u32 2102212464, %v1512
    %v1522 = vor.u32 %v1520, %v1521
    %v1523 = vshll.u32 2102212464, %v1511
    %v1524 = vshrl.u32 920167782, %v1512
    %v1525 = vor.u32 %v1523, %v1524
    %v1526 = vshll.u32 920167782, %v1511
    %v1527 = vshrl.u32 1326507024, %v1512
    %v1528 = vor.u32 %v1526, %v1527
    %vm1529 = vcmp.lt.s32.totalorder %v1510, 1
    %vm1530 = vcmp.lt.s32.totalorder %v1510, 2
    %vm1531 = vcmp.lt.s32.totalorder %v1510, 3
    %vm1532 = vcmp.lt.s32.totalorder %v1510, 4
    %v1533 = vsel %vm1529, %v1513, %v1516
    %v1534 = vsel %vm1532, %v1522, 2102212464
    %v1535 = vsel %vm1531, %v1519, %v1534
    %v1536 = vsel %vm1530, %v1533, %v1535
    %v1537 = vsel %vm1529, %v1516, %v1519
    %v1538 = vsel %vm1532, %v1525, 920167782
    %v1539 = vsel %vm1531, %v1522, %v1538
    %v1540 = vsel %vm1530, %v1537, %v1539
    %v1541 = vsel %vm1529, %v1519, %v1522
    %v1542 = vsel %vm1532, %v1528, 1326507024
    %v1543 = vsel %vm1531, %v1525, %v1542
    %v1544 = vsel %vm1530, %v1541, %v1543
    %v1545 = vshll.u32 %v1505, 8
    %v1546 = vmul.u32.u64.compose %v1545, %v1544
    %v1547 = vextract.low.u32 %v1546
    %v1548 = vextract.high.u32 %v1546
    %v1549 = vmul.u32.u64.compose %v1545, %v1540
    %v1550 = vextract.low.u32 %v1549
    %v1551 = vextract.high.u32 %v1549
    %v1552 = vmul.u32 %v1545, %v1536
    %v1553 = vadd.s32 %v1548, %v1550
    %vm1554 = vc.u32 %v1548, %v1550
    %v1555 = vadd.s32 %v1551, 1
    %v1556 = vsel %vm1554, %v1555, %v1551
    %v1557 = vadd.s32 %v1552, %v1556
    %v1558 = vadd.s32 %v1557, 536870912
    %v1559 = vshrl.u32 %v1558, 30
    %v1560 = vshll.u32 %v1559, 30
    %v1561 = vsub.s32 %v1557, %v1560
    %vm1562 = vcmp.lt.s32.totalorder %v1561, 0
    %v1563 = vsub.s32 0, %v1561
    %v1564 = vsel %vm1562, %v1563, %v1561
    %v1565 = vclz %v1564
    %v1566 = vsub.s32 %v1565, 2
    %vm1567 = vcmp.gt.s32.totalorder 0, %v1566
    %v1568 = vsel %vm1567, 0, %v1566
    %v1569 = vsub.s32 32, %v1568
    %v1570 = vshll.u32 %v1561, %v1568
    %v1571 = vshrl.u32 %v1553, %v1569
    %v1572 = vor.u32 %v1570, %v1571
    %v1573 = vsub.s32 4294967266, %v1568
    %v1574 = vadd.s32 %v1573, 127
    %v1575 = vshll.u32 %v1574, 23
    %v1576 = vor.u32 4788187, %v1575
    %v1577 = vand.u32 2147483647, %v1576
    %v1579 = vcvt.s32.f32 %v1572
    %v1580 = vmul.f32 %v1579, %v1577
    %v1581 = vxor.u32 %v1580, 2147483648
    %v1582 = vsel %vm1499, %v1581, %v1580
    %v1583 = vsub.s32 4, %v1559
    %v1584 = vsel %vm1499, %v1583, %v1559
    %v1585 = vsel %vm1498, %v435, %v1582
    %v1586 = vsel %vm1498, 0, %v1584
    %v1587 = vcosq.f32.pop %v1585
    %v1588 = vsinq.f32.pop %v1585
    %vm1589 = vweird.f32 %v435
    %v1590 = vadd.s32 %v1586, 3
    %v1591 = vand.u32 %v1590, 3
    %vm1592 = vcmp.lt.s32.totalorder %v1591, 2
    %vm1593 = vcmp.eq.s32.totalorder %v1591, 0
    %v1594 = vxor.u32 %v1588, 2147483648
    %v1595 = vsel %vm1593, %v1587, %v1594
    %vm1596 = vcmp.eq.s32.totalorder %v1591, 2
    %v1597 = vxor.u32 %v1587, 2147483648
    %v1598 = vsel %vm1596, %v1597, %v1588
    %v1599 = vsel %vm1592, %v1595, %v1598
    %v1600 = vsel %vm1589, nan, %v1599
    %v1601 = vand.u32 2147483647, %v436
    %vm1602 = vcmp.le.f32.partialorder %v1601, 0.7853982
    %vm1603 = vcmp.lt.s32.totalorder %v436, 0
    %v1604 = vand.u32 %v436, 2139095040
    %v1605 = vshrl.u32 %v1604, 23
    %v1606 = vsub.s32 %v1605, 127
    %v1607 = vand.u32 2147483647, %v436
    %v1608 = vand.u32 %v1607, 8388607
    %v1609 = vor.u32 %v1608, 8388608
    %v1610 = vsub.s32 0, %v1609
    %v1611 = vadd.s32 %v1606, 1
    %vm1612 = vcmp.gt.s32.totalorder %v1611, 0
    %v1613 = vsel %vm1612, %v1611, 0
    %v1614 = vshrl.u32 %v1613, 5
    %v1615 = vand.u32 %v1613, 31
    %v1616 = vsub.s32 32, %v1615
    %v1617 = vshrl.u32 683565275, %v1616
    %v1618 = vshll.u32 683565275, %v1615
    %v1619 = vshrl.u32 2475754826, %v1616
    %v1620 = vor.u32 %v1618, %v1619
    %v1621 = vshll.u32 2475754826, %v1615
    %v1622 = vshrl.u32 2131351028, %v1616
    %v1623 = vor.u32 %v1621, %v1622
    %v1624 = vshll.u32 2131351028, %v1615
    %v1625 = vshrl.u32 2102212464, %v1616
    %v1626 = vor.u32 %v1624, %v1625
    %v1627 = vshll.u32 2102212464, %v1615
    %v1628 = vshrl.u32 920167782, %v1616
    %v1629 = vor.u32 %v1627, %v1628
    %v1630 = vshll.u32 920167782, %v1615
    %v1631 = vshrl.u32 1326507024, %v1616
    %v1632 = vor.u32 %v1630, %v1631
    %vm1633 = vcmp.lt.s32.totalorder %v1614, 1
    %vm1634 = vcmp.lt.s32.totalorder %v1614, 2
    %vm1635 = vcmp.lt.s32.totalorder %v1614, 3
    %vm1636 = vcmp.lt.s32.totalorder %v1614, 4
    %v1637 = vsel %vm1633, %v1617, %v1620
    %v1638 = vsel %vm1636, %v1626, 2102212464
    %v1639 = vsel %vm1635, %v1623, %v1638
    %v1640 = vsel %vm1634, %v1637, %v1639
    %v1641 = vsel %vm1633, %v1620, %v1623
    %v1642 = vsel %vm1636, %v1629, 920167782
    %v1643 = vsel %vm1635, %v1626, %v1642
    %v1644 = vsel %vm1634, %v1641, %v1643
    %v1645 = vsel %vm1633, %v1623, %v1626
    %v1646 = vsel %vm1636, %v1632, 1326507024
    %v1647 = vsel %vm1635, %v1629, %v1646
    %v1648 = vsel %vm1634, %v1645, %v1647
    %v1649 = vshll.u32 %v1609, 8
    %v1650 = vmul.u32.u64.compose %v1649, %v1648
    %v1651 = vextract.low.u32 %v1650
    %v1652 = vextract.high.u32 %v1650
    %v1653 = vmul.u32.u64.compose %v1649, %v1644
    %v1654 = vextract.low.u32 %v1653
    %v1655 = vextract.high.u32 %v1653
    %v1656 = vmul.u32 %v1649, %v1640
    %v1657 = vadd.s32 %v1652, %v1654
    %vm1658 = vc.u32 %v1652, %v1654
    %v1659 = vadd.s32 %v1655, 1
    %v1660 = vsel %vm1658, %v1659, %v1655
    %v1661 = vadd.s32 %v1656, %v1660
    %v1662 = vadd.s32 %v1661, 536870912
    %v1663 = vshrl.u32 %v1662, 30
    %v1664 = vshll.u32 %v1663, 30
    %v1665 = vsub.s32 %v1661, %v1664
    %vm1666 = vcmp.lt.s32.totalorder %v1665, 0
    %v1667 = vsub.s32 0, %v1665
    %v1668 = vsel %vm1666, %v1667, %v1665
    %v1669 = vclz %v1668
    %v1670 = vsub.s32 %v1669, 2
    %vm1671 = vcmp.gt.s32.totalorder 0, %v1670
    %v1672 = vsel %vm1671, 0, %v1670
    %v1673 = vsub.s32 32, %v1672
    %v1674 = vshll.u32 %v1665, %v1672
    %v1675 = vshrl.u32 %v1657, %v1673
    %v1676 = vor.u32 %v1674, %v1675
    %v1677 = vsub.s32 4294967266, %v1672
    %v1678 = vadd.s32 %v1677, 127
    %v1679 = vshll.u32 %v1678, 23
    %v1680 = vor.u32 4788187, %v1679
    %v1681 = vand.u32 2147483647, %v1680
    %v1683 = vcvt.s32.f32 %v1676
    %v1684 = vmul.f32 %v1683, %v1681
    %v1685 = vxor.u32 %v1684, 2147483648
    %v1686 = vsel %vm1603, %v1685, %v1684
    %v1687 = vsub.s32 4, %v1663
    %v1688 = vsel %vm1603, %v1687, %v1663
    %v1689 = vsel %vm1602, %v436, %v1686
    %v1690 = vsel %vm1602, 0, %v1688
    %v1691 = vcosq.f32.pop %v1689
    %v1692 = vsinq.f32.pop %v1689
    %vm1693 = vweird.f32 %v436
    %v1694 = vadd.s32 %v1690, 3
    %v1695 = vand.u32 %v1694, 3
    %vm1696 = vcmp.lt.s32.totalorder %v1695, 2
    %vm1697 = vcmp.eq.s32.totalorder %v1695, 0
    %v1698 = vxor.u32 %v1692, 2147483648
    %v1699 = vsel %vm1697, %v1691, %v1698
    %vm1700 = vcmp.eq.s32.totalorder %v1695, 2
    %v1701 = vxor.u32 %v1691, 2147483648
    %v1702 = vsel %vm1700, %v1701, %v1692
    %v1703 = vsel %vm1696, %v1699, %v1702
    %v1704 = vsel %vm1693, nan, %v1703
    %v1705 = vand.u32 2147483647, %v437
    %vm1706 = vcmp.le.f32.partialorder %v1705, 0.7853982
    %vm1707 = vcmp.lt.s32.totalorder %v437, 0
    %v1708 = vand.u32 %v437, 2139095040
    %v1709 = vshrl.u32 %v1708, 23
    %v1710 = vsub.s32 %v1709, 127
    %v1711 = vand.u32 2147483647, %v437
    %v1712 = vand.u32 %v1711, 8388607
    %v1713 = vor.u32 %v1712, 8388608
    %v1714 = vsub.s32 0, %v1713
    %v1715 = vadd.s32 %v1710, 1
    %vm1716 = vcmp.gt.s32.totalorder %v1715, 0
    %v1717 = vsel %vm1716, %v1715, 0
    %v1718 = vshrl.u32 %v1717, 5
    %v1719 = vand.u32 %v1717, 31
    %v1720 = vsub.s32 32, %v1719
    %v1721 = vshrl.u32 683565275, %v1720
    %v1722 = vshll.u32 683565275, %v1719
    %v1723 = vshrl.u32 2475754826, %v1720
    %v1724 = vor.u32 %v1722, %v1723
    %v1725 = vshll.u32 2475754826, %v1719
    %v1726 = vshrl.u32 2131351028, %v1720
    %v1727 = vor.u32 %v1725, %v1726
    %v1728 = vshll.u32 2131351028, %v1719
    %v1729 = vshrl.u32 2102212464, %v1720
    %v1730 = vor.u32 %v1728, %v1729
    %v1731 = vshll.u32 2102212464, %v1719
    %v1732 = vshrl.u32 920167782, %v1720
    %v1733 = vor.u32 %v1731, %v1732
    %v1734 = vshll.u32 920167782, %v1719
    %v1735 = vshrl.u32 1326507024, %v1720
    %v1736 = vor.u32 %v1734, %v1735
    %vm1737 = vcmp.lt.s32.totalorder %v1718, 1
    %vm1738 = vcmp.lt.s32.totalorder %v1718, 2
    %vm1739 = vcmp.lt.s32.totalorder %v1718, 3
    %vm1740 = vcmp.lt.s32.totalorder %v1718, 4
    %v1741 = vsel %vm1737, %v1721, %v1724
    %v1742 = vsel %vm1740, %v1730, 2102212464
    %v1743 = vsel %vm1739, %v1727, %v1742
    %v1744 = vsel %vm1738, %v1741, %v1743
    %v1745 = vsel %vm1737, %v1724, %v1727
    %v1746 = vsel %vm1740, %v1733, 920167782
    %v1747 = vsel %vm1739, %v1730, %v1746
    %v1748 = vsel %vm1738, %v1745, %v1747
    %v1749 = vsel %vm1737, %v1727, %v1730
    %v1750 = vsel %vm1740, %v1736, 1326507024
    %v1751 = vsel %vm1739, %v1733, %v1750
    %v1752 = vsel %vm1738, %v1749, %v1751
    %v1753 = vshll.u32 %v1713, 8
    %v1754 = vmul.u32.u64.compose %v1753, %v1752
    %v1755 = vextract.low.u32 %v1754
    %v1756 = vextract.high.u32 %v1754
    %v1757 = vmul.u32.u64.compose %v1753, %v1748
    %v1758 = vextract.low.u32 %v1757
    %v1759 = vextract.high.u32 %v1757
    %v1760 = vmul.u32 %v1753, %v1744
    %v1761 = vadd.s32 %v1756, %v1758
    %vm1762 = vc.u32 %v1756, %v1758
    %v1763 = vadd.s32 %v1759, 1
    %v1764 = vsel %vm1762, %v1763, %v1759
    %v1765 = vadd.s32 %v1760, %v1764
    %v1766 = vadd.s32 %v1765, 536870912
    %v1767 = vshrl.u32 %v1766, 30
    %v1768 = vshll.u32 %v1767, 30
    %v1769 = vsub.s32 %v1765, %v1768
    %vm1770 = vcmp.lt.s32.totalorder %v1769, 0
    %v1771 = vsub.s32 0, %v1769
    %v1772 = vsel %vm1770, %v1771, %v1769
    %v1773 = vclz %v1772
    %v1774 = vsub.s32 %v1773, 2
    %vm1775 = vcmp.gt.s32.totalorder 0, %v1774
    %v1776 = vsel %vm1775, 0, %v1774
    %v1777 = vsub.s32 32, %v1776
    %v1778 = vshll.u32 %v1769, %v1776
    %v1779 = vshrl.u32 %v1761, %v1777
    %v1780 = vor.u32 %v1778, %v1779
    %v1781 = vsub.s32 4294967266, %v1776
    %v1782 = vadd.s32 %v1781, 127
    %v1783 = vshll.u32 %v1782, 23
    %v1784 = vor.u32 4788187, %v1783
    %v1785 = vand.u32 2147483647, %v1784
    %v1787 = vcvt.s32.f32 %v1780
    %v1788 = vmul.f32 %v1787, %v1785
    %v1789 = vxor.u32 %v1788, 2147483648
    %v1790 = vsel %vm1707, %v1789, %v1788
    %v1791 = vsub.s32 4, %v1767
    %v1792 = vsel %vm1707, %v1791, %v1767
    %v1793 = vsel %vm1706, %v437, %v1790
    %v1794 = vsel %vm1706, 0, %v1792
    %v1795 = vcosq.f32.pop %v1793
    %v1796 = vsinq.f32.pop %v1793
    %vm1797 = vweird.f32 %v437
    %v1798 = vadd.s32 %v1794, 3
    %v1799 = vand.u32 %v1798, 3
    %vm1800 = vcmp.lt.s32.totalorder %v1799, 2
    %vm1801 = vcmp.eq.s32.totalorder %v1799, 0
    %v1802 = vxor.u32 %v1796, 2147483648
    %v1803 = vsel %vm1801, %v1795, %v1802
    %vm1804 = vcmp.eq.s32.totalorder %v1799, 2
    %v1805 = vxor.u32 %v1795, 2147483648
    %v1806 = vsel %vm1804, %v1805, %v1796
    %v1807 = vsel %vm1800, %v1803, %v1806
    %v1808 = vsel %vm1797, nan, %v1807
    %v1809 = vand.u32 2147483647, %v438
    %vm1810 = vcmp.le.f32.partialorder %v1809, 0.7853982
    %vm1811 = vcmp.lt.s32.totalorder %v438, 0
    %v1812 = vand.u32 %v438, 2139095040
    %v1813 = vshrl.u32 %v1812, 23
    %v1814 = vsub.s32 %v1813, 127
    %v1815 = vand.u32 2147483647, %v438
    %v1816 = vand.u32 %v1815, 8388607
    %v1817 = vor.u32 %v1816, 8388608
    %v1818 = vsub.s32 0, %v1817
    %v1819 = vadd.s32 %v1814, 1
    %vm1820 = vcmp.gt.s32.totalorder %v1819, 0
    %v1821 = vsel %vm1820, %v1819, 0
    %v1822 = vshrl.u32 %v1821, 5
    %v1823 = vand.u32 %v1821, 31
    %v1824 = vsub.s32 32, %v1823
    %v1825 = vshrl.u32 683565275, %v1824
    %v1826 = vshll.u32 683565275, %v1823
    %v1827 = vshrl.u32 2475754826, %v1824
    %v1828 = vor.u32 %v1826, %v1827
    %v1829 = vshll.u32 2475754826, %v1823
    %v1830 = vshrl.u32 2131351028, %v1824
    %v1831 = vor.u32 %v1829, %v1830
    %v1832 = vshll.u32 2131351028, %v1823
    %v1833 = vshrl.u32 2102212464, %v1824
    %v1834 = vor.u32 %v1832, %v1833
    %v1835 = vshll.u32 2102212464, %v1823
    %v1836 = vshrl.u32 920167782, %v1824
    %v1837 = vor.u32 %v1835, %v1836
    %v1838 = vshll.u32 920167782, %v1823
    %v1839 = vshrl.u32 1326507024, %v1824
    %v1840 = vor.u32 %v1838, %v1839
    %vm1841 = vcmp.lt.s32.totalorder %v1822, 1
    %vm1842 = vcmp.lt.s32.totalorder %v1822, 2
    %vm1843 = vcmp.lt.s32.totalorder %v1822, 3
    %vm1844 = vcmp.lt.s32.totalorder %v1822, 4
    %v1845 = vsel %vm1841, %v1825, %v1828
    %v1846 = vsel %vm1844, %v1834, 2102212464
    %v1847 = vsel %vm1843, %v1831, %v1846
    %v1848 = vsel %vm1842, %v1845, %v1847
    %v1849 = vsel %vm1841, %v1828, %v1831
    %v1850 = vsel %vm1844, %v1837, 920167782
    %v1851 = vsel %vm1843, %v1834, %v1850
    %v1852 = vsel %vm1842, %v1849, %v1851
    %v1853 = vsel %vm1841, %v1831, %v1834
    %v1854 = vsel %vm1844, %v1840, 1326507024
    %v1855 = vsel %vm1843, %v1837, %v1854
    %v1856 = vsel %vm1842, %v1853, %v1855
    %v1857 = vshll.u32 %v1817, 8
    %v1858 = vmul.u32.u64.compose %v1857, %v1856
    %v1859 = vextract.low.u32 %v1858
    %v1860 = vextract.high.u32 %v1858
    %v1861 = vmul.u32.u64.compose %v1857, %v1852
    %v1862 = vextract.low.u32 %v1861
    %v1863 = vextract.high.u32 %v1861
    %v1864 = vmul.u32 %v1857, %v1848
    %v1865 = vadd.s32 %v1860, %v1862
    %vm1866 = vc.u32 %v1860, %v1862
    %v1867 = vadd.s32 %v1863, 1
    %v1868 = vsel %vm1866, %v1867, %v1863
    %v1869 = vadd.s32 %v1864, %v1868
    %v1870 = vadd.s32 %v1869, 536870912
    %v1871 = vshrl.u32 %v1870, 30
    %v1872 = vshll.u32 %v1871, 30
    %v1873 = vsub.s32 %v1869, %v1872
    %vm1874 = vcmp.lt.s32.totalorder %v1873, 0
    %v1875 = vsub.s32 0, %v1873
    %v1876 = vsel %vm1874, %v1875, %v1873
    %v1877 = vclz %v1876
    %v1878 = vsub.s32 %v1877, 2
    %vm1879 = vcmp.gt.s32.totalorder 0, %v1878
    %v1880 = vsel %vm1879, 0, %v1878
    %v1881 = vsub.s32 32, %v1880
    %v1882 = vshll.u32 %v1873, %v1880
    %v1883 = vshrl.u32 %v1865, %v1881
    %v1884 = vor.u32 %v1882, %v1883
    %v1885 = vsub.s32 4294967266, %v1880
    %v1886 = vadd.s32 %v1885, 127
    %v1887 = vshll.u32 %v1886, 23
    %v1888 = vor.u32 4788187, %v1887
    %v1889 = vand.u32 2147483647, %v1888
    %v1891 = vcvt.s32.f32 %v1884
    %v1892 = vmul.f32 %v1891, %v1889
    %v1893 = vxor.u32 %v1892, 2147483648
    %v1894 = vsel %vm1811, %v1893, %v1892
    %v1895 = vsub.s32 4, %v1871
    %v1896 = vsel %vm1811, %v1895, %v1871
    %v1897 = vsel %vm1810, %v438, %v1894
    %v1898 = vsel %vm1810, 0, %v1896
    %v1899 = vcosq.f32.pop %v1897
    %v1900 = vsinq.f32.pop %v1897
    %vm1901 = vweird.f32 %v438
    %v1902 = vadd.s32 %v1898, 3
    %v1903 = vand.u32 %v1902, 3
    %vm1904 = vcmp.lt.s32.totalorder %v1903, 2
    %vm1905 = vcmp.eq.s32.totalorder %v1903, 0
    %v1906 = vxor.u32 %v1900, 2147483648
    %v1907 = vsel %vm1905, %v1899, %v1906
    %vm1908 = vcmp.eq.s32.totalorder %v1903, 2
    %v1909 = vxor.u32 %v1899, 2147483648
    %v1910 = vsel %vm1908, %v1909, %v1900
    %v1911 = vsel %vm1904, %v1907, %v1910
    %v1912 = vsel %vm1901, nan, %v1911
    %v1913 = vand.u32 2147483647, %v439
    %vm1914 = vcmp.le.f32.partialorder %v1913, 0.7853982
    %vm1915 = vcmp.lt.s32.totalorder %v439, 0
    %v1916 = vand.u32 %v439, 2139095040
    %v1917 = vshrl.u32 %v1916, 23
    %v1918 = vsub.s32 %v1917, 127
    %v1919 = vand.u32 2147483647, %v439
    %v1920 = vand.u32 %v1919, 8388607
    %v1921 = vor.u32 %v1920, 8388608
    %v1922 = vsub.s32 0, %v1921
    %v1923 = vadd.s32 %v1918, 1
    %vm1924 = vcmp.gt.s32.totalorder %v1923, 0
    %v1925 = vsel %vm1924, %v1923, 0
    %v1926 = vshrl.u32 %v1925, 5
    %v1927 = vand.u32 %v1925, 31
    %v1928 = vsub.s32 32, %v1927
    %v1929 = vshrl.u32 683565275, %v1928
    %v1930 = vshll.u32 683565275, %v1927
    %v1931 = vshrl.u32 2475754826, %v1928
    %v1932 = vor.u32 %v1930, %v1931
    %v1933 = vshll.u32 2475754826, %v1927
    %v1934 = vshrl.u32 2131351028, %v1928
    %v1935 = vor.u32 %v1933, %v1934
    %v1936 = vshll.u32 2131351028, %v1927
    %v1937 = vshrl.u32 2102212464, %v1928
    %v1938 = vor.u32 %v1936, %v1937
    %v1939 = vshll.u32 2102212464, %v1927
    %v1940 = vshrl.u32 920167782, %v1928
    %v1941 = vor.u32 %v1939, %v1940
    %v1942 = vshll.u32 920167782, %v1927
    %v1943 = vshrl.u32 1326507024, %v1928
    %v1944 = vor.u32 %v1942, %v1943
    %vm1945 = vcmp.lt.s32.totalorder %v1926, 1
    %vm1946 = vcmp.lt.s32.totalorder %v1926, 2
    %vm1947 = vcmp.lt.s32.totalorder %v1926, 3
    %vm1948 = vcmp.lt.s32.totalorder %v1926, 4
    %v1949 = vsel %vm1945, %v1929, %v1932
    %v1950 = vsel %vm1948, %v1938, 2102212464
    %v1951 = vsel %vm1947, %v1935, %v1950
    %v1952 = vsel %vm1946, %v1949, %v1951
    %v1953 = vsel %vm1945, %v1932, %v1935
    %v1954 = vsel %vm1948, %v1941, 920167782
    %v1955 = vsel %vm1947, %v1938, %v1954
    %v1956 = vsel %vm1946, %v1953, %v1955
    %v1957 = vsel %vm1945, %v1935, %v1938
    %v1958 = vsel %vm1948, %v1944, 1326507024
    %v1959 = vsel %vm1947, %v1941, %v1958
    %v1960 = vsel %vm1946, %v1957, %v1959
    %v1961 = vshll.u32 %v1921, 8
    %v1962 = vmul.u32.u64.compose %v1961, %v1960
    %v1963 = vextract.low.u32 %v1962
    %v1964 = vextract.high.u32 %v1962
    %v1965 = vmul.u32.u64.compose %v1961, %v1956
    %v1966 = vextract.low.u32 %v1965
    %v1967 = vextract.high.u32 %v1965
    %v1968 = vmul.u32 %v1961, %v1952
    %v1969 = vadd.s32 %v1964, %v1966
    %vm1970 = vc.u32 %v1964, %v1966
    %v1971 = vadd.s32 %v1967, 1
    %v1972 = vsel %vm1970, %v1971, %v1967
    %v1973 = vadd.s32 %v1968, %v1972
    %v1974 = vadd.s32 %v1973, 536870912
    %v1975 = vshrl.u32 %v1974, 30
    %v1976 = vshll.u32 %v1975, 30
    %v1977 = vsub.s32 %v1973, %v1976
    %vm1978 = vcmp.lt.s32.totalorder %v1977, 0
    %v1979 = vsub.s32 0, %v1977
    %v1980 = vsel %vm1978, %v1979, %v1977
    %v1981 = vclz %v1980
    %v1982 = vsub.s32 %v1981, 2
    %vm1983 = vcmp.gt.s32.totalorder 0, %v1982
    %v1984 = vsel %vm1983, 0, %v1982
    %v1985 = vsub.s32 32, %v1984
    %v1986 = vshll.u32 %v1977, %v1984
    %v1987 = vshrl.u32 %v1969, %v1985
    %v1988 = vor.u32 %v1986, %v1987
    %v1989 = vsub.s32 4294967266, %v1984
    %v1990 = vadd.s32 %v1989, 127
    %v1991 = vshll.u32 %v1990, 23
    %v1992 = vor.u32 4788187, %v1991
    %v1993 = vand.u32 2147483647, %v1992
    %v1995 = vcvt.s32.f32 %v1988
    %v1996 = vmul.f32 %v1995, %v1993
    %v1997 = vxor.u32 %v1996, 2147483648
    %v1998 = vsel %vm1915, %v1997, %v1996
    %v1999 = vsub.s32 4, %v1975
    %v2000 = vsel %vm1915, %v1999, %v1975
    %v2001 = vsel %vm1914, %v439, %v1998
    %v2002 = vsel %vm1914, 0, %v2000
    %v2003 = vcosq.f32.pop %v2001
    %v2004 = vsinq.f32.pop %v2001
    %vm2005 = vweird.f32 %v439
    %v2006 = vadd.s32 %v2002, 3
    %v2007 = vand.u32 %v2006, 3
    %vm2008 = vcmp.lt.s32.totalorder %v2007, 2
    %vm2009 = vcmp.eq.s32.totalorder %v2007, 0
    %v2010 = vxor.u32 %v2004, 2147483648
    %v2011 = vsel %vm2009, %v2003, %v2010
    %vm2012 = vcmp.eq.s32.totalorder %v2007, 2
    %v2013 = vxor.u32 %v2003, 2147483648
    %v2014 = vsel %vm2012, %v2013, %v2004
    %v2015 = vsel %vm2008, %v2011, %v2014
    %v2016 = vsel %vm2005, nan, %v2015
    %v2017 = vand.u32 2147483647, %v440
    %vm2018 = vcmp.le.f32.partialorder %v2017, 0.7853982
    %vm2019 = vcmp.lt.s32.totalorder %v440, 0
    %v2020 = vand.u32 %v440, 2139095040
    %v2021 = vshrl.u32 %v2020, 23
    %v2022 = vsub.s32 %v2021, 127
    %v2023 = vand.u32 2147483647, %v440
    %v2024 = vand.u32 %v2023, 8388607
    %v2025 = vor.u32 %v2024, 8388608
    %v2026 = vsub.s32 0, %v2025
    %v2027 = vadd.s32 %v2022, 1
    %vm2028 = vcmp.gt.s32.totalorder %v2027, 0
    %v2029 = vsel %vm2028, %v2027, 0
    %v2030 = vshrl.u32 %v2029, 5
    %v2031 = vand.u32 %v2029, 31
    %v2032 = vsub.s32 32, %v2031
    %v2033 = vshrl.u32 683565275, %v2032
    %v2034 = vshll.u32 683565275, %v2031
    %v2035 = vshrl.u32 2475754826, %v2032
    %v2036 = vor.u32 %v2034, %v2035
    %v2037 = vshll.u32 2475754826, %v2031
    %v2038 = vshrl.u32 2131351028, %v2032
    %v2039 = vor.u32 %v2037, %v2038
    %v2040 = vshll.u32 2131351028, %v2031
    %v2041 = vshrl.u32 2102212464, %v2032
    %v2042 = vor.u32 %v2040, %v2041
    %v2043 = vshll.u32 2102212464, %v2031
    %v2044 = vshrl.u32 920167782, %v2032
    %v2045 = vor.u32 %v2043, %v2044
    %v2046 = vshll.u32 920167782, %v2031
    %v2047 = vshrl.u32 1326507024, %v2032
    %v2048 = vor.u32 %v2046, %v2047
    %vm2049 = vcmp.lt.s32.totalorder %v2030, 1
    %vm2050 = vcmp.lt.s32.totalorder %v2030, 2
    %vm2051 = vcmp.lt.s32.totalorder %v2030, 3
    %vm2052 = vcmp.lt.s32.totalorder %v2030, 4
    %v2053 = vsel %vm2049, %v2033, %v2036
    %v2054 = vsel %vm2052, %v2042, 2102212464
    %v2055 = vsel %vm2051, %v2039, %v2054
    %v2056 = vsel %vm2050, %v2053, %v2055
    %v2057 = vsel %vm2049, %v2036, %v2039
    %v2058 = vsel %vm2052, %v2045, 920167782
    %v2059 = vsel %vm2051, %v2042, %v2058
    %v2060 = vsel %vm2050, %v2057, %v2059
    %v2061 = vsel %vm2049, %v2039, %v2042
    %v2062 = vsel %vm2052, %v2048, 1326507024
    %v2063 = vsel %vm2051, %v2045, %v2062
    %v2064 = vsel %vm2050, %v2061, %v2063
    %v2065 = vshll.u32 %v2025, 8
    %v2066 = vmul.u32.u64.compose %v2065, %v2064
    %v2067 = vextract.low.u32 %v2066
    %v2068 = vextract.high.u32 %v2066
    %v2069 = vmul.u32.u64.compose %v2065, %v2060
    %v2070 = vextract.low.u32 %v2069
    %v2071 = vextract.high.u32 %v2069
    %v2072 = vmul.u32 %v2065, %v2056
    %v2073 = vadd.s32 %v2068, %v2070
    %vm2074 = vc.u32 %v2068, %v2070
    %v2075 = vadd.s32 %v2071, 1
    %v2076 = vsel %vm2074, %v2075, %v2071
    %v2077 = vadd.s32 %v2072, %v2076
    %v2078 = vadd.s32 %v2077, 536870912
    %v2079 = vshrl.u32 %v2078, 30
    %v2080 = vshll.u32 %v2079, 30
    %v2081 = vsub.s32 %v2077, %v2080
    %vm2082 = vcmp.lt.s32.totalorder %v2081, 0
    %v2083 = vsub.s32 0, %v2081
    %v2084 = vsel %vm2082, %v2083, %v2081
    %v2085 = vclz %v2084
    %v2086 = vsub.s32 %v2085, 2
    %vm2087 = vcmp.gt.s32.totalorder 0, %v2086
    %v2088 = vsel %vm2087, 0, %v2086
    %v2089 = vsub.s32 32, %v2088
    %v2090 = vshll.u32 %v2081, %v2088
    %v2091 = vshrl.u32 %v2073, %v2089
    %v2092 = vor.u32 %v2090, %v2091
    %v2093 = vsub.s32 4294967266, %v2088
    %v2094 = vadd.s32 %v2093, 127
    %v2095 = vshll.u32 %v2094, 23
    %v2096 = vor.u32 4788187, %v2095
    %v2097 = vand.u32 2147483647, %v2096
    %v2099 = vcvt.s32.f32 %v2092
    %v2100 = vmul.f32 %v2099, %v2097
    %v2101 = vxor.u32 %v2100, 2147483648
    %v2102 = vsel %vm2019, %v2101, %v2100
    %v2103 = vsub.s32 4, %v2079
    %v2104 = vsel %vm2019, %v2103, %v2079
    %v2105 = vsel %vm2018, %v440, %v2102
    %v2106 = vsel %vm2018, 0, %v2104
    %v2107 = vcosq.f32.pop %v2105
    %v2108 = vsinq.f32.pop %v2105
    %vm2109 = vweird.f32 %v440
    %v2110 = vadd.s32 %v2106, 3
    %v2111 = vand.u32 %v2110, 3
    %vm2112 = vcmp.lt.s32.totalorder %v2111, 2
    %vm2113 = vcmp.eq.s32.totalorder %v2111, 0
    %v2114 = vxor.u32 %v2108, 2147483648
    %v2115 = vsel %vm2113, %v2107, %v2114
    %vm2116 = vcmp.eq.s32.totalorder %v2111, 2
    %v2117 = vxor.u32 %v2107, 2147483648
    %v2118 = vsel %vm2116, %v2117, %v2108
    %v2119 = vsel %vm2112, %v2115, %v2118
    %v2120 = vsel %vm2109, nan, %v2119
    %v2121 = vand.u32 2147483647, %v441
    %vm2122 = vcmp.le.f32.partialorder %v2121, 0.7853982
    %vm2123 = vcmp.lt.s32.totalorder %v441, 0
    %v2124 = vand.u32 %v441, 2139095040
    %v2125 = vshrl.u32 %v2124, 23
    %v2126 = vsub.s32 %v2125, 127
    %v2127 = vand.u32 2147483647, %v441
    %v2128 = vand.u32 %v2127, 8388607
    %v2129 = vor.u32 %v2128, 8388608
    %v2130 = vsub.s32 0, %v2129
    %v2131 = vadd.s32 %v2126, 1
    %vm2132 = vcmp.gt.s32.totalorder %v2131, 0
    %v2133 = vsel %vm2132, %v2131, 0
    %v2134 = vshrl.u32 %v2133, 5
    %v2135 = vand.u32 %v2133, 31
    %v2136 = vsub.s32 32, %v2135
    %v2137 = vshrl.u32 683565275, %v2136
    %v2138 = vshll.u32 683565275, %v2135
    %v2139 = vshrl.u32 2475754826, %v2136
    %v2140 = vor.u32 %v2138, %v2139
    %v2141 = vshll.u32 2475754826, %v2135
    %v2142 = vshrl.u32 2131351028, %v2136
    %v2143 = vor.u32 %v2141, %v2142
    %v2144 = vshll.u32 2131351028, %v2135
    %v2145 = vshrl.u32 2102212464, %v2136
    %v2146 = vor.u32 %v2144, %v2145
    %v2147 = vshll.u32 2102212464, %v2135
    %v2148 = vshrl.u32 920167782, %v2136
    %v2149 = vor.u32 %v2147, %v2148
    %v2150 = vshll.u32 920167782, %v2135
    %v2151 = vshrl.u32 1326507024, %v2136
    %v2152 = vor.u32 %v2150, %v2151
    %vm2153 = vcmp.lt.s32.totalorder %v2134, 1
    %vm2154 = vcmp.lt.s32.totalorder %v2134, 2
    %vm2155 = vcmp.lt.s32.totalorder %v2134, 3
    %vm2156 = vcmp.lt.s32.totalorder %v2134, 4
    %v2157 = vsel %vm2153, %v2137, %v2140
    %v2158 = vsel %vm2156, %v2146, 2102212464
    %v2159 = vsel %vm2155, %v2143, %v2158
    %v2160 = vsel %vm2154, %v2157, %v2159
    %v2161 = vsel %vm2153, %v2140, %v2143
    %v2162 = vsel %vm2156, %v2149, 920167782
    %v2163 = vsel %vm2155, %v2146, %v2162
    %v2164 = vsel %vm2154, %v2161, %v2163
    %v2165 = vsel %vm2153, %v2143, %v2146
    %v2166 = vsel %vm2156, %v2152, 1326507024
    %v2167 = vsel %vm2155, %v2149, %v2166
    %v2168 = vsel %vm2154, %v2165, %v2167
    %v2169 = vshll.u32 %v2129, 8
    %v2170 = vmul.u32.u64.compose %v2169, %v2168
    %v2171 = vextract.low.u32 %v2170
    %v2172 = vextract.high.u32 %v2170
    %v2173 = vmul.u32.u64.compose %v2169, %v2164
    %v2174 = vextract.low.u32 %v2173
    %v2175 = vextract.high.u32 %v2173
    %v2176 = vmul.u32 %v2169, %v2160
    %v2177 = vadd.s32 %v2172, %v2174
    %vm2178 = vc.u32 %v2172, %v2174
    %v2179 = vadd.s32 %v2175, 1
    %v2180 = vsel %vm2178, %v2179, %v2175
    %v2181 = vadd.s32 %v2176, %v2180
    %v2182 = vadd.s32 %v2181, 536870912
    %v2183 = vshrl.u32 %v2182, 30
    %v2184 = vshll.u32 %v2183, 30
    %v2185 = vsub.s32 %v2181, %v2184
    %vm2186 = vcmp.lt.s32.totalorder %v2185, 0
    %v2187 = vsub.s32 0, %v2185
    %v2188 = vsel %vm2186, %v2187, %v2185
    %v2189 = vclz %v2188
    %v2190 = vsub.s32 %v2189, 2
    %vm2191 = vcmp.gt.s32.totalorder 0, %v2190
    %v2192 = vsel %vm2191, 0, %v2190
    %v2193 = vsub.s32 32, %v2192
    %v2194 = vshll.u32 %v2185, %v2192
    %v2195 = vshrl.u32 %v2177, %v2193
    %v2196 = vor.u32 %v2194, %v2195
    %v2197 = vsub.s32 4294967266, %v2192
    %v2198 = vadd.s32 %v2197, 127
    %v2199 = vshll.u32 %v2198, 23
    %v2200 = vor.u32 4788187, %v2199
    %v2201 = vand.u32 2147483647, %v2200
    %v2203 = vcvt.s32.f32 %v2196
    %v2204 = vmul.f32 %v2203, %v2201
    %v2205 = vxor.u32 %v2204, 2147483648
    %v2206 = vsel %vm2123, %v2205, %v2204
    %v2207 = vsub.s32 4, %v2183
    %v2208 = vsel %vm2123, %v2207, %v2183
    %v2209 = vsel %vm2122, %v441, %v2206
    %v2210 = vsel %vm2122, 0, %v2208
    %v2211 = vcosq.f32.pop %v2209
    %v2212 = vsinq.f32.pop %v2209
    %vm2213 = vweird.f32 %v441
    %v2214 = vadd.s32 %v2210, 3
    %v2215 = vand.u32 %v2214, 3
    %vm2216 = vcmp.lt.s32.totalorder %v2215, 2
    %vm2217 = vcmp.eq.s32.totalorder %v2215, 0
    %v2218 = vxor.u32 %v2212, 2147483648
    %v2219 = vsel %vm2217, %v2211, %v2218
    %vm2220 = vcmp.eq.s32.totalorder %v2215, 2
    %v2221 = vxor.u32 %v2211, 2147483648
    %v2222 = vsel %vm2220, %v2221, %v2212
    %v2223 = vsel %vm2216, %v2219, %v2222
    %v2224 = vsel %vm2213, nan, %v2223
    %v2225 = vand.u32 2147483647, %v442
    %vm2226 = vcmp.le.f32.partialorder %v2225, 0.7853982
    %vm2227 = vcmp.lt.s32.totalorder %v442, 0
    %v2228 = vand.u32 %v442, 2139095040
    %v2229 = vshrl.u32 %v2228, 23
    %v2230 = vsub.s32 %v2229, 127
    %v2231 = vand.u32 2147483647, %v442
    %v2232 = vand.u32 %v2231, 8388607
    %v2233 = vor.u32 %v2232, 8388608
    %v2234 = vsub.s32 0, %v2233
    %v2235 = vadd.s32 %v2230, 1
    %vm2236 = vcmp.gt.s32.totalorder %v2235, 0
    %v2237 = vsel %vm2236, %v2235, 0
    %v2238 = vshrl.u32 %v2237, 5
    %v2239 = vand.u32 %v2237, 31
    %v2240 = vsub.s32 32, %v2239
    %v2241 = vshrl.u32 683565275, %v2240
    %v2242 = vshll.u32 683565275, %v2239
    %v2243 = vshrl.u32 2475754826, %v2240
    %v2244 = vor.u32 %v2242, %v2243
    %v2245 = vshll.u32 2475754826, %v2239
    %v2246 = vshrl.u32 2131351028, %v2240
    %v2247 = vor.u32 %v2245, %v2246
    %v2248 = vshll.u32 2131351028, %v2239
    %v2249 = vshrl.u32 2102212464, %v2240
    %v2250 = vor.u32 %v2248, %v2249
    %v2251 = vshll.u32 2102212464, %v2239
    %v2252 = vshrl.u32 920167782, %v2240
    %v2253 = vor.u32 %v2251, %v2252
    %v2254 = vshll.u32 920167782, %v2239
    %v2255 = vshrl.u32 1326507024, %v2240
    %v2256 = vor.u32 %v2254, %v2255
    %vm2257 = vcmp.lt.s32.totalorder %v2238, 1
    %vm2258 = vcmp.lt.s32.totalorder %v2238, 2
    %vm2259 = vcmp.lt.s32.totalorder %v2238, 3
    %vm2260 = vcmp.lt.s32.totalorder %v2238, 4
    %v2261 = vsel %vm2257, %v2241, %v2244
    %v2262 = vsel %vm2260, %v2250, 2102212464
    %v2263 = vsel %vm2259, %v2247, %v2262
    %v2264 = vsel %vm2258, %v2261, %v2263
    %v2265 = vsel %vm2257, %v2244, %v2247
    %v2266 = vsel %vm2260, %v2253, 920167782
    %v2267 = vsel %vm2259, %v2250, %v2266
    %v2268 = vsel %vm2258, %v2265, %v2267
    %v2269 = vsel %vm2257, %v2247, %v2250
    %v2270 = vsel %vm2260, %v2256, 1326507024
    %v2271 = vsel %vm2259, %v2253, %v2270
    %v2272 = vsel %vm2258, %v2269, %v2271
    %v2273 = vshll.u32 %v2233, 8
    %v2274 = vmul.u32.u64.compose %v2273, %v2272
    %v2275 = vextract.low.u32 %v2274
    %v2276 = vextract.high.u32 %v2274
    %v2277 = vmul.u32.u64.compose %v2273, %v2268
    %v2278 = vextract.low.u32 %v2277
    %v2279 = vextract.high.u32 %v2277
    %v2280 = vmul.u32 %v2273, %v2264
    %v2281 = vadd.s32 %v2276, %v2278
    %vm2282 = vc.u32 %v2276, %v2278
    %v2283 = vadd.s32 %v2279, 1
    %v2284 = vsel %vm2282, %v2283, %v2279
    %v2285 = vadd.s32 %v2280, %v2284
    %v2286 = vadd.s32 %v2285, 536870912
    %v2287 = vshrl.u32 %v2286, 30
    %v2288 = vshll.u32 %v2287, 30
    %v2289 = vsub.s32 %v2285, %v2288
    %vm2290 = vcmp.lt.s32.totalorder %v2289, 0
    %v2291 = vsub.s32 0, %v2289
    %v2292 = vsel %vm2290, %v2291, %v2289
    %v2293 = vclz %v2292
    %v2294 = vsub.s32 %v2293, 2
    %vm2295 = vcmp.gt.s32.totalorder 0, %v2294
    %v2296 = vsel %vm2295, 0, %v2294
    %v2297 = vsub.s32 32, %v2296
    %v2298 = vshll.u32 %v2289, %v2296
    %v2299 = vshrl.u32 %v2281, %v2297
    %v2300 = vor.u32 %v2298, %v2299
    %v2301 = vsub.s32 4294967266, %v2296
    %v2302 = vadd.s32 %v2301, 127
    %v2303 = vshll.u32 %v2302, 23
    %v2304 = vor.u32 4788187, %v2303
    %v2305 = vand.u32 2147483647, %v2304
    %v2307 = vcvt.s32.f32 %v2300
    %v2308 = vmul.f32 %v2307, %v2305
    %v2309 = vxor.u32 %v2308, 2147483648
    %v2310 = vsel %vm2227, %v2309, %v2308
    %v2311 = vsub.s32 4, %v2287
    %v2312 = vsel %vm2227, %v2311, %v2287
    %v2313 = vsel %vm2226, %v442, %v2310
    %v2314 = vsel %vm2226, 0, %v2312
    %v2315 = vcosq.f32.pop %v2313
    %v2316 = vsinq.f32.pop %v2313
    %vm2317 = vweird.f32 %v442
    %v2318 = vadd.s32 %v2314, 3
    %v2319 = vand.u32 %v2318, 3
    %vm2320 = vcmp.lt.s32.totalorder %v2319, 2
    %vm2321 = vcmp.eq.s32.totalorder %v2319, 0
    %v2322 = vxor.u32 %v2316, 2147483648
    %v2323 = vsel %vm2321, %v2315, %v2322
    %vm2324 = vcmp.eq.s32.totalorder %v2319, 2
    %v2325 = vxor.u32 %v2315, 2147483648
    %v2326 = vsel %vm2324, %v2325, %v2316
    %v2327 = vsel %vm2320, %v2323, %v2326
    %v2328 = vsel %vm2317, nan, %v2327
    %v2329 = vand.u32 2147483647, %v443
    %vm2330 = vcmp.le.f32.partialorder %v2329, 0.7853982
    %vm2331 = vcmp.lt.s32.totalorder %v443, 0
    %v2332 = vand.u32 %v443, 2139095040
    %v2333 = vshrl.u32 %v2332, 23
    %v2334 = vsub.s32 %v2333, 127
    %v2335 = vand.u32 2147483647, %v443
    %v2336 = vand.u32 %v2335, 8388607
    %v2337 = vor.u32 %v2336, 8388608
    %v2338 = vsub.s32 0, %v2337
    %v2339 = vadd.s32 %v2334, 1
    %vm2340 = vcmp.gt.s32.totalorder %v2339, 0
    %v2341 = vsel %vm2340, %v2339, 0
    %v2342 = vshrl.u32 %v2341, 5
    %v2343 = vand.u32 %v2341, 31
    %v2344 = vsub.s32 32, %v2343
    %v2345 = vshrl.u32 683565275, %v2344
    %v2346 = vshll.u32 683565275, %v2343
    %v2347 = vshrl.u32 2475754826, %v2344
    %v2348 = vor.u32 %v2346, %v2347
    %v2349 = vshll.u32 2475754826, %v2343
    %v2350 = vshrl.u32 2131351028, %v2344
    %v2351 = vor.u32 %v2349, %v2350
    %v2352 = vshll.u32 2131351028, %v2343
    %v2353 = vshrl.u32 2102212464, %v2344
    %v2354 = vor.u32 %v2352, %v2353
    %v2355 = vshll.u32 2102212464, %v2343
    %v2356 = vshrl.u32 920167782, %v2344
    %v2357 = vor.u32 %v2355, %v2356
    %v2358 = vshll.u32 920167782, %v2343
    %v2359 = vshrl.u32 1326507024, %v2344
    %v2360 = vor.u32 %v2358, %v2359
    %vm2361 = vcmp.lt.s32.totalorder %v2342, 1
    %vm2362 = vcmp.lt.s32.totalorder %v2342, 2
    %vm2363 = vcmp.lt.s32.totalorder %v2342, 3
    %vm2364 = vcmp.lt.s32.totalorder %v2342, 4
    %v2365 = vsel %vm2361, %v2345, %v2348
    %v2366 = vsel %vm2364, %v2354, 2102212464
    %v2367 = vsel %vm2363, %v2351, %v2366
    %v2368 = vsel %vm2362, %v2365, %v2367
    %v2369 = vsel %vm2361, %v2348, %v2351
    %v2370 = vsel %vm2364, %v2357, 920167782
    %v2371 = vsel %vm2363, %v2354, %v2370
    %v2372 = vsel %vm2362, %v2369, %v2371
    %v2373 = vsel %vm2361, %v2351, %v2354
    %v2374 = vsel %vm2364, %v2360, 1326507024
    %v2375 = vsel %vm2363, %v2357, %v2374
    %v2376 = vsel %vm2362, %v2373, %v2375
    %v2377 = vshll.u32 %v2337, 8
    %v2378 = vmul.u32.u64.compose %v2377, %v2376
    %v2379 = vextract.low.u32 %v2378
    %v2380 = vextract.high.u32 %v2378
    %v2381 = vmul.u32.u64.compose %v2377, %v2372
    %v2382 = vextract.low.u32 %v2381
    %v2383 = vextract.high.u32 %v2381
    %v2384 = vmul.u32 %v2377, %v2368
    %v2385 = vadd.s32 %v2380, %v2382
    %vm2386 = vc.u32 %v2380, %v2382
    %v2387 = vadd.s32 %v2383, 1
    %v2388 = vsel %vm2386, %v2387, %v2383
    %v2389 = vadd.s32 %v2384, %v2388
    %v2390 = vadd.s32 %v2389, 536870912
    %v2391 = vshrl.u32 %v2390, 30
    %v2392 = vshll.u32 %v2391, 30
    %v2393 = vsub.s32 %v2389, %v2392
    %vm2394 = vcmp.lt.s32.totalorder %v2393, 0
    %v2395 = vsub.s32 0, %v2393
    %v2396 = vsel %vm2394, %v2395, %v2393
    %v2397 = vclz %v2396
    %v2398 = vsub.s32 %v2397, 2
    %vm2399 = vcmp.gt.s32.totalorder 0, %v2398
    %v2400 = vsel %vm2399, 0, %v2398
    %v2401 = vsub.s32 32, %v2400
    %v2402 = vshll.u32 %v2393, %v2400
    %v2403 = vshrl.u32 %v2385, %v2401
    %v2404 = vor.u32 %v2402, %v2403
    %v2405 = vsub.s32 4294967266, %v2400
    %v2406 = vadd.s32 %v2405, 127
    %v2407 = vshll.u32 %v2406, 23
    %v2408 = vor.u32 4788187, %v2407
    %v2409 = vand.u32 2147483647, %v2408
    %v2411 = vcvt.s32.f32 %v2404
    %v2412 = vmul.f32 %v2411, %v2409
    %v2413 = vxor.u32 %v2412, 2147483648
    %v2414 = vsel %vm2331, %v2413, %v2412
    %v2415 = vsub.s32 4, %v2391
    %v2416 = vsel %vm2331, %v2415, %v2391
    %v2417 = vsel %vm2330, %v443, %v2414
    %v2418 = vsel %vm2330, 0, %v2416
    %v2419 = vcosq.f32.pop %v2417
    %v2420 = vsinq.f32.pop %v2417
    %vm2421 = vweird.f32 %v443
    %v2422 = vadd.s32 %v2418, 3
    %v2423 = vand.u32 %v2422, 3
    %vm2424 = vcmp.lt.s32.totalorder %v2423, 2
    %vm2425 = vcmp.eq.s32.totalorder %v2423, 0
    %v2426 = vxor.u32 %v2420, 2147483648
    %v2427 = vsel %vm2425, %v2419, %v2426
    %vm2428 = vcmp.eq.s32.totalorder %v2423, 2
    %v2429 = vxor.u32 %v2419, 2147483648
    %v2430 = vsel %vm2428, %v2429, %v2420
    %v2431 = vsel %vm2424, %v2427, %v2430
    %v2432 = vsel %vm2421, nan, %v2431
    %v2433 = vand.u32 2147483647, %v444
    %vm2434 = vcmp.le.f32.partialorder %v2433, 0.7853982
    %vm2435 = vcmp.lt.s32.totalorder %v444, 0
    %v2436 = vand.u32 %v444, 2139095040
    %v2437 = vshrl.u32 %v2436, 23
    %v2438 = vsub.s32 %v2437, 127
    %v2439 = vand.u32 2147483647, %v444
    %v2440 = vand.u32 %v2439, 8388607
    %v2441 = vor.u32 %v2440, 8388608
    %v2442 = vsub.s32 0, %v2441
    %v2443 = vadd.s32 %v2438, 1
    %vm2444 = vcmp.gt.s32.totalorder %v2443, 0
    %v2445 = vsel %vm2444, %v2443, 0
    %v2446 = vshrl.u32 %v2445, 5
    %v2447 = vand.u32 %v2445, 31
    %v2448 = vsub.s32 32, %v2447
    %v2449 = vshrl.u32 683565275, %v2448
    %v2450 = vshll.u32 683565275, %v2447
    %v2451 = vshrl.u32 2475754826, %v2448
    %v2452 = vor.u32 %v2450, %v2451
    %v2453 = vshll.u32 2475754826, %v2447
    %v2454 = vshrl.u32 2131351028, %v2448
    %v2455 = vor.u32 %v2453, %v2454
    %v2456 = vshll.u32 2131351028, %v2447
    %v2457 = vshrl.u32 2102212464, %v2448
    %v2458 = vor.u32 %v2456, %v2457
    %v2459 = vshll.u32 2102212464, %v2447
    %v2460 = vshrl.u32 920167782, %v2448
    %v2461 = vor.u32 %v2459, %v2460
    %v2462 = vshll.u32 920167782, %v2447
    %v2463 = vshrl.u32 1326507024, %v2448
    %v2464 = vor.u32 %v2462, %v2463
    %vm2465 = vcmp.lt.s32.totalorder %v2446, 1
    %vm2466 = vcmp.lt.s32.totalorder %v2446, 2
    %vm2467 = vcmp.lt.s32.totalorder %v2446, 3
    %vm2468 = vcmp.lt.s32.totalorder %v2446, 4
    %v2469 = vsel %vm2465, %v2449, %v2452
    %v2470 = vsel %vm2468, %v2458, 2102212464
    %v2471 = vsel %vm2467, %v2455, %v2470
    %v2472 = vsel %vm2466, %v2469, %v2471
    %v2473 = vsel %vm2465, %v2452, %v2455
    %v2474 = vsel %vm2468, %v2461, 920167782
    %v2475 = vsel %vm2467, %v2458, %v2474
    %v2476 = vsel %vm2466, %v2473, %v2475
    %v2477 = vsel %vm2465, %v2455, %v2458
    %v2478 = vsel %vm2468, %v2464, 1326507024
    %v2479 = vsel %vm2467, %v2461, %v2478
    %v2480 = vsel %vm2466, %v2477, %v2479
    %v2481 = vshll.u32 %v2441, 8
    %v2482 = vmul.u32.u64.compose %v2481, %v2480
    %v2483 = vextract.low.u32 %v2482
    %v2484 = vextract.high.u32 %v2482
    %v2485 = vmul.u32.u64.compose %v2481, %v2476
    %v2486 = vextract.low.u32 %v2485
    %v2487 = vextract.high.u32 %v2485
    %v2488 = vmul.u32 %v2481, %v2472
    %v2489 = vadd.s32 %v2484, %v2486
    %vm2490 = vc.u32 %v2484, %v2486
    %v2491 = vadd.s32 %v2487, 1
    %v2492 = vsel %vm2490, %v2491, %v2487
    %v2493 = vadd.s32 %v2488, %v2492
    %v2494 = vadd.s32 %v2493, 536870912
    %v2495 = vshrl.u32 %v2494, 30
    %v2496 = vshll.u32 %v2495, 30
    %v2497 = vsub.s32 %v2493, %v2496
    %vm2498 = vcmp.lt.s32.totalorder %v2497, 0
    %v2499 = vsub.s32 0, %v2497
    %v2500 = vsel %vm2498, %v2499, %v2497
    %v2501 = vclz %v2500
    %v2502 = vsub.s32 %v2501, 2
    %vm2503 = vcmp.gt.s32.totalorder 0, %v2502
    %v2504 = vsel %vm2503, 0, %v2502
    %v2505 = vsub.s32 32, %v2504
    %v2506 = vshll.u32 %v2497, %v2504
    %v2507 = vshrl.u32 %v2489, %v2505
    %v2508 = vor.u32 %v2506, %v2507
    %v2509 = vsub.s32 4294967266, %v2504
    %v2510 = vadd.s32 %v2509, 127
    %v2511 = vshll.u32 %v2510, 23
    %v2512 = vor.u32 4788187, %v2511
    %v2513 = vand.u32 2147483647, %v2512
    %v2515 = vcvt.s32.f32 %v2508
    %v2516 = vmul.f32 %v2515, %v2513
    %v2517 = vxor.u32 %v2516, 2147483648
    %v2518 = vsel %vm2435, %v2517, %v2516
    %v2519 = vsub.s32 4, %v2495
    %v2520 = vsel %vm2435, %v2519, %v2495
    %v2521 = vsel %vm2434, %v444, %v2518
    %v2522 = vsel %vm2434, 0, %v2520
    %v2523 = vcosq.f32.pop %v2521
    %v2524 = vsinq.f32.pop %v2521
    %vm2525 = vweird.f32 %v444
    %v2526 = vadd.s32 %v2522, 3
    %v2527 = vand.u32 %v2526, 3
    %vm2528 = vcmp.lt.s32.totalorder %v2527, 2
    %vm2529 = vcmp.eq.s32.totalorder %v2527, 0
    %v2530 = vxor.u32 %v2524, 2147483648
    %v2531 = vsel %vm2529, %v2523, %v2530
    %vm2532 = vcmp.eq.s32.totalorder %v2527, 2
    %v2533 = vxor.u32 %v2523, 2147483648
    %v2534 = vsel %vm2532, %v2533, %v2524
    %v2535 = vsel %vm2528, %v2531, %v2534
    %v2536 = vsel %vm2525, nan, %v2535
    %v2537 = vand.u32 2147483647, %v445
    %vm2538 = vcmp.le.f32.partialorder %v2537, 0.7853982
    %vm2539 = vcmp.lt.s32.totalorder %v445, 0
    %v2540 = vand.u32 %v445, 2139095040
    %v2541 = vshrl.u32 %v2540, 23
    %v2542 = vsub.s32 %v2541, 127
    %v2543 = vand.u32 2147483647, %v445
    %v2544 = vand.u32 %v2543, 8388607
    %v2545 = vor.u32 %v2544, 8388608
    %v2546 = vsub.s32 0, %v2545
    %v2547 = vadd.s32 %v2542, 1
    %vm2548 = vcmp.gt.s32.totalorder %v2547, 0
    %v2549 = vsel %vm2548, %v2547, 0
    %v2550 = vshrl.u32 %v2549, 5
    %v2551 = vand.u32 %v2549, 31
    %v2552 = vsub.s32 32, %v2551
    %v2553 = vshrl.u32 683565275, %v2552
    %v2554 = vshll.u32 683565275, %v2551
    %v2555 = vshrl.u32 2475754826, %v2552
    %v2556 = vor.u32 %v2554, %v2555
    %v2557 = vshll.u32 2475754826, %v2551
    %v2558 = vshrl.u32 2131351028, %v2552
    %v2559 = vor.u32 %v2557, %v2558
    %v2560 = vshll.u32 2131351028, %v2551
    %v2561 = vshrl.u32 2102212464, %v2552
    %v2562 = vor.u32 %v2560, %v2561
    %v2563 = vshll.u32 2102212464, %v2551
    %v2564 = vshrl.u32 920167782, %v2552
    %v2565 = vor.u32 %v2563, %v2564
    %v2566 = vshll.u32 920167782, %v2551
    %v2567 = vshrl.u32 1326507024, %v2552
    %v2568 = vor.u32 %v2566, %v2567
    %vm2569 = vcmp.lt.s32.totalorder %v2550, 1
    %vm2570 = vcmp.lt.s32.totalorder %v2550, 2
    %vm2571 = vcmp.lt.s32.totalorder %v2550, 3
    %vm2572 = vcmp.lt.s32.totalorder %v2550, 4
    %v2573 = vsel %vm2569, %v2553, %v2556
    %v2574 = vsel %vm2572, %v2562, 2102212464
    %v2575 = vsel %vm2571, %v2559, %v2574
    %v2576 = vsel %vm2570, %v2573, %v2575
    %v2577 = vsel %vm2569, %v2556, %v2559
    %v2578 = vsel %vm2572, %v2565, 920167782
    %v2579 = vsel %vm2571, %v2562, %v2578
    %v2580 = vsel %vm2570, %v2577, %v2579
    %v2581 = vsel %vm2569, %v2559, %v2562
    %v2582 = vsel %vm2572, %v2568, 1326507024
    %v2583 = vsel %vm2571, %v2565, %v2582
    %v2584 = vsel %vm2570, %v2581, %v2583
    %v2585 = vshll.u32 %v2545, 8
    %v2586 = vmul.u32.u64.compose %v2585, %v2584
    %v2587 = vextract.low.u32 %v2586
    %v2588 = vextract.high.u32 %v2586
    %v2589 = vmul.u32.u64.compose %v2585, %v2580
    %v2590 = vextract.low.u32 %v2589
    %v2591 = vextract.high.u32 %v2589
    %v2592 = vmul.u32 %v2585, %v2576
    %v2593 = vadd.s32 %v2588, %v2590
    %vm2594 = vc.u32 %v2588, %v2590
    %v2595 = vadd.s32 %v2591, 1
    %v2596 = vsel %vm2594, %v2595, %v2591
    %v2597 = vadd.s32 %v2592, %v2596
    %v2598 = vadd.s32 %v2597, 536870912
    %v2599 = vshrl.u32 %v2598, 30
    %v2600 = vshll.u32 %v2599, 30
    %v2601 = vsub.s32 %v2597, %v2600
    %vm2602 = vcmp.lt.s32.totalorder %v2601, 0
    %v2603 = vsub.s32 0, %v2601
    %v2604 = vsel %vm2602, %v2603, %v2601
    %v2605 = vclz %v2604
    %v2606 = vsub.s32 %v2605, 2
    %vm2607 = vcmp.gt.s32.totalorder 0, %v2606
    %v2608 = vsel %vm2607, 0, %v2606
    %v2609 = vsub.s32 32, %v2608
    %v2610 = vshll.u32 %v2601, %v2608
    %v2611 = vshrl.u32 %v2593, %v2609
    %v2612 = vor.u32 %v2610, %v2611
    %v2613 = vsub.s32 4294967266, %v2608
    %v2614 = vadd.s32 %v2613, 127
    %v2615 = vshll.u32 %v2614, 23
    %v2616 = vor.u32 4788187, %v2615
    %v2617 = vand.u32 2147483647, %v2616
    %v2619 = vcvt.s32.f32 %v2612
    %v2620 = vmul.f32 %v2619, %v2617
    %v2621 = vxor.u32 %v2620, 2147483648
    %v2622 = vsel %vm2539, %v2621, %v2620
    %v2623 = vsub.s32 4, %v2599
    %v2624 = vsel %vm2539, %v2623, %v2599
    %v2625 = vsel %vm2538, %v445, %v2622
    %v2626 = vsel %vm2538, 0, %v2624
    %v2627 = vcosq.f32.pop %v2625
    %v2628 = vsinq.f32.pop %v2625
    %vm2629 = vweird.f32 %v445
    %v2630 = vadd.s32 %v2626, 3
    %v2631 = vand.u32 %v2630, 3
    %vm2632 = vcmp.lt.s32.totalorder %v2631, 2
    %vm2633 = vcmp.eq.s32.totalorder %v2631, 0
    %v2634 = vxor.u32 %v2628, 2147483648
    %v2635 = vsel %vm2633, %v2627, %v2634
    %vm2636 = vcmp.eq.s32.totalorder %v2631, 2
    %v2637 = vxor.u32 %v2627, 2147483648
    %v2638 = vsel %vm2636, %v2637, %v2628
    %v2639 = vsel %vm2632, %v2635, %v2638
    %v2640 = vsel %vm2629, nan, %v2639
    %v2641 = vand.u32 2147483647, %v446
    %vm2642 = vcmp.le.f32.partialorder %v2641, 0.7853982
    %vm2643 = vcmp.lt.s32.totalorder %v446, 0
    %v2644 = vand.u32 %v446, 2139095040
    %v2645 = vshrl.u32 %v2644, 23
    %v2646 = vsub.s32 %v2645, 127
    %v2647 = vand.u32 2147483647, %v446
    %v2648 = vand.u32 %v2647, 8388607
    %v2649 = vor.u32 %v2648, 8388608
    %v2650 = vsub.s32 0, %v2649
    %v2651 = vadd.s32 %v2646, 1
    %vm2652 = vcmp.gt.s32.totalorder %v2651, 0
    %v2653 = vsel %vm2652, %v2651, 0
    %v2654 = vshrl.u32 %v2653, 5
    %v2655 = vand.u32 %v2653, 31
    %v2656 = vsub.s32 32, %v2655
    %v2657 = vshrl.u32 683565275, %v2656
    %v2658 = vshll.u32 683565275, %v2655
    %v2659 = vshrl.u32 2475754826, %v2656
    %v2660 = vor.u32 %v2658, %v2659
    %v2661 = vshll.u32 2475754826, %v2655
    %v2662 = vshrl.u32 2131351028, %v2656
    %v2663 = vor.u32 %v2661, %v2662
    %v2664 = vshll.u32 2131351028, %v2655
    %v2665 = vshrl.u32 2102212464, %v2656
    %v2666 = vor.u32 %v2664, %v2665
    %v2667 = vshll.u32 2102212464, %v2655
    %v2668 = vshrl.u32 920167782, %v2656
    %v2669 = vor.u32 %v2667, %v2668
    %v2670 = vshll.u32 920167782, %v2655
    %v2671 = vshrl.u32 1326507024, %v2656
    %v2672 = vor.u32 %v2670, %v2671
    %vm2673 = vcmp.lt.s32.totalorder %v2654, 1
    %vm2674 = vcmp.lt.s32.totalorder %v2654, 2
    %vm2675 = vcmp.lt.s32.totalorder %v2654, 3
    %vm2676 = vcmp.lt.s32.totalorder %v2654, 4
    %v2677 = vsel %vm2673, %v2657, %v2660
    %v2678 = vsel %vm2676, %v2666, 2102212464
    %v2679 = vsel %vm2675, %v2663, %v2678
    %v2680 = vsel %vm2674, %v2677, %v2679
    %v2681 = vsel %vm2673, %v2660, %v2663
    %v2682 = vsel %vm2676, %v2669, 920167782
    %v2683 = vsel %vm2675, %v2666, %v2682
    %v2684 = vsel %vm2674, %v2681, %v2683
    %v2685 = vsel %vm2673, %v2663, %v2666
    %v2686 = vsel %vm2676, %v2672, 1326507024
    %v2687 = vsel %vm2675, %v2669, %v2686
    %v2688 = vsel %vm2674, %v2685, %v2687
    %v2689 = vshll.u32 %v2649, 8
    %v2690 = vmul.u32.u64.compose %v2689, %v2688
    %v2691 = vextract.low.u32 %v2690
    %v2692 = vextract.high.u32 %v2690
    %v2693 = vmul.u32.u64.compose %v2689, %v2684
    %v2694 = vextract.low.u32 %v2693
    %v2695 = vextract.high.u32 %v2693
    %v2696 = vmul.u32 %v2689, %v2680
    %v2697 = vadd.s32 %v2692, %v2694
    %vm2698 = vc.u32 %v2692, %v2694
    %v2699 = vadd.s32 %v2695, 1
    %v2700 = vsel %vm2698, %v2699, %v2695
    %v2701 = vadd.s32 %v2696, %v2700
    %v2702 = vadd.s32 %v2701, 536870912
    %v2703 = vshrl.u32 %v2702, 30
    %v2704 = vshll.u32 %v2703, 30
    %v2705 = vsub.s32 %v2701, %v2704
    %vm2706 = vcmp.lt.s32.totalorder %v2705, 0
    %v2707 = vsub.s32 0, %v2705
    %v2708 = vsel %vm2706, %v2707, %v2705
    %v2709 = vclz %v2708
    %v2710 = vsub.s32 %v2709, 2
    %vm2711 = vcmp.gt.s32.totalorder 0, %v2710
    %v2712 = vsel %vm2711, 0, %v2710
    %v2713 = vsub.s32 32, %v2712
    %v2714 = vshll.u32 %v2705, %v2712
    %v2715 = vshrl.u32 %v2697, %v2713
    %v2716 = vor.u32 %v2714, %v2715
    %v2717 = vsub.s32 4294967266, %v2712
    %v2718 = vadd.s32 %v2717, 127
    %v2719 = vshll.u32 %v2718, 23
    %v2720 = vor.u32 4788187, %v2719
    %v2721 = vand.u32 2147483647, %v2720
    %v2723 = vcvt.s32.f32 %v2716
    %v2724 = vmul.f32 %v2723, %v2721
    %v2725 = vxor.u32 %v2724, 2147483648
    %v2726 = vsel %vm2643, %v2725, %v2724
    %v2727 = vsub.s32 4, %v2703
    %v2728 = vsel %vm2643, %v2727, %v2703
    %v2729 = vsel %vm2642, %v446, %v2726
    %v2730 = vsel %vm2642, 0, %v2728
    %v2731 = vcosq.f32.pop %v2729
    %v2732 = vsinq.f32.pop %v2729
    %vm2733 = vweird.f32 %v446
    %v2734 = vadd.s32 %v2730, 3
    %v2735 = vand.u32 %v2734, 3
    %vm2736 = vcmp.lt.s32.totalorder %v2735, 2
    %vm2737 = vcmp.eq.s32.totalorder %v2735, 0
    %v2738 = vxor.u32 %v2732, 2147483648
    %v2739 = vsel %vm2737, %v2731, %v2738
    %vm2740 = vcmp.eq.s32.totalorder %v2735, 2
    %v2741 = vxor.u32 %v2731, 2147483648
    %v2742 = vsel %vm2740, %v2741, %v2732
    %v2743 = vsel %vm2736, %v2739, %v2742
    %v2744 = vsel %vm2733, nan, %v2743
    %v2745 = vand.u32 2147483647, %v447
    %vm2746 = vcmp.le.f32.partialorder %v2745, 0.7853982
    %vm2747 = vcmp.lt.s32.totalorder %v447, 0
    %v2748 = vand.u32 %v447, 2139095040
    %v2749 = vshrl.u32 %v2748, 23
    %v2750 = vsub.s32 %v2749, 127
    %v2751 = vand.u32 2147483647, %v447
    %v2752 = vand.u32 %v2751, 8388607
    %v2753 = vor.u32 %v2752, 8388608
    %v2754 = vsub.s32 0, %v2753
    %v2755 = vadd.s32 %v2750, 1
    %vm2756 = vcmp.gt.s32.totalorder %v2755, 0
    %v2757 = vsel %vm2756, %v2755, 0
    %v2758 = vshrl.u32 %v2757, 5
    %v2759 = vand.u32 %v2757, 31
    %v2760 = vsub.s32 32, %v2759
    %v2761 = vshrl.u32 683565275, %v2760
    %v2762 = vshll.u32 683565275, %v2759
    %v2763 = vshrl.u32 2475754826, %v2760
    %v2764 = vor.u32 %v2762, %v2763
    %v2765 = vshll.u32 2475754826, %v2759
    %v2766 = vshrl.u32 2131351028, %v2760
    %v2767 = vor.u32 %v2765, %v2766
    %v2768 = vshll.u32 2131351028, %v2759
    %v2769 = vshrl.u32 2102212464, %v2760
    %v2770 = vor.u32 %v2768, %v2769
    %v2771 = vshll.u32 2102212464, %v2759
    %v2772 = vshrl.u32 920167782, %v2760
    %v2773 = vor.u32 %v2771, %v2772
    %v2774 = vshll.u32 920167782, %v2759
    %v2775 = vshrl.u32 1326507024, %v2760
    %v2776 = vor.u32 %v2774, %v2775
    %vm2777 = vcmp.lt.s32.totalorder %v2758, 1
    %vm2778 = vcmp.lt.s32.totalorder %v2758, 2
    %vm2779 = vcmp.lt.s32.totalorder %v2758, 3
    %vm2780 = vcmp.lt.s32.totalorder %v2758, 4
    %v2781 = vsel %vm2777, %v2761, %v2764
    %v2782 = vsel %vm2780, %v2770, 2102212464
    %v2783 = vsel %vm2779, %v2767, %v2782
    %v2784 = vsel %vm2778, %v2781, %v2783
    %v2785 = vsel %vm2777, %v2764, %v2767
    %v2786 = vsel %vm2780, %v2773, 920167782
    %v2787 = vsel %vm2779, %v2770, %v2786
    %v2788 = vsel %vm2778, %v2785, %v2787
    %v2789 = vsel %vm2777, %v2767, %v2770
    %v2790 = vsel %vm2780, %v2776, 1326507024
    %v2791 = vsel %vm2779, %v2773, %v2790
    %v2792 = vsel %vm2778, %v2789, %v2791
    %v2793 = vshll.u32 %v2753, 8
    %v2794 = vmul.u32.u64.compose %v2793, %v2792
    %v2795 = vextract.low.u32 %v2794
    %v2796 = vextract.high.u32 %v2794
    %v2797 = vmul.u32.u64.compose %v2793, %v2788
    %v2798 = vextract.low.u32 %v2797
    %v2799 = vextract.high.u32 %v2797
    %v2800 = vmul.u32 %v2793, %v2784
    %v2801 = vadd.s32 %v2796, %v2798
    %vm2802 = vc.u32 %v2796, %v2798
    %v2803 = vadd.s32 %v2799, 1
    %v2804 = vsel %vm2802, %v2803, %v2799
    %v2805 = vadd.s32 %v2800, %v2804
    %v2806 = vadd.s32 %v2805, 536870912
    %v2807 = vshrl.u32 %v2806, 30
    %v2808 = vshll.u32 %v2807, 30
    %v2809 = vsub.s32 %v2805, %v2808
    %vm2810 = vcmp.lt.s32.totalorder %v2809, 0
    %v2811 = vsub.s32 0, %v2809
    %v2812 = vsel %vm2810, %v2811, %v2809
    %v2813 = vclz %v2812
    %v2814 = vsub.s32 %v2813, 2
    %vm2815 = vcmp.gt.s32.totalorder 0, %v2814
    %v2816 = vsel %vm2815, 0, %v2814
    %v2817 = vsub.s32 32, %v2816
    %v2818 = vshll.u32 %v2809, %v2816
    %v2819 = vshrl.u32 %v2801, %v2817
    %v2820 = vor.u32 %v2818, %v2819
    %v2821 = vsub.s32 4294967266, %v2816
    %v2822 = vadd.s32 %v2821, 127
    %v2823 = vshll.u32 %v2822, 23
    %v2824 = vor.u32 4788187, %v2823
    %v2825 = vand.u32 2147483647, %v2824
    %v2827 = vcvt.s32.f32 %v2820
    %v2828 = vmul.f32 %v2827, %v2825
    %v2829 = vxor.u32 %v2828, 2147483648
    %v2830 = vsel %vm2747, %v2829, %v2828
    %v2831 = vsub.s32 4, %v2807
    %v2832 = vsel %vm2747, %v2831, %v2807
    %v2833 = vsel %vm2746, %v447, %v2830
    %v2834 = vsel %vm2746, 0, %v2832
    %v2835 = vcosq.f32.pop %v2833
    %v2836 = vsinq.f32.pop %v2833
    %vm2837 = vweird.f32 %v447
    %v2838 = vadd.s32 %v2834, 3
    %v2839 = vand.u32 %v2838, 3
    %vm2840 = vcmp.lt.s32.totalorder %v2839, 2
    %vm2841 = vcmp.eq.s32.totalorder %v2839, 0
    %v2842 = vxor.u32 %v2836, 2147483648
    %v2843 = vsel %vm2841, %v2835, %v2842
    %vm2844 = vcmp.eq.s32.totalorder %v2839, 2
    %v2845 = vxor.u32 %v2835, 2147483648
    %v2846 = vsel %vm2844, %v2845, %v2836
    %v2847 = vsel %vm2840, %v2843, %v2846
    %v2848 = vsel %vm2837, nan, %v2847
    %v2849 = vand.u32 2147483647, %v448
    %vm2850 = vcmp.le.f32.partialorder %v2849, 0.7853982
    %vm2851 = vcmp.lt.s32.totalorder %v448, 0
    %v2852 = vand.u32 %v448, 2139095040
    %v2853 = vshrl.u32 %v2852, 23
    %v2854 = vsub.s32 %v2853, 127
    %v2855 = vand.u32 2147483647, %v448
    %v2856 = vand.u32 %v2855, 8388607
    %v2857 = vor.u32 %v2856, 8388608
    %v2858 = vsub.s32 0, %v2857
    %v2859 = vadd.s32 %v2854, 1
    %vm2860 = vcmp.gt.s32.totalorder %v2859, 0
    %v2861 = vsel %vm2860, %v2859, 0
    %v2862 = vshrl.u32 %v2861, 5
    %v2863 = vand.u32 %v2861, 31
    %v2864 = vsub.s32 32, %v2863
    %v2865 = vshrl.u32 683565275, %v2864
    %v2866 = vshll.u32 683565275, %v2863
    %v2867 = vshrl.u32 2475754826, %v2864
    %v2868 = vor.u32 %v2866, %v2867
    %v2869 = vshll.u32 2475754826, %v2863
    %v2870 = vshrl.u32 2131351028, %v2864
    %v2871 = vor.u32 %v2869, %v2870
    %v2872 = vshll.u32 2131351028, %v2863
    %v2873 = vshrl.u32 2102212464, %v2864
    %v2874 = vor.u32 %v2872, %v2873
    %v2875 = vshll.u32 2102212464, %v2863
    %v2876 = vshrl.u32 920167782, %v2864
    %v2877 = vor.u32 %v2875, %v2876
    %v2878 = vshll.u32 920167782, %v2863
    %v2879 = vshrl.u32 1326507024, %v2864
    %v2880 = vor.u32 %v2878, %v2879
    %vm2881 = vcmp.lt.s32.totalorder %v2862, 1
    %vm2882 = vcmp.lt.s32.totalorder %v2862, 2
    %vm2883 = vcmp.lt.s32.totalorder %v2862, 3
    %vm2884 = vcmp.lt.s32.totalorder %v2862, 4
    %v2885 = vsel %vm2881, %v2865, %v2868
    %v2886 = vsel %vm2884, %v2874, 2102212464
    %v2887 = vsel %vm2883, %v2871, %v2886
    %v2888 = vsel %vm2882, %v2885, %v2887
    %v2889 = vsel %vm2881, %v2868, %v2871
    %v2890 = vsel %vm2884, %v2877, 920167782
    %v2891 = vsel %vm2883, %v2874, %v2890
    %v2892 = vsel %vm2882, %v2889, %v2891
    %v2893 = vsel %vm2881, %v2871, %v2874
    %v2894 = vsel %vm2884, %v2880, 1326507024
    %v2895 = vsel %vm2883, %v2877, %v2894
    %v2896 = vsel %vm2882, %v2893, %v2895
    %v2897 = vshll.u32 %v2857, 8
    %v2898 = vmul.u32.u64.compose %v2897, %v2896
    %v2899 = vextract.low.u32 %v2898
    %v2900 = vextract.high.u32 %v2898
    %v2901 = vmul.u32.u64.compose %v2897, %v2892
    %v2902 = vextract.low.u32 %v2901
    %v2903 = vextract.high.u32 %v2901
    %v2904 = vmul.u32 %v2897, %v2888
    %v2905 = vadd.s32 %v2900, %v2902
    %vm2906 = vc.u32 %v2900, %v2902
    %v2907 = vadd.s32 %v2903, 1
    %v2908 = vsel %vm2906, %v2907, %v2903
    %v2909 = vadd.s32 %v2904, %v2908
    %v2910 = vadd.s32 %v2909, 536870912
    %v2911 = vshrl.u32 %v2910, 30
    %v2912 = vshll.u32 %v2911, 30
    %v2913 = vsub.s32 %v2909, %v2912
    %vm2914 = vcmp.lt.s32.totalorder %v2913, 0
    %v2915 = vsub.s32 0, %v2913
    %v2916 = vsel %vm2914, %v2915, %v2913
    %v2917 = vclz %v2916
    %v2918 = vsub.s32 %v2917, 2
    %vm2919 = vcmp.gt.s32.totalorder 0, %v2918
    %v2920 = vsel %vm2919, 0, %v2918
    %v2921 = vsub.s32 32, %v2920
    %v2922 = vshll.u32 %v2913, %v2920
    %v2923 = vshrl.u32 %v2905, %v2921
    %v2924 = vor.u32 %v2922, %v2923
    %v2925 = vsub.s32 4294967266, %v2920
    %v2926 = vadd.s32 %v2925, 127
    %v2927 = vshll.u32 %v2926, 23
    %v2928 = vor.u32 4788187, %v2927
    %v2929 = vand.u32 2147483647, %v2928
    %v2931 = vcvt.s32.f32 %v2924
    %v2932 = vmul.f32 %v2931, %v2929
    %v2933 = vxor.u32 %v2932, 2147483648
    %v2934 = vsel %vm2851, %v2933, %v2932
    %v2935 = vsub.s32 4, %v2911
    %v2936 = vsel %vm2851, %v2935, %v2911
    %v2937 = vsel %vm2850, %v448, %v2934
    %v2938 = vsel %vm2850, 0, %v2936
    %v2939 = vcosq.f32.pop %v2937
    %v2940 = vsinq.f32.pop %v2937
    %vm2941 = vweird.f32 %v448
    %v2942 = vadd.s32 %v2938, 3
    %v2943 = vand.u32 %v2942, 3
    %vm2944 = vcmp.lt.s32.totalorder %v2943, 2
    %vm2945 = vcmp.eq.s32.totalorder %v2943, 0
    %v2946 = vxor.u32 %v2940, 2147483648
    %v2947 = vsel %vm2945, %v2939, %v2946
    %vm2948 = vcmp.eq.s32.totalorder %v2943, 2
    %v2949 = vxor.u32 %v2939, 2147483648
    %v2950 = vsel %vm2948, %v2949, %v2940
    %v2951 = vsel %vm2944, %v2947, %v2950
    %v2952 = vsel %vm2941, nan, %v2951
    %v2953 = vand.u32 2147483647, %v449
    %vm2954 = vcmp.le.f32.partialorder %v2953, 0.7853982
    %vm2955 = vcmp.lt.s32.totalorder %v449, 0
    %v2956 = vand.u32 %v449, 2139095040
    %v2957 = vshrl.u32 %v2956, 23
    %v2958 = vsub.s32 %v2957, 127
    %v2959 = vand.u32 2147483647, %v449
    %v2960 = vand.u32 %v2959, 8388607
    %v2961 = vor.u32 %v2960, 8388608
    %v2962 = vsub.s32 0, %v2961
    %v2963 = vadd.s32 %v2958, 1
    %vm2964 = vcmp.gt.s32.totalorder %v2963, 0
    %v2965 = vsel %vm2964, %v2963, 0
    %v2966 = vshrl.u32 %v2965, 5
    %v2967 = vand.u32 %v2965, 31
    %v2968 = vsub.s32 32, %v2967
    %v2969 = vshrl.u32 683565275, %v2968
    %v2970 = vshll.u32 683565275, %v2967
    %v2971 = vshrl.u32 2475754826, %v2968
    %v2972 = vor.u32 %v2970, %v2971
    %v2973 = vshll.u32 2475754826, %v2967
    %v2974 = vshrl.u32 2131351028, %v2968
    %v2975 = vor.u32 %v2973, %v2974
    %v2976 = vshll.u32 2131351028, %v2967
    %v2977 = vshrl.u32 2102212464, %v2968
    %v2978 = vor.u32 %v2976, %v2977
    %v2979 = vshll.u32 2102212464, %v2967
    %v2980 = vshrl.u32 920167782, %v2968
    %v2981 = vor.u32 %v2979, %v2980
    %v2982 = vshll.u32 920167782, %v2967
    %v2983 = vshrl.u32 1326507024, %v2968
    %v2984 = vor.u32 %v2982, %v2983
    %vm2985 = vcmp.lt.s32.totalorder %v2966, 1
    %vm2986 = vcmp.lt.s32.totalorder %v2966, 2
    %vm2987 = vcmp.lt.s32.totalorder %v2966, 3
    %vm2988 = vcmp.lt.s32.totalorder %v2966, 4
    %v2989 = vsel %vm2985, %v2969, %v2972
    %v2990 = vsel %vm2988, %v2978, 2102212464
    %v2991 = vsel %vm2987, %v2975, %v2990
    %v2992 = vsel %vm2986, %v2989, %v2991
    %v2993 = vsel %vm2985, %v2972, %v2975
    %v2994 = vsel %vm2988, %v2981, 920167782
    %v2995 = vsel %vm2987, %v2978, %v2994
    %v2996 = vsel %vm2986, %v2993, %v2995
    %v2997 = vsel %vm2985, %v2975, %v2978
    %v2998 = vsel %vm2988, %v2984, 1326507024
    %v2999 = vsel %vm2987, %v2981, %v2998
    %v3000 = vsel %vm2986, %v2997, %v2999
    %v3001 = vshll.u32 %v2961, 8
    %v3002 = vmul.u32.u64.compose %v3001, %v3000
    %v3003 = vextract.low.u32 %v3002
    %v3004 = vextract.high.u32 %v3002
    %v3005 = vmul.u32.u64.compose %v3001, %v2996
    %v3006 = vextract.low.u32 %v3005
    %v3007 = vextract.high.u32 %v3005
    %v3008 = vmul.u32 %v3001, %v2992
    %v3009 = vadd.s32 %v3004, %v3006
    %vm3010 = vc.u32 %v3004, %v3006
    %v3011 = vadd.s32 %v3007, 1
    %v3012 = vsel %vm3010, %v3011, %v3007
    %v3013 = vadd.s32 %v3008, %v3012
    %v3014 = vadd.s32 %v3013, 536870912
    %v3015 = vshrl.u32 %v3014, 30
    %v3016 = vshll.u32 %v3015, 30
    %v3017 = vsub.s32 %v3013, %v3016
    %vm3018 = vcmp.lt.s32.totalorder %v3017, 0
    %v3019 = vsub.s32 0, %v3017
    %v3020 = vsel %vm3018, %v3019, %v3017
    %v3021 = vclz %v3020
    %v3022 = vsub.s32 %v3021, 2
    %vm3023 = vcmp.gt.s32.totalorder 0, %v3022
    %v3024 = vsel %vm3023, 0, %v3022
    %v3025 = vsub.s32 32, %v3024
    %v3026 = vshll.u32 %v3017, %v3024
    %v3027 = vshrl.u32 %v3009, %v3025
    %v3028 = vor.u32 %v3026, %v3027
    %v3029 = vsub.s32 4294967266, %v3024
    %v3030 = vadd.s32 %v3029, 127
    %v3031 = vshll.u32 %v3030, 23
    %v3032 = vor.u32 4788187, %v3031
    %v3033 = vand.u32 2147483647, %v3032
    %v3035 = vcvt.s32.f32 %v3028
    %v3036 = vmul.f32 %v3035, %v3033
    %v3037 = vxor.u32 %v3036, 2147483648
    %v3038 = vsel %vm2955, %v3037, %v3036
    %v3039 = vsub.s32 4, %v3015
    %v3040 = vsel %vm2955, %v3039, %v3015
    %v3041 = vsel %vm2954, %v449, %v3038
    %v3042 = vsel %vm2954, 0, %v3040
    %v3043 = vcosq.f32.pop %v3041
    %v3044 = vsinq.f32.pop %v3041
    %vm3045 = vweird.f32 %v449
    %v3046 = vadd.s32 %v3042, 3
    %v3047 = vand.u32 %v3046, 3
    %vm3048 = vcmp.lt.s32.totalorder %v3047, 2
    %vm3049 = vcmp.eq.s32.totalorder %v3047, 0
    %v3050 = vxor.u32 %v3044, 2147483648
    %v3051 = vsel %vm3049, %v3043, %v3050
    %vm3052 = vcmp.eq.s32.totalorder %v3047, 2
    %v3053 = vxor.u32 %v3043, 2147483648
    %v3054 = vsel %vm3052, %v3053, %v3044
    %v3055 = vsel %vm3048, %v3051, %v3054
    %v3056 = vsel %vm3045, nan, %v3055
    %v3057 = vand.u32 2147483647, %v450
    %vm3058 = vcmp.le.f32.partialorder %v3057, 0.7853982
    %vm3059 = vcmp.lt.s32.totalorder %v450, 0
    %v3060 = vand.u32 %v450, 2139095040
    %v3061 = vshrl.u32 %v3060, 23
    %v3062 = vsub.s32 %v3061, 127
    %v3063 = vand.u32 2147483647, %v450
    %v3064 = vand.u32 %v3063, 8388607
    %v3065 = vor.u32 %v3064, 8388608
    %v3066 = vsub.s32 0, %v3065
    %v3067 = vadd.s32 %v3062, 1
    %vm3068 = vcmp.gt.s32.totalorder %v3067, 0
    %v3069 = vsel %vm3068, %v3067, 0
    %v3070 = vshrl.u32 %v3069, 5
    %v3071 = vand.u32 %v3069, 31
    %v3072 = vsub.s32 32, %v3071
    %v3073 = vshrl.u32 683565275, %v3072
    %v3074 = vshll.u32 683565275, %v3071
    %v3075 = vshrl.u32 2475754826, %v3072
    %v3076 = vor.u32 %v3074, %v3075
    %v3077 = vshll.u32 2475754826, %v3071
    %v3078 = vshrl.u32 2131351028, %v3072
    %v3079 = vor.u32 %v3077, %v3078
    %v3080 = vshll.u32 2131351028, %v3071
    %v3081 = vshrl.u32 2102212464, %v3072
    %v3082 = vor.u32 %v3080, %v3081
    %v3083 = vshll.u32 2102212464, %v3071
    %v3084 = vshrl.u32 920167782, %v3072
    %v3085 = vor.u32 %v3083, %v3084
    %v3086 = vshll.u32 920167782, %v3071
    %v3087 = vshrl.u32 1326507024, %v3072
    %v3088 = vor.u32 %v3086, %v3087
    %vm3089 = vcmp.lt.s32.totalorder %v3070, 1
    %vm3090 = vcmp.lt.s32.totalorder %v3070, 2
    %vm3091 = vcmp.lt.s32.totalorder %v3070, 3
    %vm3092 = vcmp.lt.s32.totalorder %v3070, 4
    %v3093 = vsel %vm3089, %v3073, %v3076
    %v3094 = vsel %vm3092, %v3082, 2102212464
    %v3095 = vsel %vm3091, %v3079, %v3094
    %v3096 = vsel %vm3090, %v3093, %v3095
    %v3097 = vsel %vm3089, %v3076, %v3079
    %v3098 = vsel %vm3092, %v3085, 920167782
    %v3099 = vsel %vm3091, %v3082, %v3098
    %v3100 = vsel %vm3090, %v3097, %v3099
    %v3101 = vsel %vm3089, %v3079, %v3082
    %v3102 = vsel %vm3092, %v3088, 1326507024
    %v3103 = vsel %vm3091, %v3085, %v3102
    %v3104 = vsel %vm3090, %v3101, %v3103
    %v3105 = vshll.u32 %v3065, 8
    %v3106 = vmul.u32.u64.compose %v3105, %v3104
    %v3107 = vextract.low.u32 %v3106
    %v3108 = vextract.high.u32 %v3106
    %v3109 = vmul.u32.u64.compose %v3105, %v3100
    %v3110 = vextract.low.u32 %v3109
    %v3111 = vextract.high.u32 %v3109
    %v3112 = vmul.u32 %v3105, %v3096
    %v3113 = vadd.s32 %v3108, %v3110
    %vm3114 = vc.u32 %v3108, %v3110
    %v3115 = vadd.s32 %v3111, 1
    %v3116 = vsel %vm3114, %v3115, %v3111
    %v3117 = vadd.s32 %v3112, %v3116
    %v3118 = vadd.s32 %v3117, 536870912
    %v3119 = vshrl.u32 %v3118, 30
    %v3120 = vshll.u32 %v3119, 30
    %v3121 = vsub.s32 %v3117, %v3120
    %vm3122 = vcmp.lt.s32.totalorder %v3121, 0
    %v3123 = vsub.s32 0, %v3121
    %v3124 = vsel %vm3122, %v3123, %v3121
    %v3125 = vclz %v3124
    %v3126 = vsub.s32 %v3125, 2
    %vm3127 = vcmp.gt.s32.totalorder 0, %v3126
    %v3128 = vsel %vm3127, 0, %v3126
    %v3129 = vsub.s32 32, %v3128
    %v3130 = vshll.u32 %v3121, %v3128
    %v3131 = vshrl.u32 %v3113, %v3129
    %v3132 = vor.u32 %v3130, %v3131
    %v3133 = vsub.s32 4294967266, %v3128
    %v3134 = vadd.s32 %v3133, 127
    %v3135 = vshll.u32 %v3134, 23
    %v3136 = vor.u32 4788187, %v3135
    %v3137 = vand.u32 2147483647, %v3136
    %v3139 = vcvt.s32.f32 %v3132
    %v3140 = vmul.f32 %v3139, %v3137
    %v3141 = vxor.u32 %v3140, 2147483648
    %v3142 = vsel %vm3059, %v3141, %v3140
    %v3143 = vsub.s32 4, %v3119
    %v3144 = vsel %vm3059, %v3143, %v3119
    %v3145 = vsel %vm3058, %v450, %v3142
    %v3146 = vsel %vm3058, 0, %v3144
    %v3147 = vcosq.f32.pop %v3145
    %v3148 = vsinq.f32.pop %v3145
    %vm3149 = vweird.f32 %v450
    %v3150 = vadd.s32 %v3146, 3
    %v3151 = vand.u32 %v3150, 3
    %vm3152 = vcmp.lt.s32.totalorder %v3151, 2
    %vm3153 = vcmp.eq.s32.totalorder %v3151, 0
    %v3154 = vxor.u32 %v3148, 2147483648
    %v3155 = vsel %vm3153, %v3147, %v3154
    %vm3156 = vcmp.eq.s32.totalorder %v3151, 2
    %v3157 = vxor.u32 %v3147, 2147483648
    %v3158 = vsel %vm3156, %v3157, %v3148
    %v3159 = vsel %vm3152, %v3155, %v3158
    %v3160 = vsel %vm3149, nan, %v3159
    %v3161 = vand.u32 2147483647, %v451
    %vm3162 = vcmp.le.f32.partialorder %v3161, 0.7853982
    %vm3163 = vcmp.lt.s32.totalorder %v451, 0
    %v3164 = vand.u32 %v451, 2139095040
    %v3165 = vshrl.u32 %v3164, 23
    %v3166 = vsub.s32 %v3165, 127
    %v3167 = vand.u32 2147483647, %v451
    %v3168 = vand.u32 %v3167, 8388607
    %v3169 = vor.u32 %v3168, 8388608
    %v3170 = vsub.s32 0, %v3169
    %v3171 = vadd.s32 %v3166, 1
    %vm3172 = vcmp.gt.s32.totalorder %v3171, 0
    %v3173 = vsel %vm3172, %v3171, 0
    %v3174 = vshrl.u32 %v3173, 5
    %v3175 = vand.u32 %v3173, 31
    %v3176 = vsub.s32 32, %v3175
    %v3177 = vshrl.u32 683565275, %v3176
    %v3178 = vshll.u32 683565275, %v3175
    %v3179 = vshrl.u32 2475754826, %v3176
    %v3180 = vor.u32 %v3178, %v3179
    %v3181 = vshll.u32 2475754826, %v3175
    %v3182 = vshrl.u32 2131351028, %v3176
    %v3183 = vor.u32 %v3181, %v3182
    %v3184 = vshll.u32 2131351028, %v3175
    %v3185 = vshrl.u32 2102212464, %v3176
    %v3186 = vor.u32 %v3184, %v3185
    %v3187 = vshll.u32 2102212464, %v3175
    %v3188 = vshrl.u32 920167782, %v3176
    %v3189 = vor.u32 %v3187, %v3188
    %v3190 = vshll.u32 920167782, %v3175
    %v3191 = vshrl.u32 1326507024, %v3176
    %v3192 = vor.u32 %v3190, %v3191
    %vm3193 = vcmp.lt.s32.totalorder %v3174, 1
    %vm3194 = vcmp.lt.s32.totalorder %v3174, 2
    %vm3195 = vcmp.lt.s32.totalorder %v3174, 3
    %vm3196 = vcmp.lt.s32.totalorder %v3174, 4
    %v3197 = vsel %vm3193, %v3177, %v3180
    %v3198 = vsel %vm3196, %v3186, 2102212464
    %v3199 = vsel %vm3195, %v3183, %v3198
    %v3200 = vsel %vm3194, %v3197, %v3199
    %v3201 = vsel %vm3193, %v3180, %v3183
    %v3202 = vsel %vm3196, %v3189, 920167782
    %v3203 = vsel %vm3195, %v3186, %v3202
    %v3204 = vsel %vm3194, %v3201, %v3203
    %v3205 = vsel %vm3193, %v3183, %v3186
    %v3206 = vsel %vm3196, %v3192, 1326507024
    %v3207 = vsel %vm3195, %v3189, %v3206
    %v3208 = vsel %vm3194, %v3205, %v3207
    %v3209 = vshll.u32 %v3169, 8
    %v3210 = vmul.u32.u64.compose %v3209, %v3208
    %v3211 = vextract.low.u32 %v3210
    %v3212 = vextract.high.u32 %v3210
    %v3213 = vmul.u32.u64.compose %v3209, %v3204
    %v3214 = vextract.low.u32 %v3213
    %v3215 = vextract.high.u32 %v3213
    %v3216 = vmul.u32 %v3209, %v3200
    %v3217 = vadd.s32 %v3212, %v3214
    %vm3218 = vc.u32 %v3212, %v3214
    %v3219 = vadd.s32 %v3215, 1
    %v3220 = vsel %vm3218, %v3219, %v3215
    %v3221 = vadd.s32 %v3216, %v3220
    %v3222 = vadd.s32 %v3221, 536870912
    %v3223 = vshrl.u32 %v3222, 30
    %v3224 = vshll.u32 %v3223, 30
    %v3225 = vsub.s32 %v3221, %v3224
    %vm3226 = vcmp.lt.s32.totalorder %v3225, 0
    %v3227 = vsub.s32 0, %v3225
    %v3228 = vsel %vm3226, %v3227, %v3225
    %v3229 = vclz %v3228
    %v3230 = vsub.s32 %v3229, 2
    %vm3231 = vcmp.gt.s32.totalorder 0, %v3230
    %v3232 = vsel %vm3231, 0, %v3230
    %v3233 = vsub.s32 32, %v3232
    %v3234 = vshll.u32 %v3225, %v3232
    %v3235 = vshrl.u32 %v3217, %v3233
    %v3236 = vor.u32 %v3234, %v3235
    %v3237 = vsub.s32 4294967266, %v3232
    %v3238 = vadd.s32 %v3237, 127
    %v3239 = vshll.u32 %v3238, 23
    %v3240 = vor.u32 4788187, %v3239
    %v3241 = vand.u32 2147483647, %v3240
    %v3243 = vcvt.s32.f32 %v3236
    %v3244 = vmul.f32 %v3243, %v3241
    %v3245 = vxor.u32 %v3244, 2147483648
    %v3246 = vsel %vm3163, %v3245, %v3244
    %v3247 = vsub.s32 4, %v3223
    %v3248 = vsel %vm3163, %v3247, %v3223
    %v3249 = vsel %vm3162, %v451, %v3246
    %v3250 = vsel %vm3162, 0, %v3248
    %v3251 = vcosq.f32.pop %v3249
    %v3252 = vsinq.f32.pop %v3249
    %vm3253 = vweird.f32 %v451
    %v3254 = vadd.s32 %v3250, 3
    %v3255 = vand.u32 %v3254, 3
    %vm3256 = vcmp.lt.s32.totalorder %v3255, 2
    %vm3257 = vcmp.eq.s32.totalorder %v3255, 0
    %v3258 = vxor.u32 %v3252, 2147483648
    %v3259 = vsel %vm3257, %v3251, %v3258
    %vm3260 = vcmp.eq.s32.totalorder %v3255, 2
    %v3261 = vxor.u32 %v3251, 2147483648
    %v3262 = vsel %vm3260, %v3261, %v3252
    %v3263 = vsel %vm3256, %v3259, %v3262
    %v3264 = vsel %vm3253, nan, %v3263
    %v3265 = vand.u32 2147483647, %v452
    %vm3266 = vcmp.le.f32.partialorder %v3265, 0.7853982
    %vm3267 = vcmp.lt.s32.totalorder %v452, 0
    %v3268 = vand.u32 %v452, 2139095040
    %v3269 = vshrl.u32 %v3268, 23
    %v3270 = vsub.s32 %v3269, 127
    %v3271 = vand.u32 2147483647, %v452
    %v3272 = vand.u32 %v3271, 8388607
    %v3273 = vor.u32 %v3272, 8388608
    %v3274 = vsub.s32 0, %v3273
    %v3275 = vadd.s32 %v3270, 1
    %vm3276 = vcmp.gt.s32.totalorder %v3275, 0
    %v3277 = vsel %vm3276, %v3275, 0
    %v3278 = vshrl.u32 %v3277, 5
    %v3279 = vand.u32 %v3277, 31
    %v3280 = vsub.s32 32, %v3279
    %v3281 = vshrl.u32 683565275, %v3280
    %v3282 = vshll.u32 683565275, %v3279
    %v3283 = vshrl.u32 2475754826, %v3280
    %v3284 = vor.u32 %v3282, %v3283
    %v3285 = vshll.u32 2475754826, %v3279
    %v3286 = vshrl.u32 2131351028, %v3280
    %v3287 = vor.u32 %v3285, %v3286
    %v3288 = vshll.u32 2131351028, %v3279
    %v3289 = vshrl.u32 2102212464, %v3280
    %v3290 = vor.u32 %v3288, %v3289
    %v3291 = vshll.u32 2102212464, %v3279
    %v3292 = vshrl.u32 920167782, %v3280
    %v3293 = vor.u32 %v3291, %v3292
    %v3294 = vshll.u32 920167782, %v3279
    %v3295 = vshrl.u32 1326507024, %v3280
    %v3296 = vor.u32 %v3294, %v3295
    %vm3297 = vcmp.lt.s32.totalorder %v3278, 1
    %vm3298 = vcmp.lt.s32.totalorder %v3278, 2
    %vm3299 = vcmp.lt.s32.totalorder %v3278, 3
    %vm3300 = vcmp.lt.s32.totalorder %v3278, 4
    %v3301 = vsel %vm3297, %v3281, %v3284
    %v3302 = vsel %vm3300, %v3290, 2102212464
    %v3303 = vsel %vm3299, %v3287, %v3302
    %v3304 = vsel %vm3298, %v3301, %v3303
    %v3305 = vsel %vm3297, %v3284, %v3287
    %v3306 = vsel %vm3300, %v3293, 920167782
    %v3307 = vsel %vm3299, %v3290, %v3306
    %v3308 = vsel %vm3298, %v3305, %v3307
    %v3309 = vsel %vm3297, %v3287, %v3290
    %v3310 = vsel %vm3300, %v3296, 1326507024
    %v3311 = vsel %vm3299, %v3293, %v3310
    %v3312 = vsel %vm3298, %v3309, %v3311
    %v3313 = vshll.u32 %v3273, 8
    %v3314 = vmul.u32.u64.compose %v3313, %v3312
    %v3315 = vextract.low.u32 %v3314
    %v3316 = vextract.high.u32 %v3314
    %v3317 = vmul.u32.u64.compose %v3313, %v3308
    %v3318 = vextract.low.u32 %v3317
    %v3319 = vextract.high.u32 %v3317
    %v3320 = vmul.u32 %v3313, %v3304
    %v3321 = vadd.s32 %v3316, %v3318
    %vm3322 = vc.u32 %v3316, %v3318
    %v3323 = vadd.s32 %v3319, 1
    %v3324 = vsel %vm3322, %v3323, %v3319
    %v3325 = vadd.s32 %v3320, %v3324
    %v3326 = vadd.s32 %v3325, 536870912
    %v3327 = vshrl.u32 %v3326, 30
    %v3328 = vshll.u32 %v3327, 30
    %v3329 = vsub.s32 %v3325, %v3328
    %vm3330 = vcmp.lt.s32.totalorder %v3329, 0
    %v3331 = vsub.s32 0, %v3329
    %v3332 = vsel %vm3330, %v3331, %v3329
    %v3333 = vclz %v3332
    %v3334 = vsub.s32 %v3333, 2
    %vm3335 = vcmp.gt.s32.totalorder 0, %v3334
    %v3336 = vsel %vm3335, 0, %v3334
    %v3337 = vsub.s32 32, %v3336
    %v3338 = vshll.u32 %v3329, %v3336
    %v3339 = vshrl.u32 %v3321, %v3337
    %v3340 = vor.u32 %v3338, %v3339
    %v3341 = vsub.s32 4294967266, %v3336
    %v3342 = vadd.s32 %v3341, 127
    %v3343 = vshll.u32 %v3342, 23
    %v3344 = vor.u32 4788187, %v3343
    %v3345 = vand.u32 2147483647, %v3344
    %v3347 = vcvt.s32.f32 %v3340
    %v3348 = vmul.f32 %v3347, %v3345
    %v3349 = vxor.u32 %v3348, 2147483648
    %v3350 = vsel %vm3267, %v3349, %v3348
    %v3351 = vsub.s32 4, %v3327
    %v3352 = vsel %vm3267, %v3351, %v3327
    %v3353 = vsel %vm3266, %v452, %v3350
    %v3354 = vsel %vm3266, 0, %v3352
    %v3355 = vcosq.f32.pop %v3353
    %v3356 = vsinq.f32.pop %v3353
    %vm3357 = vweird.f32 %v452
    %v3358 = vadd.s32 %v3354, 3
    %v3359 = vand.u32 %v3358, 3
    %vm3360 = vcmp.lt.s32.totalorder %v3359, 2
    %vm3361 = vcmp.eq.s32.totalorder %v3359, 0
    %v3362 = vxor.u32 %v3356, 2147483648
    %v3363 = vsel %vm3361, %v3355, %v3362
    %vm3364 = vcmp.eq.s32.totalorder %v3359, 2
    %v3365 = vxor.u32 %v3355, 2147483648
    %v3366 = vsel %vm3364, %v3365, %v3356
    %v3367 = vsel %vm3360, %v3363, %v3366
    %v3368 = vsel %vm3357, nan, %v3367
    %v3369 = vand.u32 2147483647, %v453
    %vm3370 = vcmp.le.f32.partialorder %v3369, 0.7853982
    %vm3371 = vcmp.lt.s32.totalorder %v453, 0
    %v3372 = vand.u32 %v453, 2139095040
    %v3373 = vshrl.u32 %v3372, 23
    %v3374 = vsub.s32 %v3373, 127
    %v3375 = vand.u32 2147483647, %v453
    %v3376 = vand.u32 %v3375, 8388607
    %v3377 = vor.u32 %v3376, 8388608
    %v3378 = vsub.s32 0, %v3377
    %v3379 = vadd.s32 %v3374, 1
    %vm3380 = vcmp.gt.s32.totalorder %v3379, 0
    %v3381 = vsel %vm3380, %v3379, 0
    %v3382 = vshrl.u32 %v3381, 5
    %v3383 = vand.u32 %v3381, 31
    %v3384 = vsub.s32 32, %v3383
    %v3385 = vshrl.u32 683565275, %v3384
    %v3386 = vshll.u32 683565275, %v3383
    %v3387 = vshrl.u32 2475754826, %v3384
    %v3388 = vor.u32 %v3386, %v3387
    %v3389 = vshll.u32 2475754826, %v3383
    %v3390 = vshrl.u32 2131351028, %v3384
    %v3391 = vor.u32 %v3389, %v3390
    %v3392 = vshll.u32 2131351028, %v3383
    %v3393 = vshrl.u32 2102212464, %v3384
    %v3394 = vor.u32 %v3392, %v3393
    %v3395 = vshll.u32 2102212464, %v3383
    %v3396 = vshrl.u32 920167782, %v3384
    %v3397 = vor.u32 %v3395, %v3396
    %v3398 = vshll.u32 920167782, %v3383
    %v3399 = vshrl.u32 1326507024, %v3384
    %v3400 = vor.u32 %v3398, %v3399
    %vm3401 = vcmp.lt.s32.totalorder %v3382, 1
    %vm3402 = vcmp.lt.s32.totalorder %v3382, 2
    %vm3403 = vcmp.lt.s32.totalorder %v3382, 3
    %vm3404 = vcmp.lt.s32.totalorder %v3382, 4
    %v3405 = vsel %vm3401, %v3385, %v3388
    %v3406 = vsel %vm3404, %v3394, 2102212464
    %v3407 = vsel %vm3403, %v3391, %v3406
    %v3408 = vsel %vm3402, %v3405, %v3407
    %v3409 = vsel %vm3401, %v3388, %v3391
    %v3410 = vsel %vm3404, %v3397, 920167782
    %v3411 = vsel %vm3403, %v3394, %v3410
    %v3412 = vsel %vm3402, %v3409, %v3411
    %v3413 = vsel %vm3401, %v3391, %v3394
    %v3414 = vsel %vm3404, %v3400, 1326507024
    %v3415 = vsel %vm3403, %v3397, %v3414
    %v3416 = vsel %vm3402, %v3413, %v3415
    %v3417 = vshll.u32 %v3377, 8
    %v3418 = vmul.u32.u64.compose %v3417, %v3416
    %v3419 = vextract.low.u32 %v3418
    %v3420 = vextract.high.u32 %v3418
    %v3421 = vmul.u32.u64.compose %v3417, %v3412
    %v3422 = vextract.low.u32 %v3421
    %v3423 = vextract.high.u32 %v3421
    %v3424 = vmul.u32 %v3417, %v3408
    %v3425 = vadd.s32 %v3420, %v3422
    %vm3426 = vc.u32 %v3420, %v3422
    %v3427 = vadd.s32 %v3423, 1
    %v3428 = vsel %vm3426, %v3427, %v3423
    %v3429 = vadd.s32 %v3424, %v3428
    %v3430 = vadd.s32 %v3429, 536870912
    %v3431 = vshrl.u32 %v3430, 30
    %v3432 = vshll.u32 %v3431, 30
    %v3433 = vsub.s32 %v3429, %v3432
    %vm3434 = vcmp.lt.s32.totalorder %v3433, 0
    %v3435 = vsub.s32 0, %v3433
    %v3436 = vsel %vm3434, %v3435, %v3433
    %v3437 = vclz %v3436
    %v3438 = vsub.s32 %v3437, 2
    %vm3439 = vcmp.gt.s32.totalorder 0, %v3438
    %v3440 = vsel %vm3439, 0, %v3438
    %v3441 = vsub.s32 32, %v3440
    %v3442 = vshll.u32 %v3433, %v3440
    %v3443 = vshrl.u32 %v3425, %v3441
    %v3444 = vor.u32 %v3442, %v3443
    %v3445 = vsub.s32 4294967266, %v3440
    %v3446 = vadd.s32 %v3445, 127
    %v3447 = vshll.u32 %v3446, 23
    %v3448 = vor.u32 4788187, %v3447
    %v3449 = vand.u32 2147483647, %v3448
    %v3451 = vcvt.s32.f32 %v3444
    %v3452 = vmul.f32 %v3451, %v3449
    %v3453 = vxor.u32 %v3452, 2147483648
    %v3454 = vsel %vm3371, %v3453, %v3452
    %v3455 = vsub.s32 4, %v3431
    %v3456 = vsel %vm3371, %v3455, %v3431
    %v3457 = vsel %vm3370, %v453, %v3454
    %v3458 = vsel %vm3370, 0, %v3456
    %v3459 = vcosq.f32.pop %v3457
    %v3460 = vsinq.f32.pop %v3457
    %vm3461 = vweird.f32 %v453
    %v3462 = vadd.s32 %v3458, 3
    %v3463 = vand.u32 %v3462, 3
    %vm3464 = vcmp.lt.s32.totalorder %v3463, 2
    %vm3465 = vcmp.eq.s32.totalorder %v3463, 0
    %v3466 = vxor.u32 %v3460, 2147483648
    %v3467 = vsel %vm3465, %v3459, %v3466
    %vm3468 = vcmp.eq.s32.totalorder %v3463, 2
    %v3469 = vxor.u32 %v3459, 2147483648
    %v3470 = vsel %vm3468, %v3469, %v3460
    %v3471 = vsel %vm3464, %v3467, %v3470
    %v3472 = vsel %vm3461, nan, %v3471
    %v3473 = vand.u32 2147483647, %v454
    %vm3474 = vcmp.le.f32.partialorder %v3473, 0.7853982
    %vm3475 = vcmp.lt.s32.totalorder %v454, 0
    %v3476 = vand.u32 %v454, 2139095040
    %v3477 = vshrl.u32 %v3476, 23
    %v3478 = vsub.s32 %v3477, 127
    %v3479 = vand.u32 2147483647, %v454
    %v3480 = vand.u32 %v3479, 8388607
    %v3481 = vor.u32 %v3480, 8388608
    %v3482 = vsub.s32 0, %v3481
    %v3483 = vadd.s32 %v3478, 1
    %vm3484 = vcmp.gt.s32.totalorder %v3483, 0
    %v3485 = vsel %vm3484, %v3483, 0
    %v3486 = vshrl.u32 %v3485, 5
    %v3487 = vand.u32 %v3485, 31
    %v3488 = vsub.s32 32, %v3487
    %v3489 = vshrl.u32 683565275, %v3488
    %v3490 = vshll.u32 683565275, %v3487
    %v3491 = vshrl.u32 2475754826, %v3488
    %v3492 = vor.u32 %v3490, %v3491
    %v3493 = vshll.u32 2475754826, %v3487
    %v3494 = vshrl.u32 2131351028, %v3488
    %v3495 = vor.u32 %v3493, %v3494
    %v3496 = vshll.u32 2131351028, %v3487
    %v3497 = vshrl.u32 2102212464, %v3488
    %v3498 = vor.u32 %v3496, %v3497
    %v3499 = vshll.u32 2102212464, %v3487
    %v3500 = vshrl.u32 920167782, %v3488
    %v3501 = vor.u32 %v3499, %v3500
    %v3502 = vshll.u32 920167782, %v3487
    %v3503 = vshrl.u32 1326507024, %v3488
    %v3504 = vor.u32 %v3502, %v3503
    %vm3505 = vcmp.lt.s32.totalorder %v3486, 1
    %vm3506 = vcmp.lt.s32.totalorder %v3486, 2
    %vm3507 = vcmp.lt.s32.totalorder %v3486, 3
    %vm3508 = vcmp.lt.s32.totalorder %v3486, 4
    %v3509 = vsel %vm3505, %v3489, %v3492
    %v3510 = vsel %vm3508, %v3498, 2102212464
    %v3511 = vsel %vm3507, %v3495, %v3510
    %v3512 = vsel %vm3506, %v3509, %v3511
    %v3513 = vsel %vm3505, %v3492, %v3495
    %v3514 = vsel %vm3508, %v3501, 920167782
    %v3515 = vsel %vm3507, %v3498, %v3514
    %v3516 = vsel %vm3506, %v3513, %v3515
    %v3517 = vsel %vm3505, %v3495, %v3498
    %v3518 = vsel %vm3508, %v3504, 1326507024
    %v3519 = vsel %vm3507, %v3501, %v3518
    %v3520 = vsel %vm3506, %v3517, %v3519
    %v3521 = vshll.u32 %v3481, 8
    %v3522 = vmul.u32.u64.compose %v3521, %v3520
    %v3523 = vextract.low.u32 %v3522
    %v3524 = vextract.high.u32 %v3522
    %v3525 = vmul.u32.u64.compose %v3521, %v3516
    %v3526 = vextract.low.u32 %v3525
    %v3527 = vextract.high.u32 %v3525
    %v3528 = vmul.u32 %v3521, %v3512
    %v3529 = vadd.s32 %v3524, %v3526
    %vm3530 = vc.u32 %v3524, %v3526
    %v3531 = vadd.s32 %v3527, 1
    %v3532 = vsel %vm3530, %v3531, %v3527
    %v3533 = vadd.s32 %v3528, %v3532
    %v3534 = vadd.s32 %v3533, 536870912
    %v3535 = vshrl.u32 %v3534, 30
    %v3536 = vshll.u32 %v3535, 30
    %v3537 = vsub.s32 %v3533, %v3536
    %vm3538 = vcmp.lt.s32.totalorder %v3537, 0
    %v3539 = vsub.s32 0, %v3537
    %v3540 = vsel %vm3538, %v3539, %v3537
    %v3541 = vclz %v3540
    %v3542 = vsub.s32 %v3541, 2
    %vm3543 = vcmp.gt.s32.totalorder 0, %v3542
    %v3544 = vsel %vm3543, 0, %v3542
    %v3545 = vsub.s32 32, %v3544
    %v3546 = vshll.u32 %v3537, %v3544
    %v3547 = vshrl.u32 %v3529, %v3545
    %v3548 = vor.u32 %v3546, %v3547
    %v3549 = vsub.s32 4294967266, %v3544
    %v3550 = vadd.s32 %v3549, 127
    %v3551 = vshll.u32 %v3550, 23
    %v3552 = vor.u32 4788187, %v3551
    %v3553 = vand.u32 2147483647, %v3552
    %v3555 = vcvt.s32.f32 %v3548
    %v3556 = vmul.f32 %v3555, %v3553
    %v3557 = vxor.u32 %v3556, 2147483648
    %v3558 = vsel %vm3475, %v3557, %v3556
    %v3559 = vsub.s32 4, %v3535
    %v3560 = vsel %vm3475, %v3559, %v3535
    %v3561 = vsel %vm3474, %v454, %v3558
    %v3562 = vsel %vm3474, 0, %v3560
    %v3563 = vcosq.f32.pop %v3561
    %v3564 = vsinq.f32.pop %v3561
    %vm3565 = vweird.f32 %v454
    %v3566 = vadd.s32 %v3562, 3
    %v3567 = vand.u32 %v3566, 3
    %vm3568 = vcmp.lt.s32.totalorder %v3567, 2
    %vm3569 = vcmp.eq.s32.totalorder %v3567, 0
    %v3570 = vxor.u32 %v3564, 2147483648
    %v3571 = vsel %vm3569, %v3563, %v3570
    %vm3572 = vcmp.eq.s32.totalorder %v3567, 2
    %v3573 = vxor.u32 %v3563, 2147483648
    %v3574 = vsel %vm3572, %v3573, %v3564
    %v3575 = vsel %vm3568, %v3571, %v3574
    %v3576 = vsel %vm3565, nan, %v3575
    %v3577 = vand.u32 2147483647, %v455
    %vm3578 = vcmp.le.f32.partialorder %v3577, 0.7853982
    %vm3579 = vcmp.lt.s32.totalorder %v455, 0
    %v3580 = vand.u32 %v455, 2139095040
    %v3581 = vshrl.u32 %v3580, 23
    %v3582 = vsub.s32 %v3581, 127
    %v3583 = vand.u32 2147483647, %v455
    %v3584 = vand.u32 %v3583, 8388607
    %v3585 = vor.u32 %v3584, 8388608
    %v3586 = vsub.s32 0, %v3585
    %v3587 = vadd.s32 %v3582, 1
    %vm3588 = vcmp.gt.s32.totalorder %v3587, 0
    %v3589 = vsel %vm3588, %v3587, 0
    %v3590 = vshrl.u32 %v3589, 5
    %v3591 = vand.u32 %v3589, 31
    %v3592 = vsub.s32 32, %v3591
    %v3593 = vshrl.u32 683565275, %v3592
    %v3594 = vshll.u32 683565275, %v3591
    %v3595 = vshrl.u32 2475754826, %v3592
    %v3596 = vor.u32 %v3594, %v3595
    %v3597 = vshll.u32 2475754826, %v3591
    %v3598 = vshrl.u32 2131351028, %v3592
    %v3599 = vor.u32 %v3597, %v3598
    %v3600 = vshll.u32 2131351028, %v3591
    %v3601 = vshrl.u32 2102212464, %v3592
    %v3602 = vor.u32 %v3600, %v3601
    %v3603 = vshll.u32 2102212464, %v3591
    %v3604 = vshrl.u32 920167782, %v3592
    %v3605 = vor.u32 %v3603, %v3604
    %v3606 = vshll.u32 920167782, %v3591
    %v3607 = vshrl.u32 1326507024, %v3592
    %v3608 = vor.u32 %v3606, %v3607
    %vm3609 = vcmp.lt.s32.totalorder %v3590, 1
    %vm3610 = vcmp.lt.s32.totalorder %v3590, 2
    %vm3611 = vcmp.lt.s32.totalorder %v3590, 3
    %vm3612 = vcmp.lt.s32.totalorder %v3590, 4
    %v3613 = vsel %vm3609, %v3593, %v3596
    %v3614 = vsel %vm3612, %v3602, 2102212464
    %v3615 = vsel %vm3611, %v3599, %v3614
    %v3616 = vsel %vm3610, %v3613, %v3615
    %v3617 = vsel %vm3609, %v3596, %v3599
    %v3618 = vsel %vm3612, %v3605, 920167782
    %v3619 = vsel %vm3611, %v3602, %v3618
    %v3620 = vsel %vm3610, %v3617, %v3619
    %v3621 = vsel %vm3609, %v3599, %v3602
    %v3622 = vsel %vm3612, %v3608, 1326507024
    %v3623 = vsel %vm3611, %v3605, %v3622
    %v3624 = vsel %vm3610, %v3621, %v3623
    %v3625 = vshll.u32 %v3585, 8
    %v3626 = vmul.u32.u64.compose %v3625, %v3624
    %v3627 = vextract.low.u32 %v3626
    %v3628 = vextract.high.u32 %v3626
    %v3629 = vmul.u32.u64.compose %v3625, %v3620
    %v3630 = vextract.low.u32 %v3629
    %v3631 = vextract.high.u32 %v3629
    %v3632 = vmul.u32 %v3625, %v3616
    %v3633 = vadd.s32 %v3628, %v3630
    %vm3634 = vc.u32 %v3628, %v3630
    %v3635 = vadd.s32 %v3631, 1
    %v3636 = vsel %vm3634, %v3635, %v3631
    %v3637 = vadd.s32 %v3632, %v3636
    %v3638 = vadd.s32 %v3637, 536870912
    %v3639 = vshrl.u32 %v3638, 30
    %v3640 = vshll.u32 %v3639, 30
    %v3641 = vsub.s32 %v3637, %v3640
    %vm3642 = vcmp.lt.s32.totalorder %v3641, 0
    %v3643 = vsub.s32 0, %v3641
    %v3644 = vsel %vm3642, %v3643, %v3641
    %v3645 = vclz %v3644
    %v3646 = vsub.s32 %v3645, 2
    %vm3647 = vcmp.gt.s32.totalorder 0, %v3646
    %v3648 = vsel %vm3647, 0, %v3646
    %v3649 = vsub.s32 32, %v3648
    %v3650 = vshll.u32 %v3641, %v3648
    %v3651 = vshrl.u32 %v3633, %v3649
    %v3652 = vor.u32 %v3650, %v3651
    %v3653 = vsub.s32 4294967266, %v3648
    %v3654 = vadd.s32 %v3653, 127
    %v3655 = vshll.u32 %v3654, 23
    %v3656 = vor.u32 4788187, %v3655
    %v3657 = vand.u32 2147483647, %v3656
    %v3659 = vcvt.s32.f32 %v3652
    %v3660 = vmul.f32 %v3659, %v3657
    %v3661 = vxor.u32 %v3660, 2147483648
    %v3662 = vsel %vm3579, %v3661, %v3660
    %v3663 = vsub.s32 4, %v3639
    %v3664 = vsel %vm3579, %v3663, %v3639
    %v3665 = vsel %vm3578, %v455, %v3662
    %v3666 = vsel %vm3578, 0, %v3664
    %v3667 = vcosq.f32.pop %v3665
    %v3668 = vsinq.f32.pop %v3665
    %vm3669 = vweird.f32 %v455
    %v3670 = vadd.s32 %v3666, 3
    %v3671 = vand.u32 %v3670, 3
    %vm3672 = vcmp.lt.s32.totalorder %v3671, 2
    %vm3673 = vcmp.eq.s32.totalorder %v3671, 0
    %v3674 = vxor.u32 %v3668, 2147483648
    %v3675 = vsel %vm3673, %v3667, %v3674
    %vm3676 = vcmp.eq.s32.totalorder %v3671, 2
    %v3677 = vxor.u32 %v3667, 2147483648
    %v3678 = vsel %vm3676, %v3677, %v3668
    %v3679 = vsel %vm3672, %v3675, %v3678
    %v3680 = vsel %vm3669, nan, %v3679
    %v3681 = vand.u32 2147483647, %v456
    %vm3682 = vcmp.le.f32.partialorder %v3681, 0.7853982
    %vm3683 = vcmp.lt.s32.totalorder %v456, 0
    %v3684 = vand.u32 %v456, 2139095040
    %v3685 = vshrl.u32 %v3684, 23
    %v3686 = vsub.s32 %v3685, 127
    %v3687 = vand.u32 2147483647, %v456
    %v3688 = vand.u32 %v3687, 8388607
    %v3689 = vor.u32 %v3688, 8388608
    %v3690 = vsub.s32 0, %v3689
    %v3691 = vadd.s32 %v3686, 1
    %vm3692 = vcmp.gt.s32.totalorder %v3691, 0
    %v3693 = vsel %vm3692, %v3691, 0
    %v3694 = vshrl.u32 %v3693, 5
    %v3695 = vand.u32 %v3693, 31
    %v3696 = vsub.s32 32, %v3695
    %v3697 = vshrl.u32 683565275, %v3696
    %v3698 = vshll.u32 683565275, %v3695
    %v3699 = vshrl.u32 2475754826, %v3696
    %v3700 = vor.u32 %v3698, %v3699
    %v3701 = vshll.u32 2475754826, %v3695
    %v3702 = vshrl.u32 2131351028, %v3696
    %v3703 = vor.u32 %v3701, %v3702
    %v3704 = vshll.u32 2131351028, %v3695
    %v3705 = vshrl.u32 2102212464, %v3696
    %v3706 = vor.u32 %v3704, %v3705
    %v3707 = vshll.u32 2102212464, %v3695
    %v3708 = vshrl.u32 920167782, %v3696
    %v3709 = vor.u32 %v3707, %v3708
    %v3710 = vshll.u32 920167782, %v3695
    %v3711 = vshrl.u32 1326507024, %v3696
    %v3712 = vor.u32 %v3710, %v3711
    %vm3713 = vcmp.lt.s32.totalorder %v3694, 1
    %vm3714 = vcmp.lt.s32.totalorder %v3694, 2
    %vm3715 = vcmp.lt.s32.totalorder %v3694, 3
    %vm3716 = vcmp.lt.s32.totalorder %v3694, 4
    %v3717 = vsel %vm3713, %v3697, %v3700
    %v3718 = vsel %vm3716, %v3706, 2102212464
    %v3719 = vsel %vm3715, %v3703, %v3718
    %v3720 = vsel %vm3714, %v3717, %v3719
    %v3721 = vsel %vm3713, %v3700, %v3703
    %v3722 = vsel %vm3716, %v3709, 920167782
    %v3723 = vsel %vm3715, %v3706, %v3722
    %v3724 = vsel %vm3714, %v3721, %v3723
    %v3725 = vsel %vm3713, %v3703, %v3706
    %v3726 = vsel %vm3716, %v3712, 1326507024
    %v3727 = vsel %vm3715, %v3709, %v3726
    %v3728 = vsel %vm3714, %v3725, %v3727
    %v3729 = vshll.u32 %v3689, 8
    %v3730 = vmul.u32.u64.compose %v3729, %v3728
    %v3731 = vextract.low.u32 %v3730
    %v3732 = vextract.high.u32 %v3730
    %v3733 = vmul.u32.u64.compose %v3729, %v3724
    %v3734 = vextract.low.u32 %v3733
    %v3735 = vextract.high.u32 %v3733
    %v3736 = vmul.u32 %v3729, %v3720
    %v3737 = vadd.s32 %v3732, %v3734
    %vm3738 = vc.u32 %v3732, %v3734
    %v3739 = vadd.s32 %v3735, 1
    %v3740 = vsel %vm3738, %v3739, %v3735
    %v3741 = vadd.s32 %v3736, %v3740
    %v3742 = vadd.s32 %v3741, 536870912
    %v3743 = vshrl.u32 %v3742, 30
    %v3744 = vshll.u32 %v3743, 30
    %v3745 = vsub.s32 %v3741, %v3744
    %vm3746 = vcmp.lt.s32.totalorder %v3745, 0
    %v3747 = vsub.s32 0, %v3745
    %v3748 = vsel %vm3746, %v3747, %v3745
    %v3749 = vclz %v3748
    %v3750 = vsub.s32 %v3749, 2
    %vm3751 = vcmp.gt.s32.totalorder 0, %v3750
    %v3752 = vsel %vm3751, 0, %v3750
    %v3753 = vsub.s32 32, %v3752
    %v3754 = vshll.u32 %v3745, %v3752
    %v3755 = vshrl.u32 %v3737, %v3753
    %v3756 = vor.u32 %v3754, %v3755
    %v3757 = vsub.s32 4294967266, %v3752
    %v3758 = vadd.s32 %v3757, 127
    %v3759 = vshll.u32 %v3758, 23
    %v3760 = vor.u32 4788187, %v3759
    %v3761 = vand.u32 2147483647, %v3760
    %v3763 = vcvt.s32.f32 %v3756
    %v3764 = vmul.f32 %v3763, %v3761
    %v3765 = vxor.u32 %v3764, 2147483648
    %v3766 = vsel %vm3683, %v3765, %v3764
    %v3767 = vsub.s32 4, %v3743
    %v3768 = vsel %vm3683, %v3767, %v3743
    %v3769 = vsel %vm3682, %v456, %v3766
    %v3770 = vsel %vm3682, 0, %v3768
    %v3771 = vcosq.f32.pop %v3769
    %v3772 = vsinq.f32.pop %v3769
    %vm3773 = vweird.f32 %v456
    %v3774 = vadd.s32 %v3770, 3
    %v3775 = vand.u32 %v3774, 3
    %vm3776 = vcmp.lt.s32.totalorder %v3775, 2
    %vm3777 = vcmp.eq.s32.totalorder %v3775, 0
    %v3778 = vxor.u32 %v3772, 2147483648
    %v3779 = vsel %vm3777, %v3771, %v3778
    %vm3780 = vcmp.eq.s32.totalorder %v3775, 2
    %v3781 = vxor.u32 %v3771, 2147483648
    %v3782 = vsel %vm3780, %v3781, %v3772
    %v3783 = vsel %vm3776, %v3779, %v3782
    %v3784 = vsel %vm3773, nan, %v3783
    %v3785 = vld [vmem:[%s4] sm:$0xff]
    %v3786 = vld [vmem:[%s4 + $0x8] sm:$0xff]
    %v3787 = vld [vmem:[%s4 + $0x10] sm:$0xff]
    %v3788 = vld [vmem:[%s4 + $0x18] sm:$0xff]
    %v3789 = vld [vmem:[%s4 + $0x20] sm:$0xff]
    %v3790 = vld [vmem:[%s4 + $0x28] sm:$0xff]
    %v3791 = vld [vmem:[%s4 + $0x30] sm:$0xff]
    %v3792 = vld [vmem:[%s4 + $0x38] sm:$0xff]
    %v3793 = vld [vmem:[%s4 + $0x40] sm:$0xff]
    %v3794 = vld [vmem:[%s4 + $0x48] sm:$0xff]
    %v3795 = vld [vmem:[%s4 + $0x50] sm:$0xff]
    %v3796 = vld [vmem:[%s4 + $0x58] sm:$0xff]
    %v3797 = vld [vmem:[%s4 + $0x60] sm:$0xff]
    %v3798 = vld [vmem:[%s4 + $0x68] sm:$0xff]
    %v3799 = vld [vmem:[%s4 + $0x70] sm:$0xff]
    %v3800 = vld [vmem:[%s4 + $0x78] sm:$0xff]
    %s3801 = sld [smem:[#allocation2 + $0x1]]
    %v3802 = vld [vmem:[%s5] sm:$0x1]
    %v3804 = vlaneseq
    %v3805 = vshrl.u32 %v3804, 7
    %v3806 = vsub.s32 0, %v3805
    %v3807 = vrot.slane %v3802, %v3806
    %3809 = vmatprep.subr.mxu0 0.0
    %3810 = vmatpush1.msra.mxu0 %v3785
    %3811 = vmatprep.subr.mxu0 0.0
    %3812 = vmatpush1.msra.mxu0 %v3786
    %3813 = vmatprep.subr.mxu0 0.0
    %3814 = vmatpush1.msra.mxu0 %v3787
    %3815 = vmatprep.subr.mxu0 0.0
    %3816 = vmatpush1.msra.mxu0 %v3788
    %3817 = vmatprep.subr.mxu0 0.0
    %3818 = vmatpush1.msra.mxu0 %v3789
    %3819 = vmatprep.subr.mxu0 0.0
    %3820 = vmatpush1.msra.mxu0 %v3790
    %3821 = vmatprep.subr.mxu0 0.0
    %3822 = vmatpush1.msra.mxu0 %v3791
    %3823 = vmatprep.subr.mxu0 0.0
    %3824 = vmatpush1.msra.mxu0 %v3792
    %3825 = vmatprep.subr.mxu0 0.0
    %3826 = vmatpush1.msra.mxu0 %v3793
    %3827 = vmatprep.subr.mxu0 0.0
    %3828 = vmatpush1.msra.mxu0 %v3794
    %3829 = vmatprep.subr.mxu0 0.0
    %3830 = vmatpush1.msra.mxu0 %v3795
    %3831 = vmatprep.subr.mxu0 0.0
    %3832 = vmatpush1.msra.mxu0 %v3796
    %3833 = vmatprep.subr.mxu0 0.0
    %3834 = vmatpush1.msra.mxu0 %v3797
    %3835 = vmatprep.subr.mxu0 0.0
    %3836 = vmatpush1.msra.mxu0 %v3798
    %3837 = vmatprep.subr.mxu0 0.0
    %3838 = vmatpush1.msra.mxu0 %v3799
    %3839 = vmatprep.subr.mxu0 0.0
    %3840 = vmatpush1.msra.mxu0 %v3800
    %3841 = vmatprep.subr.mxu0 0.0
    %3842 = vmatpush1.msra.mxu0 0.0
    %3843 = vmatprep.subr.mxu0 0.0
    %3844 = vmatpush1.msra.mxu0 0.0
    %3845 = vmatprep.subr.mxu0 0.0
    %3846 = vmatpush1.msra.mxu0 0.0
    %3847 = vmatprep.subr.mxu0 0.0
    %3848 = vmatpush1.msra.mxu0 0.0
    %3849 = vmatprep.subr.mxu0 0.0
    %3850 = vmatpush1.msra.mxu0 0.0
    %3851 = vmatprep.subr.mxu0 0.0
    %3852 = vmatpush1.msra.mxu0 0.0
    %3853 = vmatprep.subr.mxu0 0.0
    %3854 = vmatpush1.msra.mxu0 0.0
    %3855 = vmatprep.subr.mxu0 0.0
    %3856 = vmatpush1.msra.mxu0 0.0
    %3857 = vmatprep.subr.mxu0 0.0
    %3858 = vmatpush1.msra.mxu0 0.0
    %3859 = vmatprep.subr.mxu0 0.0
    %3860 = vmatpush1.msra.mxu0 0.0
    %3861 = vmatprep.subr.mxu0 0.0
    %3862 = vmatpush1.msra.mxu0 0.0
    %3863 = vmatprep.subr.mxu0 0.0
    %3864 = vmatpush1.msra.mxu0 0.0
    %3865 = vmatprep.subr.mxu0 0.0
    %3866 = vmatpush1.msra.mxu0 0.0
    %3867 = vmatprep.subr.mxu0 0.0
    %3868 = vmatpush1.msra.mxu0 0.0
    %3869 = vmatprep.subr.mxu0 0.0
    %3870 = vmatpush1.msra.mxu0 0.0
    %3871 = vmatprep.subr.mxu0 0.0
    %3872 = vmatpush1.msra.mxu0 0.0
    %3873 = vmatprep.mubr.f32.mxu0 0.0
    %3874 = vmatmul.mubr.f32.gmra.mrb[0].mxu0 %v560
    %v3875 = vpop.f32.mrb[0].mxu0
    %v3876 = vadd.f32 %v3807, %v3875
    %v3877 = vpop.f32.mrb[0].mxu0
    %3878 = vmatprep.mubr.f32.mxu0 0.0
    %3879 = vmatmul.mubr.f32.gmra.mrb[0].mxu0 %v664
    %v3880 = vpop.f32.mrb[0].mxu0
    %v3881 = vadd.f32 %v3807, %v3880
    %v3882 = vpop.f32.mrb[0].mxu0
    %3883 = vmatprep.mubr.f32.mxu0 0.0
    %3884 = vmatmul.mubr.f32.gmra.mrb[0].mxu0 %v768
    %v3885 = vpop.f32.mrb[0].mxu0
    %v3886 = vadd.f32 %v3807, %v3885
    %v3887 = vpop.f32.mrb[0].mxu0
    %3888 = vmatprep.mubr.f32.mxu0 0.0
    %3889 = vmatmul.mubr.f32.gmra.mrb[0].mxu0 %v872
    %v3890 = vpop.f32.mrb[0].mxu0
    %v3891 = vadd.f32 %v3807, %v3890
    %v3892 = vpop.f32.mrb[0].mxu0
    %3893 = vmatprep.mubr.f32.mxu0 0.0
    %3894 = vmatmul.mubr.f32.gmra.mrb[0].mxu0 %v976
    %v3895 = vpop.f32.mrb[0].mxu0
    %v3896 = vadd.f32 %v3807, %v3895
    %v3897 = vpop.f32.mrb[0].mxu0
    %3898 = vmatprep.mubr.f32.mxu0 0.0
    %3899 = vmatmul.mubr.f32.gmra.mrb[0].mxu0 %v1080
    %v3900 = vpop.f32.mrb[0].mxu0
    %v3901 = vadd.f32 %v3807, %v3900
    %v3902 = vpop.f32.mrb[0].mxu0
    %3903 = vmatprep.mubr.f32.mxu0 0.0
    %3904 = vmatmul.mubr.f32.gmra.mrb[0].mxu0 %v1184
    %v3905 = vpop.f32.mrb[0].mxu0
    %v3906 = vadd.f32 %v3807, %v3905
    %v3907 = vpop.f32.mrb[0].mxu0
    %3908 = vmatprep.mubr.f32.mxu0 0.0
    %3909 = vmatmul.mubr.f32.gmra.mrb[0].mxu0 %v1288
    %v3910 = vpop.f32.mrb[0].mxu0
    %v3911 = vadd.f32 %v3807, %v3910
    %v3912 = vpop.f32.mrb[0].mxu0
    %3913 = vmatprep.mubr.f32.mxu0 0.0
    %3914 = vmatmul.mubr.f32.gmra.mrb[0].mxu0 %v1392
    %v3915 = vpop.f32.mrb[0].mxu0
    %v3916 = vadd.f32 %v3807, %v3915
    %v3917 = vpop.f32.mrb[0].mxu0
    %3918 = vmatprep.mubr.f32.mxu0 0.0
    %3919 = vmatmul.mubr.f32.gmra.mrb[0].mxu0 %v1496
    %v3920 = vpop.f32.mrb[0].mxu0
    %v3921 = vadd.f32 %v3807, %v3920
    %v3922 = vpop.f32.mrb[0].mxu0
    %3923 = vmatprep.mubr.f32.mxu0 0.0
    %3924 = vmatmul.mubr.f32.gmra.mrb[0].mxu0 %v1600
    %v3925 = vpop.f32.mrb[0].mxu0
    %v3926 = vadd.f32 %v3807, %v3925
    %v3927 = vpop.f32.mrb[0].mxu0
    %3928 = vmatprep.mubr.f32.mxu0 0.0
    %3929 = vmatmul.mubr.f32.gmra.mrb[0].mxu0 %v1704
    %v3930 = vpop.f32.mrb[0].mxu0
    %v3931 = vadd.f32 %v3807, %v3930
    %v3932 = vpop.f32.mrb[0].mxu0
    %3933 = vmatprep.mubr.f32.mxu0 0.0
    %3934 = vmatmul.mubr.f32.gmra.mrb[0].mxu0 %v1808
    %v3935 = vpop.f32.mrb[0].mxu0
    %v3936 = vadd.f32 %v3807, %v3935
    %v3937 = vpop.f32.mrb[0].mxu0
    %3938 = vmatprep.mubr.f32.mxu0 0.0
    %3939 = vmatmul.mubr.f32.gmra.mrb[0].mxu0 %v1912
    %v3940 = vpop.f32.mrb[0].mxu0
    %v3941 = vadd.f32 %v3807, %v3940
    %v3942 = vpop.f32.mrb[0].mxu0
    %3943 = vmatprep.mubr.f32.mxu0 0.0
    %3944 = vmatmul.mubr.f32.gmra.mrb[0].mxu0 %v2016
    %v3945 = vpop.f32.mrb[0].mxu0
    %v3946 = vadd.f32 %v3807, %v3945
    %v3947 = vpop.f32.mrb[0].mxu0
    %3948 = vmatprep.mubr.f32.mxu0 0.0
    %3949 = vmatmul.mubr.f32.gmra.mrb[0].mxu0 %v2120
    %v3950 = vpop.f32.mrb[0].mxu0
    %v3951 = vadd.f32 %v3807, %v3950
    %v3952 = vpop.f32.mrb[0].mxu0
    %3953 = vmatprep.mubr.f32.mxu0 0.0
    %3954 = vmatmul.mubr.f32.gmra.mrb[0].mxu0 %v2224
    %v3955 = vpop.f32.mrb[0].mxu0
    %v3956 = vadd.f32 %v3807, %v3955
    %v3957 = vpop.f32.mrb[0].mxu0
    %3958 = vmatprep.mubr.f32.mxu0 0.0
    %3959 = vmatmul.mubr.f32.gmra.mrb[0].mxu0 %v2328
    %v3960 = vpop.f32.mrb[0].mxu0
    %v3961 = vadd.f32 %v3807, %v3960
    %v3962 = vpop.f32.mrb[0].mxu0
    %3963 = vmatprep.mubr.f32.mxu0 0.0
    %3964 = vmatmul.mubr.f32.gmra.mrb[0].mxu0 %v2432
    %v3965 = vpop.f32.mrb[0].mxu0
    %v3966 = vadd.f32 %v3807, %v3965
    %v3967 = vpop.f32.mrb[0].mxu0
    %3968 = vmatprep.mubr.f32.mxu0 0.0
    %3969 = vmatmul.mubr.f32.gmra.mrb[0].mxu0 %v2536
    %v3970 = vpop.f32.mrb[0].mxu0
    %v3971 = vadd.f32 %v3807, %v3970
    %v3972 = vpop.f32.mrb[0].mxu0
    %3973 = vmatprep.mubr.f32.mxu0 0.0
    %3974 = vmatmul.mubr.f32.gmra.mrb[0].mxu0 %v2640
    %v3975 = vpop.f32.mrb[0].mxu0
    %v3976 = vadd.f32 %v3807, %v3975
    %v3977 = vpop.f32.mrb[0].mxu0
    %3978 = vmatprep.mubr.f32.mxu0 0.0
    %3979 = vmatmul.mubr.f32.gmra.mrb[0].mxu0 %v2744
    %v3980 = vpop.f32.mrb[0].mxu0
    %v3981 = vadd.f32 %v3807, %v3980
    %v3982 = vpop.f32.mrb[0].mxu0
    %3983 = vmatprep.mubr.f32.mxu0 0.0
    %3984 = vmatmul.mubr.f32.gmra.mrb[0].mxu0 %v2848
    %v3985 = vpop.f32.mrb[0].mxu0
    %v3986 = vadd.f32 %v3807, %v3985
    %v3987 = vpop.f32.mrb[0].mxu0
    %3988 = vmatprep.mubr.f32.mxu0 0.0
    %3989 = vmatmul.mubr.f32.gmra.mrb[0].mxu0 %v2952
    %v3990 = vpop.f32.mrb[0].mxu0
    %v3991 = vadd.f32 %v3807, %v3990
    %v3992 = vpop.f32.mrb[0].mxu0
    %3993 = vmatprep.mubr.f32.mxu0 0.0
    %3994 = vmatmul.mubr.f32.gmra.mrb[0].mxu0 %v3056
    %v3995 = vpop.f32.mrb[0].mxu0
    %v3996 = vadd.f32 %v3807, %v3995
    %v3997 = vpop.f32.mrb[0].mxu0
    %3998 = vmatprep.mubr.f32.mxu0 0.0
    %3999 = vmatmul.mubr.f32.gmra.mrb[0].mxu0 %v3160
    %v4000 = vpop.f32.mrb[0].mxu0
    %v4001 = vadd.f32 %v3807, %v4000
    %v4002 = vpop.f32.mrb[0].mxu0
    %4003 = vmatprep.mubr.f32.mxu0 0.0
    %4004 = vmatmul.mubr.f32.gmra.mrb[0].mxu0 %v3264
    %v4005 = vpop.f32.mrb[0].mxu0
    %v4006 = vadd.f32 %v3807, %v4005
    %v4007 = vpop.f32.mrb[0].mxu0
    %4008 = vmatprep.mubr.f32.mxu0 0.0
    %4009 = vmatmul.mubr.f32.gmra.mrb[0].mxu0 %v3368
    %v4010 = vpop.f32.mrb[0].mxu0
    %v4011 = vadd.f32 %v3807, %v4010
    %v4012 = vpop.f32.mrb[0].mxu0
    %4013 = vmatprep.mubr.f32.mxu0 0.0
    %4014 = vmatmul.mubr.f32.gmra.mrb[0].mxu0 %v3472
    %v4015 = vpop.f32.mrb[0].mxu0
    %v4016 = vadd.f32 %v3807, %v4015
    %v4017 = vpop.f32.mrb[0].mxu0
    %4018 = vmatprep.mubr.f32.mxu0 0.0
    %4019 = vmatmul.mubr.f32.gmra.mrb[0].mxu0 %v3576
    %v4020 = vpop.f32.mrb[0].mxu0
    %v4021 = vadd.f32 %v3807, %v4020
    %v4022 = vpop.f32.mrb[0].mxu0
    %4023 = vmatprep.mubr.f32.mxu0 0.0
    %4024 = vmatmul.mubr.f32.gmra.mrb[0].mxu0 %v3680
    %v4025 = vpop.f32.mrb[0].mxu0
    %v4026 = vadd.f32 %v3807, %v4025
    %v4027 = vpop.f32.mrb[0].mxu0
    %4028 = vmatprep.mubr.f32.mxu0 0.0
    %4029 = vmatmul.mubr.f32.gmra.mrb[0].mxu0 %v3784
    %v4030 = vpop.f32.mrb[0].mxu0
    %v4031 = vadd.f32 %v3807, %v4030
    %v4032 = vpop.f32.mrb[0].mxu0
    %4033 = vdwg.mxu0
    %v4034 = vstv %s3801
    %v4035 = vmul.f32 %v4034, %v3876
    %v4036 = vmul.f32 %v4034, %v3881
    %v4037 = vmul.f32 %v4034, %v3886
    %v4038 = vmul.f32 %v4034, %v3891
    %v4039 = vmul.f32 %v4034, %v3896
    %v4040 = vmul.f32 %v4034, %v3901
    %v4041 = vmul.f32 %v4034, %v3906
    %v4042 = vmul.f32 %v4034, %v3911
    %v4043 = vmul.f32 %v4034, %v3916
    %v4044 = vmul.f32 %v4034, %v3921
    %v4045 = vmul.f32 %v4034, %v3926
    %v4046 = vmul.f32 %v4034, %v3931
    %v4047 = vmul.f32 %v4034, %v3936
    %v4048 = vmul.f32 %v4034, %v3941
    %v4049 = vmul.f32 %v4034, %v3946
    %v4050 = vmul.f32 %v4034, %v3951
    %v4051 = vmul.f32 %v4034, %v3956
    %v4052 = vmul.f32 %v4034, %v3961
    %v4053 = vmul.f32 %v4034, %v3966
    %v4054 = vmul.f32 %v4034, %v3971
    %v4055 = vmul.f32 %v4034, %v3976
    %v4056 = vmul.f32 %v4034, %v3981
    %v4057 = vmul.f32 %v4034, %v3986
    %v4058 = vmul.f32 %v4034, %v3991
    %v4059 = vmul.f32 %v4034, %v3996
    %v4060 = vmul.f32 %v4034, %v4001
    %v4061 = vmul.f32 %v4034, %v4006
    %v4062 = vmul.f32 %v4034, %v4011
    %v4063 = vmul.f32 %v4034, %v4016
    %v4064 = vmul.f32 %v4034, %v4021
    %v4065 = vmul.f32 %v4034, %v4026
    %v4066 = vmul.f32 %v4034, %v4031
    %v4067 = vand.u32 2147483647, %v4035
    %vm4068 = vcmp.le.f32.partialorder %v4067, 0.7853982
    %vm4069 = vcmp.lt.s32.totalorder %v4035, 0
    %v4070 = vand.u32 %v4035, 2139095040
    %v4071 = vshrl.u32 %v4070, 23
    %v4072 = vsub.s32 %v4071, 127
    %v4073 = vand.u32 2147483647, %v4035
    %v4074 = vand.u32 %v4073, 8388607
    %v4075 = vor.u32 %v4074, 8388608
    %v4076 = vsub.s32 0, %v4075
    %v4077 = vadd.s32 %v4072, 1
    %vm4078 = vcmp.gt.s32.totalorder %v4077, 0
    %v4079 = vsel %vm4078, %v4077, 0
    %v4080 = vshrl.u32 %v4079, 5
    %v4081 = vand.u32 %v4079, 31
    %v4082 = vsub.s32 32, %v4081
    %v4083 = vshrl.u32 683565275, %v4082
    %v4084 = vshll.u32 683565275, %v4081
    %v4085 = vshrl.u32 2475754826, %v4082
    %v4086 = vor.u32 %v4084, %v4085
    %v4087 = vshll.u32 2475754826, %v4081
    %v4088 = vshrl.u32 2131351028, %v4082
    %v4089 = vor.u32 %v4087, %v4088
    %v4090 = vshll.u32 2131351028, %v4081
    %v4091 = vshrl.u32 2102212464, %v4082
    %v4092 = vor.u32 %v4090, %v4091
    %v4093 = vshll.u32 2102212464, %v4081
    %v4094 = vshrl.u32 920167782, %v4082
    %v4095 = vor.u32 %v4093, %v4094
    %v4096 = vshll.u32 920167782, %v4081
    %v4097 = vshrl.u32 1326507024, %v4082
    %v4098 = vor.u32 %v4096, %v4097
    %vm4099 = vcmp.lt.s32.totalorder %v4080, 1
    %vm4100 = vcmp.lt.s32.totalorder %v4080, 2
    %vm4101 = vcmp.lt.s32.totalorder %v4080, 3
    %vm4102 = vcmp.lt.s32.totalorder %v4080, 4
    %v4103 = vsel %vm4099, %v4083, %v4086
    %v4104 = vsel %vm4102, %v4092, 2102212464
    %v4105 = vsel %vm4101, %v4089, %v4104
    %v4106 = vsel %vm4100, %v4103, %v4105
    %v4107 = vsel %vm4099, %v4086, %v4089
    %v4108 = vsel %vm4102, %v4095, 920167782
    %v4109 = vsel %vm4101, %v4092, %v4108
    %v4110 = vsel %vm4100, %v4107, %v4109
    %v4111 = vsel %vm4099, %v4089, %v4092
    %v4112 = vsel %vm4102, %v4098, 1326507024
    %v4113 = vsel %vm4101, %v4095, %v4112
    %v4114 = vsel %vm4100, %v4111, %v4113
    %v4115 = vshll.u32 %v4075, 8
    %v4116 = vmul.u32.u64.compose %v4115, %v4114
    %v4117 = vextract.low.u32 %v4116
    %v4118 = vextract.high.u32 %v4116
    %v4119 = vmul.u32.u64.compose %v4115, %v4110
    %v4120 = vextract.low.u32 %v4119
    %v4121 = vextract.high.u32 %v4119
    %v4122 = vmul.u32 %v4115, %v4106
    %v4123 = vadd.s32 %v4118, %v4120
    %vm4124 = vc.u32 %v4118, %v4120
    %v4125 = vadd.s32 %v4121, 1
    %v4126 = vsel %vm4124, %v4125, %v4121
    %v4127 = vadd.s32 %v4122, %v4126
    %v4128 = vadd.s32 %v4127, 536870912
    %v4129 = vshrl.u32 %v4128, 30
    %v4130 = vshll.u32 %v4129, 30
    %v4131 = vsub.s32 %v4127, %v4130
    %vm4132 = vcmp.lt.s32.totalorder %v4131, 0
    %v4133 = vsub.s32 0, %v4131
    %v4134 = vsel %vm4132, %v4133, %v4131
    %v4135 = vclz %v4134
    %v4136 = vsub.s32 %v4135, 2
    %vm4137 = vcmp.gt.s32.totalorder 0, %v4136
    %v4138 = vsel %vm4137, 0, %v4136
    %v4139 = vsub.s32 32, %v4138
    %v4140 = vshll.u32 %v4131, %v4138
    %v4141 = vshrl.u32 %v4123, %v4139
    %v4142 = vor.u32 %v4140, %v4141
    %v4143 = vsub.s32 4294967266, %v4138
    %v4144 = vadd.s32 %v4143, 127
    %v4145 = vshll.u32 %v4144, 23
    %v4146 = vor.u32 4788187, %v4145
    %v4147 = vand.u32 2147483647, %v4146
    %v4149 = vcvt.s32.f32 %v4142
    %v4150 = vmul.f32 %v4149, %v4147
    %v4151 = vxor.u32 %v4150, 2147483648
    %v4152 = vsel %vm4069, %v4151, %v4150
    %v4153 = vsub.s32 4, %v4129
    %v4154 = vsel %vm4069, %v4153, %v4129
    %v4155 = vsel %vm4068, %v4035, %v4152
    %v4156 = vsel %vm4068, 0, %v4154
    %v4157 = vcosq.f32.pop %v4155
    %v4158 = vsinq.f32.pop %v4155
    %vm4159 = vweird.f32 %v4035
    %v4160 = vadd.s32 %v4156, 3
    %v4161 = vand.u32 %v4160, 3
    %vm4162 = vcmp.lt.s32.totalorder %v4161, 2
    %vm4163 = vcmp.eq.s32.totalorder %v4161, 0
    %v4164 = vxor.u32 %v4158, 2147483648
    %v4165 = vsel %vm4163, %v4157, %v4164
    %vm4166 = vcmp.eq.s32.totalorder %v4161, 2
    %v4167 = vxor.u32 %v4157, 2147483648
    %v4168 = vsel %vm4166, %v4167, %v4158
    %v4169 = vsel %vm4162, %v4165, %v4168
    %v4170 = vsel %vm4159, nan, %v4169
    %v4171 = vand.u32 2147483647, %v4036
    %vm4172 = vcmp.le.f32.partialorder %v4171, 0.7853982
    %vm4173 = vcmp.lt.s32.totalorder %v4036, 0
    %v4174 = vand.u32 %v4036, 2139095040
    %v4175 = vshrl.u32 %v4174, 23
    %v4176 = vsub.s32 %v4175, 127
    %v4177 = vand.u32 2147483647, %v4036
    %v4178 = vand.u32 %v4177, 8388607
    %v4179 = vor.u32 %v4178, 8388608
    %v4180 = vsub.s32 0, %v4179
    %v4181 = vadd.s32 %v4176, 1
    %vm4182 = vcmp.gt.s32.totalorder %v4181, 0
    %v4183 = vsel %vm4182, %v4181, 0
    %v4184 = vshrl.u32 %v4183, 5
    %v4185 = vand.u32 %v4183, 31
    %v4186 = vsub.s32 32, %v4185
    %v4187 = vshrl.u32 683565275, %v4186
    %v4188 = vshll.u32 683565275, %v4185
    %v4189 = vshrl.u32 2475754826, %v4186
    %v4190 = vor.u32 %v4188, %v4189
    %v4191 = vshll.u32 2475754826, %v4185
    %v4192 = vshrl.u32 2131351028, %v4186
    %v4193 = vor.u32 %v4191, %v4192
    %v4194 = vshll.u32 2131351028, %v4185
    %v4195 = vshrl.u32 2102212464, %v4186
    %v4196 = vor.u32 %v4194, %v4195
    %v4197 = vshll.u32 2102212464, %v4185
    %v4198 = vshrl.u32 920167782, %v4186
    %v4199 = vor.u32 %v4197, %v4198
    %v4200 = vshll.u32 920167782, %v4185
    %v4201 = vshrl.u32 1326507024, %v4186
    %v4202 = vor.u32 %v4200, %v4201
    %vm4203 = vcmp.lt.s32.totalorder %v4184, 1
    %vm4204 = vcmp.lt.s32.totalorder %v4184, 2
    %vm4205 = vcmp.lt.s32.totalorder %v4184, 3
    %vm4206 = vcmp.lt.s32.totalorder %v4184, 4
    %v4207 = vsel %vm4203, %v4187, %v4190
    %v4208 = vsel %vm4206, %v4196, 2102212464
    %v4209 = vsel %vm4205, %v4193, %v4208
    %v4210 = vsel %vm4204, %v4207, %v4209
    %v4211 = vsel %vm4203, %v4190, %v4193
    %v4212 = vsel %vm4206, %v4199, 920167782
    %v4213 = vsel %vm4205, %v4196, %v4212
    %v4214 = vsel %vm4204, %v4211, %v4213
    %v4215 = vsel %vm4203, %v4193, %v4196
    %v4216 = vsel %vm4206, %v4202, 1326507024
    %v4217 = vsel %vm4205, %v4199, %v4216
    %v4218 = vsel %vm4204, %v4215, %v4217
    %v4219 = vshll.u32 %v4179, 8
    %v4220 = vmul.u32.u64.compose %v4219, %v4218
    %v4221 = vextract.low.u32 %v4220
    %v4222 = vextract.high.u32 %v4220
    %v4223 = vmul.u32.u64.compose %v4219, %v4214
    %v4224 = vextract.low.u32 %v4223
    %v4225 = vextract.high.u32 %v4223
    %v4226 = vmul.u32 %v4219, %v4210
    %v4227 = vadd.s32 %v4222, %v4224
    %vm4228 = vc.u32 %v4222, %v4224
    %v4229 = vadd.s32 %v4225, 1
    %v4230 = vsel %vm4228, %v4229, %v4225
    %v4231 = vadd.s32 %v4226, %v4230
    %v4232 = vadd.s32 %v4231, 536870912
    %v4233 = vshrl.u32 %v4232, 30
    %v4234 = vshll.u32 %v4233, 30
    %v4235 = vsub.s32 %v4231, %v4234
    %vm4236 = vcmp.lt.s32.totalorder %v4235, 0
    %v4237 = vsub.s32 0, %v4235
    %v4238 = vsel %vm4236, %v4237, %v4235
    %v4239 = vclz %v4238
    %v4240 = vsub.s32 %v4239, 2
    %vm4241 = vcmp.gt.s32.totalorder 0, %v4240
    %v4242 = vsel %vm4241, 0, %v4240
    %v4243 = vsub.s32 32, %v4242
    %v4244 = vshll.u32 %v4235, %v4242
    %v4245 = vshrl.u32 %v4227, %v4243
    %v4246 = vor.u32 %v4244, %v4245
    %v4247 = vsub.s32 4294967266, %v4242
    %v4248 = vadd.s32 %v4247, 127
    %v4249 = vshll.u32 %v4248, 23
    %v4250 = vor.u32 4788187, %v4249
    %v4251 = vand.u32 2147483647, %v4250
    %v4253 = vcvt.s32.f32 %v4246
    %v4254 = vmul.f32 %v4253, %v4251
    %v4255 = vxor.u32 %v4254, 2147483648
    %v4256 = vsel %vm4173, %v4255, %v4254
    %v4257 = vsub.s32 4, %v4233
    %v4258 = vsel %vm4173, %v4257, %v4233
    %v4259 = vsel %vm4172, %v4036, %v4256
    %v4260 = vsel %vm4172, 0, %v4258
    %v4261 = vcosq.f32.pop %v4259
    %v4262 = vsinq.f32.pop %v4259
    %vm4263 = vweird.f32 %v4036
    %v4264 = vadd.s32 %v4260, 3
    %v4265 = vand.u32 %v4264, 3
    %vm4266 = vcmp.lt.s32.totalorder %v4265, 2
    %vm4267 = vcmp.eq.s32.totalorder %v4265, 0
    %v4268 = vxor.u32 %v4262, 2147483648
    %v4269 = vsel %vm4267, %v4261, %v4268
    %vm4270 = vcmp.eq.s32.totalorder %v4265, 2
    %v4271 = vxor.u32 %v4261, 2147483648
    %v4272 = vsel %vm4270, %v4271, %v4262
    %v4273 = vsel %vm4266, %v4269, %v4272
    %v4274 = vsel %vm4263, nan, %v4273
    %v4275 = vand.u32 2147483647, %v4037
    %vm4276 = vcmp.le.f32.partialorder %v4275, 0.7853982
    %vm4277 = vcmp.lt.s32.totalorder %v4037, 0
    %v4278 = vand.u32 %v4037, 2139095040
    %v4279 = vshrl.u32 %v4278, 23
    %v4280 = vsub.s32 %v4279, 127
    %v4281 = vand.u32 2147483647, %v4037
    %v4282 = vand.u32 %v4281, 8388607
    %v4283 = vor.u32 %v4282, 8388608
    %v4284 = vsub.s32 0, %v4283
    %v4285 = vadd.s32 %v4280, 1
    %vm4286 = vcmp.gt.s32.totalorder %v4285, 0
    %v4287 = vsel %vm4286, %v4285, 0
    %v4288 = vshrl.u32 %v4287, 5
    %v4289 = vand.u32 %v4287, 31
    %v4290 = vsub.s32 32, %v4289
    %v4291 = vshrl.u32 683565275, %v4290
    %v4292 = vshll.u32 683565275, %v4289
    %v4293 = vshrl.u32 2475754826, %v4290
    %v4294 = vor.u32 %v4292, %v4293
    %v4295 = vshll.u32 2475754826, %v4289
    %v4296 = vshrl.u32 2131351028, %v4290
    %v4297 = vor.u32 %v4295, %v4296
    %v4298 = vshll.u32 2131351028, %v4289
    %v4299 = vshrl.u32 2102212464, %v4290
    %v4300 = vor.u32 %v4298, %v4299
    %v4301 = vshll.u32 2102212464, %v4289
    %v4302 = vshrl.u32 920167782, %v4290
    %v4303 = vor.u32 %v4301, %v4302
    %v4304 = vshll.u32 920167782, %v4289
    %v4305 = vshrl.u32 1326507024, %v4290
    %v4306 = vor.u32 %v4304, %v4305
    %vm4307 = vcmp.lt.s32.totalorder %v4288, 1
    %vm4308 = vcmp.lt.s32.totalorder %v4288, 2
    %vm4309 = vcmp.lt.s32.totalorder %v4288, 3
    %vm4310 = vcmp.lt.s32.totalorder %v4288, 4
    %v4311 = vsel %vm4307, %v4291, %v4294
    %v4312 = vsel %vm4310, %v4300, 2102212464
    %v4313 = vsel %vm4309, %v4297, %v4312
    %v4314 = vsel %vm4308, %v4311, %v4313
    %v4315 = vsel %vm4307, %v4294, %v4297
    %v4316 = vsel %vm4310, %v4303, 920167782
    %v4317 = vsel %vm4309, %v4300, %v4316
    %v4318 = vsel %vm4308, %v4315, %v4317
    %v4319 = vsel %vm4307, %v4297, %v4300
    %v4320 = vsel %vm4310, %v4306, 1326507024
    %v4321 = vsel %vm4309, %v4303, %v4320
    %v4322 = vsel %vm4308, %v4319, %v4321
    %v4323 = vshll.u32 %v4283, 8
    %v4324 = vmul.u32.u64.compose %v4323, %v4322
    %v4325 = vextract.low.u32 %v4324
    %v4326 = vextract.high.u32 %v4324
    %v4327 = vmul.u32.u64.compose %v4323, %v4318
    %v4328 = vextract.low.u32 %v4327
    %v4329 = vextract.high.u32 %v4327
    %v4330 = vmul.u32 %v4323, %v4314
    %v4331 = vadd.s32 %v4326, %v4328
    %vm4332 = vc.u32 %v4326, %v4328
    %v4333 = vadd.s32 %v4329, 1
    %v4334 = vsel %vm4332, %v4333, %v4329
    %v4335 = vadd.s32 %v4330, %v4334
    %v4336 = vadd.s32 %v4335, 536870912
    %v4337 = vshrl.u32 %v4336, 30
    %v4338 = vshll.u32 %v4337, 30
    %v4339 = vsub.s32 %v4335, %v4338
    %vm4340 = vcmp.lt.s32.totalorder %v4339, 0
    %v4341 = vsub.s32 0, %v4339
    %v4342 = vsel %vm4340, %v4341, %v4339
    %v4343 = vclz %v4342
    %v4344 = vsub.s32 %v4343, 2
    %vm4345 = vcmp.gt.s32.totalorder 0, %v4344
    %v4346 = vsel %vm4345, 0, %v4344
    %v4347 = vsub.s32 32, %v4346
    %v4348 = vshll.u32 %v4339, %v4346
    %v4349 = vshrl.u32 %v4331, %v4347
    %v4350 = vor.u32 %v4348, %v4349
    %v4351 = vsub.s32 4294967266, %v4346
    %v4352 = vadd.s32 %v4351, 127
    %v4353 = vshll.u32 %v4352, 23
    %v4354 = vor.u32 4788187, %v4353
    %v4355 = vand.u32 2147483647, %v4354
    %v4357 = vcvt.s32.f32 %v4350
    %v4358 = vmul.f32 %v4357, %v4355
    %v4359 = vxor.u32 %v4358, 2147483648
    %v4360 = vsel %vm4277, %v4359, %v4358
    %v4361 = vsub.s32 4, %v4337
    %v4362 = vsel %vm4277, %v4361, %v4337
    %v4363 = vsel %vm4276, %v4037, %v4360
    %v4364 = vsel %vm4276, 0, %v4362
    %v4365 = vcosq.f32.pop %v4363
    %v4366 = vsinq.f32.pop %v4363
    %vm4367 = vweird.f32 %v4037
    %v4368 = vadd.s32 %v4364, 3
    %v4369 = vand.u32 %v4368, 3
    %vm4370 = vcmp.lt.s32.totalorder %v4369, 2
    %vm4371 = vcmp.eq.s32.totalorder %v4369, 0
    %v4372 = vxor.u32 %v4366, 2147483648
    %v4373 = vsel %vm4371, %v4365, %v4372
    %vm4374 = vcmp.eq.s32.totalorder %v4369, 2
    %v4375 = vxor.u32 %v4365, 2147483648
    %v4376 = vsel %vm4374, %v4375, %v4366
    %v4377 = vsel %vm4370, %v4373, %v4376
    %v4378 = vsel %vm4367, nan, %v4377
    %v4379 = vand.u32 2147483647, %v4038
    %vm4380 = vcmp.le.f32.partialorder %v4379, 0.7853982
    %vm4381 = vcmp.lt.s32.totalorder %v4038, 0
    %v4382 = vand.u32 %v4038, 2139095040
    %v4383 = vshrl.u32 %v4382, 23
    %v4384 = vsub.s32 %v4383, 127
    %v4385 = vand.u32 2147483647, %v4038
    %v4386 = vand.u32 %v4385, 8388607
    %v4387 = vor.u32 %v4386, 8388608
    %v4388 = vsub.s32 0, %v4387
    %v4389 = vadd.s32 %v4384, 1
    %vm4390 = vcmp.gt.s32.totalorder %v4389, 0
    %v4391 = vsel %vm4390, %v4389, 0
    %v4392 = vshrl.u32 %v4391, 5
    %v4393 = vand.u32 %v4391, 31
    %v4394 = vsub.s32 32, %v4393
    %v4395 = vshrl.u32 683565275, %v4394
    %v4396 = vshll.u32 683565275, %v4393
    %v4397 = vshrl.u32 2475754826, %v4394
    %v4398 = vor.u32 %v4396, %v4397
    %v4399 = vshll.u32 2475754826, %v4393
    %v4400 = vshrl.u32 2131351028, %v4394
    %v4401 = vor.u32 %v4399, %v4400
    %v4402 = vshll.u32 2131351028, %v4393
    %v4403 = vshrl.u32 2102212464, %v4394
    %v4404 = vor.u32 %v4402, %v4403
    %v4405 = vshll.u32 2102212464, %v4393
    %v4406 = vshrl.u32 920167782, %v4394
    %v4407 = vor.u32 %v4405, %v4406
    %v4408 = vshll.u32 920167782, %v4393
    %v4409 = vshrl.u32 1326507024, %v4394
    %v4410 = vor.u32 %v4408, %v4409
    %vm4411 = vcmp.lt.s32.totalorder %v4392, 1
    %vm4412 = vcmp.lt.s32.totalorder %v4392, 2
    %vm4413 = vcmp.lt.s32.totalorder %v4392, 3
    %vm4414 = vcmp.lt.s32.totalorder %v4392, 4
    %v4415 = vsel %vm4411, %v4395, %v4398
    %v4416 = vsel %vm4414, %v4404, 2102212464
    %v4417 = vsel %vm4413, %v4401, %v4416
    %v4418 = vsel %vm4412, %v4415, %v4417
    %v4419 = vsel %vm4411, %v4398, %v4401
    %v4420 = vsel %vm4414, %v4407, 920167782
    %v4421 = vsel %vm4413, %v4404, %v4420
    %v4422 = vsel %vm4412, %v4419, %v4421
    %v4423 = vsel %vm4411, %v4401, %v4404
    %v4424 = vsel %vm4414, %v4410, 1326507024
    %v4425 = vsel %vm4413, %v4407, %v4424
    %v4426 = vsel %vm4412, %v4423, %v4425
    %v4427 = vshll.u32 %v4387, 8
    %v4428 = vmul.u32.u64.compose %v4427, %v4426
    %v4429 = vextract.low.u32 %v4428
    %v4430 = vextract.high.u32 %v4428
    %v4431 = vmul.u32.u64.compose %v4427, %v4422
    %v4432 = vextract.low.u32 %v4431
    %v4433 = vextract.high.u32 %v4431
    %v4434 = vmul.u32 %v4427, %v4418
    %v4435 = vadd.s32 %v4430, %v4432
    %vm4436 = vc.u32 %v4430, %v4432
    %v4437 = vadd.s32 %v4433, 1
    %v4438 = vsel %vm4436, %v4437, %v4433
    %v4439 = vadd.s32 %v4434, %v4438
    %v4440 = vadd.s32 %v4439, 536870912
    %v4441 = vshrl.u32 %v4440, 30
    %v4442 = vshll.u32 %v4441, 30
    %v4443 = vsub.s32 %v4439, %v4442
    %vm4444 = vcmp.lt.s32.totalorder %v4443, 0
    %v4445 = vsub.s32 0, %v4443
    %v4446 = vsel %vm4444, %v4445, %v4443
    %v4447 = vclz %v4446
    %v4448 = vsub.s32 %v4447, 2
    %vm4449 = vcmp.gt.s32.totalorder 0, %v4448
    %v4450 = vsel %vm4449, 0, %v4448
    %v4451 = vsub.s32 32, %v4450
    %v4452 = vshll.u32 %v4443, %v4450
    %v4453 = vshrl.u32 %v4435, %v4451
    %v4454 = vor.u32 %v4452, %v4453
    %v4455 = vsub.s32 4294967266, %v4450
    %v4456 = vadd.s32 %v4455, 127
    %v4457 = vshll.u32 %v4456, 23
    %v4458 = vor.u32 4788187, %v4457
    %v4459 = vand.u32 2147483647, %v4458
    %v4461 = vcvt.s32.f32 %v4454
    %v4462 = vmul.f32 %v4461, %v4459
    %v4463 = vxor.u32 %v4462, 2147483648
    %v4464 = vsel %vm4381, %v4463, %v4462
    %v4465 = vsub.s32 4, %v4441
    %v4466 = vsel %vm4381, %v4465, %v4441
    %v4467 = vsel %vm4380, %v4038, %v4464
    %v4468 = vsel %vm4380, 0, %v4466
    %v4469 = vcosq.f32.pop %v4467
    %v4470 = vsinq.f32.pop %v4467
    %vm4471 = vweird.f32 %v4038
    %v4472 = vadd.s32 %v4468, 3
    %v4473 = vand.u32 %v4472, 3
    %vm4474 = vcmp.lt.s32.totalorder %v4473, 2
    %vm4475 = vcmp.eq.s32.totalorder %v4473, 0
    %v4476 = vxor.u32 %v4470, 2147483648
    %v4477 = vsel %vm4475, %v4469, %v4476
    %vm4478 = vcmp.eq.s32.totalorder %v4473, 2
    %v4479 = vxor.u32 %v4469, 2147483648
    %v4480 = vsel %vm4478, %v4479, %v4470
    %v4481 = vsel %vm4474, %v4477, %v4480
    %v4482 = vsel %vm4471, nan, %v4481
    %v4483 = vand.u32 2147483647, %v4039
    %vm4484 = vcmp.le.f32.partialorder %v4483, 0.7853982
    %vm4485 = vcmp.lt.s32.totalorder %v4039, 0
    %v4486 = vand.u32 %v4039, 2139095040
    %v4487 = vshrl.u32 %v4486, 23
    %v4488 = vsub.s32 %v4487, 127
    %v4489 = vand.u32 2147483647, %v4039
    %v4490 = vand.u32 %v4489, 8388607
    %v4491 = vor.u32 %v4490, 8388608
    %v4492 = vsub.s32 0, %v4491
    %v4493 = vadd.s32 %v4488, 1
    %vm4494 = vcmp.gt.s32.totalorder %v4493, 0
    %v4495 = vsel %vm4494, %v4493, 0
    %v4496 = vshrl.u32 %v4495, 5
    %v4497 = vand.u32 %v4495, 31
    %v4498 = vsub.s32 32, %v4497
    %v4499 = vshrl.u32 683565275, %v4498
    %v4500 = vshll.u32 683565275, %v4497
    %v4501 = vshrl.u32 2475754826, %v4498
    %v4502 = vor.u32 %v4500, %v4501
    %v4503 = vshll.u32 2475754826, %v4497
    %v4504 = vshrl.u32 2131351028, %v4498
    %v4505 = vor.u32 %v4503, %v4504
    %v4506 = vshll.u32 2131351028, %v4497
    %v4507 = vshrl.u32 2102212464, %v4498
    %v4508 = vor.u32 %v4506, %v4507
    %v4509 = vshll.u32 2102212464, %v4497
    %v4510 = vshrl.u32 920167782, %v4498
    %v4511 = vor.u32 %v4509, %v4510
    %v4512 = vshll.u32 920167782, %v4497
    %v4513 = vshrl.u32 1326507024, %v4498
    %v4514 = vor.u32 %v4512, %v4513
    %vm4515 = vcmp.lt.s32.totalorder %v4496, 1
    %vm4516 = vcmp.lt.s32.totalorder %v4496, 2
    %vm4517 = vcmp.lt.s32.totalorder %v4496, 3
    %vm4518 = vcmp.lt.s32.totalorder %v4496, 4
    %v4519 = vsel %vm4515, %v4499, %v4502
    %v4520 = vsel %vm4518, %v4508, 2102212464
    %v4521 = vsel %vm4517, %v4505, %v4520
    %v4522 = vsel %vm4516, %v4519, %v4521
    %v4523 = vsel %vm4515, %v4502, %v4505
    %v4524 = vsel %vm4518, %v4511, 920167782
    %v4525 = vsel %vm4517, %v4508, %v4524
    %v4526 = vsel %vm4516, %v4523, %v4525
    %v4527 = vsel %vm4515, %v4505, %v4508
    %v4528 = vsel %vm4518, %v4514, 1326507024
    %v4529 = vsel %vm4517, %v4511, %v4528
    %v4530 = vsel %vm4516, %v4527, %v4529
    %v4531 = vshll.u32 %v4491, 8
    %v4532 = vmul.u32.u64.compose %v4531, %v4530
    %v4533 = vextract.low.u32 %v4532
    %v4534 = vextract.high.u32 %v4532
    %v4535 = vmul.u32.u64.compose %v4531, %v4526
    %v4536 = vextract.low.u32 %v4535
    %v4537 = vextract.high.u32 %v4535
    %v4538 = vmul.u32 %v4531, %v4522
    %v4539 = vadd.s32 %v4534, %v4536
    %vm4540 = vc.u32 %v4534, %v4536
    %v4541 = vadd.s32 %v4537, 1
    %v4542 = vsel %vm4540, %v4541, %v4537
    %v4543 = vadd.s32 %v4538, %v4542
    %v4544 = vadd.s32 %v4543, 536870912
    %v4545 = vshrl.u32 %v4544, 30
    %v4546 = vshll.u32 %v4545, 30
    %v4547 = vsub.s32 %v4543, %v4546
    %vm4548 = vcmp.lt.s32.totalorder %v4547, 0
    %v4549 = vsub.s32 0, %v4547
    %v4550 = vsel %vm4548, %v4549, %v4547
    %v4551 = vclz %v4550
    %v4552 = vsub.s32 %v4551, 2
    %vm4553 = vcmp.gt.s32.totalorder 0, %v4552
    %v4554 = vsel %vm4553, 0, %v4552
    %v4555 = vsub.s32 32, %v4554
    %v4556 = vshll.u32 %v4547, %v4554
    %v4557 = vshrl.u32 %v4539, %v4555
    %v4558 = vor.u32 %v4556, %v4557
    %v4559 = vsub.s32 4294967266, %v4554
    %v4560 = vadd.s32 %v4559, 127
    %v4561 = vshll.u32 %v4560, 23
    %v4562 = vor.u32 4788187, %v4561
    %v4563 = vand.u32 2147483647, %v4562
    %v4565 = vcvt.s32.f32 %v4558
    %v4566 = vmul.f32 %v4565, %v4563
    %v4567 = vxor.u32 %v4566, 2147483648
    %v4568 = vsel %vm4485, %v4567, %v4566
    %v4569 = vsub.s32 4, %v4545
    %v4570 = vsel %vm4485, %v4569, %v4545
    %v4571 = vsel %vm4484, %v4039, %v4568
    %v4572 = vsel %vm4484, 0, %v4570
    %v4573 = vcosq.f32.pop %v4571
    %v4574 = vsinq.f32.pop %v4571
    %vm4575 = vweird.f32 %v4039
    %v4576 = vadd.s32 %v4572, 3
    %v4577 = vand.u32 %v4576, 3
    %vm4578 = vcmp.lt.s32.totalorder %v4577, 2
    %vm4579 = vcmp.eq.s32.totalorder %v4577, 0
    %v4580 = vxor.u32 %v4574, 2147483648
    %v4581 = vsel %vm4579, %v4573, %v4580
    %vm4582 = vcmp.eq.s32.totalorder %v4577, 2
    %v4583 = vxor.u32 %v4573, 2147483648
    %v4584 = vsel %vm4582, %v4583, %v4574
    %v4585 = vsel %vm4578, %v4581, %v4584
    %v4586 = vsel %vm4575, nan, %v4585
    %v4587 = vand.u32 2147483647, %v4040
    %vm4588 = vcmp.le.f32.partialorder %v4587, 0.7853982
    %vm4589 = vcmp.lt.s32.totalorder %v4040, 0
    %v4590 = vand.u32 %v4040, 2139095040
    %v4591 = vshrl.u32 %v4590, 23
    %v4592 = vsub.s32 %v4591, 127
    %v4593 = vand.u32 2147483647, %v4040
    %v4594 = vand.u32 %v4593, 8388607
    %v4595 = vor.u32 %v4594, 8388608
    %v4596 = vsub.s32 0, %v4595
    %v4597 = vadd.s32 %v4592, 1
    %vm4598 = vcmp.gt.s32.totalorder %v4597, 0
    %v4599 = vsel %vm4598, %v4597, 0
    %v4600 = vshrl.u32 %v4599, 5
    %v4601 = vand.u32 %v4599, 31
    %v4602 = vsub.s32 32, %v4601
    %v4603 = vshrl.u32 683565275, %v4602
    %v4604 = vshll.u32 683565275, %v4601
    %v4605 = vshrl.u32 2475754826, %v4602
    %v4606 = vor.u32 %v4604, %v4605
    %v4607 = vshll.u32 2475754826, %v4601
    %v4608 = vshrl.u32 2131351028, %v4602
    %v4609 = vor.u32 %v4607, %v4608
    %v4610 = vshll.u32 2131351028, %v4601
    %v4611 = vshrl.u32 2102212464, %v4602
    %v4612 = vor.u32 %v4610, %v4611
    %v4613 = vshll.u32 2102212464, %v4601
    %v4614 = vshrl.u32 920167782, %v4602
    %v4615 = vor.u32 %v4613, %v4614
    %v4616 = vshll.u32 920167782, %v4601
    %v4617 = vshrl.u32 1326507024, %v4602
    %v4618 = vor.u32 %v4616, %v4617
    %vm4619 = vcmp.lt.s32.totalorder %v4600, 1
    %vm4620 = vcmp.lt.s32.totalorder %v4600, 2
    %vm4621 = vcmp.lt.s32.totalorder %v4600, 3
    %vm4622 = vcmp.lt.s32.totalorder %v4600, 4
    %v4623 = vsel %vm4619, %v4603, %v4606
    %v4624 = vsel %vm4622, %v4612, 2102212464
    %v4625 = vsel %vm4621, %v4609, %v4624
    %v4626 = vsel %vm4620, %v4623, %v4625
    %v4627 = vsel %vm4619, %v4606, %v4609
    %v4628 = vsel %vm4622, %v4615, 920167782
    %v4629 = vsel %vm4621, %v4612, %v4628
    %v4630 = vsel %vm4620, %v4627, %v4629
    %v4631 = vsel %vm4619, %v4609, %v4612
    %v4632 = vsel %vm4622, %v4618, 1326507024
    %v4633 = vsel %vm4621, %v4615, %v4632
    %v4634 = vsel %vm4620, %v4631, %v4633
    %v4635 = vshll.u32 %v4595, 8
    %v4636 = vmul.u32.u64.compose %v4635, %v4634
    %v4637 = vextract.low.u32 %v4636
    %v4638 = vextract.high.u32 %v4636
    %v4639 = vmul.u32.u64.compose %v4635, %v4630
    %v4640 = vextract.low.u32 %v4639
    %v4641 = vextract.high.u32 %v4639
    %v4642 = vmul.u32 %v4635, %v4626
    %v4643 = vadd.s32 %v4638, %v4640
    %vm4644 = vc.u32 %v4638, %v4640
    %v4645 = vadd.s32 %v4641, 1
    %v4646 = vsel %vm4644, %v4645, %v4641
    %v4647 = vadd.s32 %v4642, %v4646
    %v4648 = vadd.s32 %v4647, 536870912
    %v4649 = vshrl.u32 %v4648, 30
    %v4650 = vshll.u32 %v4649, 30
    %v4651 = vsub.s32 %v4647, %v4650
    %vm4652 = vcmp.lt.s32.totalorder %v4651, 0
    %v4653 = vsub.s32 0, %v4651
    %v4654 = vsel %vm4652, %v4653, %v4651
    %v4655 = vclz %v4654
    %v4656 = vsub.s32 %v4655, 2
    %vm4657 = vcmp.gt.s32.totalorder 0, %v4656
    %v4658 = vsel %vm4657, 0, %v4656
    %v4659 = vsub.s32 32, %v4658
    %v4660 = vshll.u32 %v4651, %v4658
    %v4661 = vshrl.u32 %v4643, %v4659
    %v4662 = vor.u32 %v4660, %v4661
    %v4663 = vsub.s32 4294967266, %v4658
    %v4664 = vadd.s32 %v4663, 127
    %v4665 = vshll.u32 %v4664, 23
    %v4666 = vor.u32 4788187, %v4665
    %v4667 = vand.u32 2147483647, %v4666
    %v4669 = vcvt.s32.f32 %v4662
    %v4670 = vmul.f32 %v4669, %v4667
    %v4671 = vxor.u32 %v4670, 2147483648
    %v4672 = vsel %vm4589, %v4671, %v4670
    %v4673 = vsub.s32 4, %v4649
    %v4674 = vsel %vm4589, %v4673, %v4649
    %v4675 = vsel %vm4588, %v4040, %v4672
    %v4676 = vsel %vm4588, 0, %v4674
    %v4677 = vcosq.f32.pop %v4675
    %v4678 = vsinq.f32.pop %v4675
    %vm4679 = vweird.f32 %v4040
    %v4680 = vadd.s32 %v4676, 3
    %v4681 = vand.u32 %v4680, 3
    %vm4682 = vcmp.lt.s32.totalorder %v4681, 2
    %vm4683 = vcmp.eq.s32.totalorder %v4681, 0
    %v4684 = vxor.u32 %v4678, 2147483648
    %v4685 = vsel %vm4683, %v4677, %v4684
    %vm4686 = vcmp.eq.s32.totalorder %v4681, 2
    %v4687 = vxor.u32 %v4677, 2147483648
    %v4688 = vsel %vm4686, %v4687, %v4678
    %v4689 = vsel %vm4682, %v4685, %v4688
    %v4690 = vsel %vm4679, nan, %v4689
    %v4691 = vand.u32 2147483647, %v4041
    %vm4692 = vcmp.le.f32.partialorder %v4691, 0.7853982
    %vm4693 = vcmp.lt.s32.totalorder %v4041, 0
    %v4694 = vand.u32 %v4041, 2139095040
    %v4695 = vshrl.u32 %v4694, 23
    %v4696 = vsub.s32 %v4695, 127
    %v4697 = vand.u32 2147483647, %v4041
    %v4698 = vand.u32 %v4697, 8388607
    %v4699 = vor.u32 %v4698, 8388608
    %v4700 = vsub.s32 0, %v4699
    %v4701 = vadd.s32 %v4696, 1
    %vm4702 = vcmp.gt.s32.totalorder %v4701, 0
    %v4703 = vsel %vm4702, %v4701, 0
    %v4704 = vshrl.u32 %v4703, 5
    %v4705 = vand.u32 %v4703, 31
    %v4706 = vsub.s32 32, %v4705
    %v4707 = vshrl.u32 683565275, %v4706
    %v4708 = vshll.u32 683565275, %v4705
    %v4709 = vshrl.u32 2475754826, %v4706
    %v4710 = vor.u32 %v4708, %v4709
    %v4711 = vshll.u32 2475754826, %v4705
    %v4712 = vshrl.u32 2131351028, %v4706
    %v4713 = vor.u32 %v4711, %v4712
    %v4714 = vshll.u32 2131351028, %v4705
    %v4715 = vshrl.u32 2102212464, %v4706
    %v4716 = vor.u32 %v4714, %v4715
    %v4717 = vshll.u32 2102212464, %v4705
    %v4718 = vshrl.u32 920167782, %v4706
    %v4719 = vor.u32 %v4717, %v4718
    %v4720 = vshll.u32 920167782, %v4705
    %v4721 = vshrl.u32 1326507024, %v4706
    %v4722 = vor.u32 %v4720, %v4721
    %vm4723 = vcmp.lt.s32.totalorder %v4704, 1
    %vm4724 = vcmp.lt.s32.totalorder %v4704, 2
    %vm4725 = vcmp.lt.s32.totalorder %v4704, 3
    %vm4726 = vcmp.lt.s32.totalorder %v4704, 4
    %v4727 = vsel %vm4723, %v4707, %v4710
    %v4728 = vsel %vm4726, %v4716, 2102212464
    %v4729 = vsel %vm4725, %v4713, %v4728
    %v4730 = vsel %vm4724, %v4727, %v4729
    %v4731 = vsel %vm4723, %v4710, %v4713
    %v4732 = vsel %vm4726, %v4719, 920167782
    %v4733 = vsel %vm4725, %v4716, %v4732
    %v4734 = vsel %vm4724, %v4731, %v4733
    %v4735 = vsel %vm4723, %v4713, %v4716
    %v4736 = vsel %vm4726, %v4722, 1326507024
    %v4737 = vsel %vm4725, %v4719, %v4736
    %v4738 = vsel %vm4724, %v4735, %v4737
    %v4739 = vshll.u32 %v4699, 8
    %v4740 = vmul.u32.u64.compose %v4739, %v4738
    %v4741 = vextract.low.u32 %v4740
    %v4742 = vextract.high.u32 %v4740
    %v4743 = vmul.u32.u64.compose %v4739, %v4734
    %v4744 = vextract.low.u32 %v4743
    %v4745 = vextract.high.u32 %v4743
    %v4746 = vmul.u32 %v4739, %v4730
    %v4747 = vadd.s32 %v4742, %v4744
    %vm4748 = vc.u32 %v4742, %v4744
    %v4749 = vadd.s32 %v4745, 1
    %v4750 = vsel %vm4748, %v4749, %v4745
    %v4751 = vadd.s32 %v4746, %v4750
    %v4752 = vadd.s32 %v4751, 536870912
    %v4753 = vshrl.u32 %v4752, 30
    %v4754 = vshll.u32 %v4753, 30
    %v4755 = vsub.s32 %v4751, %v4754
    %vm4756 = vcmp.lt.s32.totalorder %v4755, 0
    %v4757 = vsub.s32 0, %v4755
    %v4758 = vsel %vm4756, %v4757, %v4755
    %v4759 = vclz %v4758
    %v4760 = vsub.s32 %v4759, 2
    %vm4761 = vcmp.gt.s32.totalorder 0, %v4760
    %v4762 = vsel %vm4761, 0, %v4760
    %v4763 = vsub.s32 32, %v4762
    %v4764 = vshll.u32 %v4755, %v4762
    %v4765 = vshrl.u32 %v4747, %v4763
    %v4766 = vor.u32 %v4764, %v4765
    %v4767 = vsub.s32 4294967266, %v4762
    %v4768 = vadd.s32 %v4767, 127
    %v4769 = vshll.u32 %v4768, 23
    %v4770 = vor.u32 4788187, %v4769
    %v4771 = vand.u32 2147483647, %v4770
    %v4773 = vcvt.s32.f32 %v4766
    %v4774 = vmul.f32 %v4773, %v4771
    %v4775 = vxor.u32 %v4774, 2147483648
    %v4776 = vsel %vm4693, %v4775, %v4774
    %v4777 = vsub.s32 4, %v4753
    %v4778 = vsel %vm4693, %v4777, %v4753
    %v4779 = vsel %vm4692, %v4041, %v4776
    %v4780 = vsel %vm4692, 0, %v4778
    %v4781 = vcosq.f32.pop %v4779
    %v4782 = vsinq.f32.pop %v4779
    %vm4783 = vweird.f32 %v4041
    %v4784 = vadd.s32 %v4780, 3
    %v4785 = vand.u32 %v4784, 3
    %vm4786 = vcmp.lt.s32.totalorder %v4785, 2
    %vm4787 = vcmp.eq.s32.totalorder %v4785, 0
    %v4788 = vxor.u32 %v4782, 2147483648
    %v4789 = vsel %vm4787, %v4781, %v4788
    %vm4790 = vcmp.eq.s32.totalorder %v4785, 2
    %v4791 = vxor.u32 %v4781, 2147483648
    %v4792 = vsel %vm4790, %v4791, %v4782
    %v4793 = vsel %vm4786, %v4789, %v4792
    %v4794 = vsel %vm4783, nan, %v4793
    %v4795 = vand.u32 2147483647, %v4042
    %vm4796 = vcmp.le.f32.partialorder %v4795, 0.7853982
    %vm4797 = vcmp.lt.s32.totalorder %v4042, 0
    %v4798 = vand.u32 %v4042, 2139095040
    %v4799 = vshrl.u32 %v4798, 23
    %v4800 = vsub.s32 %v4799, 127
    %v4801 = vand.u32 2147483647, %v4042
    %v4802 = vand.u32 %v4801, 8388607
    %v4803 = vor.u32 %v4802, 8388608
    %v4804 = vsub.s32 0, %v4803
    %v4805 = vadd.s32 %v4800, 1
    %vm4806 = vcmp.gt.s32.totalorder %v4805, 0
    %v4807 = vsel %vm4806, %v4805, 0
    %v4808 = vshrl.u32 %v4807, 5
    %v4809 = vand.u32 %v4807, 31
    %v4810 = vsub.s32 32, %v4809
    %v4811 = vshrl.u32 683565275, %v4810
    %v4812 = vshll.u32 683565275, %v4809
    %v4813 = vshrl.u32 2475754826, %v4810
    %v4814 = vor.u32 %v4812, %v4813
    %v4815 = vshll.u32 2475754826, %v4809
    %v4816 = vshrl.u32 2131351028, %v4810
    %v4817 = vor.u32 %v4815, %v4816
    %v4818 = vshll.u32 2131351028, %v4809
    %v4819 = vshrl.u32 2102212464, %v4810
    %v4820 = vor.u32 %v4818, %v4819
    %v4821 = vshll.u32 2102212464, %v4809
    %v4822 = vshrl.u32 920167782, %v4810
    %v4823 = vor.u32 %v4821, %v4822
    %v4824 = vshll.u32 920167782, %v4809
    %v4825 = vshrl.u32 1326507024, %v4810
    %v4826 = vor.u32 %v4824, %v4825
    %vm4827 = vcmp.lt.s32.totalorder %v4808, 1
    %vm4828 = vcmp.lt.s32.totalorder %v4808, 2
    %vm4829 = vcmp.lt.s32.totalorder %v4808, 3
    %vm4830 = vcmp.lt.s32.totalorder %v4808, 4
    %v4831 = vsel %vm4827, %v4811, %v4814
    %v4832 = vsel %vm4830, %v4820, 2102212464
    %v4833 = vsel %vm4829, %v4817, %v4832
    %v4834 = vsel %vm4828, %v4831, %v4833
    %v4835 = vsel %vm4827, %v4814, %v4817
    %v4836 = vsel %vm4830, %v4823, 920167782
    %v4837 = vsel %vm4829, %v4820, %v4836
    %v4838 = vsel %vm4828, %v4835, %v4837
    %v4839 = vsel %vm4827, %v4817, %v4820
    %v4840 = vsel %vm4830, %v4826, 1326507024
    %v4841 = vsel %vm4829, %v4823, %v4840
    %v4842 = vsel %vm4828, %v4839, %v4841
    %v4843 = vshll.u32 %v4803, 8
    %v4844 = vmul.u32.u64.compose %v4843, %v4842
    %v4845 = vextract.low.u32 %v4844
    %v4846 = vextract.high.u32 %v4844
    %v4847 = vmul.u32.u64.compose %v4843, %v4838
    %v4848 = vextract.low.u32 %v4847
    %v4849 = vextract.high.u32 %v4847
    %v4850 = vmul.u32 %v4843, %v4834
    %v4851 = vadd.s32 %v4846, %v4848
    %vm4852 = vc.u32 %v4846, %v4848
    %v4853 = vadd.s32 %v4849, 1
    %v4854 = vsel %vm4852, %v4853, %v4849
    %v4855 = vadd.s32 %v4850, %v4854
    %v4856 = vadd.s32 %v4855, 536870912
    %v4857 = vshrl.u32 %v4856, 30
    %v4858 = vshll.u32 %v4857, 30
    %v4859 = vsub.s32 %v4855, %v4858
    %vm4860 = vcmp.lt.s32.totalorder %v4859, 0
    %v4861 = vsub.s32 0, %v4859
    %v4862 = vsel %vm4860, %v4861, %v4859
    %v4863 = vclz %v4862
    %v4864 = vsub.s32 %v4863, 2
    %vm4865 = vcmp.gt.s32.totalorder 0, %v4864
    %v4866 = vsel %vm4865, 0, %v4864
    %v4867 = vsub.s32 32, %v4866
    %v4868 = vshll.u32 %v4859, %v4866
    %v4869 = vshrl.u32 %v4851, %v4867
    %v4870 = vor.u32 %v4868, %v4869
    %v4871 = vsub.s32 4294967266, %v4866
    %v4872 = vadd.s32 %v4871, 127
    %v4873 = vshll.u32 %v4872, 23
    %v4874 = vor.u32 4788187, %v4873
    %v4875 = vand.u32 2147483647, %v4874
    %v4877 = vcvt.s32.f32 %v4870
    %v4878 = vmul.f32 %v4877, %v4875
    %v4879 = vxor.u32 %v4878, 2147483648
    %v4880 = vsel %vm4797, %v4879, %v4878
    %v4881 = vsub.s32 4, %v4857
    %v4882 = vsel %vm4797, %v4881, %v4857
    %v4883 = vsel %vm4796, %v4042, %v4880
    %v4884 = vsel %vm4796, 0, %v4882
    %v4885 = vcosq.f32.pop %v4883
    %v4886 = vsinq.f32.pop %v4883
    %vm4887 = vweird.f32 %v4042
    %v4888 = vadd.s32 %v4884, 3
    %v4889 = vand.u32 %v4888, 3
    %vm4890 = vcmp.lt.s32.totalorder %v4889, 2
    %vm4891 = vcmp.eq.s32.totalorder %v4889, 0
    %v4892 = vxor.u32 %v4886, 2147483648
    %v4893 = vsel %vm4891, %v4885, %v4892
    %vm4894 = vcmp.eq.s32.totalorder %v4889, 2
    %v4895 = vxor.u32 %v4885, 2147483648
    %v4896 = vsel %vm4894, %v4895, %v4886
    %v4897 = vsel %vm4890, %v4893, %v4896
    %v4898 = vsel %vm4887, nan, %v4897
    %v4899 = vand.u32 2147483647, %v4043
    %vm4900 = vcmp.le.f32.partialorder %v4899, 0.7853982
    %vm4901 = vcmp.lt.s32.totalorder %v4043, 0
    %v4902 = vand.u32 %v4043, 2139095040
    %v4903 = vshrl.u32 %v4902, 23
    %v4904 = vsub.s32 %v4903, 127
    %v4905 = vand.u32 2147483647, %v4043
    %v4906 = vand.u32 %v4905, 8388607
    %v4907 = vor.u32 %v4906, 8388608
    %v4908 = vsub.s32 0, %v4907
    %v4909 = vadd.s32 %v4904, 1
    %vm4910 = vcmp.gt.s32.totalorder %v4909, 0
    %v4911 = vsel %vm4910, %v4909, 0
    %v4912 = vshrl.u32 %v4911, 5
    %v4913 = vand.u32 %v4911, 31
    %v4914 = vsub.s32 32, %v4913
    %v4915 = vshrl.u32 683565275, %v4914
    %v4916 = vshll.u32 683565275, %v4913
    %v4917 = vshrl.u32 2475754826, %v4914
    %v4918 = vor.u32 %v4916, %v4917
    %v4919 = vshll.u32 2475754826, %v4913
    %v4920 = vshrl.u32 2131351028, %v4914
    %v4921 = vor.u32 %v4919, %v4920
    %v4922 = vshll.u32 2131351028, %v4913
    %v4923 = vshrl.u32 2102212464, %v4914
    %v4924 = vor.u32 %v4922, %v4923
    %v4925 = vshll.u32 2102212464, %v4913
    %v4926 = vshrl.u32 920167782, %v4914
    %v4927 = vor.u32 %v4925, %v4926
    %v4928 = vshll.u32 920167782, %v4913
    %v4929 = vshrl.u32 1326507024, %v4914
    %v4930 = vor.u32 %v4928, %v4929
    %vm4931 = vcmp.lt.s32.totalorder %v4912, 1
    %vm4932 = vcmp.lt.s32.totalorder %v4912, 2
    %vm4933 = vcmp.lt.s32.totalorder %v4912, 3
    %vm4934 = vcmp.lt.s32.totalorder %v4912, 4
    %v4935 = vsel %vm4931, %v4915, %v4918
    %v4936 = vsel %vm4934, %v4924, 2102212464
    %v4937 = vsel %vm4933, %v4921, %v4936
    %v4938 = vsel %vm4932, %v4935, %v4937
    %v4939 = vsel %vm4931, %v4918, %v4921
    %v4940 = vsel %vm4934, %v4927, 920167782
    %v4941 = vsel %vm4933, %v4924, %v4940
    %v4942 = vsel %vm4932, %v4939, %v4941
    %v4943 = vsel %vm4931, %v4921, %v4924
    %v4944 = vsel %vm4934, %v4930, 1326507024
    %v4945 = vsel %vm4933, %v4927, %v4944
    %v4946 = vsel %vm4932, %v4943, %v4945
    %v4947 = vshll.u32 %v4907, 8
    %v4948 = vmul.u32.u64.compose %v4947, %v4946
    %v4949 = vextract.low.u32 %v4948
    %v4950 = vextract.high.u32 %v4948
    %v4951 = vmul.u32.u64.compose %v4947, %v4942
    %v4952 = vextract.low.u32 %v4951
    %v4953 = vextract.high.u32 %v4951
    %v4954 = vmul.u32 %v4947, %v4938
    %v4955 = vadd.s32 %v4950, %v4952
    %vm4956 = vc.u32 %v4950, %v4952
    %v4957 = vadd.s32 %v4953, 1
    %v4958 = vsel %vm4956, %v4957, %v4953
    %v4959 = vadd.s32 %v4954, %v4958
    %v4960 = vadd.s32 %v4959, 536870912
    %v4961 = vshrl.u32 %v4960, 30
    %v4962 = vshll.u32 %v4961, 30
    %v4963 = vsub.s32 %v4959, %v4962
    %vm4964 = vcmp.lt.s32.totalorder %v4963, 0
    %v4965 = vsub.s32 0, %v4963
    %v4966 = vsel %vm4964, %v4965, %v4963
    %v4967 = vclz %v4966
    %v4968 = vsub.s32 %v4967, 2
    %vm4969 = vcmp.gt.s32.totalorder 0, %v4968
    %v4970 = vsel %vm4969, 0, %v4968
    %v4971 = vsub.s32 32, %v4970
    %v4972 = vshll.u32 %v4963, %v4970
    %v4973 = vshrl.u32 %v4955, %v4971
    %v4974 = vor.u32 %v4972, %v4973
    %v4975 = vsub.s32 4294967266, %v4970
    %v4976 = vadd.s32 %v4975, 127
    %v4977 = vshll.u32 %v4976, 23
    %v4978 = vor.u32 4788187, %v4977
    %v4979 = vand.u32 2147483647, %v4978
    %v4981 = vcvt.s32.f32 %v4974
    %v4982 = vmul.f32 %v4981, %v4979
    %v4983 = vxor.u32 %v4982, 2147483648
    %v4984 = vsel %vm4901, %v4983, %v4982
    %v4985 = vsub.s32 4, %v4961
    %v4986 = vsel %vm4901, %v4985, %v4961
    %v4987 = vsel %vm4900, %v4043, %v4984
    %v4988 = vsel %vm4900, 0, %v4986
    %v4989 = vcosq.f32.pop %v4987
    %v4990 = vsinq.f32.pop %v4987
    %vm4991 = vweird.f32 %v4043
    %v4992 = vadd.s32 %v4988, 3
    %v4993 = vand.u32 %v4992, 3
    %vm4994 = vcmp.lt.s32.totalorder %v4993, 2
    %vm4995 = vcmp.eq.s32.totalorder %v4993, 0
    %v4996 = vxor.u32 %v4990, 2147483648
    %v4997 = vsel %vm4995, %v4989, %v4996
    %vm4998 = vcmp.eq.s32.totalorder %v4993, 2
    %v4999 = vxor.u32 %v4989, 2147483648
    %v5000 = vsel %vm4998, %v4999, %v4990
    %v5001 = vsel %vm4994, %v4997, %v5000
    %v5002 = vsel %vm4991, nan, %v5001
    %v5003 = vand.u32 2147483647, %v4044
    %vm5004 = vcmp.le.f32.partialorder %v5003, 0.7853982
    %vm5005 = vcmp.lt.s32.totalorder %v4044, 0
    %v5006 = vand.u32 %v4044, 2139095040
    %v5007 = vshrl.u32 %v5006, 23
    %v5008 = vsub.s32 %v5007, 127
    %v5009 = vand.u32 2147483647, %v4044
    %v5010 = vand.u32 %v5009, 8388607
    %v5011 = vor.u32 %v5010, 8388608
    %v5012 = vsub.s32 0, %v5011
    %v5013 = vadd.s32 %v5008, 1
    %vm5014 = vcmp.gt.s32.totalorder %v5013, 0
    %v5015 = vsel %vm5014, %v5013, 0
    %v5016 = vshrl.u32 %v5015, 5
    %v5017 = vand.u32 %v5015, 31
    %v5018 = vsub.s32 32, %v5017
    %v5019 = vshrl.u32 683565275, %v5018
    %v5020 = vshll.u32 683565275, %v5017
    %v5021 = vshrl.u32 2475754826, %v5018
    %v5022 = vor.u32 %v5020, %v5021
    %v5023 = vshll.u32 2475754826, %v5017
    %v5024 = vshrl.u32 2131351028, %v5018
    %v5025 = vor.u32 %v5023, %v5024
    %v5026 = vshll.u32 2131351028, %v5017
    %v5027 = vshrl.u32 2102212464, %v5018
    %v5028 = vor.u32 %v5026, %v5027
    %v5029 = vshll.u32 2102212464, %v5017
    %v5030 = vshrl.u32 920167782, %v5018
    %v5031 = vor.u32 %v5029, %v5030
    %v5032 = vshll.u32 920167782, %v5017
    %v5033 = vshrl.u32 1326507024, %v5018
    %v5034 = vor.u32 %v5032, %v5033
    %vm5035 = vcmp.lt.s32.totalorder %v5016, 1
    %vm5036 = vcmp.lt.s32.totalorder %v5016, 2
    %vm5037 = vcmp.lt.s32.totalorder %v5016, 3
    %vm5038 = vcmp.lt.s32.totalorder %v5016, 4
    %v5039 = vsel %vm5035, %v5019, %v5022
    %v5040 = vsel %vm5038, %v5028, 2102212464
    %v5041 = vsel %vm5037, %v5025, %v5040
    %v5042 = vsel %vm5036, %v5039, %v5041
    %v5043 = vsel %vm5035, %v5022, %v5025
    %v5044 = vsel %vm5038, %v5031, 920167782
    %v5045 = vsel %vm5037, %v5028, %v5044
    %v5046 = vsel %vm5036, %v5043, %v5045
    %v5047 = vsel %vm5035, %v5025, %v5028
    %v5048 = vsel %vm5038, %v5034, 1326507024
    %v5049 = vsel %vm5037, %v5031, %v5048
    %v5050 = vsel %vm5036, %v5047, %v5049
    %v5051 = vshll.u32 %v5011, 8
    %v5052 = vmul.u32.u64.compose %v5051, %v5050
    %v5053 = vextract.low.u32 %v5052
    %v5054 = vextract.high.u32 %v5052
    %v5055 = vmul.u32.u64.compose %v5051, %v5046
    %v5056 = vextract.low.u32 %v5055
    %v5057 = vextract.high.u32 %v5055
    %v5058 = vmul.u32 %v5051, %v5042
    %v5059 = vadd.s32 %v5054, %v5056
    %vm5060 = vc.u32 %v5054, %v5056
    %v5061 = vadd.s32 %v5057, 1
    %v5062 = vsel %vm5060, %v5061, %v5057
    %v5063 = vadd.s32 %v5058, %v5062
    %v5064 = vadd.s32 %v5063, 536870912
    %v5065 = vshrl.u32 %v5064, 30
    %v5066 = vshll.u32 %v5065, 30
    %v5067 = vsub.s32 %v5063, %v5066
    %vm5068 = vcmp.lt.s32.totalorder %v5067, 0
    %v5069 = vsub.s32 0, %v5067
    %v5070 = vsel %vm5068, %v5069, %v5067
    %v5071 = vclz %v5070
    %v5072 = vsub.s32 %v5071, 2
    %vm5073 = vcmp.gt.s32.totalorder 0, %v5072
    %v5074 = vsel %vm5073, 0, %v5072
    %v5075 = vsub.s32 32, %v5074
    %v5076 = vshll.u32 %v5067, %v5074
    %v5077 = vshrl.u32 %v5059, %v5075
    %v5078 = vor.u32 %v5076, %v5077
    %v5079 = vsub.s32 4294967266, %v5074
    %v5080 = vadd.s32 %v5079, 127
    %v5081 = vshll.u32 %v5080, 23
    %v5082 = vor.u32 4788187, %v5081
    %v5083 = vand.u32 2147483647, %v5082
    %v5085 = vcvt.s32.f32 %v5078
    %v5086 = vmul.f32 %v5085, %v5083
    %v5087 = vxor.u32 %v5086, 2147483648
    %v5088 = vsel %vm5005, %v5087, %v5086
    %v5089 = vsub.s32 4, %v5065
    %v5090 = vsel %vm5005, %v5089, %v5065
    %v5091 = vsel %vm5004, %v4044, %v5088
    %v5092 = vsel %vm5004, 0, %v5090
    %v5093 = vcosq.f32.pop %v5091
    %v5094 = vsinq.f32.pop %v5091
    %vm5095 = vweird.f32 %v4044
    %v5096 = vadd.s32 %v5092, 3
    %v5097 = vand.u32 %v5096, 3
    %vm5098 = vcmp.lt.s32.totalorder %v5097, 2
    %vm5099 = vcmp.eq.s32.totalorder %v5097, 0
    %v5100 = vxor.u32 %v5094, 2147483648
    %v5101 = vsel %vm5099, %v5093, %v5100
    %vm5102 = vcmp.eq.s32.totalorder %v5097, 2
    %v5103 = vxor.u32 %v5093, 2147483648
    %v5104 = vsel %vm5102, %v5103, %v5094
    %v5105 = vsel %vm5098, %v5101, %v5104
    %v5106 = vsel %vm5095, nan, %v5105
    %v5107 = vand.u32 2147483647, %v4045
    %vm5108 = vcmp.le.f32.partialorder %v5107, 0.7853982
    %vm5109 = vcmp.lt.s32.totalorder %v4045, 0
    %v5110 = vand.u32 %v4045, 2139095040
    %v5111 = vshrl.u32 %v5110, 23
    %v5112 = vsub.s32 %v5111, 127
    %v5113 = vand.u32 2147483647, %v4045
    %v5114 = vand.u32 %v5113, 8388607
    %v5115 = vor.u32 %v5114, 8388608
    %v5116 = vsub.s32 0, %v5115
    %v5117 = vadd.s32 %v5112, 1
    %vm5118 = vcmp.gt.s32.totalorder %v5117, 0
    %v5119 = vsel %vm5118, %v5117, 0
    %v5120 = vshrl.u32 %v5119, 5
    %v5121 = vand.u32 %v5119, 31
    %v5122 = vsub.s32 32, %v5121
    %v5123 = vshrl.u32 683565275, %v5122
    %v5124 = vshll.u32 683565275, %v5121
    %v5125 = vshrl.u32 2475754826, %v5122
    %v5126 = vor.u32 %v5124, %v5125
    %v5127 = vshll.u32 2475754826, %v5121
    %v5128 = vshrl.u32 2131351028, %v5122
    %v5129 = vor.u32 %v5127, %v5128
    %v5130 = vshll.u32 2131351028, %v5121
    %v5131 = vshrl.u32 2102212464, %v5122
    %v5132 = vor.u32 %v5130, %v5131
    %v5133 = vshll.u32 2102212464, %v5121
    %v5134 = vshrl.u32 920167782, %v5122
    %v5135 = vor.u32 %v5133, %v5134
    %v5136 = vshll.u32 920167782, %v5121
    %v5137 = vshrl.u32 1326507024, %v5122
    %v5138 = vor.u32 %v5136, %v5137
    %vm5139 = vcmp.lt.s32.totalorder %v5120, 1
    %vm5140 = vcmp.lt.s32.totalorder %v5120, 2
    %vm5141 = vcmp.lt.s32.totalorder %v5120, 3
    %vm5142 = vcmp.lt.s32.totalorder %v5120, 4
    %v5143 = vsel %vm5139, %v5123, %v5126
    %v5144 = vsel %vm5142, %v5132, 2102212464
    %v5145 = vsel %vm5141, %v5129, %v5144
    %v5146 = vsel %vm5140, %v5143, %v5145
    %v5147 = vsel %vm5139, %v5126, %v5129
    %v5148 = vsel %vm5142, %v5135, 920167782
    %v5149 = vsel %vm5141, %v5132, %v5148
    %v5150 = vsel %vm5140, %v5147, %v5149
    %v5151 = vsel %vm5139, %v5129, %v5132
    %v5152 = vsel %vm5142, %v5138, 1326507024
    %v5153 = vsel %vm5141, %v5135, %v5152
    %v5154 = vsel %vm5140, %v5151, %v5153
    %v5155 = vshll.u32 %v5115, 8
    %v5156 = vmul.u32.u64.compose %v5155, %v5154
    %v5157 = vextract.low.u32 %v5156
    %v5158 = vextract.high.u32 %v5156
    %v5159 = vmul.u32.u64.compose %v5155, %v5150
    %v5160 = vextract.low.u32 %v5159
    %v5161 = vextract.high.u32 %v5159
    %v5162 = vmul.u32 %v5155, %v5146
    %v5163 = vadd.s32 %v5158, %v5160
    %vm5164 = vc.u32 %v5158, %v5160
    %v5165 = vadd.s32 %v5161, 1
    %v5166 = vsel %vm5164, %v5165, %v5161
    %v5167 = vadd.s32 %v5162, %v5166
    %v5168 = vadd.s32 %v5167, 536870912
    %v5169 = vshrl.u32 %v5168, 30
    %v5170 = vshll.u32 %v5169, 30
    %v5171 = vsub.s32 %v5167, %v5170
    %vm5172 = vcmp.lt.s32.totalorder %v5171, 0
    %v5173 = vsub.s32 0, %v5171
    %v5174 = vsel %vm5172, %v5173, %v5171
    %v5175 = vclz %v5174
    %v5176 = vsub.s32 %v5175, 2
    %vm5177 = vcmp.gt.s32.totalorder 0, %v5176
    %v5178 = vsel %vm5177, 0, %v5176
    %v5179 = vsub.s32 32, %v5178
    %v5180 = vshll.u32 %v5171, %v5178
    %v5181 = vshrl.u32 %v5163, %v5179
    %v5182 = vor.u32 %v5180, %v5181
    %v5183 = vsub.s32 4294967266, %v5178
    %v5184 = vadd.s32 %v5183, 127
    %v5185 = vshll.u32 %v5184, 23
    %v5186 = vor.u32 4788187, %v5185
    %v5187 = vand.u32 2147483647, %v5186
    %v5189 = vcvt.s32.f32 %v5182
    %v5190 = vmul.f32 %v5189, %v5187
    %v5191 = vxor.u32 %v5190, 2147483648
    %v5192 = vsel %vm5109, %v5191, %v5190
    %v5193 = vsub.s32 4, %v5169
    %v5194 = vsel %vm5109, %v5193, %v5169
    %v5195 = vsel %vm5108, %v4045, %v5192
    %v5196 = vsel %vm5108, 0, %v5194
    %v5197 = vcosq.f32.pop %v5195
    %v5198 = vsinq.f32.pop %v5195
    %vm5199 = vweird.f32 %v4045
    %v5200 = vadd.s32 %v5196, 3
    %v5201 = vand.u32 %v5200, 3
    %vm5202 = vcmp.lt.s32.totalorder %v5201, 2
    %vm5203 = vcmp.eq.s32.totalorder %v5201, 0
    %v5204 = vxor.u32 %v5198, 2147483648
    %v5205 = vsel %vm5203, %v5197, %v5204
    %vm5206 = vcmp.eq.s32.totalorder %v5201, 2
    %v5207 = vxor.u32 %v5197, 2147483648
    %v5208 = vsel %vm5206, %v5207, %v5198
    %v5209 = vsel %vm5202, %v5205, %v5208
    %v5210 = vsel %vm5199, nan, %v5209
    %v5211 = vand.u32 2147483647, %v4046
    %vm5212 = vcmp.le.f32.partialorder %v5211, 0.7853982
    %vm5213 = vcmp.lt.s32.totalorder %v4046, 0
    %v5214 = vand.u32 %v4046, 2139095040
    %v5215 = vshrl.u32 %v5214, 23
    %v5216 = vsub.s32 %v5215, 127
    %v5217 = vand.u32 2147483647, %v4046
    %v5218 = vand.u32 %v5217, 8388607
    %v5219 = vor.u32 %v5218, 8388608
    %v5220 = vsub.s32 0, %v5219
    %v5221 = vadd.s32 %v5216, 1
    %vm5222 = vcmp.gt.s32.totalorder %v5221, 0
    %v5223 = vsel %vm5222, %v5221, 0
    %v5224 = vshrl.u32 %v5223, 5
    %v5225 = vand.u32 %v5223, 31
    %v5226 = vsub.s32 32, %v5225
    %v5227 = vshrl.u32 683565275, %v5226
    %v5228 = vshll.u32 683565275, %v5225
    %v5229 = vshrl.u32 2475754826, %v5226
    %v5230 = vor.u32 %v5228, %v5229
    %v5231 = vshll.u32 2475754826, %v5225
    %v5232 = vshrl.u32 2131351028, %v5226
    %v5233 = vor.u32 %v5231, %v5232
    %v5234 = vshll.u32 2131351028, %v5225
    %v5235 = vshrl.u32 2102212464, %v5226
    %v5236 = vor.u32 %v5234, %v5235
    %v5237 = vshll.u32 2102212464, %v5225
    %v5238 = vshrl.u32 920167782, %v5226
    %v5239 = vor.u32 %v5237, %v5238
    %v5240 = vshll.u32 920167782, %v5225
    %v5241 = vshrl.u32 1326507024, %v5226
    %v5242 = vor.u32 %v5240, %v5241
    %vm5243 = vcmp.lt.s32.totalorder %v5224, 1
    %vm5244 = vcmp.lt.s32.totalorder %v5224, 2
    %vm5245 = vcmp.lt.s32.totalorder %v5224, 3
    %vm5246 = vcmp.lt.s32.totalorder %v5224, 4
    %v5247 = vsel %vm5243, %v5227, %v5230
    %v5248 = vsel %vm5246, %v5236, 2102212464
    %v5249 = vsel %vm5245, %v5233, %v5248
    %v5250 = vsel %vm5244, %v5247, %v5249
    %v5251 = vsel %vm5243, %v5230, %v5233
    %v5252 = vsel %vm5246, %v5239, 920167782
    %v5253 = vsel %vm5245, %v5236, %v5252
    %v5254 = vsel %vm5244, %v5251, %v5253
    %v5255 = vsel %vm5243, %v5233, %v5236
    %v5256 = vsel %vm5246, %v5242, 1326507024
    %v5257 = vsel %vm5245, %v5239, %v5256
    %v5258 = vsel %vm5244, %v5255, %v5257
    %v5259 = vshll.u32 %v5219, 8
    %v5260 = vmul.u32.u64.compose %v5259, %v5258
    %v5261 = vextract.low.u32 %v5260
    %v5262 = vextract.high.u32 %v5260
    %v5263 = vmul.u32.u64.compose %v5259, %v5254
    %v5264 = vextract.low.u32 %v5263
    %v5265 = vextract.high.u32 %v5263
    %v5266 = vmul.u32 %v5259, %v5250
    %v5267 = vadd.s32 %v5262, %v5264
    %vm5268 = vc.u32 %v5262, %v5264
    %v5269 = vadd.s32 %v5265, 1
    %v5270 = vsel %vm5268, %v5269, %v5265
    %v5271 = vadd.s32 %v5266, %v5270
    %v5272 = vadd.s32 %v5271, 536870912
    %v5273 = vshrl.u32 %v5272, 30
    %v5274 = vshll.u32 %v5273, 30
    %v5275 = vsub.s32 %v5271, %v5274
    %vm5276 = vcmp.lt.s32.totalorder %v5275, 0
    %v5277 = vsub.s32 0, %v5275
    %v5278 = vsel %vm5276, %v5277, %v5275
    %v5279 = vclz %v5278
    %v5280 = vsub.s32 %v5279, 2
    %vm5281 = vcmp.gt.s32.totalorder 0, %v5280
    %v5282 = vsel %vm5281, 0, %v5280
    %v5283 = vsub.s32 32, %v5282
    %v5284 = vshll.u32 %v5275, %v5282
    %v5285 = vshrl.u32 %v5267, %v5283
    %v5286 = vor.u32 %v5284, %v5285
    %v5287 = vsub.s32 4294967266, %v5282
    %v5288 = vadd.s32 %v5287, 127
    %v5289 = vshll.u32 %v5288, 23
    %v5290 = vor.u32 4788187, %v5289
    %v5291 = vand.u32 2147483647, %v5290
    %v5293 = vcvt.s32.f32 %v5286
    %v5294 = vmul.f32 %v5293, %v5291
    %v5295 = vxor.u32 %v5294, 2147483648
    %v5296 = vsel %vm5213, %v5295, %v5294
    %v5297 = vsub.s32 4, %v5273
    %v5298 = vsel %vm5213, %v5297, %v5273
    %v5299 = vsel %vm5212, %v4046, %v5296
    %v5300 = vsel %vm5212, 0, %v5298
    %v5301 = vcosq.f32.pop %v5299
    %v5302 = vsinq.f32.pop %v5299
    %vm5303 = vweird.f32 %v4046
    %v5304 = vadd.s32 %v5300, 3
    %v5305 = vand.u32 %v5304, 3
    %vm5306 = vcmp.lt.s32.totalorder %v5305, 2
    %vm5307 = vcmp.eq.s32.totalorder %v5305, 0
    %v5308 = vxor.u32 %v5302, 2147483648
    %v5309 = vsel %vm5307, %v5301, %v5308
    %vm5310 = vcmp.eq.s32.totalorder %v5305, 2
    %v5311 = vxor.u32 %v5301, 2147483648
    %v5312 = vsel %vm5310, %v5311, %v5302
    %v5313 = vsel %vm5306, %v5309, %v5312
    %v5314 = vsel %vm5303, nan, %v5313
    %v5315 = vand.u32 2147483647, %v4047
    %vm5316 = vcmp.le.f32.partialorder %v5315, 0.7853982
    %vm5317 = vcmp.lt.s32.totalorder %v4047, 0
    %v5318 = vand.u32 %v4047, 2139095040
    %v5319 = vshrl.u32 %v5318, 23
    %v5320 = vsub.s32 %v5319, 127
    %v5321 = vand.u32 2147483647, %v4047
    %v5322 = vand.u32 %v5321, 8388607
    %v5323 = vor.u32 %v5322, 8388608
    %v5324 = vsub.s32 0, %v5323
    %v5325 = vadd.s32 %v5320, 1
    %vm5326 = vcmp.gt.s32.totalorder %v5325, 0
    %v5327 = vsel %vm5326, %v5325, 0
    %v5328 = vshrl.u32 %v5327, 5
    %v5329 = vand.u32 %v5327, 31
    %v5330 = vsub.s32 32, %v5329
    %v5331 = vshrl.u32 683565275, %v5330
    %v5332 = vshll.u32 683565275, %v5329
    %v5333 = vshrl.u32 2475754826, %v5330
    %v5334 = vor.u32 %v5332, %v5333
    %v5335 = vshll.u32 2475754826, %v5329
    %v5336 = vshrl.u32 2131351028, %v5330
    %v5337 = vor.u32 %v5335, %v5336
    %v5338 = vshll.u32 2131351028, %v5329
    %v5339 = vshrl.u32 2102212464, %v5330
    %v5340 = vor.u32 %v5338, %v5339
    %v5341 = vshll.u32 2102212464, %v5329
    %v5342 = vshrl.u32 920167782, %v5330
    %v5343 = vor.u32 %v5341, %v5342
    %v5344 = vshll.u32 920167782, %v5329
    %v5345 = vshrl.u32 1326507024, %v5330
    %v5346 = vor.u32 %v5344, %v5345
    %vm5347 = vcmp.lt.s32.totalorder %v5328, 1
    %vm5348 = vcmp.lt.s32.totalorder %v5328, 2
    %vm5349 = vcmp.lt.s32.totalorder %v5328, 3
    %vm5350 = vcmp.lt.s32.totalorder %v5328, 4
    %v5351 = vsel %vm5347, %v5331, %v5334
    %v5352 = vsel %vm5350, %v5340, 2102212464
    %v5353 = vsel %vm5349, %v5337, %v5352
    %v5354 = vsel %vm5348, %v5351, %v5353
    %v5355 = vsel %vm5347, %v5334, %v5337
    %v5356 = vsel %vm5350, %v5343, 920167782
    %v5357 = vsel %vm5349, %v5340, %v5356
    %v5358 = vsel %vm5348, %v5355, %v5357
    %v5359 = vsel %vm5347, %v5337, %v5340
    %v5360 = vsel %vm5350, %v5346, 1326507024
    %v5361 = vsel %vm5349, %v5343, %v5360
    %v5362 = vsel %vm5348, %v5359, %v5361
    %v5363 = vshll.u32 %v5323, 8
    %v5364 = vmul.u32.u64.compose %v5363, %v5362
    %v5365 = vextract.low.u32 %v5364
    %v5366 = vextract.high.u32 %v5364
    %v5367 = vmul.u32.u64.compose %v5363, %v5358
    %v5368 = vextract.low.u32 %v5367
    %v5369 = vextract.high.u32 %v5367
    %v5370 = vmul.u32 %v5363, %v5354
    %v5371 = vadd.s32 %v5366, %v5368
    %vm5372 = vc.u32 %v5366, %v5368
    %v5373 = vadd.s32 %v5369, 1
    %v5374 = vsel %vm5372, %v5373, %v5369
    %v5375 = vadd.s32 %v5370, %v5374
    %v5376 = vadd.s32 %v5375, 536870912
    %v5377 = vshrl.u32 %v5376, 30
    %v5378 = vshll.u32 %v5377, 30
    %v5379 = vsub.s32 %v5375, %v5378
    %vm5380 = vcmp.lt.s32.totalorder %v5379, 0
    %v5381 = vsub.s32 0, %v5379
    %v5382 = vsel %vm5380, %v5381, %v5379
    %v5383 = vclz %v5382
    %v5384 = vsub.s32 %v5383, 2
    %vm5385 = vcmp.gt.s32.totalorder 0, %v5384
    %v5386 = vsel %vm5385, 0, %v5384
    %v5387 = vsub.s32 32, %v5386
    %v5388 = vshll.u32 %v5379, %v5386
    %v5389 = vshrl.u32 %v5371, %v5387
    %v5390 = vor.u32 %v5388, %v5389
    %v5391 = vsub.s32 4294967266, %v5386
    %v5392 = vadd.s32 %v5391, 127
    %v5393 = vshll.u32 %v5392, 23
    %v5394 = vor.u32 4788187, %v5393
    %v5395 = vand.u32 2147483647, %v5394
    %v5397 = vcvt.s32.f32 %v5390
    %v5398 = vmul.f32 %v5397, %v5395
    %v5399 = vxor.u32 %v5398, 2147483648
    %v5400 = vsel %vm5317, %v5399, %v5398
    %v5401 = vsub.s32 4, %v5377
    %v5402 = vsel %vm5317, %v5401, %v5377
    %v5403 = vsel %vm5316, %v4047, %v5400
    %v5404 = vsel %vm5316, 0, %v5402
    %v5405 = vcosq.f32.pop %v5403
    %v5406 = vsinq.f32.pop %v5403
    %vm5407 = vweird.f32 %v4047
    %v5408 = vadd.s32 %v5404, 3
    %v5409 = vand.u32 %v5408, 3
    %vm5410 = vcmp.lt.s32.totalorder %v5409, 2
    %vm5411 = vcmp.eq.s32.totalorder %v5409, 0
    %v5412 = vxor.u32 %v5406, 2147483648
    %v5413 = vsel %vm5411, %v5405, %v5412
    %vm5414 = vcmp.eq.s32.totalorder %v5409, 2
    %v5415 = vxor.u32 %v5405, 2147483648
    %v5416 = vsel %vm5414, %v5415, %v5406
    %v5417 = vsel %vm5410, %v5413, %v5416
    %v5418 = vsel %vm5407, nan, %v5417
    %v5419 = vand.u32 2147483647, %v4048
    %vm5420 = vcmp.le.f32.partialorder %v5419, 0.7853982
    %vm5421 = vcmp.lt.s32.totalorder %v4048, 0
    %v5422 = vand.u32 %v4048, 2139095040
    %v5423 = vshrl.u32 %v5422, 23
    %v5424 = vsub.s32 %v5423, 127
    %v5425 = vand.u32 2147483647, %v4048
    %v5426 = vand.u32 %v5425, 8388607
    %v5427 = vor.u32 %v5426, 8388608
    %v5428 = vsub.s32 0, %v5427
    %v5429 = vadd.s32 %v5424, 1
    %vm5430 = vcmp.gt.s32.totalorder %v5429, 0
    %v5431 = vsel %vm5430, %v5429, 0
    %v5432 = vshrl.u32 %v5431, 5
    %v5433 = vand.u32 %v5431, 31
    %v5434 = vsub.s32 32, %v5433
    %v5435 = vshrl.u32 683565275, %v5434
    %v5436 = vshll.u32 683565275, %v5433
    %v5437 = vshrl.u32 2475754826, %v5434
    %v5438 = vor.u32 %v5436, %v5437
    %v5439 = vshll.u32 2475754826, %v5433
    %v5440 = vshrl.u32 2131351028, %v5434
    %v5441 = vor.u32 %v5439, %v5440
    %v5442 = vshll.u32 2131351028, %v5433
    %v5443 = vshrl.u32 2102212464, %v5434
    %v5444 = vor.u32 %v5442, %v5443
    %v5445 = vshll.u32 2102212464, %v5433
    %v5446 = vshrl.u32 920167782, %v5434
    %v5447 = vor.u32 %v5445, %v5446
    %v5448 = vshll.u32 920167782, %v5433
    %v5449 = vshrl.u32 1326507024, %v5434
    %v5450 = vor.u32 %v5448, %v5449
    %vm5451 = vcmp.lt.s32.totalorder %v5432, 1
    %vm5452 = vcmp.lt.s32.totalorder %v5432, 2
    %vm5453 = vcmp.lt.s32.totalorder %v5432, 3
    %vm5454 = vcmp.lt.s32.totalorder %v5432, 4
    %v5455 = vsel %vm5451, %v5435, %v5438
    %v5456 = vsel %vm5454, %v5444, 2102212464
    %v5457 = vsel %vm5453, %v5441, %v5456
    %v5458 = vsel %vm5452, %v5455, %v5457
    %v5459 = vsel %vm5451, %v5438, %v5441
    %v5460 = vsel %vm5454, %v5447, 920167782
    %v5461 = vsel %vm5453, %v5444, %v5460
    %v5462 = vsel %vm5452, %v5459, %v5461
    %v5463 = vsel %vm5451, %v5441, %v5444
    %v5464 = vsel %vm5454, %v5450, 1326507024
    %v5465 = vsel %vm5453, %v5447, %v5464
    %v5466 = vsel %vm5452, %v5463, %v5465
    %v5467 = vshll.u32 %v5427, 8
    %v5468 = vmul.u32.u64.compose %v5467, %v5466
    %v5469 = vextract.low.u32 %v5468
    %v5470 = vextract.high.u32 %v5468
    %v5471 = vmul.u32.u64.compose %v5467, %v5462
    %v5472 = vextract.low.u32 %v5471
    %v5473 = vextract.high.u32 %v5471
    %v5474 = vmul.u32 %v5467, %v5458
    %v5475 = vadd.s32 %v5470, %v5472
    %vm5476 = vc.u32 %v5470, %v5472
    %v5477 = vadd.s32 %v5473, 1
    %v5478 = vsel %vm5476, %v5477, %v5473
    %v5479 = vadd.s32 %v5474, %v5478
    %v5480 = vadd.s32 %v5479, 536870912
    %v5481 = vshrl.u32 %v5480, 30
    %v5482 = vshll.u32 %v5481, 30
    %v5483 = vsub.s32 %v5479, %v5482
    %vm5484 = vcmp.lt.s32.totalorder %v5483, 0
    %v5485 = vsub.s32 0, %v5483
    %v5486 = vsel %vm5484, %v5485, %v5483
    %v5487 = vclz %v5486
    %v5488 = vsub.s32 %v5487, 2
    %vm5489 = vcmp.gt.s32.totalorder 0, %v5488
    %v5490 = vsel %vm5489, 0, %v5488
    %v5491 = vsub.s32 32, %v5490
    %v5492 = vshll.u32 %v5483, %v5490
    %v5493 = vshrl.u32 %v5475, %v5491
    %v5494 = vor.u32 %v5492, %v5493
    %v5495 = vsub.s32 4294967266, %v5490
    %v5496 = vadd.s32 %v5495, 127
    %v5497 = vshll.u32 %v5496, 23
    %v5498 = vor.u32 4788187, %v5497
    %v5499 = vand.u32 2147483647, %v5498
    %v5501 = vcvt.s32.f32 %v5494
    %v5502 = vmul.f32 %v5501, %v5499
    %v5503 = vxor.u32 %v5502, 2147483648
    %v5504 = vsel %vm5421, %v5503, %v5502
    %v5505 = vsub.s32 4, %v5481
    %v5506 = vsel %vm5421, %v5505, %v5481
    %v5507 = vsel %vm5420, %v4048, %v5504
    %v5508 = vsel %vm5420, 0, %v5506
    %v5509 = vcosq.f32.pop %v5507
    %v5510 = vsinq.f32.pop %v5507
    %vm5511 = vweird.f32 %v4048
    %v5512 = vadd.s32 %v5508, 3
    %v5513 = vand.u32 %v5512, 3
    %vm5514 = vcmp.lt.s32.totalorder %v5513, 2
    %vm5515 = vcmp.eq.s32.totalorder %v5513, 0
    %v5516 = vxor.u32 %v5510, 2147483648
    %v5517 = vsel %vm5515, %v5509, %v5516
    %vm5518 = vcmp.eq.s32.totalorder %v5513, 2
    %v5519 = vxor.u32 %v5509, 2147483648
    %v5520 = vsel %vm5518, %v5519, %v5510
    %v5521 = vsel %vm5514, %v5517, %v5520
    %v5522 = vsel %vm5511, nan, %v5521
    %v5523 = vand.u32 2147483647, %v4049
    %vm5524 = vcmp.le.f32.partialorder %v5523, 0.7853982
    %vm5525 = vcmp.lt.s32.totalorder %v4049, 0
    %v5526 = vand.u32 %v4049, 2139095040
    %v5527 = vshrl.u32 %v5526, 23
    %v5528 = vsub.s32 %v5527, 127
    %v5529 = vand.u32 2147483647, %v4049
    %v5530 = vand.u32 %v5529, 8388607
    %v5531 = vor.u32 %v5530, 8388608
    %v5532 = vsub.s32 0, %v5531
    %v5533 = vadd.s32 %v5528, 1
    %vm5534 = vcmp.gt.s32.totalorder %v5533, 0
    %v5535 = vsel %vm5534, %v5533, 0
    %v5536 = vshrl.u32 %v5535, 5
    %v5537 = vand.u32 %v5535, 31
    %v5538 = vsub.s32 32, %v5537
    %v5539 = vshrl.u32 683565275, %v5538
    %v5540 = vshll.u32 683565275, %v5537
    %v5541 = vshrl.u32 2475754826, %v5538
    %v5542 = vor.u32 %v5540, %v5541
    %v5543 = vshll.u32 2475754826, %v5537
    %v5544 = vshrl.u32 2131351028, %v5538
    %v5545 = vor.u32 %v5543, %v5544
    %v5546 = vshll.u32 2131351028, %v5537
    %v5547 = vshrl.u32 2102212464, %v5538
    %v5548 = vor.u32 %v5546, %v5547
    %v5549 = vshll.u32 2102212464, %v5537
    %v5550 = vshrl.u32 920167782, %v5538
    %v5551 = vor.u32 %v5549, %v5550
    %v5552 = vshll.u32 920167782, %v5537
    %v5553 = vshrl.u32 1326507024, %v5538
    %v5554 = vor.u32 %v5552, %v5553
    %vm5555 = vcmp.lt.s32.totalorder %v5536, 1
    %vm5556 = vcmp.lt.s32.totalorder %v5536, 2
    %vm5557 = vcmp.lt.s32.totalorder %v5536, 3
    %vm5558 = vcmp.lt.s32.totalorder %v5536, 4
    %v5559 = vsel %vm5555, %v5539, %v5542
    %v5560 = vsel %vm5558, %v5548, 2102212464
    %v5561 = vsel %vm5557, %v5545, %v5560
    %v5562 = vsel %vm5556, %v5559, %v5561
    %v5563 = vsel %vm5555, %v5542, %v5545
    %v5564 = vsel %vm5558, %v5551, 920167782
    %v5565 = vsel %vm5557, %v5548, %v5564
    %v5566 = vsel %vm5556, %v5563, %v5565
    %v5567 = vsel %vm5555, %v5545, %v5548
    %v5568 = vsel %vm5558, %v5554, 1326507024
    %v5569 = vsel %vm5557, %v5551, %v5568
    %v5570 = vsel %vm5556, %v5567, %v5569
    %v5571 = vshll.u32 %v5531, 8
    %v5572 = vmul.u32.u64.compose %v5571, %v5570
    %v5573 = vextract.low.u32 %v5572
    %v5574 = vextract.high.u32 %v5572
    %v5575 = vmul.u32.u64.compose %v5571, %v5566
    %v5576 = vextract.low.u32 %v5575
    %v5577 = vextract.high.u32 %v5575
    %v5578 = vmul.u32 %v5571, %v5562
    %v5579 = vadd.s32 %v5574, %v5576
    %vm5580 = vc.u32 %v5574, %v5576
    %v5581 = vadd.s32 %v5577, 1
    %v5582 = vsel %vm5580, %v5581, %v5577
    %v5583 = vadd.s32 %v5578, %v5582
    %v5584 = vadd.s32 %v5583, 536870912
    %v5585 = vshrl.u32 %v5584, 30
    %v5586 = vshll.u32 %v5585, 30
    %v5587 = vsub.s32 %v5583, %v5586
    %vm5588 = vcmp.lt.s32.totalorder %v5587, 0
    %v5589 = vsub.s32 0, %v5587
    %v5590 = vsel %vm5588, %v5589, %v5587
    %v5591 = vclz %v5590
    %v5592 = vsub.s32 %v5591, 2
    %vm5593 = vcmp.gt.s32.totalorder 0, %v5592
    %v5594 = vsel %vm5593, 0, %v5592
    %v5595 = vsub.s32 32, %v5594
    %v5596 = vshll.u32 %v5587, %v5594
    %v5597 = vshrl.u32 %v5579, %v5595
    %v5598 = vor.u32 %v5596, %v5597
    %v5599 = vsub.s32 4294967266, %v5594
    %v5600 = vadd.s32 %v5599, 127
    %v5601 = vshll.u32 %v5600, 23
    %v5602 = vor.u32 4788187, %v5601
    %v5603 = vand.u32 2147483647, %v5602
    %v5605 = vcvt.s32.f32 %v5598
    %v5606 = vmul.f32 %v5605, %v5603
    %v5607 = vxor.u32 %v5606, 2147483648
    %v5608 = vsel %vm5525, %v5607, %v5606
    %v5609 = vsub.s32 4, %v5585
    %v5610 = vsel %vm5525, %v5609, %v5585
    %v5611 = vsel %vm5524, %v4049, %v5608
    %v5612 = vsel %vm5524, 0, %v5610
    %v5613 = vcosq.f32.pop %v5611
    %v5614 = vsinq.f32.pop %v5611
    %vm5615 = vweird.f32 %v4049
    %v5616 = vadd.s32 %v5612, 3
    %v5617 = vand.u32 %v5616, 3
    %vm5618 = vcmp.lt.s32.totalorder %v5617, 2
    %vm5619 = vcmp.eq.s32.totalorder %v5617, 0
    %v5620 = vxor.u32 %v5614, 2147483648
    %v5621 = vsel %vm5619, %v5613, %v5620
    %vm5622 = vcmp.eq.s32.totalorder %v5617, 2
    %v5623 = vxor.u32 %v5613, 2147483648
    %v5624 = vsel %vm5622, %v5623, %v5614
    %v5625 = vsel %vm5618, %v5621, %v5624
    %v5626 = vsel %vm5615, nan, %v5625
    %v5627 = vand.u32 2147483647, %v4050
    %vm5628 = vcmp.le.f32.partialorder %v5627, 0.7853982
    %vm5629 = vcmp.lt.s32.totalorder %v4050, 0
    %v5630 = vand.u32 %v4050, 2139095040
    %v5631 = vshrl.u32 %v5630, 23
    %v5632 = vsub.s32 %v5631, 127
    %v5633 = vand.u32 2147483647, %v4050
    %v5634 = vand.u32 %v5633, 8388607
    %v5635 = vor.u32 %v5634, 8388608
    %v5636 = vsub.s32 0, %v5635
    %v5637 = vadd.s32 %v5632, 1
    %vm5638 = vcmp.gt.s32.totalorder %v5637, 0
    %v5639 = vsel %vm5638, %v5637, 0
    %v5640 = vshrl.u32 %v5639, 5
    %v5641 = vand.u32 %v5639, 31
    %v5642 = vsub.s32 32, %v5641
    %v5643 = vshrl.u32 683565275, %v5642
    %v5644 = vshll.u32 683565275, %v5641
    %v5645 = vshrl.u32 2475754826, %v5642
    %v5646 = vor.u32 %v5644, %v5645
    %v5647 = vshll.u32 2475754826, %v5641
    %v5648 = vshrl.u32 2131351028, %v5642
    %v5649 = vor.u32 %v5647, %v5648
    %v5650 = vshll.u32 2131351028, %v5641
    %v5651 = vshrl.u32 2102212464, %v5642
    %v5652 = vor.u32 %v5650, %v5651
    %v5653 = vshll.u32 2102212464, %v5641
    %v5654 = vshrl.u32 920167782, %v5642
    %v5655 = vor.u32 %v5653, %v5654
    %v5656 = vshll.u32 920167782, %v5641
    %v5657 = vshrl.u32 1326507024, %v5642
    %v5658 = vor.u32 %v5656, %v5657
    %vm5659 = vcmp.lt.s32.totalorder %v5640, 1
    %vm5660 = vcmp.lt.s32.totalorder %v5640, 2
    %vm5661 = vcmp.lt.s32.totalorder %v5640, 3
    %vm5662 = vcmp.lt.s32.totalorder %v5640, 4
    %v5663 = vsel %vm5659, %v5643, %v5646
    %v5664 = vsel %vm5662, %v5652, 2102212464
    %v5665 = vsel %vm5661, %v5649, %v5664
    %v5666 = vsel %vm5660, %v5663, %v5665
    %v5667 = vsel %vm5659, %v5646, %v5649
    %v5668 = vsel %vm5662, %v5655, 920167782
    %v5669 = vsel %vm5661, %v5652, %v5668
    %v5670 = vsel %vm5660, %v5667, %v5669
    %v5671 = vsel %vm5659, %v5649, %v5652
    %v5672 = vsel %vm5662, %v5658, 1326507024
    %v5673 = vsel %vm5661, %v5655, %v5672
    %v5674 = vsel %vm5660, %v5671, %v5673
    %v5675 = vshll.u32 %v5635, 8
    %v5676 = vmul.u32.u64.compose %v5675, %v5674
    %v5677 = vextract.low.u32 %v5676
    %v5678 = vextract.high.u32 %v5676
    %v5679 = vmul.u32.u64.compose %v5675, %v5670
    %v5680 = vextract.low.u32 %v5679
    %v5681 = vextract.high.u32 %v5679
    %v5682 = vmul.u32 %v5675, %v5666
    %v5683 = vadd.s32 %v5678, %v5680
    %vm5684 = vc.u32 %v5678, %v5680
    %v5685 = vadd.s32 %v5681, 1
    %v5686 = vsel %vm5684, %v5685, %v5681
    %v5687 = vadd.s32 %v5682, %v5686
    %v5688 = vadd.s32 %v5687, 536870912
    %v5689 = vshrl.u32 %v5688, 30
    %v5690 = vshll.u32 %v5689, 30
    %v5691 = vsub.s32 %v5687, %v5690
    %vm5692 = vcmp.lt.s32.totalorder %v5691, 0
    %v5693 = vsub.s32 0, %v5691
    %v5694 = vsel %vm5692, %v5693, %v5691
    %v5695 = vclz %v5694
    %v5696 = vsub.s32 %v5695, 2
    %vm5697 = vcmp.gt.s32.totalorder 0, %v5696
    %v5698 = vsel %vm5697, 0, %v5696
    %v5699 = vsub.s32 32, %v5698
    %v5700 = vshll.u32 %v5691, %v5698
    %v5701 = vshrl.u32 %v5683, %v5699
    %v5702 = vor.u32 %v5700, %v5701
    %v5703 = vsub.s32 4294967266, %v5698
    %v5704 = vadd.s32 %v5703, 127
    %v5705 = vshll.u32 %v5704, 23
    %v5706 = vor.u32 4788187, %v5705
    %v5707 = vand.u32 2147483647, %v5706
    %v5709 = vcvt.s32.f32 %v5702
    %v5710 = vmul.f32 %v5709, %v5707
    %v5711 = vxor.u32 %v5710, 2147483648
    %v5712 = vsel %vm5629, %v5711, %v5710
    %v5713 = vsub.s32 4, %v5689
    %v5714 = vsel %vm5629, %v5713, %v5689
    %v5715 = vsel %vm5628, %v4050, %v5712
    %v5716 = vsel %vm5628, 0, %v5714
    %v5717 = vcosq.f32.pop %v5715
    %v5718 = vsinq.f32.pop %v5715
    %vm5719 = vweird.f32 %v4050
    %v5720 = vadd.s32 %v5716, 3
    %v5721 = vand.u32 %v5720, 3
    %vm5722 = vcmp.lt.s32.totalorder %v5721, 2
    %vm5723 = vcmp.eq.s32.totalorder %v5721, 0
    %v5724 = vxor.u32 %v5718, 2147483648
    %v5725 = vsel %vm5723, %v5717, %v5724
    %vm5726 = vcmp.eq.s32.totalorder %v5721, 2
    %v5727 = vxor.u32 %v5717, 2147483648
    %v5728 = vsel %vm5726, %v5727, %v5718
    %v5729 = vsel %vm5722, %v5725, %v5728
    %v5730 = vsel %vm5719, nan, %v5729
    %v5731 = vand.u32 2147483647, %v4051
    %vm5732 = vcmp.le.f32.partialorder %v5731, 0.7853982
    %vm5733 = vcmp.lt.s32.totalorder %v4051, 0
    %v5734 = vand.u32 %v4051, 2139095040
    %v5735 = vshrl.u32 %v5734, 23
    %v5736 = vsub.s32 %v5735, 127
    %v5737 = vand.u32 2147483647, %v4051
    %v5738 = vand.u32 %v5737, 8388607
    %v5739 = vor.u32 %v5738, 8388608
    %v5740 = vsub.s32 0, %v5739
    %v5741 = vadd.s32 %v5736, 1
    %vm5742 = vcmp.gt.s32.totalorder %v5741, 0
    %v5743 = vsel %vm5742, %v5741, 0
    %v5744 = vshrl.u32 %v5743, 5
    %v5745 = vand.u32 %v5743, 31
    %v5746 = vsub.s32 32, %v5745
    %v5747 = vshrl.u32 683565275, %v5746
    %v5748 = vshll.u32 683565275, %v5745
    %v5749 = vshrl.u32 2475754826, %v5746
    %v5750 = vor.u32 %v5748, %v5749
    %v5751 = vshll.u32 2475754826, %v5745
    %v5752 = vshrl.u32 2131351028, %v5746
    %v5753 = vor.u32 %v5751, %v5752
    %v5754 = vshll.u32 2131351028, %v5745
    %v5755 = vshrl.u32 2102212464, %v5746
    %v5756 = vor.u32 %v5754, %v5755
    %v5757 = vshll.u32 2102212464, %v5745
    %v5758 = vshrl.u32 920167782, %v5746
    %v5759 = vor.u32 %v5757, %v5758
    %v5760 = vshll.u32 920167782, %v5745
    %v5761 = vshrl.u32 1326507024, %v5746
    %v5762 = vor.u32 %v5760, %v5761
    %vm5763 = vcmp.lt.s32.totalorder %v5744, 1
    %vm5764 = vcmp.lt.s32.totalorder %v5744, 2
    %vm5765 = vcmp.lt.s32.totalorder %v5744, 3
    %vm5766 = vcmp.lt.s32.totalorder %v5744, 4
    %v5767 = vsel %vm5763, %v5747, %v5750
    %v5768 = vsel %vm5766, %v5756, 2102212464
    %v5769 = vsel %vm5765, %v5753, %v5768
    %v5770 = vsel %vm5764, %v5767, %v5769
    %v5771 = vsel %vm5763, %v5750, %v5753
    %v5772 = vsel %vm5766, %v5759, 920167782
    %v5773 = vsel %vm5765, %v5756, %v5772
    %v5774 = vsel %vm5764, %v5771, %v5773
    %v5775 = vsel %vm5763, %v5753, %v5756
    %v5776 = vsel %vm5766, %v5762, 1326507024
    %v5777 = vsel %vm5765, %v5759, %v5776
    %v5778 = vsel %vm5764, %v5775, %v5777
    %v5779 = vshll.u32 %v5739, 8
    %v5780 = vmul.u32.u64.compose %v5779, %v5778
    %v5781 = vextract.low.u32 %v5780
    %v5782 = vextract.high.u32 %v5780
    %v5783 = vmul.u32.u64.compose %v5779, %v5774
    %v5784 = vextract.low.u32 %v5783
    %v5785 = vextract.high.u32 %v5783
    %v5786 = vmul.u32 %v5779, %v5770
    %v5787 = vadd.s32 %v5782, %v5784
    %vm5788 = vc.u32 %v5782, %v5784
    %v5789 = vadd.s32 %v5785, 1
    %v5790 = vsel %vm5788, %v5789, %v5785
    %v5791 = vadd.s32 %v5786, %v5790
    %v5792 = vadd.s32 %v5791, 536870912
    %v5793 = vshrl.u32 %v5792, 30
    %v5794 = vshll.u32 %v5793, 30
    %v5795 = vsub.s32 %v5791, %v5794
    %vm5796 = vcmp.lt.s32.totalorder %v5795, 0
    %v5797 = vsub.s32 0, %v5795
    %v5798 = vsel %vm5796, %v5797, %v5795
    %v5799 = vclz %v5798
    %v5800 = vsub.s32 %v5799, 2
    %vm5801 = vcmp.gt.s32.totalorder 0, %v5800
    %v5802 = vsel %vm5801, 0, %v5800
    %v5803 = vsub.s32 32, %v5802
    %v5804 = vshll.u32 %v5795, %v5802
    %v5805 = vshrl.u32 %v5787, %v5803
    %v5806 = vor.u32 %v5804, %v5805
    %v5807 = vsub.s32 4294967266, %v5802
    %v5808 = vadd.s32 %v5807, 127
    %v5809 = vshll.u32 %v5808, 23
    %v5810 = vor.u32 4788187, %v5809
    %v5811 = vand.u32 2147483647, %v5810
    %v5813 = vcvt.s32.f32 %v5806
    %v5814 = vmul.f32 %v5813, %v5811
    %v5815 = vxor.u32 %v5814, 2147483648
    %v5816 = vsel %vm5733, %v5815, %v5814
    %v5817 = vsub.s32 4, %v5793
    %v5818 = vsel %vm5733, %v5817, %v5793
    %v5819 = vsel %vm5732, %v4051, %v5816
    %v5820 = vsel %vm5732, 0, %v5818
    %v5821 = vcosq.f32.pop %v5819
    %v5822 = vsinq.f32.pop %v5819
    %vm5823 = vweird.f32 %v4051
    %v5824 = vadd.s32 %v5820, 3
    %v5825 = vand.u32 %v5824, 3
    %vm5826 = vcmp.lt.s32.totalorder %v5825, 2
    %vm5827 = vcmp.eq.s32.totalorder %v5825, 0
    %v5828 = vxor.u32 %v5822, 2147483648
    %v5829 = vsel %vm5827, %v5821, %v5828
    %vm5830 = vcmp.eq.s32.totalorder %v5825, 2
    %v5831 = vxor.u32 %v5821, 2147483648
    %v5832 = vsel %vm5830, %v5831, %v5822
    %v5833 = vsel %vm5826, %v5829, %v5832
    %v5834 = vsel %vm5823, nan, %v5833
    %v5835 = vand.u32 2147483647, %v4052
    %vm5836 = vcmp.le.f32.partialorder %v5835, 0.7853982
    %vm5837 = vcmp.lt.s32.totalorder %v4052, 0
    %v5838 = vand.u32 %v4052, 2139095040
    %v5839 = vshrl.u32 %v5838, 23
    %v5840 = vsub.s32 %v5839, 127
    %v5841 = vand.u32 2147483647, %v4052
    %v5842 = vand.u32 %v5841, 8388607
    %v5843 = vor.u32 %v5842, 8388608
    %v5844 = vsub.s32 0, %v5843
    %v5845 = vadd.s32 %v5840, 1
    %vm5846 = vcmp.gt.s32.totalorder %v5845, 0
    %v5847 = vsel %vm5846, %v5845, 0
    %v5848 = vshrl.u32 %v5847, 5
    %v5849 = vand.u32 %v5847, 31
    %v5850 = vsub.s32 32, %v5849
    %v5851 = vshrl.u32 683565275, %v5850
    %v5852 = vshll.u32 683565275, %v5849
    %v5853 = vshrl.u32 2475754826, %v5850
    %v5854 = vor.u32 %v5852, %v5853
    %v5855 = vshll.u32 2475754826, %v5849
    %v5856 = vshrl.u32 2131351028, %v5850
    %v5857 = vor.u32 %v5855, %v5856
    %v5858 = vshll.u32 2131351028, %v5849
    %v5859 = vshrl.u32 2102212464, %v5850
    %v5860 = vor.u32 %v5858, %v5859
    %v5861 = vshll.u32 2102212464, %v5849
    %v5862 = vshrl.u32 920167782, %v5850
    %v5863 = vor.u32 %v5861, %v5862
    %v5864 = vshll.u32 920167782, %v5849
    %v5865 = vshrl.u32 1326507024, %v5850
    %v5866 = vor.u32 %v5864, %v5865
    %vm5867 = vcmp.lt.s32.totalorder %v5848, 1
    %vm5868 = vcmp.lt.s32.totalorder %v5848, 2
    %vm5869 = vcmp.lt.s32.totalorder %v5848, 3
    %vm5870 = vcmp.lt.s32.totalorder %v5848, 4
    %v5871 = vsel %vm5867, %v5851, %v5854
    %v5872 = vsel %vm5870, %v5860, 2102212464
    %v5873 = vsel %vm5869, %v5857, %v5872
    %v5874 = vsel %vm5868, %v5871, %v5873
    %v5875 = vsel %vm5867, %v5854, %v5857
    %v5876 = vsel %vm5870, %v5863, 920167782
    %v5877 = vsel %vm5869, %v5860, %v5876
    %v5878 = vsel %vm5868, %v5875, %v5877
    %v5879 = vsel %vm5867, %v5857, %v5860
    %v5880 = vsel %vm5870, %v5866, 1326507024
    %v5881 = vsel %vm5869, %v5863, %v5880
    %v5882 = vsel %vm5868, %v5879, %v5881
    %v5883 = vshll.u32 %v5843, 8
    %v5884 = vmul.u32.u64.compose %v5883, %v5882
    %v5885 = vextract.low.u32 %v5884
    %v5886 = vextract.high.u32 %v5884
    %v5887 = vmul.u32.u64.compose %v5883, %v5878
    %v5888 = vextract.low.u32 %v5887
    %v5889 = vextract.high.u32 %v5887
    %v5890 = vmul.u32 %v5883, %v5874
    %v5891 = vadd.s32 %v5886, %v5888
    %vm5892 = vc.u32 %v5886, %v5888
    %v5893 = vadd.s32 %v5889, 1
    %v5894 = vsel %vm5892, %v5893, %v5889
    %v5895 = vadd.s32 %v5890, %v5894
    %v5896 = vadd.s32 %v5895, 536870912
    %v5897 = vshrl.u32 %v5896, 30
    %v5898 = vshll.u32 %v5897, 30
    %v5899 = vsub.s32 %v5895, %v5898
    %vm5900 = vcmp.lt.s32.totalorder %v5899, 0
    %v5901 = vsub.s32 0, %v5899
    %v5902 = vsel %vm5900, %v5901, %v5899
    %v5903 = vclz %v5902
    %v5904 = vsub.s32 %v5903, 2
    %vm5905 = vcmp.gt.s32.totalorder 0, %v5904
    %v5906 = vsel %vm5905, 0, %v5904
    %v5907 = vsub.s32 32, %v5906
    %v5908 = vshll.u32 %v5899, %v5906
    %v5909 = vshrl.u32 %v5891, %v5907
    %v5910 = vor.u32 %v5908, %v5909
    %v5911 = vsub.s32 4294967266, %v5906
    %v5912 = vadd.s32 %v5911, 127
    %v5913 = vshll.u32 %v5912, 23
    %v5914 = vor.u32 4788187, %v5913
    %v5915 = vand.u32 2147483647, %v5914
    %v5917 = vcvt.s32.f32 %v5910
    %v5918 = vmul.f32 %v5917, %v5915
    %v5919 = vxor.u32 %v5918, 2147483648
    %v5920 = vsel %vm5837, %v5919, %v5918
    %v5921 = vsub.s32 4, %v5897
    %v5922 = vsel %vm5837, %v5921, %v5897
    %v5923 = vsel %vm5836, %v4052, %v5920
    %v5924 = vsel %vm5836, 0, %v5922
    %v5925 = vcosq.f32.pop %v5923
    %v5926 = vsinq.f32.pop %v5923
    %vm5927 = vweird.f32 %v4052
    %v5928 = vadd.s32 %v5924, 3
    %v5929 = vand.u32 %v5928, 3
    %vm5930 = vcmp.lt.s32.totalorder %v5929, 2
    %vm5931 = vcmp.eq.s32.totalorder %v5929, 0
    %v5932 = vxor.u32 %v5926, 2147483648
    %v5933 = vsel %vm5931, %v5925, %v5932
    %vm5934 = vcmp.eq.s32.totalorder %v5929, 2
    %v5935 = vxor.u32 %v5925, 2147483648
    %v5936 = vsel %vm5934, %v5935, %v5926
    %v5937 = vsel %vm5930, %v5933, %v5936
    %v5938 = vsel %vm5927, nan, %v5937
    %v5939 = vand.u32 2147483647, %v4053
    %vm5940 = vcmp.le.f32.partialorder %v5939, 0.7853982
    %vm5941 = vcmp.lt.s32.totalorder %v4053, 0
    %v5942 = vand.u32 %v4053, 2139095040
    %v5943 = vshrl.u32 %v5942, 23
    %v5944 = vsub.s32 %v5943, 127
    %v5945 = vand.u32 2147483647, %v4053
    %v5946 = vand.u32 %v5945, 8388607
    %v5947 = vor.u32 %v5946, 8388608
    %v5948 = vsub.s32 0, %v5947
    %v5949 = vadd.s32 %v5944, 1
    %vm5950 = vcmp.gt.s32.totalorder %v5949, 0
    %v5951 = vsel %vm5950, %v5949, 0
    %v5952 = vshrl.u32 %v5951, 5
    %v5953 = vand.u32 %v5951, 31
    %v5954 = vsub.s32 32, %v5953
    %v5955 = vshrl.u32 683565275, %v5954
    %v5956 = vshll.u32 683565275, %v5953
    %v5957 = vshrl.u32 2475754826, %v5954
    %v5958 = vor.u32 %v5956, %v5957
    %v5959 = vshll.u32 2475754826, %v5953
    %v5960 = vshrl.u32 2131351028, %v5954
    %v5961 = vor.u32 %v5959, %v5960
    %v5962 = vshll.u32 2131351028, %v5953
    %v5963 = vshrl.u32 2102212464, %v5954
    %v5964 = vor.u32 %v5962, %v5963
    %v5965 = vshll.u32 2102212464, %v5953
    %v5966 = vshrl.u32 920167782, %v5954
    %v5967 = vor.u32 %v5965, %v5966
    %v5968 = vshll.u32 920167782, %v5953
    %v5969 = vshrl.u32 1326507024, %v5954
    %v5970 = vor.u32 %v5968, %v5969
    %vm5971 = vcmp.lt.s32.totalorder %v5952, 1
    %vm5972 = vcmp.lt.s32.totalorder %v5952, 2
    %vm5973 = vcmp.lt.s32.totalorder %v5952, 3
    %vm5974 = vcmp.lt.s32.totalorder %v5952, 4
    %v5975 = vsel %vm5971, %v5955, %v5958
    %v5976 = vsel %vm5974, %v5964, 2102212464
    %v5977 = vsel %vm5973, %v5961, %v5976
    %v5978 = vsel %vm5972, %v5975, %v5977
    %v5979 = vsel %vm5971, %v5958, %v5961
    %v5980 = vsel %vm5974, %v5967, 920167782
    %v5981 = vsel %vm5973, %v5964, %v5980
    %v5982 = vsel %vm5972, %v5979, %v5981
    %v5983 = vsel %vm5971, %v5961, %v5964
    %v5984 = vsel %vm5974, %v5970, 1326507024
    %v5985 = vsel %vm5973, %v5967, %v5984
    %v5986 = vsel %vm5972, %v5983, %v5985
    %v5987 = vshll.u32 %v5947, 8
    %v5988 = vmul.u32.u64.compose %v5987, %v5986
    %v5989 = vextract.low.u32 %v5988
    %v5990 = vextract.high.u32 %v5988
    %v5991 = vmul.u32.u64.compose %v5987, %v5982
    %v5992 = vextract.low.u32 %v5991
    %v5993 = vextract.high.u32 %v5991
    %v5994 = vmul.u32 %v5987, %v5978
    %v5995 = vadd.s32 %v5990, %v5992
    %vm5996 = vc.u32 %v5990, %v5992
    %v5997 = vadd.s32 %v5993, 1
    %v5998 = vsel %vm5996, %v5997, %v5993
    %v5999 = vadd.s32 %v5994, %v5998
    %v6000 = vadd.s32 %v5999, 536870912
    %v6001 = vshrl.u32 %v6000, 30
    %v6002 = vshll.u32 %v6001, 30
    %v6003 = vsub.s32 %v5999, %v6002
    %vm6004 = vcmp.lt.s32.totalorder %v6003, 0
    %v6005 = vsub.s32 0, %v6003
    %v6006 = vsel %vm6004, %v6005, %v6003
    %v6007 = vclz %v6006
    %v6008 = vsub.s32 %v6007, 2
    %vm6009 = vcmp.gt.s32.totalorder 0, %v6008
    %v6010 = vsel %vm6009, 0, %v6008
    %v6011 = vsub.s32 32, %v6010
    %v6012 = vshll.u32 %v6003, %v6010
    %v6013 = vshrl.u32 %v5995, %v6011
    %v6014 = vor.u32 %v6012, %v6013
    %v6015 = vsub.s32 4294967266, %v6010
    %v6016 = vadd.s32 %v6015, 127
    %v6017 = vshll.u32 %v6016, 23
    %v6018 = vor.u32 4788187, %v6017
    %v6019 = vand.u32 2147483647, %v6018
    %v6021 = vcvt.s32.f32 %v6014
    %v6022 = vmul.f32 %v6021, %v6019
    %v6023 = vxor.u32 %v6022, 2147483648
    %v6024 = vsel %vm5941, %v6023, %v6022
    %v6025 = vsub.s32 4, %v6001
    %v6026 = vsel %vm5941, %v6025, %v6001
    %v6027 = vsel %vm5940, %v4053, %v6024
    %v6028 = vsel %vm5940, 0, %v6026
    %v6029 = vcosq.f32.pop %v6027
    %v6030 = vsinq.f32.pop %v6027
    %vm6031 = vweird.f32 %v4053
    %v6032 = vadd.s32 %v6028, 3
    %v6033 = vand.u32 %v6032, 3
    %vm6034 = vcmp.lt.s32.totalorder %v6033, 2
    %vm6035 = vcmp.eq.s32.totalorder %v6033, 0
    %v6036 = vxor.u32 %v6030, 2147483648
    %v6037 = vsel %vm6035, %v6029, %v6036
    %vm6038 = vcmp.eq.s32.totalorder %v6033, 2
    %v6039 = vxor.u32 %v6029, 2147483648
    %v6040 = vsel %vm6038, %v6039, %v6030
    %v6041 = vsel %vm6034, %v6037, %v6040
    %v6042 = vsel %vm6031, nan, %v6041
    %v6043 = vand.u32 2147483647, %v4054
    %vm6044 = vcmp.le.f32.partialorder %v6043, 0.7853982
    %vm6045 = vcmp.lt.s32.totalorder %v4054, 0
    %v6046 = vand.u32 %v4054, 2139095040
    %v6047 = vshrl.u32 %v6046, 23
    %v6048 = vsub.s32 %v6047, 127
    %v6049 = vand.u32 2147483647, %v4054
    %v6050 = vand.u32 %v6049, 8388607
    %v6051 = vor.u32 %v6050, 8388608
    %v6052 = vsub.s32 0, %v6051
    %v6053 = vadd.s32 %v6048, 1
    %vm6054 = vcmp.gt.s32.totalorder %v6053, 0
    %v6055 = vsel %vm6054, %v6053, 0
    %v6056 = vshrl.u32 %v6055, 5
    %v6057 = vand.u32 %v6055, 31
    %v6058 = vsub.s32 32, %v6057
    %v6059 = vshrl.u32 683565275, %v6058
    %v6060 = vshll.u32 683565275, %v6057
    %v6061 = vshrl.u32 2475754826, %v6058
    %v6062 = vor.u32 %v6060, %v6061
    %v6063 = vshll.u32 2475754826, %v6057
    %v6064 = vshrl.u32 2131351028, %v6058
    %v6065 = vor.u32 %v6063, %v6064
    %v6066 = vshll.u32 2131351028, %v6057
    %v6067 = vshrl.u32 2102212464, %v6058
    %v6068 = vor.u32 %v6066, %v6067
    %v6069 = vshll.u32 2102212464, %v6057
    %v6070 = vshrl.u32 920167782, %v6058
    %v6071 = vor.u32 %v6069, %v6070
    %v6072 = vshll.u32 920167782, %v6057
    %v6073 = vshrl.u32 1326507024, %v6058
    %v6074 = vor.u32 %v6072, %v6073
    %vm6075 = vcmp.lt.s32.totalorder %v6056, 1
    %vm6076 = vcmp.lt.s32.totalorder %v6056, 2
    %vm6077 = vcmp.lt.s32.totalorder %v6056, 3
    %vm6078 = vcmp.lt.s32.totalorder %v6056, 4
    %v6079 = vsel %vm6075, %v6059, %v6062
    %v6080 = vsel %vm6078, %v6068, 2102212464
    %v6081 = vsel %vm6077, %v6065, %v6080
    %v6082 = vsel %vm6076, %v6079, %v6081
    %v6083 = vsel %vm6075, %v6062, %v6065
    %v6084 = vsel %vm6078, %v6071, 920167782
    %v6085 = vsel %vm6077, %v6068, %v6084
    %v6086 = vsel %vm6076, %v6083, %v6085
    %v6087 = vsel %vm6075, %v6065, %v6068
    %v6088 = vsel %vm6078, %v6074, 1326507024
    %v6089 = vsel %vm6077, %v6071, %v6088
    %v6090 = vsel %vm6076, %v6087, %v6089
    %v6091 = vshll.u32 %v6051, 8
    %v6092 = vmul.u32.u64.compose %v6091, %v6090
    %v6093 = vextract.low.u32 %v6092
    %v6094 = vextract.high.u32 %v6092
    %v6095 = vmul.u32.u64.compose %v6091, %v6086
    %v6096 = vextract.low.u32 %v6095
    %v6097 = vextract.high.u32 %v6095
    %v6098 = vmul.u32 %v6091, %v6082
    %v6099 = vadd.s32 %v6094, %v6096
    %vm6100 = vc.u32 %v6094, %v6096
    %v6101 = vadd.s32 %v6097, 1
    %v6102 = vsel %vm6100, %v6101, %v6097
    %v6103 = vadd.s32 %v6098, %v6102
    %v6104 = vadd.s32 %v6103, 536870912
    %v6105 = vshrl.u32 %v6104, 30
    %v6106 = vshll.u32 %v6105, 30
    %v6107 = vsub.s32 %v6103, %v6106
    %vm6108 = vcmp.lt.s32.totalorder %v6107, 0
    %v6109 = vsub.s32 0, %v6107
    %v6110 = vsel %vm6108, %v6109, %v6107
    %v6111 = vclz %v6110
    %v6112 = vsub.s32 %v6111, 2
    %vm6113 = vcmp.gt.s32.totalorder 0, %v6112
    %v6114 = vsel %vm6113, 0, %v6112
    %v6115 = vsub.s32 32, %v6114
    %v6116 = vshll.u32 %v6107, %v6114
    %v6117 = vshrl.u32 %v6099, %v6115
    %v6118 = vor.u32 %v6116, %v6117
    %v6119 = vsub.s32 4294967266, %v6114
    %v6120 = vadd.s32 %v6119, 127
    %v6121 = vshll.u32 %v6120, 23
    %v6122 = vor.u32 4788187, %v6121
    %v6123 = vand.u32 2147483647, %v6122
    %v6125 = vcvt.s32.f32 %v6118
    %v6126 = vmul.f32 %v6125, %v6123
    %v6127 = vxor.u32 %v6126, 2147483648
    %v6128 = vsel %vm6045, %v6127, %v6126
    %v6129 = vsub.s32 4, %v6105
    %v6130 = vsel %vm6045, %v6129, %v6105
    %v6131 = vsel %vm6044, %v4054, %v6128
    %v6132 = vsel %vm6044, 0, %v6130
    %v6133 = vcosq.f32.pop %v6131
    %v6134 = vsinq.f32.pop %v6131
    %vm6135 = vweird.f32 %v4054
    %v6136 = vadd.s32 %v6132, 3
    %v6137 = vand.u32 %v6136, 3
    %vm6138 = vcmp.lt.s32.totalorder %v6137, 2
    %vm6139 = vcmp.eq.s32.totalorder %v6137, 0
    %v6140 = vxor.u32 %v6134, 2147483648
    %v6141 = vsel %vm6139, %v6133, %v6140
    %vm6142 = vcmp.eq.s32.totalorder %v6137, 2
    %v6143 = vxor.u32 %v6133, 2147483648
    %v6144 = vsel %vm6142, %v6143, %v6134
    %v6145 = vsel %vm6138, %v6141, %v6144
    %v6146 = vsel %vm6135, nan, %v6145
    %v6147 = vand.u32 2147483647, %v4055
    %vm6148 = vcmp.le.f32.partialorder %v6147, 0.7853982
    %vm6149 = vcmp.lt.s32.totalorder %v4055, 0
    %v6150 = vand.u32 %v4055, 2139095040
    %v6151 = vshrl.u32 %v6150, 23
    %v6152 = vsub.s32 %v6151, 127
    %v6153 = vand.u32 2147483647, %v4055
    %v6154 = vand.u32 %v6153, 8388607
    %v6155 = vor.u32 %v6154, 8388608
    %v6156 = vsub.s32 0, %v6155
    %v6157 = vadd.s32 %v6152, 1
    %vm6158 = vcmp.gt.s32.totalorder %v6157, 0
    %v6159 = vsel %vm6158, %v6157, 0
    %v6160 = vshrl.u32 %v6159, 5
    %v6161 = vand.u32 %v6159, 31
    %v6162 = vsub.s32 32, %v6161
    %v6163 = vshrl.u32 683565275, %v6162
    %v6164 = vshll.u32 683565275, %v6161
    %v6165 = vshrl.u32 2475754826, %v6162
    %v6166 = vor.u32 %v6164, %v6165
    %v6167 = vshll.u32 2475754826, %v6161
    %v6168 = vshrl.u32 2131351028, %v6162
    %v6169 = vor.u32 %v6167, %v6168
    %v6170 = vshll.u32 2131351028, %v6161
    %v6171 = vshrl.u32 2102212464, %v6162
    %v6172 = vor.u32 %v6170, %v6171
    %v6173 = vshll.u32 2102212464, %v6161
    %v6174 = vshrl.u32 920167782, %v6162
    %v6175 = vor.u32 %v6173, %v6174
    %v6176 = vshll.u32 920167782, %v6161
    %v6177 = vshrl.u32 1326507024, %v6162
    %v6178 = vor.u32 %v6176, %v6177
    %vm6179 = vcmp.lt.s32.totalorder %v6160, 1
    %vm6180 = vcmp.lt.s32.totalorder %v6160, 2
    %vm6181 = vcmp.lt.s32.totalorder %v6160, 3
    %vm6182 = vcmp.lt.s32.totalorder %v6160, 4
    %v6183 = vsel %vm6179, %v6163, %v6166
    %v6184 = vsel %vm6182, %v6172, 2102212464
    %v6185 = vsel %vm6181, %v6169, %v6184
    %v6186 = vsel %vm6180, %v6183, %v6185
    %v6187 = vsel %vm6179, %v6166, %v6169
    %v6188 = vsel %vm6182, %v6175, 920167782
    %v6189 = vsel %vm6181, %v6172, %v6188
    %v6190 = vsel %vm6180, %v6187, %v6189
    %v6191 = vsel %vm6179, %v6169, %v6172
    %v6192 = vsel %vm6182, %v6178, 1326507024
    %v6193 = vsel %vm6181, %v6175, %v6192
    %v6194 = vsel %vm6180, %v6191, %v6193
    %v6195 = vshll.u32 %v6155, 8
    %v6196 = vmul.u32.u64.compose %v6195, %v6194
    %v6197 = vextract.low.u32 %v6196
    %v6198 = vextract.high.u32 %v6196
    %v6199 = vmul.u32.u64.compose %v6195, %v6190
    %v6200 = vextract.low.u32 %v6199
    %v6201 = vextract.high.u32 %v6199
    %v6202 = vmul.u32 %v6195, %v6186
    %v6203 = vadd.s32 %v6198, %v6200
    %vm6204 = vc.u32 %v6198, %v6200
    %v6205 = vadd.s32 %v6201, 1
    %v6206 = vsel %vm6204, %v6205, %v6201
    %v6207 = vadd.s32 %v6202, %v6206
    %v6208 = vadd.s32 %v6207, 536870912
    %v6209 = vshrl.u32 %v6208, 30
    %v6210 = vshll.u32 %v6209, 30
    %v6211 = vsub.s32 %v6207, %v6210
    %vm6212 = vcmp.lt.s32.totalorder %v6211, 0
    %v6213 = vsub.s32 0, %v6211
    %v6214 = vsel %vm6212, %v6213, %v6211
    %v6215 = vclz %v6214
    %v6216 = vsub.s32 %v6215, 2
    %vm6217 = vcmp.gt.s32.totalorder 0, %v6216
    %v6218 = vsel %vm6217, 0, %v6216
    %v6219 = vsub.s32 32, %v6218
    %v6220 = vshll.u32 %v6211, %v6218
    %v6221 = vshrl.u32 %v6203, %v6219
    %v6222 = vor.u32 %v6220, %v6221
    %v6223 = vsub.s32 4294967266, %v6218
    %v6224 = vadd.s32 %v6223, 127
    %v6225 = vshll.u32 %v6224, 23
    %v6226 = vor.u32 4788187, %v6225
    %v6227 = vand.u32 2147483647, %v6226
    %v6229 = vcvt.s32.f32 %v6222
    %v6230 = vmul.f32 %v6229, %v6227
    %v6231 = vxor.u32 %v6230, 2147483648
    %v6232 = vsel %vm6149, %v6231, %v6230
    %v6233 = vsub.s32 4, %v6209
    %v6234 = vsel %vm6149, %v6233, %v6209
    %v6235 = vsel %vm6148, %v4055, %v6232
    %v6236 = vsel %vm6148, 0, %v6234
    %v6237 = vcosq.f32.pop %v6235
    %v6238 = vsinq.f32.pop %v6235
    %vm6239 = vweird.f32 %v4055
    %v6240 = vadd.s32 %v6236, 3
    %v6241 = vand.u32 %v6240, 3
    %vm6242 = vcmp.lt.s32.totalorder %v6241, 2
    %vm6243 = vcmp.eq.s32.totalorder %v6241, 0
    %v6244 = vxor.u32 %v6238, 2147483648
    %v6245 = vsel %vm6243, %v6237, %v6244
    %vm6246 = vcmp.eq.s32.totalorder %v6241, 2
    %v6247 = vxor.u32 %v6237, 2147483648
    %v6248 = vsel %vm6246, %v6247, %v6238
    %v6249 = vsel %vm6242, %v6245, %v6248
    %v6250 = vsel %vm6239, nan, %v6249
    %v6251 = vand.u32 2147483647, %v4056
    %vm6252 = vcmp.le.f32.partialorder %v6251, 0.7853982
    %vm6253 = vcmp.lt.s32.totalorder %v4056, 0
    %v6254 = vand.u32 %v4056, 2139095040
    %v6255 = vshrl.u32 %v6254, 23
    %v6256 = vsub.s32 %v6255, 127
    %v6257 = vand.u32 2147483647, %v4056
    %v6258 = vand.u32 %v6257, 8388607
    %v6259 = vor.u32 %v6258, 8388608
    %v6260 = vsub.s32 0, %v6259
    %v6261 = vadd.s32 %v6256, 1
    %vm6262 = vcmp.gt.s32.totalorder %v6261, 0
    %v6263 = vsel %vm6262, %v6261, 0
    %v6264 = vshrl.u32 %v6263, 5
    %v6265 = vand.u32 %v6263, 31
    %v6266 = vsub.s32 32, %v6265
    %v6267 = vshrl.u32 683565275, %v6266
    %v6268 = vshll.u32 683565275, %v6265
    %v6269 = vshrl.u32 2475754826, %v6266
    %v6270 = vor.u32 %v6268, %v6269
    %v6271 = vshll.u32 2475754826, %v6265
    %v6272 = vshrl.u32 2131351028, %v6266
    %v6273 = vor.u32 %v6271, %v6272
    %v6274 = vshll.u32 2131351028, %v6265
    %v6275 = vshrl.u32 2102212464, %v6266
    %v6276 = vor.u32 %v6274, %v6275
    %v6277 = vshll.u32 2102212464, %v6265
    %v6278 = vshrl.u32 920167782, %v6266
    %v6279 = vor.u32 %v6277, %v6278
    %v6280 = vshll.u32 920167782, %v6265
    %v6281 = vshrl.u32 1326507024, %v6266
    %v6282 = vor.u32 %v6280, %v6281
    %vm6283 = vcmp.lt.s32.totalorder %v6264, 1
    %vm6284 = vcmp.lt.s32.totalorder %v6264, 2
    %vm6285 = vcmp.lt.s32.totalorder %v6264, 3
    %vm6286 = vcmp.lt.s32.totalorder %v6264, 4
    %v6287 = vsel %vm6283, %v6267, %v6270
    %v6288 = vsel %vm6286, %v6276, 2102212464
    %v6289 = vsel %vm6285, %v6273, %v6288
    %v6290 = vsel %vm6284, %v6287, %v6289
    %v6291 = vsel %vm6283, %v6270, %v6273
    %v6292 = vsel %vm6286, %v6279, 920167782
    %v6293 = vsel %vm6285, %v6276, %v6292
    %v6294 = vsel %vm6284, %v6291, %v6293
    %v6295 = vsel %vm6283, %v6273, %v6276
    %v6296 = vsel %vm6286, %v6282, 1326507024
    %v6297 = vsel %vm6285, %v6279, %v6296
    %v6298 = vsel %vm6284, %v6295, %v6297
    %v6299 = vshll.u32 %v6259, 8
    %v6300 = vmul.u32.u64.compose %v6299, %v6298
    %v6301 = vextract.low.u32 %v6300
    %v6302 = vextract.high.u32 %v6300
    %v6303 = vmul.u32.u64.compose %v6299, %v6294
    %v6304 = vextract.low.u32 %v6303
    %v6305 = vextract.high.u32 %v6303
    %v6306 = vmul.u32 %v6299, %v6290
    %v6307 = vadd.s32 %v6302, %v6304
    %vm6308 = vc.u32 %v6302, %v6304
    %v6309 = vadd.s32 %v6305, 1
    %v6310 = vsel %vm6308, %v6309, %v6305
    %v6311 = vadd.s32 %v6306, %v6310
    %v6312 = vadd.s32 %v6311, 536870912
    %v6313 = vshrl.u32 %v6312, 30
    %v6314 = vshll.u32 %v6313, 30
    %v6315 = vsub.s32 %v6311, %v6314
    %vm6316 = vcmp.lt.s32.totalorder %v6315, 0
    %v6317 = vsub.s32 0, %v6315
    %v6318 = vsel %vm6316, %v6317, %v6315
    %v6319 = vclz %v6318
    %v6320 = vsub.s32 %v6319, 2
    %vm6321 = vcmp.gt.s32.totalorder 0, %v6320
    %v6322 = vsel %vm6321, 0, %v6320
    %v6323 = vsub.s32 32, %v6322
    %v6324 = vshll.u32 %v6315, %v6322
    %v6325 = vshrl.u32 %v6307, %v6323
    %v6326 = vor.u32 %v6324, %v6325
    %v6327 = vsub.s32 4294967266, %v6322
    %v6328 = vadd.s32 %v6327, 127
    %v6329 = vshll.u32 %v6328, 23
    %v6330 = vor.u32 4788187, %v6329
    %v6331 = vand.u32 2147483647, %v6330
    %v6333 = vcvt.s32.f32 %v6326
    %v6334 = vmul.f32 %v6333, %v6331
    %v6335 = vxor.u32 %v6334, 2147483648
    %v6336 = vsel %vm6253, %v6335, %v6334
    %v6337 = vsub.s32 4, %v6313
    %v6338 = vsel %vm6253, %v6337, %v6313
    %v6339 = vsel %vm6252, %v4056, %v6336
    %v6340 = vsel %vm6252, 0, %v6338
    %v6341 = vcosq.f32.pop %v6339
    %v6342 = vsinq.f32.pop %v6339
    %vm6343 = vweird.f32 %v4056
    %v6344 = vadd.s32 %v6340, 3
    %v6345 = vand.u32 %v6344, 3
    %vm6346 = vcmp.lt.s32.totalorder %v6345, 2
    %vm6347 = vcmp.eq.s32.totalorder %v6345, 0
    %v6348 = vxor.u32 %v6342, 2147483648
    %v6349 = vsel %vm6347, %v6341, %v6348
    %vm6350 = vcmp.eq.s32.totalorder %v6345, 2
    %v6351 = vxor.u32 %v6341, 2147483648
    %v6352 = vsel %vm6350, %v6351, %v6342
    %v6353 = vsel %vm6346, %v6349, %v6352
    %v6354 = vsel %vm6343, nan, %v6353
    %v6355 = vand.u32 2147483647, %v4057
    %vm6356 = vcmp.le.f32.partialorder %v6355, 0.7853982
    %vm6357 = vcmp.lt.s32.totalorder %v4057, 0
    %v6358 = vand.u32 %v4057, 2139095040
    %v6359 = vshrl.u32 %v6358, 23
    %v6360 = vsub.s32 %v6359, 127
    %v6361 = vand.u32 2147483647, %v4057
    %v6362 = vand.u32 %v6361, 8388607
    %v6363 = vor.u32 %v6362, 8388608
    %v6364 = vsub.s32 0, %v6363
    %v6365 = vadd.s32 %v6360, 1
    %vm6366 = vcmp.gt.s32.totalorder %v6365, 0
    %v6367 = vsel %vm6366, %v6365, 0
    %v6368 = vshrl.u32 %v6367, 5
    %v6369 = vand.u32 %v6367, 31
    %v6370 = vsub.s32 32, %v6369
    %v6371 = vshrl.u32 683565275, %v6370
    %v6372 = vshll.u32 683565275, %v6369
    %v6373 = vshrl.u32 2475754826, %v6370
    %v6374 = vor.u32 %v6372, %v6373
    %v6375 = vshll.u32 2475754826, %v6369
    %v6376 = vshrl.u32 2131351028, %v6370
    %v6377 = vor.u32 %v6375, %v6376
    %v6378 = vshll.u32 2131351028, %v6369
    %v6379 = vshrl.u32 2102212464, %v6370
    %v6380 = vor.u32 %v6378, %v6379
    %v6381 = vshll.u32 2102212464, %v6369
    %v6382 = vshrl.u32 920167782, %v6370
    %v6383 = vor.u32 %v6381, %v6382
    %v6384 = vshll.u32 920167782, %v6369
    %v6385 = vshrl.u32 1326507024, %v6370
    %v6386 = vor.u32 %v6384, %v6385
    %vm6387 = vcmp.lt.s32.totalorder %v6368, 1
    %vm6388 = vcmp.lt.s32.totalorder %v6368, 2
    %vm6389 = vcmp.lt.s32.totalorder %v6368, 3
    %vm6390 = vcmp.lt.s32.totalorder %v6368, 4
    %v6391 = vsel %vm6387, %v6371, %v6374
    %v6392 = vsel %vm6390, %v6380, 2102212464
    %v6393 = vsel %vm6389, %v6377, %v6392
    %v6394 = vsel %vm6388, %v6391, %v6393
    %v6395 = vsel %vm6387, %v6374, %v6377
    %v6396 = vsel %vm6390, %v6383, 920167782
    %v6397 = vsel %vm6389, %v6380, %v6396
    %v6398 = vsel %vm6388, %v6395, %v6397
    %v6399 = vsel %vm6387, %v6377, %v6380
    %v6400 = vsel %vm6390, %v6386, 1326507024
    %v6401 = vsel %vm6389, %v6383, %v6400
    %v6402 = vsel %vm6388, %v6399, %v6401
    %v6403 = vshll.u32 %v6363, 8
    %v6404 = vmul.u32.u64.compose %v6403, %v6402
    %v6405 = vextract.low.u32 %v6404
    %v6406 = vextract.high.u32 %v6404
    %v6407 = vmul.u32.u64.compose %v6403, %v6398
    %v6408 = vextract.low.u32 %v6407
    %v6409 = vextract.high.u32 %v6407
    %v6410 = vmul.u32 %v6403, %v6394
    %v6411 = vadd.s32 %v6406, %v6408
    %vm6412 = vc.u32 %v6406, %v6408
    %v6413 = vadd.s32 %v6409, 1
    %v6414 = vsel %vm6412, %v6413, %v6409
    %v6415 = vadd.s32 %v6410, %v6414
    %v6416 = vadd.s32 %v6415, 536870912
    %v6417 = vshrl.u32 %v6416, 30
    %v6418 = vshll.u32 %v6417, 30
    %v6419 = vsub.s32 %v6415, %v6418
    %vm6420 = vcmp.lt.s32.totalorder %v6419, 0
    %v6421 = vsub.s32 0, %v6419
    %v6422 = vsel %vm6420, %v6421, %v6419
    %v6423 = vclz %v6422
    %v6424 = vsub.s32 %v6423, 2
    %vm6425 = vcmp.gt.s32.totalorder 0, %v6424
    %v6426 = vsel %vm6425, 0, %v6424
    %v6427 = vsub.s32 32, %v6426
    %v6428 = vshll.u32 %v6419, %v6426
    %v6429 = vshrl.u32 %v6411, %v6427
    %v6430 = vor.u32 %v6428, %v6429
    %v6431 = vsub.s32 4294967266, %v6426
    %v6432 = vadd.s32 %v6431, 127
    %v6433 = vshll.u32 %v6432, 23
    %v6434 = vor.u32 4788187, %v6433
    %v6435 = vand.u32 2147483647, %v6434
    %v6437 = vcvt.s32.f32 %v6430
    %v6438 = vmul.f32 %v6437, %v6435
    %v6439 = vxor.u32 %v6438, 2147483648
    %v6440 = vsel %vm6357, %v6439, %v6438
    %v6441 = vsub.s32 4, %v6417
    %v6442 = vsel %vm6357, %v6441, %v6417
    %v6443 = vsel %vm6356, %v4057, %v6440
    %v6444 = vsel %vm6356, 0, %v6442
    %v6445 = vcosq.f32.pop %v6443
    %v6446 = vsinq.f32.pop %v6443
    %vm6447 = vweird.f32 %v4057
    %v6448 = vadd.s32 %v6444, 3
    %v6449 = vand.u32 %v6448, 3
    %vm6450 = vcmp.lt.s32.totalorder %v6449, 2
    %vm6451 = vcmp.eq.s32.totalorder %v6449, 0
    %v6452 = vxor.u32 %v6446, 2147483648
    %v6453 = vsel %vm6451, %v6445, %v6452
    %vm6454 = vcmp.eq.s32.totalorder %v6449, 2
    %v6455 = vxor.u32 %v6445, 2147483648
    %v6456 = vsel %vm6454, %v6455, %v6446
    %v6457 = vsel %vm6450, %v6453, %v6456
    %v6458 = vsel %vm6447, nan, %v6457
    %v6459 = vand.u32 2147483647, %v4058
    %vm6460 = vcmp.le.f32.partialorder %v6459, 0.7853982
    %vm6461 = vcmp.lt.s32.totalorder %v4058, 0
    %v6462 = vand.u32 %v4058, 2139095040
    %v6463 = vshrl.u32 %v6462, 23
    %v6464 = vsub.s32 %v6463, 127
    %v6465 = vand.u32 2147483647, %v4058
    %v6466 = vand.u32 %v6465, 8388607
    %v6467 = vor.u32 %v6466, 8388608
    %v6468 = vsub.s32 0, %v6467
    %v6469 = vadd.s32 %v6464, 1
    %vm6470 = vcmp.gt.s32.totalorder %v6469, 0
    %v6471 = vsel %vm6470, %v6469, 0
    %v6472 = vshrl.u32 %v6471, 5
    %v6473 = vand.u32 %v6471, 31
    %v6474 = vsub.s32 32, %v6473
    %v6475 = vshrl.u32 683565275, %v6474
    %v6476 = vshll.u32 683565275, %v6473
    %v6477 = vshrl.u32 2475754826, %v6474
    %v6478 = vor.u32 %v6476, %v6477
    %v6479 = vshll.u32 2475754826, %v6473
    %v6480 = vshrl.u32 2131351028, %v6474
    %v6481 = vor.u32 %v6479, %v6480
    %v6482 = vshll.u32 2131351028, %v6473
    %v6483 = vshrl.u32 2102212464, %v6474
    %v6484 = vor.u32 %v6482, %v6483
    %v6485 = vshll.u32 2102212464, %v6473
    %v6486 = vshrl.u32 920167782, %v6474
    %v6487 = vor.u32 %v6485, %v6486
    %v6488 = vshll.u32 920167782, %v6473
    %v6489 = vshrl.u32 1326507024, %v6474
    %v6490 = vor.u32 %v6488, %v6489
    %vm6491 = vcmp.lt.s32.totalorder %v6472, 1
    %vm6492 = vcmp.lt.s32.totalorder %v6472, 2
    %vm6493 = vcmp.lt.s32.totalorder %v6472, 3
    %vm6494 = vcmp.lt.s32.totalorder %v6472, 4
    %v6495 = vsel %vm6491, %v6475, %v6478
    %v6496 = vsel %vm6494, %v6484, 2102212464
    %v6497 = vsel %vm6493, %v6481, %v6496
    %v6498 = vsel %vm6492, %v6495, %v6497
    %v6499 = vsel %vm6491, %v6478, %v6481
    %v6500 = vsel %vm6494, %v6487, 920167782
    %v6501 = vsel %vm6493, %v6484, %v6500
    %v6502 = vsel %vm6492, %v6499, %v6501
    %v6503 = vsel %vm6491, %v6481, %v6484
    %v6504 = vsel %vm6494, %v6490, 1326507024
    %v6505 = vsel %vm6493, %v6487, %v6504
    %v6506 = vsel %vm6492, %v6503, %v6505
    %v6507 = vshll.u32 %v6467, 8
    %v6508 = vmul.u32.u64.compose %v6507, %v6506
    %v6509 = vextract.low.u32 %v6508
    %v6510 = vextract.high.u32 %v6508
    %v6511 = vmul.u32.u64.compose %v6507, %v6502
    %v6512 = vextract.low.u32 %v6511
    %v6513 = vextract.high.u32 %v6511
    %v6514 = vmul.u32 %v6507, %v6498
    %v6515 = vadd.s32 %v6510, %v6512
    %vm6516 = vc.u32 %v6510, %v6512
    %v6517 = vadd.s32 %v6513, 1
    %v6518 = vsel %vm6516, %v6517, %v6513
    %v6519 = vadd.s32 %v6514, %v6518
    %v6520 = vadd.s32 %v6519, 536870912
    %v6521 = vshrl.u32 %v6520, 30
    %v6522 = vshll.u32 %v6521, 30
    %v6523 = vsub.s32 %v6519, %v6522
    %vm6524 = vcmp.lt.s32.totalorder %v6523, 0
    %v6525 = vsub.s32 0, %v6523
    %v6526 = vsel %vm6524, %v6525, %v6523
    %v6527 = vclz %v6526
    %v6528 = vsub.s32 %v6527, 2
    %vm6529 = vcmp.gt.s32.totalorder 0, %v6528
    %v6530 = vsel %vm6529, 0, %v6528
    %v6531 = vsub.s32 32, %v6530
    %v6532 = vshll.u32 %v6523, %v6530
    %v6533 = vshrl.u32 %v6515, %v6531
    %v6534 = vor.u32 %v6532, %v6533
    %v6535 = vsub.s32 4294967266, %v6530
    %v6536 = vadd.s32 %v6535, 127
    %v6537 = vshll.u32 %v6536, 23
    %v6538 = vor.u32 4788187, %v6537
    %v6539 = vand.u32 2147483647, %v6538
    %v6541 = vcvt.s32.f32 %v6534
    %v6542 = vmul.f32 %v6541, %v6539
    %v6543 = vxor.u32 %v6542, 2147483648
    %v6544 = vsel %vm6461, %v6543, %v6542
    %v6545 = vsub.s32 4, %v6521
    %v6546 = vsel %vm6461, %v6545, %v6521
    %v6547 = vsel %vm6460, %v4058, %v6544
    %v6548 = vsel %vm6460, 0, %v6546
    %v6549 = vcosq.f32.pop %v6547
    %v6550 = vsinq.f32.pop %v6547
    %vm6551 = vweird.f32 %v4058
    %v6552 = vadd.s32 %v6548, 3
    %v6553 = vand.u32 %v6552, 3
    %vm6554 = vcmp.lt.s32.totalorder %v6553, 2
    %vm6555 = vcmp.eq.s32.totalorder %v6553, 0
    %v6556 = vxor.u32 %v6550, 2147483648
    %v6557 = vsel %vm6555, %v6549, %v6556
    %vm6558 = vcmp.eq.s32.totalorder %v6553, 2
    %v6559 = vxor.u32 %v6549, 2147483648
    %v6560 = vsel %vm6558, %v6559, %v6550
    %v6561 = vsel %vm6554, %v6557, %v6560
    %v6562 = vsel %vm6551, nan, %v6561
    %v6563 = vand.u32 2147483647, %v4059
    %vm6564 = vcmp.le.f32.partialorder %v6563, 0.7853982
    %vm6565 = vcmp.lt.s32.totalorder %v4059, 0
    %v6566 = vand.u32 %v4059, 2139095040
    %v6567 = vshrl.u32 %v6566, 23
    %v6568 = vsub.s32 %v6567, 127
    %v6569 = vand.u32 2147483647, %v4059
    %v6570 = vand.u32 %v6569, 8388607
    %v6571 = vor.u32 %v6570, 8388608
    %v6572 = vsub.s32 0, %v6571
    %v6573 = vadd.s32 %v6568, 1
    %vm6574 = vcmp.gt.s32.totalorder %v6573, 0
    %v6575 = vsel %vm6574, %v6573, 0
    %v6576 = vshrl.u32 %v6575, 5
    %v6577 = vand.u32 %v6575, 31
    %v6578 = vsub.s32 32, %v6577
    %v6579 = vshrl.u32 683565275, %v6578
    %v6580 = vshll.u32 683565275, %v6577
    %v6581 = vshrl.u32 2475754826, %v6578
    %v6582 = vor.u32 %v6580, %v6581
    %v6583 = vshll.u32 2475754826, %v6577
    %v6584 = vshrl.u32 2131351028, %v6578
    %v6585 = vor.u32 %v6583, %v6584
    %v6586 = vshll.u32 2131351028, %v6577
    %v6587 = vshrl.u32 2102212464, %v6578
    %v6588 = vor.u32 %v6586, %v6587
    %v6589 = vshll.u32 2102212464, %v6577
    %v6590 = vshrl.u32 920167782, %v6578
    %v6591 = vor.u32 %v6589, %v6590
    %v6592 = vshll.u32 920167782, %v6577
    %v6593 = vshrl.u32 1326507024, %v6578
    %v6594 = vor.u32 %v6592, %v6593
    %vm6595 = vcmp.lt.s32.totalorder %v6576, 1
    %vm6596 = vcmp.lt.s32.totalorder %v6576, 2
    %vm6597 = vcmp.lt.s32.totalorder %v6576, 3
    %vm6598 = vcmp.lt.s32.totalorder %v6576, 4
    %v6599 = vsel %vm6595, %v6579, %v6582
    %v6600 = vsel %vm6598, %v6588, 2102212464
    %v6601 = vsel %vm6597, %v6585, %v6600
    %v6602 = vsel %vm6596, %v6599, %v6601
    %v6603 = vsel %vm6595, %v6582, %v6585
    %v6604 = vsel %vm6598, %v6591, 920167782
    %v6605 = vsel %vm6597, %v6588, %v6604
    %v6606 = vsel %vm6596, %v6603, %v6605
    %v6607 = vsel %vm6595, %v6585, %v6588
    %v6608 = vsel %vm6598, %v6594, 1326507024
    %v6609 = vsel %vm6597, %v6591, %v6608
    %v6610 = vsel %vm6596, %v6607, %v6609
    %v6611 = vshll.u32 %v6571, 8
    %v6612 = vmul.u32.u64.compose %v6611, %v6610
    %v6613 = vextract.low.u32 %v6612
    %v6614 = vextract.high.u32 %v6612
    %v6615 = vmul.u32.u64.compose %v6611, %v6606
    %v6616 = vextract.low.u32 %v6615
    %v6617 = vextract.high.u32 %v6615
    %v6618 = vmul.u32 %v6611, %v6602
    %v6619 = vadd.s32 %v6614, %v6616
    %vm6620 = vc.u32 %v6614, %v6616
    %v6621 = vadd.s32 %v6617, 1
    %v6622 = vsel %vm6620, %v6621, %v6617
    %v6623 = vadd.s32 %v6618, %v6622
    %v6624 = vadd.s32 %v6623, 536870912
    %v6625 = vshrl.u32 %v6624, 30
    %v6626 = vshll.u32 %v6625, 30
    %v6627 = vsub.s32 %v6623, %v6626
    %vm6628 = vcmp.lt.s32.totalorder %v6627, 0
    %v6629 = vsub.s32 0, %v6627
    %v6630 = vsel %vm6628, %v6629, %v6627
    %v6631 = vclz %v6630
    %v6632 = vsub.s32 %v6631, 2
    %vm6633 = vcmp.gt.s32.totalorder 0, %v6632
    %v6634 = vsel %vm6633, 0, %v6632
    %v6635 = vsub.s32 32, %v6634
    %v6636 = vshll.u32 %v6627, %v6634
    %v6637 = vshrl.u32 %v6619, %v6635
    %v6638 = vor.u32 %v6636, %v6637
    %v6639 = vsub.s32 4294967266, %v6634
    %v6640 = vadd.s32 %v6639, 127
    %v6641 = vshll.u32 %v6640, 23
    %v6642 = vor.u32 4788187, %v6641
    %v6643 = vand.u32 2147483647, %v6642
    %v6645 = vcvt.s32.f32 %v6638
    %v6646 = vmul.f32 %v6645, %v6643
    %v6647 = vxor.u32 %v6646, 2147483648
    %v6648 = vsel %vm6565, %v6647, %v6646
    %v6649 = vsub.s32 4, %v6625
    %v6650 = vsel %vm6565, %v6649, %v6625
    %v6651 = vsel %vm6564, %v4059, %v6648
    %v6652 = vsel %vm6564, 0, %v6650
    %v6653 = vcosq.f32.pop %v6651
    %v6654 = vsinq.f32.pop %v6651
    %vm6655 = vweird.f32 %v4059
    %v6656 = vadd.s32 %v6652, 3
    %v6657 = vand.u32 %v6656, 3
    %vm6658 = vcmp.lt.s32.totalorder %v6657, 2
    %vm6659 = vcmp.eq.s32.totalorder %v6657, 0
    %v6660 = vxor.u32 %v6654, 2147483648
    %v6661 = vsel %vm6659, %v6653, %v6660
    %vm6662 = vcmp.eq.s32.totalorder %v6657, 2
    %v6663 = vxor.u32 %v6653, 2147483648
    %v6664 = vsel %vm6662, %v6663, %v6654
    %v6665 = vsel %vm6658, %v6661, %v6664
    %v6666 = vsel %vm6655, nan, %v6665
    %v6667 = vand.u32 2147483647, %v4060
    %vm6668 = vcmp.le.f32.partialorder %v6667, 0.7853982
    %vm6669 = vcmp.lt.s32.totalorder %v4060, 0
    %v6670 = vand.u32 %v4060, 2139095040
    %v6671 = vshrl.u32 %v6670, 23
    %v6672 = vsub.s32 %v6671, 127
    %v6673 = vand.u32 2147483647, %v4060
    %v6674 = vand.u32 %v6673, 8388607
    %v6675 = vor.u32 %v6674, 8388608
    %v6676 = vsub.s32 0, %v6675
    %v6677 = vadd.s32 %v6672, 1
    %vm6678 = vcmp.gt.s32.totalorder %v6677, 0
    %v6679 = vsel %vm6678, %v6677, 0
    %v6680 = vshrl.u32 %v6679, 5
    %v6681 = vand.u32 %v6679, 31
    %v6682 = vsub.s32 32, %v6681
    %v6683 = vshrl.u32 683565275, %v6682
    %v6684 = vshll.u32 683565275, %v6681
    %v6685 = vshrl.u32 2475754826, %v6682
    %v6686 = vor.u32 %v6684, %v6685
    %v6687 = vshll.u32 2475754826, %v6681
    %v6688 = vshrl.u32 2131351028, %v6682
    %v6689 = vor.u32 %v6687, %v6688
    %v6690 = vshll.u32 2131351028, %v6681
    %v6691 = vshrl.u32 2102212464, %v6682
    %v6692 = vor.u32 %v6690, %v6691
    %v6693 = vshll.u32 2102212464, %v6681
    %v6694 = vshrl.u32 920167782, %v6682
    %v6695 = vor.u32 %v6693, %v6694
    %v6696 = vshll.u32 920167782, %v6681
    %v6697 = vshrl.u32 1326507024, %v6682
    %v6698 = vor.u32 %v6696, %v6697
    %vm6699 = vcmp.lt.s32.totalorder %v6680, 1
    %vm6700 = vcmp.lt.s32.totalorder %v6680, 2
    %vm6701 = vcmp.lt.s32.totalorder %v6680, 3
    %vm6702 = vcmp.lt.s32.totalorder %v6680, 4
    %v6703 = vsel %vm6699, %v6683, %v6686
    %v6704 = vsel %vm6702, %v6692, 2102212464
    %v6705 = vsel %vm6701, %v6689, %v6704
    %v6706 = vsel %vm6700, %v6703, %v6705
    %v6707 = vsel %vm6699, %v6686, %v6689
    %v6708 = vsel %vm6702, %v6695, 920167782
    %v6709 = vsel %vm6701, %v6692, %v6708
    %v6710 = vsel %vm6700, %v6707, %v6709
    %v6711 = vsel %vm6699, %v6689, %v6692
    %v6712 = vsel %vm6702, %v6698, 1326507024
    %v6713 = vsel %vm6701, %v6695, %v6712
    %v6714 = vsel %vm6700, %v6711, %v6713
    %v6715 = vshll.u32 %v6675, 8
    %v6716 = vmul.u32.u64.compose %v6715, %v6714
    %v6717 = vextract.low.u32 %v6716
    %v6718 = vextract.high.u32 %v6716
    %v6719 = vmul.u32.u64.compose %v6715, %v6710
    %v6720 = vextract.low.u32 %v6719
    %v6721 = vextract.high.u32 %v6719
    %v6722 = vmul.u32 %v6715, %v6706
    %v6723 = vadd.s32 %v6718, %v6720
    %vm6724 = vc.u32 %v6718, %v6720
    %v6725 = vadd.s32 %v6721, 1
    %v6726 = vsel %vm6724, %v6725, %v6721
    %v6727 = vadd.s32 %v6722, %v6726
    %v6728 = vadd.s32 %v6727, 536870912
    %v6729 = vshrl.u32 %v6728, 30
    %v6730 = vshll.u32 %v6729, 30
    %v6731 = vsub.s32 %v6727, %v6730
    %vm6732 = vcmp.lt.s32.totalorder %v6731, 0
    %v6733 = vsub.s32 0, %v6731
    %v6734 = vsel %vm6732, %v6733, %v6731
    %v6735 = vclz %v6734
    %v6736 = vsub.s32 %v6735, 2
    %vm6737 = vcmp.gt.s32.totalorder 0, %v6736
    %v6738 = vsel %vm6737, 0, %v6736
    %v6739 = vsub.s32 32, %v6738
    %v6740 = vshll.u32 %v6731, %v6738
    %v6741 = vshrl.u32 %v6723, %v6739
    %v6742 = vor.u32 %v6740, %v6741
    %v6743 = vsub.s32 4294967266, %v6738
    %v6744 = vadd.s32 %v6743, 127
    %v6745 = vshll.u32 %v6744, 23
    %v6746 = vor.u32 4788187, %v6745
    %v6747 = vand.u32 2147483647, %v6746
    %v6749 = vcvt.s32.f32 %v6742
    %v6750 = vmul.f32 %v6749, %v6747
    %v6751 = vxor.u32 %v6750, 2147483648
    %v6752 = vsel %vm6669, %v6751, %v6750
    %v6753 = vsub.s32 4, %v6729
    %v6754 = vsel %vm6669, %v6753, %v6729
    %v6755 = vsel %vm6668, %v4060, %v6752
    %v6756 = vsel %vm6668, 0, %v6754
    %v6757 = vcosq.f32.pop %v6755
    %v6758 = vsinq.f32.pop %v6755
    %vm6759 = vweird.f32 %v4060
    %v6760 = vadd.s32 %v6756, 3
    %v6761 = vand.u32 %v6760, 3
    %vm6762 = vcmp.lt.s32.totalorder %v6761, 2
    %vm6763 = vcmp.eq.s32.totalorder %v6761, 0
    %v6764 = vxor.u32 %v6758, 2147483648
    %v6765 = vsel %vm6763, %v6757, %v6764
    %vm6766 = vcmp.eq.s32.totalorder %v6761, 2
    %v6767 = vxor.u32 %v6757, 2147483648
    %v6768 = vsel %vm6766, %v6767, %v6758
    %v6769 = vsel %vm6762, %v6765, %v6768
    %v6770 = vsel %vm6759, nan, %v6769
    %v6771 = vand.u32 2147483647, %v4061
    %vm6772 = vcmp.le.f32.partialorder %v6771, 0.7853982
    %vm6773 = vcmp.lt.s32.totalorder %v4061, 0
    %v6774 = vand.u32 %v4061, 2139095040
    %v6775 = vshrl.u32 %v6774, 23
    %v6776 = vsub.s32 %v6775, 127
    %v6777 = vand.u32 2147483647, %v4061
    %v6778 = vand.u32 %v6777, 8388607
    %v6779 = vor.u32 %v6778, 8388608
    %v6780 = vsub.s32 0, %v6779
    %v6781 = vadd.s32 %v6776, 1
    %vm6782 = vcmp.gt.s32.totalorder %v6781, 0
    %v6783 = vsel %vm6782, %v6781, 0
    %v6784 = vshrl.u32 %v6783, 5
    %v6785 = vand.u32 %v6783, 31
    %v6786 = vsub.s32 32, %v6785
    %v6787 = vshrl.u32 683565275, %v6786
    %v6788 = vshll.u32 683565275, %v6785
    %v6789 = vshrl.u32 2475754826, %v6786
    %v6790 = vor.u32 %v6788, %v6789
    %v6791 = vshll.u32 2475754826, %v6785
    %v6792 = vshrl.u32 2131351028, %v6786
    %v6793 = vor.u32 %v6791, %v6792
    %v6794 = vshll.u32 2131351028, %v6785
    %v6795 = vshrl.u32 2102212464, %v6786
    %v6796 = vor.u32 %v6794, %v6795
    %v6797 = vshll.u32 2102212464, %v6785
    %v6798 = vshrl.u32 920167782, %v6786
    %v6799 = vor.u32 %v6797, %v6798
    %v6800 = vshll.u32 920167782, %v6785
    %v6801 = vshrl.u32 1326507024, %v6786
    %v6802 = vor.u32 %v6800, %v6801
    %vm6803 = vcmp.lt.s32.totalorder %v6784, 1
    %vm6804 = vcmp.lt.s32.totalorder %v6784, 2
    %vm6805 = vcmp.lt.s32.totalorder %v6784, 3
    %vm6806 = vcmp.lt.s32.totalorder %v6784, 4
    %v6807 = vsel %vm6803, %v6787, %v6790
    %v6808 = vsel %vm6806, %v6796, 2102212464
    %v6809 = vsel %vm6805, %v6793, %v6808
    %v6810 = vsel %vm6804, %v6807, %v6809
    %v6811 = vsel %vm6803, %v6790, %v6793
    %v6812 = vsel %vm6806, %v6799, 920167782
    %v6813 = vsel %vm6805, %v6796, %v6812
    %v6814 = vsel %vm6804, %v6811, %v6813
    %v6815 = vsel %vm6803, %v6793, %v6796
    %v6816 = vsel %vm6806, %v6802, 1326507024
    %v6817 = vsel %vm6805, %v6799, %v6816
    %v6818 = vsel %vm6804, %v6815, %v6817
    %v6819 = vshll.u32 %v6779, 8
    %v6820 = vmul.u32.u64.compose %v6819, %v6818
    %v6821 = vextract.low.u32 %v6820
    %v6822 = vextract.high.u32 %v6820
    %v6823 = vmul.u32.u64.compose %v6819, %v6814
    %v6824 = vextract.low.u32 %v6823
    %v6825 = vextract.high.u32 %v6823
    %v6826 = vmul.u32 %v6819, %v6810
    %v6827 = vadd.s32 %v6822, %v6824
    %vm6828 = vc.u32 %v6822, %v6824
    %v6829 = vadd.s32 %v6825, 1
    %v6830 = vsel %vm6828, %v6829, %v6825
    %v6831 = vadd.s32 %v6826, %v6830
    %v6832 = vadd.s32 %v6831, 536870912
    %v6833 = vshrl.u32 %v6832, 30
    %v6834 = vshll.u32 %v6833, 30
    %v6835 = vsub.s32 %v6831, %v6834
    %vm6836 = vcmp.lt.s32.totalorder %v6835, 0
    %v6837 = vsub.s32 0, %v6835
    %v6838 = vsel %vm6836, %v6837, %v6835
    %v6839 = vclz %v6838
    %v6840 = vsub.s32 %v6839, 2
    %vm6841 = vcmp.gt.s32.totalorder 0, %v6840
    %v6842 = vsel %vm6841, 0, %v6840
    %v6843 = vsub.s32 32, %v6842
    %v6844 = vshll.u32 %v6835, %v6842
    %v6845 = vshrl.u32 %v6827, %v6843
    %v6846 = vor.u32 %v6844, %v6845
    %v6847 = vsub.s32 4294967266, %v6842
    %v6848 = vadd.s32 %v6847, 127
    %v6849 = vshll.u32 %v6848, 23
    %v6850 = vor.u32 4788187, %v6849
    %v6851 = vand.u32 2147483647, %v6850
    %v6853 = vcvt.s32.f32 %v6846
    %v6854 = vmul.f32 %v6853, %v6851
    %v6855 = vxor.u32 %v6854, 2147483648
    %v6856 = vsel %vm6773, %v6855, %v6854
    %v6857 = vsub.s32 4, %v6833
    %v6858 = vsel %vm6773, %v6857, %v6833
    %v6859 = vsel %vm6772, %v4061, %v6856
    %v6860 = vsel %vm6772, 0, %v6858
    %v6861 = vcosq.f32.pop %v6859
    %v6862 = vsinq.f32.pop %v6859
    %vm6863 = vweird.f32 %v4061
    %v6864 = vadd.s32 %v6860, 3
    %v6865 = vand.u32 %v6864, 3
    %vm6866 = vcmp.lt.s32.totalorder %v6865, 2
    %vm6867 = vcmp.eq.s32.totalorder %v6865, 0
    %v6868 = vxor.u32 %v6862, 2147483648
    %v6869 = vsel %vm6867, %v6861, %v6868
    %vm6870 = vcmp.eq.s32.totalorder %v6865, 2
    %v6871 = vxor.u32 %v6861, 2147483648
    %v6872 = vsel %vm6870, %v6871, %v6862
    %v6873 = vsel %vm6866, %v6869, %v6872
    %v6874 = vsel %vm6863, nan, %v6873
    %v6875 = vand.u32 2147483647, %v4062
    %vm6876 = vcmp.le.f32.partialorder %v6875, 0.7853982
    %vm6877 = vcmp.lt.s32.totalorder %v4062, 0
    %v6878 = vand.u32 %v4062, 2139095040
    %v6879 = vshrl.u32 %v6878, 23
    %v6880 = vsub.s32 %v6879, 127
    %v6881 = vand.u32 2147483647, %v4062
    %v6882 = vand.u32 %v6881, 8388607
    %v6883 = vor.u32 %v6882, 8388608
    %v6884 = vsub.s32 0, %v6883
    %v6885 = vadd.s32 %v6880, 1
    %vm6886 = vcmp.gt.s32.totalorder %v6885, 0
    %v6887 = vsel %vm6886, %v6885, 0
    %v6888 = vshrl.u32 %v6887, 5
    %v6889 = vand.u32 %v6887, 31
    %v6890 = vsub.s32 32, %v6889
    %v6891 = vshrl.u32 683565275, %v6890
    %v6892 = vshll.u32 683565275, %v6889
    %v6893 = vshrl.u32 2475754826, %v6890
    %v6894 = vor.u32 %v6892, %v6893
    %v6895 = vshll.u32 2475754826, %v6889
    %v6896 = vshrl.u32 2131351028, %v6890
    %v6897 = vor.u32 %v6895, %v6896
    %v6898 = vshll.u32 2131351028, %v6889
    %v6899 = vshrl.u32 2102212464, %v6890
    %v6900 = vor.u32 %v6898, %v6899
    %v6901 = vshll.u32 2102212464, %v6889
    %v6902 = vshrl.u32 920167782, %v6890
    %v6903 = vor.u32 %v6901, %v6902
    %v6904 = vshll.u32 920167782, %v6889
    %v6905 = vshrl.u32 1326507024, %v6890
    %v6906 = vor.u32 %v6904, %v6905
    %vm6907 = vcmp.lt.s32.totalorder %v6888, 1
    %vm6908 = vcmp.lt.s32.totalorder %v6888, 2
    %vm6909 = vcmp.lt.s32.totalorder %v6888, 3
    %vm6910 = vcmp.lt.s32.totalorder %v6888, 4
    %v6911 = vsel %vm6907, %v6891, %v6894
    %v6912 = vsel %vm6910, %v6900, 2102212464
    %v6913 = vsel %vm6909, %v6897, %v6912
    %v6914 = vsel %vm6908, %v6911, %v6913
    %v6915 = vsel %vm6907, %v6894, %v6897
    %v6916 = vsel %vm6910, %v6903, 920167782
    %v6917 = vsel %vm6909, %v6900, %v6916
    %v6918 = vsel %vm6908, %v6915, %v6917
    %v6919 = vsel %vm6907, %v6897, %v6900
    %v6920 = vsel %vm6910, %v6906, 1326507024
    %v6921 = vsel %vm6909, %v6903, %v6920
    %v6922 = vsel %vm6908, %v6919, %v6921
    %v6923 = vshll.u32 %v6883, 8
    %v6924 = vmul.u32.u64.compose %v6923, %v6922
    %v6925 = vextract.low.u32 %v6924
    %v6926 = vextract.high.u32 %v6924
    %v6927 = vmul.u32.u64.compose %v6923, %v6918
    %v6928 = vextract.low.u32 %v6927
    %v6929 = vextract.high.u32 %v6927
    %v6930 = vmul.u32 %v6923, %v6914
    %v6931 = vadd.s32 %v6926, %v6928
    %vm6932 = vc.u32 %v6926, %v6928
    %v6933 = vadd.s32 %v6929, 1
    %v6934 = vsel %vm6932, %v6933, %v6929
    %v6935 = vadd.s32 %v6930, %v6934
    %v6936 = vadd.s32 %v6935, 536870912
    %v6937 = vshrl.u32 %v6936, 30
    %v6938 = vshll.u32 %v6937, 30
    %v6939 = vsub.s32 %v6935, %v6938
    %vm6940 = vcmp.lt.s32.totalorder %v6939, 0
    %v6941 = vsub.s32 0, %v6939
    %v6942 = vsel %vm6940, %v6941, %v6939
    %v6943 = vclz %v6942
    %v6944 = vsub.s32 %v6943, 2
    %vm6945 = vcmp.gt.s32.totalorder 0, %v6944
    %v6946 = vsel %vm6945, 0, %v6944
    %v6947 = vsub.s32 32, %v6946
    %v6948 = vshll.u32 %v6939, %v6946
    %v6949 = vshrl.u32 %v6931, %v6947
    %v6950 = vor.u32 %v6948, %v6949
    %v6951 = vsub.s32 4294967266, %v6946
    %v6952 = vadd.s32 %v6951, 127
    %v6953 = vshll.u32 %v6952, 23
    %v6954 = vor.u32 4788187, %v6953
    %v6955 = vand.u32 2147483647, %v6954
    %v6957 = vcvt.s32.f32 %v6950
    %v6958 = vmul.f32 %v6957, %v6955
    %v6959 = vxor.u32 %v6958, 2147483648
    %v6960 = vsel %vm6877, %v6959, %v6958
    %v6961 = vsub.s32 4, %v6937
    %v6962 = vsel %vm6877, %v6961, %v6937
    %v6963 = vsel %vm6876, %v4062, %v6960
    %v6964 = vsel %vm6876, 0, %v6962
    %v6965 = vcosq.f32.pop %v6963
    %v6966 = vsinq.f32.pop %v6963
    %vm6967 = vweird.f32 %v4062
    %v6968 = vadd.s32 %v6964, 3
    %v6969 = vand.u32 %v6968, 3
    %vm6970 = vcmp.lt.s32.totalorder %v6969, 2
    %vm6971 = vcmp.eq.s32.totalorder %v6969, 0
    %v6972 = vxor.u32 %v6966, 2147483648
    %v6973 = vsel %vm6971, %v6965, %v6972
    %vm6974 = vcmp.eq.s32.totalorder %v6969, 2
    %v6975 = vxor.u32 %v6965, 2147483648
    %v6976 = vsel %vm6974, %v6975, %v6966
    %v6977 = vsel %vm6970, %v6973, %v6976
    %v6978 = vsel %vm6967, nan, %v6977
    %v6979 = vand.u32 2147483647, %v4063
    %vm6980 = vcmp.le.f32.partialorder %v6979, 0.7853982
    %vm6981 = vcmp.lt.s32.totalorder %v4063, 0
    %v6982 = vand.u32 %v4063, 2139095040
    %v6983 = vshrl.u32 %v6982, 23
    %v6984 = vsub.s32 %v6983, 127
    %v6985 = vand.u32 2147483647, %v4063
    %v6986 = vand.u32 %v6985, 8388607
    %v6987 = vor.u32 %v6986, 8388608
    %v6988 = vsub.s32 0, %v6987
    %v6989 = vadd.s32 %v6984, 1
    %vm6990 = vcmp.gt.s32.totalorder %v6989, 0
    %v6991 = vsel %vm6990, %v6989, 0
    %v6992 = vshrl.u32 %v6991, 5
    %v6993 = vand.u32 %v6991, 31
    %v6994 = vsub.s32 32, %v6993
    %v6995 = vshrl.u32 683565275, %v6994
    %v6996 = vshll.u32 683565275, %v6993
    %v6997 = vshrl.u32 2475754826, %v6994
    %v6998 = vor.u32 %v6996, %v6997
    %v6999 = vshll.u32 2475754826, %v6993
    %v7000 = vshrl.u32 2131351028, %v6994
    %v7001 = vor.u32 %v6999, %v7000
    %v7002 = vshll.u32 2131351028, %v6993
    %v7003 = vshrl.u32 2102212464, %v6994
    %v7004 = vor.u32 %v7002, %v7003
    %v7005 = vshll.u32 2102212464, %v6993
    %v7006 = vshrl.u32 920167782, %v6994
    %v7007 = vor.u32 %v7005, %v7006
    %v7008 = vshll.u32 920167782, %v6993
    %v7009 = vshrl.u32 1326507024, %v6994
    %v7010 = vor.u32 %v7008, %v7009
    %vm7011 = vcmp.lt.s32.totalorder %v6992, 1
    %vm7012 = vcmp.lt.s32.totalorder %v6992, 2
    %vm7013 = vcmp.lt.s32.totalorder %v6992, 3
    %vm7014 = vcmp.lt.s32.totalorder %v6992, 4
    %v7015 = vsel %vm7011, %v6995, %v6998
    %v7016 = vsel %vm7014, %v7004, 2102212464
    %v7017 = vsel %vm7013, %v7001, %v7016
    %v7018 = vsel %vm7012, %v7015, %v7017
    %v7019 = vsel %vm7011, %v6998, %v7001
    %v7020 = vsel %vm7014, %v7007, 920167782
    %v7021 = vsel %vm7013, %v7004, %v7020
    %v7022 = vsel %vm7012, %v7019, %v7021
    %v7023 = vsel %vm7011, %v7001, %v7004
    %v7024 = vsel %vm7014, %v7010, 1326507024
    %v7025 = vsel %vm7013, %v7007, %v7024
    %v7026 = vsel %vm7012, %v7023, %v7025
    %v7027 = vshll.u32 %v6987, 8
    %v7028 = vmul.u32.u64.compose %v7027, %v7026
    %v7029 = vextract.low.u32 %v7028
    %v7030 = vextract.high.u32 %v7028
    %v7031 = vmul.u32.u64.compose %v7027, %v7022
    %v7032 = vextract.low.u32 %v7031
    %v7033 = vextract.high.u32 %v7031
    %v7034 = vmul.u32 %v7027, %v7018
    %v7035 = vadd.s32 %v7030, %v7032
    %vm7036 = vc.u32 %v7030, %v7032
    %v7037 = vadd.s32 %v7033, 1
    %v7038 = vsel %vm7036, %v7037, %v7033
    %v7039 = vadd.s32 %v7034, %v7038
    %v7040 = vadd.s32 %v7039, 536870912
    %v7041 = vshrl.u32 %v7040, 30
    %v7042 = vshll.u32 %v7041, 30
    %v7043 = vsub.s32 %v7039, %v7042
    %vm7044 = vcmp.lt.s32.totalorder %v7043, 0
    %v7045 = vsub.s32 0, %v7043
    %v7046 = vsel %vm7044, %v7045, %v7043
    %v7047 = vclz %v7046
    %v7048 = vsub.s32 %v7047, 2
    %vm7049 = vcmp.gt.s32.totalorder 0, %v7048
    %v7050 = vsel %vm7049, 0, %v7048
    %v7051 = vsub.s32 32, %v7050
    %v7052 = vshll.u32 %v7043, %v7050
    %v7053 = vshrl.u32 %v7035, %v7051
    %v7054 = vor.u32 %v7052, %v7053
    %v7055 = vsub.s32 4294967266, %v7050
    %v7056 = vadd.s32 %v7055, 127
    %v7057 = vshll.u32 %v7056, 23
    %v7058 = vor.u32 4788187, %v7057
    %v7059 = vand.u32 2147483647, %v7058
    %v7061 = vcvt.s32.f32 %v7054
    %v7062 = vmul.f32 %v7061, %v7059
    %v7063 = vxor.u32 %v7062, 2147483648
    %v7064 = vsel %vm6981, %v7063, %v7062
    %v7065 = vsub.s32 4, %v7041
    %v7066 = vsel %vm6981, %v7065, %v7041
    %v7067 = vsel %vm6980, %v4063, %v7064
    %v7068 = vsel %vm6980, 0, %v7066
    %v7069 = vcosq.f32.pop %v7067
    %v7070 = vsinq.f32.pop %v7067
    %vm7071 = vweird.f32 %v4063
    %v7072 = vadd.s32 %v7068, 3
    %v7073 = vand.u32 %v7072, 3
    %vm7074 = vcmp.lt.s32.totalorder %v7073, 2
    %vm7075 = vcmp.eq.s32.totalorder %v7073, 0
    %v7076 = vxor.u32 %v7070, 2147483648
    %v7077 = vsel %vm7075, %v7069, %v7076
    %vm7078 = vcmp.eq.s32.totalorder %v7073, 2
    %v7079 = vxor.u32 %v7069, 2147483648
    %v7080 = vsel %vm7078, %v7079, %v7070
    %v7081 = vsel %vm7074, %v7077, %v7080
    %v7082 = vsel %vm7071, nan, %v7081
    %v7083 = vand.u32 2147483647, %v4064
    %vm7084 = vcmp.le.f32.partialorder %v7083, 0.7853982
    %vm7085 = vcmp.lt.s32.totalorder %v4064, 0
    %v7086 = vand.u32 %v4064, 2139095040
    %v7087 = vshrl.u32 %v7086, 23
    %v7088 = vsub.s32 %v7087, 127
    %v7089 = vand.u32 2147483647, %v4064
    %v7090 = vand.u32 %v7089, 8388607
    %v7091 = vor.u32 %v7090, 8388608
    %v7092 = vsub.s32 0, %v7091
    %v7093 = vadd.s32 %v7088, 1
    %vm7094 = vcmp.gt.s32.totalorder %v7093, 0
    %v7095 = vsel %vm7094, %v7093, 0
    %v7096 = vshrl.u32 %v7095, 5
    %v7097 = vand.u32 %v7095, 31
    %v7098 = vsub.s32 32, %v7097
    %v7099 = vshrl.u32 683565275, %v7098
    %v7100 = vshll.u32 683565275, %v7097
    %v7101 = vshrl.u32 2475754826, %v7098
    %v7102 = vor.u32 %v7100, %v7101
    %v7103 = vshll.u32 2475754826, %v7097
    %v7104 = vshrl.u32 2131351028, %v7098
    %v7105 = vor.u32 %v7103, %v7104
    %v7106 = vshll.u32 2131351028, %v7097
    %v7107 = vshrl.u32 2102212464, %v7098
    %v7108 = vor.u32 %v7106, %v7107
    %v7109 = vshll.u32 2102212464, %v7097
    %v7110 = vshrl.u32 920167782, %v7098
    %v7111 = vor.u32 %v7109, %v7110
    %v7112 = vshll.u32 920167782, %v7097
    %v7113 = vshrl.u32 1326507024, %v7098
    %v7114 = vor.u32 %v7112, %v7113
    %vm7115 = vcmp.lt.s32.totalorder %v7096, 1
    %vm7116 = vcmp.lt.s32.totalorder %v7096, 2
    %vm7117 = vcmp.lt.s32.totalorder %v7096, 3
    %vm7118 = vcmp.lt.s32.totalorder %v7096, 4
    %v7119 = vsel %vm7115, %v7099, %v7102
    %v7120 = vsel %vm7118, %v7108, 2102212464
    %v7121 = vsel %vm7117, %v7105, %v7120
    %v7122 = vsel %vm7116, %v7119, %v7121
    %v7123 = vsel %vm7115, %v7102, %v7105
    %v7124 = vsel %vm7118, %v7111, 920167782
    %v7125 = vsel %vm7117, %v7108, %v7124
    %v7126 = vsel %vm7116, %v7123, %v7125
    %v7127 = vsel %vm7115, %v7105, %v7108
    %v7128 = vsel %vm7118, %v7114, 1326507024
    %v7129 = vsel %vm7117, %v7111, %v7128
    %v7130 = vsel %vm7116, %v7127, %v7129
    %v7131 = vshll.u32 %v7091, 8
    %v7132 = vmul.u32.u64.compose %v7131, %v7130
    %v7133 = vextract.low.u32 %v7132
    %v7134 = vextract.high.u32 %v7132
    %v7135 = vmul.u32.u64.compose %v7131, %v7126
    %v7136 = vextract.low.u32 %v7135
    %v7137 = vextract.high.u32 %v7135
    %v7138 = vmul.u32 %v7131, %v7122
    %v7139 = vadd.s32 %v7134, %v7136
    %vm7140 = vc.u32 %v7134, %v7136
    %v7141 = vadd.s32 %v7137, 1
    %v7142 = vsel %vm7140, %v7141, %v7137
    %v7143 = vadd.s32 %v7138, %v7142
    %v7144 = vadd.s32 %v7143, 536870912
    %v7145 = vshrl.u32 %v7144, 30
    %v7146 = vshll.u32 %v7145, 30
    %v7147 = vsub.s32 %v7143, %v7146
    %vm7148 = vcmp.lt.s32.totalorder %v7147, 0
    %v7149 = vsub.s32 0, %v7147
    %v7150 = vsel %vm7148, %v7149, %v7147
    %v7151 = vclz %v7150
    %v7152 = vsub.s32 %v7151, 2
    %vm7153 = vcmp.gt.s32.totalorder 0, %v7152
    %v7154 = vsel %vm7153, 0, %v7152
    %v7155 = vsub.s32 32, %v7154
    %v7156 = vshll.u32 %v7147, %v7154
    %v7157 = vshrl.u32 %v7139, %v7155
    %v7158 = vor.u32 %v7156, %v7157
    %v7159 = vsub.s32 4294967266, %v7154
    %v7160 = vadd.s32 %v7159, 127
    %v7161 = vshll.u32 %v7160, 23
    %v7162 = vor.u32 4788187, %v7161
    %v7163 = vand.u32 2147483647, %v7162
    %v7165 = vcvt.s32.f32 %v7158
    %v7166 = vmul.f32 %v7165, %v7163
    %v7167 = vxor.u32 %v7166, 2147483648
    %v7168 = vsel %vm7085, %v7167, %v7166
    %v7169 = vsub.s32 4, %v7145
    %v7170 = vsel %vm7085, %v7169, %v7145
    %v7171 = vsel %vm7084, %v4064, %v7168
    %v7172 = vsel %vm7084, 0, %v7170
    %v7173 = vcosq.f32.pop %v7171
    %v7174 = vsinq.f32.pop %v7171
    %vm7175 = vweird.f32 %v4064
    %v7176 = vadd.s32 %v7172, 3
    %v7177 = vand.u32 %v7176, 3
    %vm7178 = vcmp.lt.s32.totalorder %v7177, 2
    %vm7179 = vcmp.eq.s32.totalorder %v7177, 0
    %v7180 = vxor.u32 %v7174, 2147483648
    %v7181 = vsel %vm7179, %v7173, %v7180
    %vm7182 = vcmp.eq.s32.totalorder %v7177, 2
    %v7183 = vxor.u32 %v7173, 2147483648
    %v7184 = vsel %vm7182, %v7183, %v7174
    %v7185 = vsel %vm7178, %v7181, %v7184
    %v7186 = vsel %vm7175, nan, %v7185
    %v7187 = vand.u32 2147483647, %v4065
    %vm7188 = vcmp.le.f32.partialorder %v7187, 0.7853982
    %vm7189 = vcmp.lt.s32.totalorder %v4065, 0
    %v7190 = vand.u32 %v4065, 2139095040
    %v7191 = vshrl.u32 %v7190, 23
    %v7192 = vsub.s32 %v7191, 127
    %v7193 = vand.u32 2147483647, %v4065
    %v7194 = vand.u32 %v7193, 8388607
    %v7195 = vor.u32 %v7194, 8388608
    %v7196 = vsub.s32 0, %v7195
    %v7197 = vadd.s32 %v7192, 1
    %vm7198 = vcmp.gt.s32.totalorder %v7197, 0
    %v7199 = vsel %vm7198, %v7197, 0
    %v7200 = vshrl.u32 %v7199, 5
    %v7201 = vand.u32 %v7199, 31
    %v7202 = vsub.s32 32, %v7201
    %v7203 = vshrl.u32 683565275, %v7202
    %v7204 = vshll.u32 683565275, %v7201
    %v7205 = vshrl.u32 2475754826, %v7202
    %v7206 = vor.u32 %v7204, %v7205
    %v7207 = vshll.u32 2475754826, %v7201
    %v7208 = vshrl.u32 2131351028, %v7202
    %v7209 = vor.u32 %v7207, %v7208
    %v7210 = vshll.u32 2131351028, %v7201
    %v7211 = vshrl.u32 2102212464, %v7202
    %v7212 = vor.u32 %v7210, %v7211
    %v7213 = vshll.u32 2102212464, %v7201
    %v7214 = vshrl.u32 920167782, %v7202
    %v7215 = vor.u32 %v7213, %v7214
    %v7216 = vshll.u32 920167782, %v7201
    %v7217 = vshrl.u32 1326507024, %v7202
    %v7218 = vor.u32 %v7216, %v7217
    %vm7219 = vcmp.lt.s32.totalorder %v7200, 1
    %vm7220 = vcmp.lt.s32.totalorder %v7200, 2
    %vm7221 = vcmp.lt.s32.totalorder %v7200, 3
    %vm7222 = vcmp.lt.s32.totalorder %v7200, 4
    %v7223 = vsel %vm7219, %v7203, %v7206
    %v7224 = vsel %vm7222, %v7212, 2102212464
    %v7225 = vsel %vm7221, %v7209, %v7224
    %v7226 = vsel %vm7220, %v7223, %v7225
    %v7227 = vsel %vm7219, %v7206, %v7209
    %v7228 = vsel %vm7222, %v7215, 920167782
    %v7229 = vsel %vm7221, %v7212, %v7228
    %v7230 = vsel %vm7220, %v7227, %v7229
    %v7231 = vsel %vm7219, %v7209, %v7212
    %v7232 = vsel %vm7222, %v7218, 1326507024
    %v7233 = vsel %vm7221, %v7215, %v7232
    %v7234 = vsel %vm7220, %v7231, %v7233
    %v7235 = vshll.u32 %v7195, 8
    %v7236 = vmul.u32.u64.compose %v7235, %v7234
    %v7237 = vextract.low.u32 %v7236
    %v7238 = vextract.high.u32 %v7236
    %v7239 = vmul.u32.u64.compose %v7235, %v7230
    %v7240 = vextract.low.u32 %v7239
    %v7241 = vextract.high.u32 %v7239
    %v7242 = vmul.u32 %v7235, %v7226
    %v7243 = vadd.s32 %v7238, %v7240
    %vm7244 = vc.u32 %v7238, %v7240
    %v7245 = vadd.s32 %v7241, 1
    %v7246 = vsel %vm7244, %v7245, %v7241
    %v7247 = vadd.s32 %v7242, %v7246
    %v7248 = vadd.s32 %v7247, 536870912
    %v7249 = vshrl.u32 %v7248, 30
    %v7250 = vshll.u32 %v7249, 30
    %v7251 = vsub.s32 %v7247, %v7250
    %vm7252 = vcmp.lt.s32.totalorder %v7251, 0
    %v7253 = vsub.s32 0, %v7251
    %v7254 = vsel %vm7252, %v7253, %v7251
    %v7255 = vclz %v7254
    %v7256 = vsub.s32 %v7255, 2
    %vm7257 = vcmp.gt.s32.totalorder 0, %v7256
    %v7258 = vsel %vm7257, 0, %v7256
    %v7259 = vsub.s32 32, %v7258
    %v7260 = vshll.u32 %v7251, %v7258
    %v7261 = vshrl.u32 %v7243, %v7259
    %v7262 = vor.u32 %v7260, %v7261
    %v7263 = vsub.s32 4294967266, %v7258
    %v7264 = vadd.s32 %v7263, 127
    %v7265 = vshll.u32 %v7264, 23
    %v7266 = vor.u32 4788187, %v7265
    %v7267 = vand.u32 2147483647, %v7266
    %v7269 = vcvt.s32.f32 %v7262
    %v7270 = vmul.f32 %v7269, %v7267
    %v7271 = vxor.u32 %v7270, 2147483648
    %v7272 = vsel %vm7189, %v7271, %v7270
    %v7273 = vsub.s32 4, %v7249
    %v7274 = vsel %vm7189, %v7273, %v7249
    %v7275 = vsel %vm7188, %v4065, %v7272
    %v7276 = vsel %vm7188, 0, %v7274
    %v7277 = vcosq.f32.pop %v7275
    %v7278 = vsinq.f32.pop %v7275
    %vm7279 = vweird.f32 %v4065
    %v7280 = vadd.s32 %v7276, 3
    %v7281 = vand.u32 %v7280, 3
    %vm7282 = vcmp.lt.s32.totalorder %v7281, 2
    %vm7283 = vcmp.eq.s32.totalorder %v7281, 0
    %v7284 = vxor.u32 %v7278, 2147483648
    %v7285 = vsel %vm7283, %v7277, %v7284
    %vm7286 = vcmp.eq.s32.totalorder %v7281, 2
    %v7287 = vxor.u32 %v7277, 2147483648
    %v7288 = vsel %vm7286, %v7287, %v7278
    %v7289 = vsel %vm7282, %v7285, %v7288
    %v7290 = vsel %vm7279, nan, %v7289
    %v7291 = vand.u32 2147483647, %v4066
    %vm7292 = vcmp.le.f32.partialorder %v7291, 0.7853982
    %vm7293 = vcmp.lt.s32.totalorder %v4066, 0
    %v7294 = vand.u32 %v4066, 2139095040
    %v7295 = vshrl.u32 %v7294, 23
    %v7296 = vsub.s32 %v7295, 127
    %v7297 = vand.u32 2147483647, %v4066
    %v7298 = vand.u32 %v7297, 8388607
    %v7299 = vor.u32 %v7298, 8388608
    %v7300 = vsub.s32 0, %v7299
    %v7301 = vadd.s32 %v7296, 1
    %vm7302 = vcmp.gt.s32.totalorder %v7301, 0
    %v7303 = vsel %vm7302, %v7301, 0
    %v7304 = vshrl.u32 %v7303, 5
    %v7305 = vand.u32 %v7303, 31
    %v7306 = vsub.s32 32, %v7305
    %v7307 = vshrl.u32 683565275, %v7306
    %v7308 = vshll.u32 683565275, %v7305
    %v7309 = vshrl.u32 2475754826, %v7306
    %v7310 = vor.u32 %v7308, %v7309
    %v7311 = vshll.u32 2475754826, %v7305
    %v7312 = vshrl.u32 2131351028, %v7306
    %v7313 = vor.u32 %v7311, %v7312
    %v7314 = vshll.u32 2131351028, %v7305
    %v7315 = vshrl.u32 2102212464, %v7306
    %v7316 = vor.u32 %v7314, %v7315
    %v7317 = vshll.u32 2102212464, %v7305
    %v7318 = vshrl.u32 920167782, %v7306
    %v7319 = vor.u32 %v7317, %v7318
    %v7320 = vshll.u32 920167782, %v7305
    %v7321 = vshrl.u32 1326507024, %v7306
    %v7322 = vor.u32 %v7320, %v7321
    %vm7323 = vcmp.lt.s32.totalorder %v7304, 1
    %vm7324 = vcmp.lt.s32.totalorder %v7304, 2
    %vm7325 = vcmp.lt.s32.totalorder %v7304, 3
    %vm7326 = vcmp.lt.s32.totalorder %v7304, 4
    %v7327 = vsel %vm7323, %v7307, %v7310
    %v7328 = vsel %vm7326, %v7316, 2102212464
    %v7329 = vsel %vm7325, %v7313, %v7328
    %v7330 = vsel %vm7324, %v7327, %v7329
    %v7331 = vsel %vm7323, %v7310, %v7313
    %v7332 = vsel %vm7326, %v7319, 920167782
    %v7333 = vsel %vm7325, %v7316, %v7332
    %v7334 = vsel %vm7324, %v7331, %v7333
    %v7335 = vsel %vm7323, %v7313, %v7316
    %v7336 = vsel %vm7326, %v7322, 1326507024
    %v7337 = vsel %vm7325, %v7319, %v7336
    %v7338 = vsel %vm7324, %v7335, %v7337
    %v7339 = vshll.u32 %v7299, 8
    %v7340 = vmul.u32.u64.compose %v7339, %v7338
    %v7341 = vextract.low.u32 %v7340
    %v7342 = vextract.high.u32 %v7340
    %v7343 = vmul.u32.u64.compose %v7339, %v7334
    %v7344 = vextract.low.u32 %v7343
    %v7345 = vextract.high.u32 %v7343
    %v7346 = vmul.u32 %v7339, %v7330
    %v7347 = vadd.s32 %v7342, %v7344
    %vm7348 = vc.u32 %v7342, %v7344
    %v7349 = vadd.s32 %v7345, 1
    %v7350 = vsel %vm7348, %v7349, %v7345
    %v7351 = vadd.s32 %v7346, %v7350
    %v7352 = vadd.s32 %v7351, 536870912
    %v7353 = vshrl.u32 %v7352, 30
    %v7354 = vshll.u32 %v7353, 30
    %v7355 = vsub.s32 %v7351, %v7354
    %vm7356 = vcmp.lt.s32.totalorder %v7355, 0
    %v7357 = vsub.s32 0, %v7355
    %v7358 = vsel %vm7356, %v7357, %v7355
    %v7359 = vclz %v7358
    %v7360 = vsub.s32 %v7359, 2
    %vm7361 = vcmp.gt.s32.totalorder 0, %v7360
    %v7362 = vsel %vm7361, 0, %v7360
    %v7363 = vsub.s32 32, %v7362
    %v7364 = vshll.u32 %v7355, %v7362
    %v7365 = vshrl.u32 %v7347, %v7363
    %v7366 = vor.u32 %v7364, %v7365
    %v7367 = vsub.s32 4294967266, %v7362
    %v7368 = vadd.s32 %v7367, 127
    %v7369 = vshll.u32 %v7368, 23
    %v7370 = vor.u32 4788187, %v7369
    %v7371 = vand.u32 2147483647, %v7370
    %v7373 = vcvt.s32.f32 %v7366
    %v7374 = vmul.f32 %v7373, %v7371
    %v7375 = vxor.u32 %v7374, 2147483648
    %v7376 = vsel %vm7293, %v7375, %v7374
    %v7377 = vsub.s32 4, %v7353
    %v7378 = vsel %vm7293, %v7377, %v7353
    %v7379 = vsel %vm7292, %v4066, %v7376
    %v7380 = vsel %vm7292, 0, %v7378
    %v7381 = vcosq.f32.pop %v7379
    %v7382 = vsinq.f32.pop %v7379
    %vm7383 = vweird.f32 %v4066
    %v7384 = vadd.s32 %v7380, 3
    %v7385 = vand.u32 %v7384, 3
    %vm7386 = vcmp.lt.s32.totalorder %v7385, 2
    %vm7387 = vcmp.eq.s32.totalorder %v7385, 0
    %v7388 = vxor.u32 %v7382, 2147483648
    %v7389 = vsel %vm7387, %v7381, %v7388
    %vm7390 = vcmp.eq.s32.totalorder %v7385, 2
    %v7391 = vxor.u32 %v7381, 2147483648
    %v7392 = vsel %vm7390, %v7391, %v7382
    %v7393 = vsel %vm7386, %v7389, %v7392
    %v7394 = vsel %vm7383, nan, %v7393
    %s7395 = scalar_lea.vmem %s4, 128
    %v7396 = vld [vmem:[%s7395] sm:$0xff]
    %v7397 = vld [vmem:[%s7395 + $0x8] sm:$0xff]
    %v7398 = vld [vmem:[%s7395 + $0x10] sm:$0xff]
    %v7399 = vld [vmem:[%s7395 + $0x18] sm:$0xff]
    %v7400 = vld [vmem:[%s7395 + $0x20] sm:$0xff]
    %v7401 = vld [vmem:[%s7395 + $0x28] sm:$0xff]
    %v7402 = vld [vmem:[%s7395 + $0x30] sm:$0xff]
    %v7403 = vld [vmem:[%s7395 + $0x38] sm:$0xff]
    %v7404 = vld [vmem:[%s7395 + $0x40] sm:$0xff]
    %v7405 = vld [vmem:[%s7395 + $0x48] sm:$0xff]
    %v7406 = vld [vmem:[%s7395 + $0x50] sm:$0xff]
    %v7407 = vld [vmem:[%s7395 + $0x58] sm:$0xff]
    %v7408 = vld [vmem:[%s7395 + $0x60] sm:$0xff]
    %v7409 = vld [vmem:[%s7395 + $0x68] sm:$0xff]
    %v7410 = vld [vmem:[%s7395 + $0x70] sm:$0xff]
    %v7411 = vld [vmem:[%s7395 + $0x78] sm:$0xff]
    %s7412 = sld [smem:[#allocation2 + $0x2]]
    %s7413 = scalar_lea.vmem %s5, 1
    %v7414 = vld [vmem:[%s7413] sm:$0x1]
    %v7416 = vlaneseq
    %v7417 = vshrl.u32 %v7416, 7
    %v7418 = vsub.s32 0, %v7417
    %v7419 = vrot.slane %v7414, %v7418
    %7421 = vmatprep.subr.mxu0 0.0
    %7422 = vmatpush1.msra.mxu0 %v7396
    %7423 = vmatprep.subr.mxu0 0.0
    %7424 = vmatpush1.msra.mxu0 %v7397
    %7425 = vmatprep.subr.mxu0 0.0
    %7426 = vmatpush1.msra.mxu0 %v7398
    %7427 = vmatprep.subr.mxu0 0.0
    %7428 = vmatpush1.msra.mxu0 %v7399
    %7429 = vmatprep.subr.mxu0 0.0
    %7430 = vmatpush1.msra.mxu0 %v7400
    %7431 = vmatprep.subr.mxu0 0.0
    %7432 = vmatpush1.msra.mxu0 %v7401
    %7433 = vmatprep.subr.mxu0 0.0
    %7434 = vmatpush1.msra.mxu0 %v7402
    %7435 = vmatprep.subr.mxu0 0.0
    %7436 = vmatpush1.msra.mxu0 %v7403
    %7437 = vmatprep.subr.mxu0 0.0
    %7438 = vmatpush1.msra.mxu0 %v7404
    %7439 = vmatprep.subr.mxu0 0.0
    %7440 = vmatpush1.msra.mxu0 %v7405
    %7441 = vmatprep.subr.mxu0 0.0
    %7442 = vmatpush1.msra.mxu0 %v7406
    %7443 = vmatprep.subr.mxu0 0.0
    %7444 = vmatpush1.msra.mxu0 %v7407
    %7445 = vmatprep.subr.mxu0 0.0
    %7446 = vmatpush1.msra.mxu0 %v7408
    %7447 = vmatprep.subr.mxu0 0.0
    %7448 = vmatpush1.msra.mxu0 %v7409
    %7449 = vmatprep.subr.mxu0 0.0
    %7450 = vmatpush1.msra.mxu0 %v7410
    %7451 = vmatprep.subr.mxu0 0.0
    %7452 = vmatpush1.msra.mxu0 %v7411
    %7453 = vmatprep.subr.mxu0 0.0
    %7454 = vmatpush1.msra.mxu0 0.0
    %7455 = vmatprep.subr.mxu0 0.0
    %7456 = vmatpush1.msra.mxu0 0.0
    %7457 = vmatprep.subr.mxu0 0.0
    %7458 = vmatpush1.msra.mxu0 0.0
    %7459 = vmatprep.subr.mxu0 0.0
    %7460 = vmatpush1.msra.mxu0 0.0
    %7461 = vmatprep.subr.mxu0 0.0
    %7462 = vmatpush1.msra.mxu0 0.0
    %7463 = vmatprep.subr.mxu0 0.0
    %7464 = vmatpush1.msra.mxu0 0.0
    %7465 = vmatprep.subr.mxu0 0.0
    %7466 = vmatpush1.msra.mxu0 0.0
    %7467 = vmatprep.subr.mxu0 0.0
    %7468 = vmatpush1.msra.mxu0 0.0
    %7469 = vmatprep.subr.mxu0 0.0
    %7470 = vmatpush1.msra.mxu0 0.0
    %7471 = vmatprep.subr.mxu0 0.0
    %7472 = vmatpush1.msra.mxu0 0.0
    %7473 = vmatprep.subr.mxu0 0.0
    %7474 = vmatpush1.msra.mxu0 0.0
    %7475 = vmatprep.subr.mxu0 0.0
    %7476 = vmatpush1.msra.mxu0 0.0
    %7477 = vmatprep.subr.mxu0 0.0
    %7478 = vmatpush1.msra.mxu0 0.0
    %7479 = vmatprep.subr.mxu0 0.0
    %7480 = vmatpush1.msra.mxu0 0.0
    %7481 = vmatprep.subr.mxu0 0.0
    %7482 = vmatpush1.msra.mxu0 0.0
    %7483 = vmatprep.subr.mxu0 0.0
    %7484 = vmatpush1.msra.mxu0 0.0
    %7485 = vmatprep.mubr.f32.mxu0 0.0
    %7486 = vmatmul.mubr.f32.gmra.mrb[0].mxu0 %v4170
    %v7487 = vpop.f32.mrb[0].mxu0
    %v7488 = vadd.f32 %v7419, %v7487
    %v7489 = vpop.f32.mrb[0].mxu0
    %7490 = vmatprep.mubr.f32.mxu0 0.0
    %7491 = vmatmul.mubr.f32.gmra.mrb[0].mxu0 %v4274
    %v7492 = vpop.f32.mrb[0].mxu0
    %v7493 = vadd.f32 %v7419, %v7492
    %v7494 = vpop.f32.mrb[0].mxu0
    %7495 = vmatprep.mubr.f32.mxu0 0.0
    %7496 = vmatmul.mubr.f32.gmra.mrb[0].mxu0 %v4378
    %v7497 = vpop.f32.mrb[0].mxu0
    %v7498 = vadd.f32 %v7419, %v7497
    %v7499 = vpop.f32.mrb[0].mxu0
    %7500 = vmatprep.mubr.f32.mxu0 0.0
    %7501 = vmatmul.mubr.f32.gmra.mrb[0].mxu0 %v4482
    %v7502 = vpop.f32.mrb[0].mxu0
    %v7503 = vadd.f32 %v7419, %v7502
    %v7504 = vpop.f32.mrb[0].mxu0
    %7505 = vmatprep.mubr.f32.mxu0 0.0
    %7506 = vmatmul.mubr.f32.gmra.mrb[0].mxu0 %v4586
    %v7507 = vpop.f32.mrb[0].mxu0
    %v7508 = vadd.f32 %v7419, %v7507
    %v7509 = vpop.f32.mrb[0].mxu0
    %7510 = vmatprep.mubr.f32.mxu0 0.0
    %7511 = vmatmul.mubr.f32.gmra.mrb[0].mxu0 %v4690
    %v7512 = vpop.f32.mrb[0].mxu0
    %v7513 = vadd.f32 %v7419, %v7512
    %v7514 = vpop.f32.mrb[0].mxu0
    %7515 = vmatprep.mubr.f32.mxu0 0.0
    %7516 = vmatmul.mubr.f32.gmra.mrb[0].mxu0 %v4794
    %v7517 = vpop.f32.mrb[0].mxu0
    %v7518 = vadd.f32 %v7419, %v7517
    %v7519 = vpop.f32.mrb[0].mxu0
    %7520 = vmatprep.mubr.f32.mxu0 0.0
    %7521 = vmatmul.mubr.f32.gmra.mrb[0].mxu0 %v4898
    %v7522 = vpop.f32.mrb[0].mxu0
    %v7523 = vadd.f32 %v7419, %v7522
    %v7524 = vpop.f32.mrb[0].mxu0
    %7525 = vmatprep.mubr.f32.mxu0 0.0
    %7526 = vmatmul.mubr.f32.gmra.mrb[0].mxu0 %v5002
    %v7527 = vpop.f32.mrb[0].mxu0
    %v7528 = vadd.f32 %v7419, %v7527
    %v7529 = vpop.f32.mrb[0].mxu0
    %7530 = vmatprep.mubr.f32.mxu0 0.0
    %7531 = vmatmul.mubr.f32.gmra.mrb[0].mxu0 %v5106
    %v7532 = vpop.f32.mrb[0].mxu0
    %v7533 = vadd.f32 %v7419, %v7532
    %v7534 = vpop.f32.mrb[0].mxu0
    %7535 = vmatprep.mubr.f32.mxu0 0.0
    %7536 = vmatmul.mubr.f32.gmra.mrb[0].mxu0 %v5210
    %v7537 = vpop.f32.mrb[0].mxu0
    %v7538 = vadd.f32 %v7419, %v7537
    %v7539 = vpop.f32.mrb[0].mxu0
    %7540 = vmatprep.mubr.f32.mxu0 0.0
    %7541 = vmatmul.mubr.f32.gmra.mrb[0].mxu0 %v5314
    %v7542 = vpop.f32.mrb[0].mxu0
    %v7543 = vadd.f32 %v7419, %v7542
    %v7544 = vpop.f32.mrb[0].mxu0
    %7545 = vmatprep.mubr.f32.mxu0 0.0
    %7546 = vmatmul.mubr.f32.gmra.mrb[0].mxu0 %v5418
    %v7547 = vpop.f32.mrb[0].mxu0
    %v7548 = vadd.f32 %v7419, %v7547
    %v7549 = vpop.f32.mrb[0].mxu0
    %7550 = vmatprep.mubr.f32.mxu0 0.0
    %7551 = vmatmul.mubr.f32.gmra.mrb[0].mxu0 %v5522
    %v7552 = vpop.f32.mrb[0].mxu0
    %v7553 = vadd.f32 %v7419, %v7552
    %v7554 = vpop.f32.mrb[0].mxu0
    %7555 = vmatprep.mubr.f32.mxu0 0.0
    %7556 = vmatmul.mubr.f32.gmra.mrb[0].mxu0 %v5626
    %v7557 = vpop.f32.mrb[0].mxu0
    %v7558 = vadd.f32 %v7419, %v7557
    %v7559 = vpop.f32.mrb[0].mxu0
    %7560 = vmatprep.mubr.f32.mxu0 0.0
    %7561 = vmatmul.mubr.f32.gmra.mrb[0].mxu0 %v5730
    %v7562 = vpop.f32.mrb[0].mxu0
    %v7563 = vadd.f32 %v7419, %v7562
    %v7564 = vpop.f32.mrb[0].mxu0
    %7565 = vmatprep.mubr.f32.mxu0 0.0
    %7566 = vmatmul.mubr.f32.gmra.mrb[0].mxu0 %v5834
    %v7567 = vpop.f32.mrb[0].mxu0
    %v7568 = vadd.f32 %v7419, %v7567
    %v7569 = vpop.f32.mrb[0].mxu0
    %7570 = vmatprep.mubr.f32.mxu0 0.0
    %7571 = vmatmul.mubr.f32.gmra.mrb[0].mxu0 %v5938
    %v7572 = vpop.f32.mrb[0].mxu0
    %v7573 = vadd.f32 %v7419, %v7572
    %v7574 = vpop.f32.mrb[0].mxu0
    %7575 = vmatprep.mubr.f32.mxu0 0.0
    %7576 = vmatmul.mubr.f32.gmra.mrb[0].mxu0 %v6042
    %v7577 = vpop.f32.mrb[0].mxu0
    %v7578 = vadd.f32 %v7419, %v7577
    %v7579 = vpop.f32.mrb[0].mxu0
    %7580 = vmatprep.mubr.f32.mxu0 0.0
    %7581 = vmatmul.mubr.f32.gmra.mrb[0].mxu0 %v6146
    %v7582 = vpop.f32.mrb[0].mxu0
    %v7583 = vadd.f32 %v7419, %v7582
    %v7584 = vpop.f32.mrb[0].mxu0
    %7585 = vmatprep.mubr.f32.mxu0 0.0
    %7586 = vmatmul.mubr.f32.gmra.mrb[0].mxu0 %v6250
    %v7587 = vpop.f32.mrb[0].mxu0
    %v7588 = vadd.f32 %v7419, %v7587
    %v7589 = vpop.f32.mrb[0].mxu0
    %7590 = vmatprep.mubr.f32.mxu0 0.0
    %7591 = vmatmul.mubr.f32.gmra.mrb[0].mxu0 %v6354
    %v7592 = vpop.f32.mrb[0].mxu0
    %v7593 = vadd.f32 %v7419, %v7592
    %v7594 = vpop.f32.mrb[0].mxu0
    %7595 = vmatprep.mubr.f32.mxu0 0.0
    %7596 = vmatmul.mubr.f32.gmra.mrb[0].mxu0 %v6458
    %v7597 = vpop.f32.mrb[0].mxu0
    %v7598 = vadd.f32 %v7419, %v7597
    %v7599 = vpop.f32.mrb[0].mxu0
    %7600 = vmatprep.mubr.f32.mxu0 0.0
    %7601 = vmatmul.mubr.f32.gmra.mrb[0].mxu0 %v6562
    %v7602 = vpop.f32.mrb[0].mxu0
    %v7603 = vadd.f32 %v7419, %v7602
    %v7604 = vpop.f32.mrb[0].mxu0
    %7605 = vmatprep.mubr.f32.mxu0 0.0
    %7606 = vmatmul.mubr.f32.gmra.mrb[0].mxu0 %v6666
    %v7607 = vpop.f32.mrb[0].mxu0
    %v7608 = vadd.f32 %v7419, %v7607
    %v7609 = vpop.f32.mrb[0].mxu0
    %7610 = vmatprep.mubr.f32.mxu0 0.0
    %7611 = vmatmul.mubr.f32.gmra.mrb[0].mxu0 %v6770
    %v7612 = vpop.f32.mrb[0].mxu0
    %v7613 = vadd.f32 %v7419, %v7612
    %v7614 = vpop.f32.mrb[0].mxu0
    %7615 = vmatprep.mubr.f32.mxu0 0.0
    %7616 = vmatmul.mubr.f32.gmra.mrb[0].mxu0 %v6874
    %v7617 = vpop.f32.mrb[0].mxu0
    %v7618 = vadd.f32 %v7419, %v7617
    %v7619 = vpop.f32.mrb[0].mxu0
    %7620 = vmatprep.mubr.f32.mxu0 0.0
    %7621 = vmatmul.mubr.f32.gmra.mrb[0].mxu0 %v6978
    %v7622 = vpop.f32.mrb[0].mxu0
    %v7623 = vadd.f32 %v7419, %v7622
    %v7624 = vpop.f32.mrb[0].mxu0
    %7625 = vmatprep.mubr.f32.mxu0 0.0
    %7626 = vmatmul.mubr.f32.gmra.mrb[0].mxu0 %v7082
    %v7627 = vpop.f32.mrb[0].mxu0
    %v7628 = vadd.f32 %v7419, %v7627
    %v7629 = vpop.f32.mrb[0].mxu0
    %7630 = vmatprep.mubr.f32.mxu0 0.0
    %7631 = vmatmul.mubr.f32.gmra.mrb[0].mxu0 %v7186
    %v7632 = vpop.f32.mrb[0].mxu0
    %v7633 = vadd.f32 %v7419, %v7632
    %v7634 = vpop.f32.mrb[0].mxu0
    %7635 = vmatprep.mubr.f32.mxu0 0.0
    %7636 = vmatmul.mubr.f32.gmra.mrb[0].mxu0 %v7290
    %v7637 = vpop.f32.mrb[0].mxu0
    %v7638 = vadd.f32 %v7419, %v7637
    %v7639 = vpop.f32.mrb[0].mxu0
    %7640 = vmatprep.mubr.f32.mxu0 0.0
    %7641 = vmatmul.mubr.f32.gmra.mrb[0].mxu0 %v7394
    %v7642 = vpop.f32.mrb[0].mxu0
    %v7643 = vadd.f32 %v7419, %v7642
    %v7644 = vpop.f32.mrb[0].mxu0
    %7645 = vdwg.mxu0
    %v7646 = vstv %s7412
    %v7647 = vmul.f32 %v7646, %v7488
    %v7648 = vmul.f32 %v7646, %v7493
    %v7649 = vmul.f32 %v7646, %v7498
    %v7650 = vmul.f32 %v7646, %v7503
    %v7651 = vmul.f32 %v7646, %v7508
    %v7652 = vmul.f32 %v7646, %v7513
    %v7653 = vmul.f32 %v7646, %v7518
    %v7654 = vmul.f32 %v7646, %v7523
    %v7655 = vmul.f32 %v7646, %v7528
    %v7656 = vmul.f32 %v7646, %v7533
    %v7657 = vmul.f32 %v7646, %v7538
    %v7658 = vmul.f32 %v7646, %v7543
    %v7659 = vmul.f32 %v7646, %v7548
    %v7660 = vmul.f32 %v7646, %v7553
    %v7661 = vmul.f32 %v7646, %v7558
    %v7662 = vmul.f32 %v7646, %v7563
    %v7663 = vmul.f32 %v7646, %v7568
    %v7664 = vmul.f32 %v7646, %v7573
    %v7665 = vmul.f32 %v7646, %v7578
    %v7666 = vmul.f32 %v7646, %v7583
    %v7667 = vmul.f32 %v7646, %v7588
    %v7668 = vmul.f32 %v7646, %v7593
    %v7669 = vmul.f32 %v7646, %v7598
    %v7670 = vmul.f32 %v7646, %v7603
    %v7671 = vmul.f32 %v7646, %v7608
    %v7672 = vmul.f32 %v7646, %v7613
    %v7673 = vmul.f32 %v7646, %v7618
    %v7674 = vmul.f32 %v7646, %v7623
    %v7675 = vmul.f32 %v7646, %v7628
    %v7676 = vmul.f32 %v7646, %v7633
    %v7677 = vmul.f32 %v7646, %v7638
    %v7678 = vmul.f32 %v7646, %v7643
    %v7679 = vand.u32 2147483647, %v7647
    %vm7680 = vcmp.le.f32.partialorder %v7679, 0.7853982
    %vm7681 = vcmp.lt.s32.totalorder %v7647, 0
    %v7682 = vand.u32 %v7647, 2139095040
    %v7683 = vshrl.u32 %v7682, 23
    %v7684 = vsub.s32 %v7683, 127
    %v7685 = vand.u32 2147483647, %v7647
    %v7686 = vand.u32 %v7685, 8388607
    %v7687 = vor.u32 %v7686, 8388608
    %v7688 = vsub.s32 0, %v7687
    %v7689 = vadd.s32 %v7684, 1
    %vm7690 = vcmp.gt.s32.totalorder %v7689, 0
    %v7691 = vsel %vm7690, %v7689, 0
    %v7692 = vshrl.u32 %v7691, 5
    %v7693 = vand.u32 %v7691, 31
    %v7694 = vsub.s32 32, %v7693
    %v7695 = vshrl.u32 683565275, %v7694
    %v7696 = vshll.u32 683565275, %v7693
    %v7697 = vshrl.u32 2475754826, %v7694
    %v7698 = vor.u32 %v7696, %v7697
    %v7699 = vshll.u32 2475754826, %v7693
    %v7700 = vshrl.u32 2131351028, %v7694
    %v7701 = vor.u32 %v7699, %v7700
    %v7702 = vshll.u32 2131351028, %v7693
    %v7703 = vshrl.u32 2102212464, %v7694
    %v7704 = vor.u32 %v7702, %v7703
    %v7705 = vshll.u32 2102212464, %v7693
    %v7706 = vshrl.u32 920167782, %v7694
    %v7707 = vor.u32 %v7705, %v7706
    %v7708 = vshll.u32 920167782, %v7693
    %v7709 = vshrl.u32 1326507024, %v7694
    %v7710 = vor.u32 %v7708, %v7709
    %vm7711 = vcmp.lt.s32.totalorder %v7692, 1
    %vm7712 = vcmp.lt.s32.totalorder %v7692, 2
    %vm7713 = vcmp.lt.s32.totalorder %v7692, 3
    %vm7714 = vcmp.lt.s32.totalorder %v7692, 4
    %v7715 = vsel %vm7711, %v7695, %v7698
    %v7716 = vsel %vm7714, %v7704, 2102212464
    %v7717 = vsel %vm7713, %v7701, %v7716
    %v7718 = vsel %vm7712, %v7715, %v7717
    %v7719 = vsel %vm7711, %v7698, %v7701
    %v7720 = vsel %vm7714, %v7707, 920167782
    %v7721 = vsel %vm7713, %v7704, %v7720
    %v7722 = vsel %vm7712, %v7719, %v7721
    %v7723 = vsel %vm7711, %v7701, %v7704
    %v7724 = vsel %vm7714, %v7710, 1326507024
    %v7725 = vsel %vm7713, %v7707, %v7724
    %v7726 = vsel %vm7712, %v7723, %v7725
    %v7727 = vshll.u32 %v7687, 8
    %v7728 = vmul.u32.u64.compose %v7727, %v7726
    %v7729 = vextract.low.u32 %v7728
    %v7730 = vextract.high.u32 %v7728
    %v7731 = vmul.u32.u64.compose %v7727, %v7722
    %v7732 = vextract.low.u32 %v7731
    %v7733 = vextract.high.u32 %v7731
    %v7734 = vmul.u32 %v7727, %v7718
    %v7735 = vadd.s32 %v7730, %v7732
    %vm7736 = vc.u32 %v7730, %v7732
    %v7737 = vadd.s32 %v7733, 1
    %v7738 = vsel %vm7736, %v7737, %v7733
    %v7739 = vadd.s32 %v7734, %v7738
    %v7740 = vadd.s32 %v7739, 536870912
    %v7741 = vshrl.u32 %v7740, 30
    %v7742 = vshll.u32 %v7741, 30
    %v7743 = vsub.s32 %v7739, %v7742
    %vm7744 = vcmp.lt.s32.totalorder %v7743, 0
    %v7745 = vsub.s32 0, %v7743
    %v7746 = vsel %vm7744, %v7745, %v7743
    %v7747 = vclz %v7746
    %v7748 = vsub.s32 %v7747, 2
    %vm7749 = vcmp.gt.s32.totalorder 0, %v7748
    %v7750 = vsel %vm7749, 0, %v7748
    %v7751 = vsub.s32 32, %v7750
    %v7752 = vshll.u32 %v7743, %v7750
    %v7753 = vshrl.u32 %v7735, %v7751
    %v7754 = vor.u32 %v7752, %v7753
    %v7755 = vsub.s32 4294967266, %v7750
    %v7756 = vadd.s32 %v7755, 127
    %v7757 = vshll.u32 %v7756, 23
    %v7758 = vor.u32 4788187, %v7757
    %v7759 = vand.u32 2147483647, %v7758
    %v7761 = vcvt.s32.f32 %v7754
    %v7762 = vmul.f32 %v7761, %v7759
    %v7763 = vxor.u32 %v7762, 2147483648
    %v7764 = vsel %vm7681, %v7763, %v7762
    %v7765 = vsub.s32 4, %v7741
    %v7766 = vsel %vm7681, %v7765, %v7741
    %v7767 = vsel %vm7680, %v7647, %v7764
    %v7768 = vsel %vm7680, 0, %v7766
    %v7769 = vcosq.f32.pop %v7767
    %v7770 = vsinq.f32.pop %v7767
    %vm7771 = vweird.f32 %v7647
    %v7772 = vadd.s32 %v7768, 3
    %v7773 = vand.u32 %v7772, 3
    %vm7774 = vcmp.lt.s32.totalorder %v7773, 2
    %vm7775 = vcmp.eq.s32.totalorder %v7773, 0
    %v7776 = vxor.u32 %v7770, 2147483648
    %v7777 = vsel %vm7775, %v7769, %v7776
    %vm7778 = vcmp.eq.s32.totalorder %v7773, 2
    %v7779 = vxor.u32 %v7769, 2147483648
    %v7780 = vsel %vm7778, %v7779, %v7770
    %v7781 = vsel %vm7774, %v7777, %v7780
    %v7782 = vsel %vm7771, nan, %v7781
    %v7783 = vand.u32 2147483647, %v7648
    %vm7784 = vcmp.le.f32.partialorder %v7783, 0.7853982
    %vm7785 = vcmp.lt.s32.totalorder %v7648, 0
    %v7786 = vand.u32 %v7648, 2139095040
    %v7787 = vshrl.u32 %v7786, 23
    %v7788 = vsub.s32 %v7787, 127
    %v7789 = vand.u32 2147483647, %v7648
    %v7790 = vand.u32 %v7789, 8388607
    %v7791 = vor.u32 %v7790, 8388608
    %v7792 = vsub.s32 0, %v7791
    %v7793 = vadd.s32 %v7788, 1
    %vm7794 = vcmp.gt.s32.totalorder %v7793, 0
    %v7795 = vsel %vm7794, %v7793, 0
    %v7796 = vshrl.u32 %v7795, 5
    %v7797 = vand.u32 %v7795, 31
    %v7798 = vsub.s32 32, %v7797
    %v7799 = vshrl.u32 683565275, %v7798
    %v7800 = vshll.u32 683565275, %v7797
    %v7801 = vshrl.u32 2475754826, %v7798
    %v7802 = vor.u32 %v7800, %v7801
    %v7803 = vshll.u32 2475754826, %v7797
    %v7804 = vshrl.u32 2131351028, %v7798
    %v7805 = vor.u32 %v7803, %v7804
    %v7806 = vshll.u32 2131351028, %v7797
    %v7807 = vshrl.u32 2102212464, %v7798
    %v7808 = vor.u32 %v7806, %v7807
    %v7809 = vshll.u32 2102212464, %v7797
    %v7810 = vshrl.u32 920167782, %v7798
    %v7811 = vor.u32 %v7809, %v7810
    %v7812 = vshll.u32 920167782, %v7797
    %v7813 = vshrl.u32 1326507024, %v7798
    %v7814 = vor.u32 %v7812, %v7813
    %vm7815 = vcmp.lt.s32.totalorder %v7796, 1
    %vm7816 = vcmp.lt.s32.totalorder %v7796, 2
    %vm7817 = vcmp.lt.s32.totalorder %v7796, 3
    %vm7818 = vcmp.lt.s32.totalorder %v7796, 4
    %v7819 = vsel %vm7815, %v7799, %v7802
    %v7820 = vsel %vm7818, %v7808, 2102212464
    %v7821 = vsel %vm7817, %v7805, %v7820
    %v7822 = vsel %vm7816, %v7819, %v7821
    %v7823 = vsel %vm7815, %v7802, %v7805
    %v7824 = vsel %vm7818, %v7811, 920167782
    %v7825 = vsel %vm7817, %v7808, %v7824
    %v7826 = vsel %vm7816, %v7823, %v7825
    %v7827 = vsel %vm7815, %v7805, %v7808
    %v7828 = vsel %vm7818, %v7814, 1326507024
    %v7829 = vsel %vm7817, %v7811, %v7828
    %v7830 = vsel %vm7816, %v7827, %v7829
    %v7831 = vshll.u32 %v7791, 8
    %v7832 = vmul.u32.u64.compose %v7831, %v7830
    %v7833 = vextract.low.u32 %v7832
    %v7834 = vextract.high.u32 %v7832
    %v7835 = vmul.u32.u64.compose %v7831, %v7826
    %v7836 = vextract.low.u32 %v7835
    %v7837 = vextract.high.u32 %v7835
    %v7838 = vmul.u32 %v7831, %v7822
    %v7839 = vadd.s32 %v7834, %v7836
    %vm7840 = vc.u32 %v7834, %v7836
    %v7841 = vadd.s32 %v7837, 1
    %v7842 = vsel %vm7840, %v7841, %v7837
    %v7843 = vadd.s32 %v7838, %v7842
    %v7844 = vadd.s32 %v7843, 536870912
    %v7845 = vshrl.u32 %v7844, 30
    %v7846 = vshll.u32 %v7845, 30
    %v7847 = vsub.s32 %v7843, %v7846
    %vm7848 = vcmp.lt.s32.totalorder %v7847, 0
    %v7849 = vsub.s32 0, %v7847
    %v7850 = vsel %vm7848, %v7849, %v7847
    %v7851 = vclz %v7850
    %v7852 = vsub.s32 %v7851, 2
    %vm7853 = vcmp.gt.s32.totalorder 0, %v7852
    %v7854 = vsel %vm7853, 0, %v7852
    %v7855 = vsub.s32 32, %v7854
    %v7856 = vshll.u32 %v7847, %v7854
    %v7857 = vshrl.u32 %v7839, %v7855
    %v7858 = vor.u32 %v7856, %v7857
    %v7859 = vsub.s32 4294967266, %v7854
    %v7860 = vadd.s32 %v7859, 127
    %v7861 = vshll.u32 %v7860, 23
    %v7862 = vor.u32 4788187, %v7861
    %v7863 = vand.u32 2147483647, %v7862
    %v7865 = vcvt.s32.f32 %v7858
    %v7866 = vmul.f32 %v7865, %v7863
    %v7867 = vxor.u32 %v7866, 2147483648
    %v7868 = vsel %vm7785, %v7867, %v7866
    %v7869 = vsub.s32 4, %v7845
    %v7870 = vsel %vm7785, %v7869, %v7845
    %v7871 = vsel %vm7784, %v7648, %v7868
    %v7872 = vsel %vm7784, 0, %v7870
    %v7873 = vcosq.f32.pop %v7871
    %v7874 = vsinq.f32.pop %v7871
    %vm7875 = vweird.f32 %v7648
    %v7876 = vadd.s32 %v7872, 3
    %v7877 = vand.u32 %v7876, 3
    %vm7878 = vcmp.lt.s32.totalorder %v7877, 2
    %vm7879 = vcmp.eq.s32.totalorder %v7877, 0
    %v7880 = vxor.u32 %v7874, 2147483648
    %v7881 = vsel %vm7879, %v7873, %v7880
    %vm7882 = vcmp.eq.s32.totalorder %v7877, 2
    %v7883 = vxor.u32 %v7873, 2147483648
    %v7884 = vsel %vm7882, %v7883, %v7874
    %v7885 = vsel %vm7878, %v7881, %v7884
    %v7886 = vsel %vm7875, nan, %v7885
    %v7887 = vand.u32 2147483647, %v7649
    %vm7888 = vcmp.le.f32.partialorder %v7887, 0.7853982
    %vm7889 = vcmp.lt.s32.totalorder %v7649, 0
    %v7890 = vand.u32 %v7649, 2139095040
    %v7891 = vshrl.u32 %v7890, 23
    %v7892 = vsub.s32 %v7891, 127
    %v7893 = vand.u32 2147483647, %v7649
    %v7894 = vand.u32 %v7893, 8388607
    %v7895 = vor.u32 %v7894, 8388608
    %v7896 = vsub.s32 0, %v7895
    %v7897 = vadd.s32 %v7892, 1
    %vm7898 = vcmp.gt.s32.totalorder %v7897, 0
    %v7899 = vsel %vm7898, %v7897, 0
    %v7900 = vshrl.u32 %v7899, 5
    %v7901 = vand.u32 %v7899, 31
    %v7902 = vsub.s32 32, %v7901
    %v7903 = vshrl.u32 683565275, %v7902
    %v7904 = vshll.u32 683565275, %v7901
    %v7905 = vshrl.u32 2475754826, %v7902
    %v7906 = vor.u32 %v7904, %v7905
    %v7907 = vshll.u32 2475754826, %v7901
    %v7908 = vshrl.u32 2131351028, %v7902
    %v7909 = vor.u32 %v7907, %v7908
    %v7910 = vshll.u32 2131351028, %v7901
    %v7911 = vshrl.u32 2102212464, %v7902
    %v7912 = vor.u32 %v7910, %v7911
    %v7913 = vshll.u32 2102212464, %v7901
    %v7914 = vshrl.u32 920167782, %v7902
    %v7915 = vor.u32 %v7913, %v7914
    %v7916 = vshll.u32 920167782, %v7901
    %v7917 = vshrl.u32 1326507024, %v7902
    %v7918 = vor.u32 %v7916, %v7917
    %vm7919 = vcmp.lt.s32.totalorder %v7900, 1
    %vm7920 = vcmp.lt.s32.totalorder %v7900, 2
    %vm7921 = vcmp.lt.s32.totalorder %v7900, 3
    %vm7922 = vcmp.lt.s32.totalorder %v7900, 4
    %v7923 = vsel %vm7919, %v7903, %v7906
    %v7924 = vsel %vm7922, %v7912, 2102212464
    %v7925 = vsel %vm7921, %v7909, %v7924
    %v7926 = vsel %vm7920, %v7923, %v7925
    %v7927 = vsel %vm7919, %v7906, %v7909
    %v7928 = vsel %vm7922, %v7915, 920167782
    %v7929 = vsel %vm7921, %v7912, %v7928
    %v7930 = vsel %vm7920, %v7927, %v7929
    %v7931 = vsel %vm7919, %v7909, %v7912
    %v7932 = vsel %vm7922, %v7918, 1326507024
    %v7933 = vsel %vm7921, %v7915, %v7932
    %v7934 = vsel %vm7920, %v7931, %v7933
    %v7935 = vshll.u32 %v7895, 8
    %v7936 = vmul.u32.u64.compose %v7935, %v7934
    %v7937 = vextract.low.u32 %v7936
    %v7938 = vextract.high.u32 %v7936
    %v7939 = vmul.u32.u64.compose %v7935, %v7930
    %v7940 = vextract.low.u32 %v7939
    %v7941 = vextract.high.u32 %v7939
    %v7942 = vmul.u32 %v7935, %v7926
    %v7943 = vadd.s32 %v7938, %v7940
    %vm7944 = vc.u32 %v7938, %v7940
    %v7945 = vadd.s32 %v7941, 1
    %v7946 = vsel %vm7944, %v7945, %v7941
    %v7947 = vadd.s32 %v7942, %v7946
    %v7948 = vadd.s32 %v7947, 536870912
    %v7949 = vshrl.u32 %v7948, 30
    %v7950 = vshll.u32 %v7949, 30
    %v7951 = vsub.s32 %v7947, %v7950
    %vm7952 = vcmp.lt.s32.totalorder %v7951, 0
    %v7953 = vsub.s32 0, %v7951
    %v7954 = vsel %vm7952, %v7953, %v7951
    %v7955 = vclz %v7954
    %v7956 = vsub.s32 %v7955, 2
    %vm7957 = vcmp.gt.s32.totalorder 0, %v7956
    %v7958 = vsel %vm7957, 0, %v7956
    %v7959 = vsub.s32 32, %v7958
    %v7960 = vshll.u32 %v7951, %v7958
    %v7961 = vshrl.u32 %v7943, %v7959
    %v7962 = vor.u32 %v7960, %v7961
    %v7963 = vsub.s32 4294967266, %v7958
    %v7964 = vadd.s32 %v7963, 127
    %v7965 = vshll.u32 %v7964, 23
    %v7966 = vor.u32 4788187, %v7965
    %v7967 = vand.u32 2147483647, %v7966
    %v7969 = vcvt.s32.f32 %v7962
    %v7970 = vmul.f32 %v7969, %v7967
    %v7971 = vxor.u32 %v7970, 2147483648
    %v7972 = vsel %vm7889, %v7971, %v7970
    %v7973 = vsub.s32 4, %v7949
    %v7974 = vsel %vm7889, %v7973, %v7949
    %v7975 = vsel %vm7888, %v7649, %v7972
    %v7976 = vsel %vm7888, 0, %v7974
    %v7977 = vcosq.f32.pop %v7975
    %v7978 = vsinq.f32.pop %v7975
    %vm7979 = vweird.f32 %v7649
    %v7980 = vadd.s32 %v7976, 3
    %v7981 = vand.u32 %v7980, 3
    %vm7982 = vcmp.lt.s32.totalorder %v7981, 2
    %vm7983 = vcmp.eq.s32.totalorder %v7981, 0
    %v7984 = vxor.u32 %v7978, 2147483648
    %v7985 = vsel %vm7983, %v7977, %v7984
    %vm7986 = vcmp.eq.s32.totalorder %v7981, 2
    %v7987 = vxor.u32 %v7977, 2147483648
    %v7988 = vsel %vm7986, %v7987, %v7978
    %v7989 = vsel %vm7982, %v7985, %v7988
    %v7990 = vsel %vm7979, nan, %v7989
    %v7991 = vand.u32 2147483647, %v7650
    %vm7992 = vcmp.le.f32.partialorder %v7991, 0.7853982
    %vm7993 = vcmp.lt.s32.totalorder %v7650, 0
    %v7994 = vand.u32 %v7650, 2139095040
    %v7995 = vshrl.u32 %v7994, 23
    %v7996 = vsub.s32 %v7995, 127
    %v7997 = vand.u32 2147483647, %v7650
    %v7998 = vand.u32 %v7997, 8388607
    %v7999 = vor.u32 %v7998, 8388608
    %v8000 = vsub.s32 0, %v7999
    %v8001 = vadd.s32 %v7996, 1
    %vm8002 = vcmp.gt.s32.totalorder %v8001, 0
    %v8003 = vsel %vm8002, %v8001, 0
    %v8004 = vshrl.u32 %v8003, 5
    %v8005 = vand.u32 %v8003, 31
    %v8006 = vsub.s32 32, %v8005
    %v8007 = vshrl.u32 683565275, %v8006
    %v8008 = vshll.u32 683565275, %v8005
    %v8009 = vshrl.u32 2475754826, %v8006
    %v8010 = vor.u32 %v8008, %v8009
    %v8011 = vshll.u32 2475754826, %v8005
    %v8012 = vshrl.u32 2131351028, %v8006
    %v8013 = vor.u32 %v8011, %v8012
    %v8014 = vshll.u32 2131351028, %v8005
    %v8015 = vshrl.u32 2102212464, %v8006
    %v8016 = vor.u32 %v8014, %v8015
    %v8017 = vshll.u32 2102212464, %v8005
    %v8018 = vshrl.u32 920167782, %v8006
    %v8019 = vor.u32 %v8017, %v8018
    %v8020 = vshll.u32 920167782, %v8005
    %v8021 = vshrl.u32 1326507024, %v8006
    %v8022 = vor.u32 %v8020, %v8021
    %vm8023 = vcmp.lt.s32.totalorder %v8004, 1
    %vm8024 = vcmp.lt.s32.totalorder %v8004, 2
    %vm8025 = vcmp.lt.s32.totalorder %v8004, 3
    %vm8026 = vcmp.lt.s32.totalorder %v8004, 4
    %v8027 = vsel %vm8023, %v8007, %v8010
    %v8028 = vsel %vm8026, %v8016, 2102212464
    %v8029 = vsel %vm8025, %v8013, %v8028
    %v8030 = vsel %vm8024, %v8027, %v8029
    %v8031 = vsel %vm8023, %v8010, %v8013
    %v8032 = vsel %vm8026, %v8019, 920167782
    %v8033 = vsel %vm8025, %v8016, %v8032
    %v8034 = vsel %vm8024, %v8031, %v8033
    %v8035 = vsel %vm8023, %v8013, %v8016
    %v8036 = vsel %vm8026, %v8022, 1326507024
    %v8037 = vsel %vm8025, %v8019, %v8036
    %v8038 = vsel %vm8024, %v8035, %v8037
    %v8039 = vshll.u32 %v7999, 8
    %v8040 = vmul.u32.u64.compose %v8039, %v8038
    %v8041 = vextract.low.u32 %v8040
    %v8042 = vextract.high.u32 %v8040
    %v8043 = vmul.u32.u64.compose %v8039, %v8034
    %v8044 = vextract.low.u32 %v8043
    %v8045 = vextract.high.u32 %v8043
    %v8046 = vmul.u32 %v8039, %v8030
    %v8047 = vadd.s32 %v8042, %v8044
    %vm8048 = vc.u32 %v8042, %v8044
    %v8049 = vadd.s32 %v8045, 1
    %v8050 = vsel %vm8048, %v8049, %v8045
    %v8051 = vadd.s32 %v8046, %v8050
    %v8052 = vadd.s32 %v8051, 536870912
    %v8053 = vshrl.u32 %v8052, 30
    %v8054 = vshll.u32 %v8053, 30
    %v8055 = vsub.s32 %v8051, %v8054
    %vm8056 = vcmp.lt.s32.totalorder %v8055, 0
    %v8057 = vsub.s32 0, %v8055
    %v8058 = vsel %vm8056, %v8057, %v8055
    %v8059 = vclz %v8058
    %v8060 = vsub.s32 %v8059, 2
    %vm8061 = vcmp.gt.s32.totalorder 0, %v8060
    %v8062 = vsel %vm8061, 0, %v8060
    %v8063 = vsub.s32 32, %v8062
    %v8064 = vshll.u32 %v8055, %v8062
    %v8065 = vshrl.u32 %v8047, %v8063
    %v8066 = vor.u32 %v8064, %v8065
    %v8067 = vsub.s32 4294967266, %v8062
    %v8068 = vadd.s32 %v8067, 127
    %v8069 = vshll.u32 %v8068, 23
    %v8070 = vor.u32 4788187, %v8069
    %v8071 = vand.u32 2147483647, %v8070
    %v8073 = vcvt.s32.f32 %v8066
    %v8074 = vmul.f32 %v8073, %v8071
    %v8075 = vxor.u32 %v8074, 2147483648
    %v8076 = vsel %vm7993, %v8075, %v8074
    %v8077 = vsub.s32 4, %v8053
    %v8078 = vsel %vm7993, %v8077, %v8053
    %v8079 = vsel %vm7992, %v7650, %v8076
    %v8080 = vsel %vm7992, 0, %v8078
    %v8081 = vcosq.f32.pop %v8079
    %v8082 = vsinq.f32.pop %v8079
    %vm8083 = vweird.f32 %v7650
    %v8084 = vadd.s32 %v8080, 3
    %v8085 = vand.u32 %v8084, 3
    %vm8086 = vcmp.lt.s32.totalorder %v8085, 2
    %vm8087 = vcmp.eq.s32.totalorder %v8085, 0
    %v8088 = vxor.u32 %v8082, 2147483648
    %v8089 = vsel %vm8087, %v8081, %v8088
    %vm8090 = vcmp.eq.s32.totalorder %v8085, 2
    %v8091 = vxor.u32 %v8081, 2147483648
    %v8092 = vsel %vm8090, %v8091, %v8082
    %v8093 = vsel %vm8086, %v8089, %v8092
    %v8094 = vsel %vm8083, nan, %v8093
    %v8095 = vand.u32 2147483647, %v7651
    %vm8096 = vcmp.le.f32.partialorder %v8095, 0.7853982
    %vm8097 = vcmp.lt.s32.totalorder %v7651, 0
    %v8098 = vand.u32 %v7651, 2139095040
    %v8099 = vshrl.u32 %v8098, 23
    %v8100 = vsub.s32 %v8099, 127
    %v8101 = vand.u32 2147483647, %v7651
    %v8102 = vand.u32 %v8101, 8388607
    %v8103 = vor.u32 %v8102, 8388608
    %v8104 = vsub.s32 0, %v8103
    %v8105 = vadd.s32 %v8100, 1
    %vm8106 = vcmp.gt.s32.totalorder %v8105, 0
    %v8107 = vsel %vm8106, %v8105, 0
    %v8108 = vshrl.u32 %v8107, 5
    %v8109 = vand.u32 %v8107, 31
    %v8110 = vsub.s32 32, %v8109
    %v8111 = vshrl.u32 683565275, %v8110
    %v8112 = vshll.u32 683565275, %v8109
    %v8113 = vshrl.u32 2475754826, %v8110
    %v8114 = vor.u32 %v8112, %v8113
    %v8115 = vshll.u32 2475754826, %v8109
    %v8116 = vshrl.u32 2131351028, %v8110
    %v8117 = vor.u32 %v8115, %v8116
    %v8118 = vshll.u32 2131351028, %v8109
    %v8119 = vshrl.u32 2102212464, %v8110
    %v8120 = vor.u32 %v8118, %v8119
    %v8121 = vshll.u32 2102212464, %v8109
    %v8122 = vshrl.u32 920167782, %v8110
    %v8123 = vor.u32 %v8121, %v8122
    %v8124 = vshll.u32 920167782, %v8109
    %v8125 = vshrl.u32 1326507024, %v8110
    %v8126 = vor.u32 %v8124, %v8125
    %vm8127 = vcmp.lt.s32.totalorder %v8108, 1
    %vm8128 = vcmp.lt.s32.totalorder %v8108, 2
    %vm8129 = vcmp.lt.s32.totalorder %v8108, 3
    %vm8130 = vcmp.lt.s32.totalorder %v8108, 4
    %v8131 = vsel %vm8127, %v8111, %v8114
    %v8132 = vsel %vm8130, %v8120, 2102212464
    %v8133 = vsel %vm8129, %v8117, %v8132
    %v8134 = vsel %vm8128, %v8131, %v8133
    %v8135 = vsel %vm8127, %v8114, %v8117
    %v8136 = vsel %vm8130, %v8123, 920167782
    %v8137 = vsel %vm8129, %v8120, %v8136
    %v8138 = vsel %vm8128, %v8135, %v8137
    %v8139 = vsel %vm8127, %v8117, %v8120
    %v8140 = vsel %vm8130, %v8126, 1326507024
    %v8141 = vsel %vm8129, %v8123, %v8140
    %v8142 = vsel %vm8128, %v8139, %v8141
    %v8143 = vshll.u32 %v8103, 8
    %v8144 = vmul.u32.u64.compose %v8143, %v8142
    %v8145 = vextract.low.u32 %v8144
    %v8146 = vextract.high.u32 %v8144
    %v8147 = vmul.u32.u64.compose %v8143, %v8138
    %v8148 = vextract.low.u32 %v8147
    %v8149 = vextract.high.u32 %v8147
    %v8150 = vmul.u32 %v8143, %v8134
    %v8151 = vadd.s32 %v8146, %v8148
    %vm8152 = vc.u32 %v8146, %v8148
    %v8153 = vadd.s32 %v8149, 1
    %v8154 = vsel %vm8152, %v8153, %v8149
    %v8155 = vadd.s32 %v8150, %v8154
    %v8156 = vadd.s32 %v8155, 536870912
    %v8157 = vshrl.u32 %v8156, 30
    %v8158 = vshll.u32 %v8157, 30
    %v8159 = vsub.s32 %v8155, %v8158
    %vm8160 = vcmp.lt.s32.totalorder %v8159, 0
    %v8161 = vsub.s32 0, %v8159
    %v8162 = vsel %vm8160, %v8161, %v8159
    %v8163 = vclz %v8162
    %v8164 = vsub.s32 %v8163, 2
    %vm8165 = vcmp.gt.s32.totalorder 0, %v8164
    %v8166 = vsel %vm8165, 0, %v8164
    %v8167 = vsub.s32 32, %v8166
    %v8168 = vshll.u32 %v8159, %v8166
    %v8169 = vshrl.u32 %v8151, %v8167
    %v8170 = vor.u32 %v8168, %v8169
    %v8171 = vsub.s32 4294967266, %v8166
    %v8172 = vadd.s32 %v8171, 127
    %v8173 = vshll.u32 %v8172, 23
    %v8174 = vor.u32 4788187, %v8173
    %v8175 = vand.u32 2147483647, %v8174
    %v8177 = vcvt.s32.f32 %v8170
    %v8178 = vmul.f32 %v8177, %v8175
    %v8179 = vxor.u32 %v8178, 2147483648
    %v8180 = vsel %vm8097, %v8179, %v8178
    %v8181 = vsub.s32 4, %v8157
    %v8182 = vsel %vm8097, %v8181, %v8157
    %v8183 = vsel %vm8096, %v7651, %v8180
    %v8184 = vsel %vm8096, 0, %v8182
    %v8185 = vcosq.f32.pop %v8183
    %v8186 = vsinq.f32.pop %v8183
    %vm8187 = vweird.f32 %v7651
    %v8188 = vadd.s32 %v8184, 3
    %v8189 = vand.u32 %v8188, 3
    %vm8190 = vcmp.lt.s32.totalorder %v8189, 2
    %vm8191 = vcmp.eq.s32.totalorder %v8189, 0
    %v8192 = vxor.u32 %v8186, 2147483648
    %v8193 = vsel %vm8191, %v8185, %v8192
    %vm8194 = vcmp.eq.s32.totalorder %v8189, 2
    %v8195 = vxor.u32 %v8185, 2147483648
    %v8196 = vsel %vm8194, %v8195, %v8186
    %v8197 = vsel %vm8190, %v8193, %v8196
    %v8198 = vsel %vm8187, nan, %v8197
    %v8199 = vand.u32 2147483647, %v7652
    %vm8200 = vcmp.le.f32.partialorder %v8199, 0.7853982
    %vm8201 = vcmp.lt.s32.totalorder %v7652, 0
    %v8202 = vand.u32 %v7652, 2139095040
    %v8203 = vshrl.u32 %v8202, 23
    %v8204 = vsub.s32 %v8203, 127
    %v8205 = vand.u32 2147483647, %v7652
    %v8206 = vand.u32 %v8205, 8388607
    %v8207 = vor.u32 %v8206, 8388608
    %v8208 = vsub.s32 0, %v8207
    %v8209 = vadd.s32 %v8204, 1
    %vm8210 = vcmp.gt.s32.totalorder %v8209, 0
    %v8211 = vsel %vm8210, %v8209, 0
    %v8212 = vshrl.u32 %v8211, 5
    %v8213 = vand.u32 %v8211, 31
    %v8214 = vsub.s32 32, %v8213
    %v8215 = vshrl.u32 683565275, %v8214
    %v8216 = vshll.u32 683565275, %v8213
    %v8217 = vshrl.u32 2475754826, %v8214
    %v8218 = vor.u32 %v8216, %v8217
    %v8219 = vshll.u32 2475754826, %v8213
    %v8220 = vshrl.u32 2131351028, %v8214
    %v8221 = vor.u32 %v8219, %v8220
    %v8222 = vshll.u32 2131351028, %v8213
    %v8223 = vshrl.u32 2102212464, %v8214
    %v8224 = vor.u32 %v8222, %v8223
    %v8225 = vshll.u32 2102212464, %v8213
    %v8226 = vshrl.u32 920167782, %v8214
    %v8227 = vor.u32 %v8225, %v8226
    %v8228 = vshll.u32 920167782, %v8213
    %v8229 = vshrl.u32 1326507024, %v8214
    %v8230 = vor.u32 %v8228, %v8229
    %vm8231 = vcmp.lt.s32.totalorder %v8212, 1
    %vm8232 = vcmp.lt.s32.totalorder %v8212, 2
    %vm8233 = vcmp.lt.s32.totalorder %v8212, 3
    %vm8234 = vcmp.lt.s32.totalorder %v8212, 4
    %v8235 = vsel %vm8231, %v8215, %v8218
    %v8236 = vsel %vm8234, %v8224, 2102212464
    %v8237 = vsel %vm8233, %v8221, %v8236
    %v8238 = vsel %vm8232, %v8235, %v8237
    %v8239 = vsel %vm8231, %v8218, %v8221
    %v8240 = vsel %vm8234, %v8227, 920167782
    %v8241 = vsel %vm8233, %v8224, %v8240
    %v8242 = vsel %vm8232, %v8239, %v8241
    %v8243 = vsel %vm8231, %v8221, %v8224
    %v8244 = vsel %vm8234, %v8230, 1326507024
    %v8245 = vsel %vm8233, %v8227, %v8244
    %v8246 = vsel %vm8232, %v8243, %v8245
    %v8247 = vshll.u32 %v8207, 8
    %v8248 = vmul.u32.u64.compose %v8247, %v8246
    %v8249 = vextract.low.u32 %v8248
    %v8250 = vextract.high.u32 %v8248
    %v8251 = vmul.u32.u64.compose %v8247, %v8242
    %v8252 = vextract.low.u32 %v8251
    %v8253 = vextract.high.u32 %v8251
    %v8254 = vmul.u32 %v8247, %v8238
    %v8255 = vadd.s32 %v8250, %v8252
    %vm8256 = vc.u32 %v8250, %v8252
    %v8257 = vadd.s32 %v8253, 1
    %v8258 = vsel %vm8256, %v8257, %v8253
    %v8259 = vadd.s32 %v8254, %v8258
    %v8260 = vadd.s32 %v8259, 536870912
    %v8261 = vshrl.u32 %v8260, 30
    %v8262 = vshll.u32 %v8261, 30
    %v8263 = vsub.s32 %v8259, %v8262
    %vm8264 = vcmp.lt.s32.totalorder %v8263, 0
    %v8265 = vsub.s32 0, %v8263
    %v8266 = vsel %vm8264, %v8265, %v8263
    %v8267 = vclz %v8266
    %v8268 = vsub.s32 %v8267, 2
    %vm8269 = vcmp.gt.s32.totalorder 0, %v8268
    %v8270 = vsel %vm8269, 0, %v8268
    %v8271 = vsub.s32 32, %v8270
    %v8272 = vshll.u32 %v8263, %v8270
    %v8273 = vshrl.u32 %v8255, %v8271
    %v8274 = vor.u32 %v8272, %v8273
    %v8275 = vsub.s32 4294967266, %v8270
    %v8276 = vadd.s32 %v8275, 127
    %v8277 = vshll.u32 %v8276, 23
    %v8278 = vor.u32 4788187, %v8277
    %v8279 = vand.u32 2147483647, %v8278
    %v8281 = vcvt.s32.f32 %v8274
    %v8282 = vmul.f32 %v8281, %v8279
    %v8283 = vxor.u32 %v8282, 2147483648
    %v8284 = vsel %vm8201, %v8283, %v8282
    %v8285 = vsub.s32 4, %v8261
    %v8286 = vsel %vm8201, %v8285, %v8261
    %v8287 = vsel %vm8200, %v7652, %v8284
    %v8288 = vsel %vm8200, 0, %v8286
    %v8289 = vcosq.f32.pop %v8287
    %v8290 = vsinq.f32.pop %v8287
    %vm8291 = vweird.f32 %v7652
    %v8292 = vadd.s32 %v8288, 3
    %v8293 = vand.u32 %v8292, 3
    %vm8294 = vcmp.lt.s32.totalorder %v8293, 2
    %vm8295 = vcmp.eq.s32.totalorder %v8293, 0
    %v8296 = vxor.u32 %v8290, 2147483648
    %v8297 = vsel %vm8295, %v8289, %v8296
    %vm8298 = vcmp.eq.s32.totalorder %v8293, 2
    %v8299 = vxor.u32 %v8289, 2147483648
    %v8300 = vsel %vm8298, %v8299, %v8290
    %v8301 = vsel %vm8294, %v8297, %v8300
    %v8302 = vsel %vm8291, nan, %v8301
    %v8303 = vand.u32 2147483647, %v7653
    %vm8304 = vcmp.le.f32.partialorder %v8303, 0.7853982
    %vm8305 = vcmp.lt.s32.totalorder %v7653, 0
    %v8306 = vand.u32 %v7653, 2139095040
    %v8307 = vshrl.u32 %v8306, 23
    %v8308 = vsub.s32 %v8307, 127
    %v8309 = vand.u32 2147483647, %v7653
    %v8310 = vand.u32 %v8309, 8388607
    %v8311 = vor.u32 %v8310, 8388608
    %v8312 = vsub.s32 0, %v8311
    %v8313 = vadd.s32 %v8308, 1
    %vm8314 = vcmp.gt.s32.totalorder %v8313, 0
    %v8315 = vsel %vm8314, %v8313, 0
    %v8316 = vshrl.u32 %v8315, 5
    %v8317 = vand.u32 %v8315, 31
    %v8318 = vsub.s32 32, %v8317
    %v8319 = vshrl.u32 683565275, %v8318
    %v8320 = vshll.u32 683565275, %v8317
    %v8321 = vshrl.u32 2475754826, %v8318
    %v8322 = vor.u32 %v8320, %v8321
    %v8323 = vshll.u32 2475754826, %v8317
    %v8324 = vshrl.u32 2131351028, %v8318
    %v8325 = vor.u32 %v8323, %v8324
    %v8326 = vshll.u32 2131351028, %v8317
    %v8327 = vshrl.u32 2102212464, %v8318
    %v8328 = vor.u32 %v8326, %v8327
    %v8329 = vshll.u32 2102212464, %v8317
    %v8330 = vshrl.u32 920167782, %v8318
    %v8331 = vor.u32 %v8329, %v8330
    %v8332 = vshll.u32 920167782, %v8317
    %v8333 = vshrl.u32 1326507024, %v8318
    %v8334 = vor.u32 %v8332, %v8333
    %vm8335 = vcmp.lt.s32.totalorder %v8316, 1
    %vm8336 = vcmp.lt.s32.totalorder %v8316, 2
    %vm8337 = vcmp.lt.s32.totalorder %v8316, 3
    %vm8338 = vcmp.lt.s32.totalorder %v8316, 4
    %v8339 = vsel %vm8335, %v8319, %v8322
    %v8340 = vsel %vm8338, %v8328, 2102212464
    %v8341 = vsel %vm8337, %v8325, %v8340
    %v8342 = vsel %vm8336, %v8339, %v8341
    %v8343 = vsel %vm8335, %v8322, %v8325
    %v8344 = vsel %vm8338, %v8331, 920167782
    %v8345 = vsel %vm8337, %v8328, %v8344
    %v8346 = vsel %vm8336, %v8343, %v8345
    %v8347 = vsel %vm8335, %v8325, %v8328
    %v8348 = vsel %vm8338, %v8334, 1326507024
    %v8349 = vsel %vm8337, %v8331, %v8348
    %v8350 = vsel %vm8336, %v8347, %v8349
    %v8351 = vshll.u32 %v8311, 8
    %v8352 = vmul.u32.u64.compose %v8351, %v8350
    %v8353 = vextract.low.u32 %v8352
    %v8354 = vextract.high.u32 %v8352
    %v8355 = vmul.u32.u64.compose %v8351, %v8346
    %v8356 = vextract.low.u32 %v8355
    %v8357 = vextract.high.u32 %v8355
    %v8358 = vmul.u32 %v8351, %v8342
    %v8359 = vadd.s32 %v8354, %v8356
    %vm8360 = vc.u32 %v8354, %v8356
    %v8361 = vadd.s32 %v8357, 1
    %v8362 = vsel %vm8360, %v8361, %v8357
    %v8363 = vadd.s32 %v8358, %v8362
    %v8364 = vadd.s32 %v8363, 536870912
    %v8365 = vshrl.u32 %v8364, 30
    %v8366 = vshll.u32 %v8365, 30
    %v8367 = vsub.s32 %v8363, %v8366
    %vm8368 = vcmp.lt.s32.totalorder %v8367, 0
    %v8369 = vsub.s32 0, %v8367
    %v8370 = vsel %vm8368, %v8369, %v8367
    %v8371 = vclz %v8370
    %v8372 = vsub.s32 %v8371, 2
    %vm8373 = vcmp.gt.s32.totalorder 0, %v8372
    %v8374 = vsel %vm8373, 0, %v8372
    %v8375 = vsub.s32 32, %v8374
    %v8376 = vshll.u32 %v8367, %v8374
    %v8377 = vshrl.u32 %v8359, %v8375
    %v8378 = vor.u32 %v8376, %v8377
    %v8379 = vsub.s32 4294967266, %v8374
    %v8380 = vadd.s32 %v8379, 127
    %v8381 = vshll.u32 %v8380, 23
    %v8382 = vor.u32 4788187, %v8381
    %v8383 = vand.u32 2147483647, %v8382
    %v8385 = vcvt.s32.f32 %v8378
    %v8386 = vmul.f32 %v8385, %v8383
    %v8387 = vxor.u32 %v8386, 2147483648
    %v8388 = vsel %vm8305, %v8387, %v8386
    %v8389 = vsub.s32 4, %v8365
    %v8390 = vsel %vm8305, %v8389, %v8365
    %v8391 = vsel %vm8304, %v7653, %v8388
    %v8392 = vsel %vm8304, 0, %v8390
    %v8393 = vcosq.f32.pop %v8391
    %v8394 = vsinq.f32.pop %v8391
    %vm8395 = vweird.f32 %v7653
    %v8396 = vadd.s32 %v8392, 3
    %v8397 = vand.u32 %v8396, 3
    %vm8398 = vcmp.lt.s32.totalorder %v8397, 2
    %vm8399 = vcmp.eq.s32.totalorder %v8397, 0
    %v8400 = vxor.u32 %v8394, 2147483648
    %v8401 = vsel %vm8399, %v8393, %v8400
    %vm8402 = vcmp.eq.s32.totalorder %v8397, 2
    %v8403 = vxor.u32 %v8393, 2147483648
    %v8404 = vsel %vm8402, %v8403, %v8394
    %v8405 = vsel %vm8398, %v8401, %v8404
    %v8406 = vsel %vm8395, nan, %v8405
    %v8407 = vand.u32 2147483647, %v7654
    %vm8408 = vcmp.le.f32.partialorder %v8407, 0.7853982
    %vm8409 = vcmp.lt.s32.totalorder %v7654, 0
    %v8410 = vand.u32 %v7654, 2139095040
    %v8411 = vshrl.u32 %v8410, 23
    %v8412 = vsub.s32 %v8411, 127
    %v8413 = vand.u32 2147483647, %v7654
    %v8414 = vand.u32 %v8413, 8388607
    %v8415 = vor.u32 %v8414, 8388608
    %v8416 = vsub.s32 0, %v8415
    %v8417 = vadd.s32 %v8412, 1
    %vm8418 = vcmp.gt.s32.totalorder %v8417, 0
    %v8419 = vsel %vm8418, %v8417, 0
    %v8420 = vshrl.u32 %v8419, 5
    %v8421 = vand.u32 %v8419, 31
    %v8422 = vsub.s32 32, %v8421
    %v8423 = vshrl.u32 683565275, %v8422
    %v8424 = vshll.u32 683565275, %v8421
    %v8425 = vshrl.u32 2475754826, %v8422
    %v8426 = vor.u32 %v8424, %v8425
    %v8427 = vshll.u32 2475754826, %v8421
    %v8428 = vshrl.u32 2131351028, %v8422
    %v8429 = vor.u32 %v8427, %v8428
    %v8430 = vshll.u32 2131351028, %v8421
    %v8431 = vshrl.u32 2102212464, %v8422
    %v8432 = vor.u32 %v8430, %v8431
    %v8433 = vshll.u32 2102212464, %v8421
    %v8434 = vshrl.u32 920167782, %v8422
    %v8435 = vor.u32 %v8433, %v8434
    %v8436 = vshll.u32 920167782, %v8421
    %v8437 = vshrl.u32 1326507024, %v8422
    %v8438 = vor.u32 %v8436, %v8437
    %vm8439 = vcmp.lt.s32.totalorder %v8420, 1
    %vm8440 = vcmp.lt.s32.totalorder %v8420, 2
    %vm8441 = vcmp.lt.s32.totalorder %v8420, 3
    %vm8442 = vcmp.lt.s32.totalorder %v8420, 4
    %v8443 = vsel %vm8439, %v8423, %v8426
    %v8444 = vsel %vm8442, %v8432, 2102212464
    %v8445 = vsel %vm8441, %v8429, %v8444
    %v8446 = vsel %vm8440, %v8443, %v8445
    %v8447 = vsel %vm8439, %v8426, %v8429
    %v8448 = vsel %vm8442, %v8435, 920167782
    %v8449 = vsel %vm8441, %v8432, %v8448
    %v8450 = vsel %vm8440, %v8447, %v8449
    %v8451 = vsel %vm8439, %v8429, %v8432
    %v8452 = vsel %vm8442, %v8438, 1326507024
    %v8453 = vsel %vm8441, %v8435, %v8452
    %v8454 = vsel %vm8440, %v8451, %v8453
    %v8455 = vshll.u32 %v8415, 8
    %v8456 = vmul.u32.u64.compose %v8455, %v8454
    %v8457 = vextract.low.u32 %v8456
    %v8458 = vextract.high.u32 %v8456
    %v8459 = vmul.u32.u64.compose %v8455, %v8450
    %v8460 = vextract.low.u32 %v8459
    %v8461 = vextract.high.u32 %v8459
    %v8462 = vmul.u32 %v8455, %v8446
    %v8463 = vadd.s32 %v8458, %v8460
    %vm8464 = vc.u32 %v8458, %v8460
    %v8465 = vadd.s32 %v8461, 1
    %v8466 = vsel %vm8464, %v8465, %v8461
    %v8467 = vadd.s32 %v8462, %v8466
    %v8468 = vadd.s32 %v8467, 536870912
    %v8469 = vshrl.u32 %v8468, 30
    %v8470 = vshll.u32 %v8469, 30
    %v8471 = vsub.s32 %v8467, %v8470
    %vm8472 = vcmp.lt.s32.totalorder %v8471, 0
    %v8473 = vsub.s32 0, %v8471
    %v8474 = vsel %vm8472, %v8473, %v8471
    %v8475 = vclz %v8474
    %v8476 = vsub.s32 %v8475, 2
    %vm8477 = vcmp.gt.s32.totalorder 0, %v8476
    %v8478 = vsel %vm8477, 0, %v8476
    %v8479 = vsub.s32 32, %v8478
    %v8480 = vshll.u32 %v8471, %v8478
    %v8481 = vshrl.u32 %v8463, %v8479
    %v8482 = vor.u32 %v8480, %v8481
    %v8483 = vsub.s32 4294967266, %v8478
    %v8484 = vadd.s32 %v8483, 127
    %v8485 = vshll.u32 %v8484, 23
    %v8486 = vor.u32 4788187, %v8485
    %v8487 = vand.u32 2147483647, %v8486
    %v8489 = vcvt.s32.f32 %v8482
    %v8490 = vmul.f32 %v8489, %v8487
    %v8491 = vxor.u32 %v8490, 2147483648
    %v8492 = vsel %vm8409, %v8491, %v8490
    %v8493 = vsub.s32 4, %v8469
    %v8494 = vsel %vm8409, %v8493, %v8469
    %v8495 = vsel %vm8408, %v7654, %v8492
    %v8496 = vsel %vm8408, 0, %v8494
    %v8497 = vcosq.f32.pop %v8495
    %v8498 = vsinq.f32.pop %v8495
    %vm8499 = vweird.f32 %v7654
    %v8500 = vadd.s32 %v8496, 3
    %v8501 = vand.u32 %v8500, 3
    %vm8502 = vcmp.lt.s32.totalorder %v8501, 2
    %vm8503 = vcmp.eq.s32.totalorder %v8501, 0
    %v8504 = vxor.u32 %v8498, 2147483648
    %v8505 = vsel %vm8503, %v8497, %v8504
    %vm8506 = vcmp.eq.s32.totalorder %v8501, 2
    %v8507 = vxor.u32 %v8497, 2147483648
    %v8508 = vsel %vm8506, %v8507, %v8498
    %v8509 = vsel %vm8502, %v8505, %v8508
    %v8510 = vsel %vm8499, nan, %v8509
    %v8511 = vand.u32 2147483647, %v7655
    %vm8512 = vcmp.le.f32.partialorder %v8511, 0.7853982
    %vm8513 = vcmp.lt.s32.totalorder %v7655, 0
    %v8514 = vand.u32 %v7655, 2139095040
    %v8515 = vshrl.u32 %v8514, 23
    %v8516 = vsub.s32 %v8515, 127
    %v8517 = vand.u32 2147483647, %v7655
    %v8518 = vand.u32 %v8517, 8388607
    %v8519 = vor.u32 %v8518, 8388608
    %v8520 = vsub.s32 0, %v8519
    %v8521 = vadd.s32 %v8516, 1
    %vm8522 = vcmp.gt.s32.totalorder %v8521, 0
    %v8523 = vsel %vm8522, %v8521, 0
    %v8524 = vshrl.u32 %v8523, 5
    %v8525 = vand.u32 %v8523, 31
    %v8526 = vsub.s32 32, %v8525
    %v8527 = vshrl.u32 683565275, %v8526
    %v8528 = vshll.u32 683565275, %v8525
    %v8529 = vshrl.u32 2475754826, %v8526
    %v8530 = vor.u32 %v8528, %v8529
    %v8531 = vshll.u32 2475754826, %v8525
    %v8532 = vshrl.u32 2131351028, %v8526
    %v8533 = vor.u32 %v8531, %v8532
    %v8534 = vshll.u32 2131351028, %v8525
    %v8535 = vshrl.u32 2102212464, %v8526
    %v8536 = vor.u32 %v8534, %v8535
    %v8537 = vshll.u32 2102212464, %v8525
    %v8538 = vshrl.u32 920167782, %v8526
    %v8539 = vor.u32 %v8537, %v8538
    %v8540 = vshll.u32 920167782, %v8525
    %v8541 = vshrl.u32 1326507024, %v8526
    %v8542 = vor.u32 %v8540, %v8541
    %vm8543 = vcmp.lt.s32.totalorder %v8524, 1
    %vm8544 = vcmp.lt.s32.totalorder %v8524, 2
    %vm8545 = vcmp.lt.s32.totalorder %v8524, 3
    %vm8546 = vcmp.lt.s32.totalorder %v8524, 4
    %v8547 = vsel %vm8543, %v8527, %v8530
    %v8548 = vsel %vm8546, %v8536, 2102212464
    %v8549 = vsel %vm8545, %v8533, %v8548
    %v8550 = vsel %vm8544, %v8547, %v8549
    %v8551 = vsel %vm8543, %v8530, %v8533
    %v8552 = vsel %vm8546, %v8539, 920167782
    %v8553 = vsel %vm8545, %v8536, %v8552
    %v8554 = vsel %vm8544, %v8551, %v8553
    %v8555 = vsel %vm8543, %v8533, %v8536
    %v8556 = vsel %vm8546, %v8542, 1326507024
    %v8557 = vsel %vm8545, %v8539, %v8556
    %v8558 = vsel %vm8544, %v8555, %v8557
    %v8559 = vshll.u32 %v8519, 8
    %v8560 = vmul.u32.u64.compose %v8559, %v8558
    %v8561 = vextract.low.u32 %v8560
    %v8562 = vextract.high.u32 %v8560
    %v8563 = vmul.u32.u64.compose %v8559, %v8554
    %v8564 = vextract.low.u32 %v8563
    %v8565 = vextract.high.u32 %v8563
    %v8566 = vmul.u32 %v8559, %v8550
    %v8567 = vadd.s32 %v8562, %v8564
    %vm8568 = vc.u32 %v8562, %v8564
    %v8569 = vadd.s32 %v8565, 1
    %v8570 = vsel %vm8568, %v8569, %v8565
    %v8571 = vadd.s32 %v8566, %v8570
    %v8572 = vadd.s32 %v8571, 536870912
    %v8573 = vshrl.u32 %v8572, 30
    %v8574 = vshll.u32 %v8573, 30
    %v8575 = vsub.s32 %v8571, %v8574
    %vm8576 = vcmp.lt.s32.totalorder %v8575, 0
    %v8577 = vsub.s32 0, %v8575
    %v8578 = vsel %vm8576, %v8577, %v8575
    %v8579 = vclz %v8578
    %v8580 = vsub.s32 %v8579, 2
    %vm8581 = vcmp.gt.s32.totalorder 0, %v8580
    %v8582 = vsel %vm8581, 0, %v8580
    %v8583 = vsub.s32 32, %v8582
    %v8584 = vshll.u32 %v8575, %v8582
    %v8585 = vshrl.u32 %v8567, %v8583
    %v8586 = vor.u32 %v8584, %v8585
    %v8587 = vsub.s32 4294967266, %v8582
    %v8588 = vadd.s32 %v8587, 127
    %v8589 = vshll.u32 %v8588, 23
    %v8590 = vor.u32 4788187, %v8589
    %v8591 = vand.u32 2147483647, %v8590
    %v8593 = vcvt.s32.f32 %v8586
    %v8594 = vmul.f32 %v8593, %v8591
    %v8595 = vxor.u32 %v8594, 2147483648
    %v8596 = vsel %vm8513, %v8595, %v8594
    %v8597 = vsub.s32 4, %v8573
    %v8598 = vsel %vm8513, %v8597, %v8573
    %v8599 = vsel %vm8512, %v7655, %v8596
    %v8600 = vsel %vm8512, 0, %v8598
    %v8601 = vcosq.f32.pop %v8599
    %v8602 = vsinq.f32.pop %v8599
    %vm8603 = vweird.f32 %v7655
    %v8604 = vadd.s32 %v8600, 3
    %v8605 = vand.u32 %v8604, 3
    %vm8606 = vcmp.lt.s32.totalorder %v8605, 2
    %vm8607 = vcmp.eq.s32.totalorder %v8605, 0
    %v8608 = vxor.u32 %v8602, 2147483648
    %v8609 = vsel %vm8607, %v8601, %v8608
    %vm8610 = vcmp.eq.s32.totalorder %v8605, 2
    %v8611 = vxor.u32 %v8601, 2147483648
    %v8612 = vsel %vm8610, %v8611, %v8602
    %v8613 = vsel %vm8606, %v8609, %v8612
    %v8614 = vsel %vm8603, nan, %v8613
    %v8615 = vand.u32 2147483647, %v7656
    %vm8616 = vcmp.le.f32.partialorder %v8615, 0.7853982
    %vm8617 = vcmp.lt.s32.totalorder %v7656, 0
    %v8618 = vand.u32 %v7656, 2139095040
    %v8619 = vshrl.u32 %v8618, 23
    %v8620 = vsub.s32 %v8619, 127
    %v8621 = vand.u32 2147483647, %v7656
    %v8622 = vand.u32 %v8621, 8388607
    %v8623 = vor.u32 %v8622, 8388608
    %v8624 = vsub.s32 0, %v8623
    %v8625 = vadd.s32 %v8620, 1
    %vm8626 = vcmp.gt.s32.totalorder %v8625, 0
    %v8627 = vsel %vm8626, %v8625, 0
    %v8628 = vshrl.u32 %v8627, 5
    %v8629 = vand.u32 %v8627, 31
    %v8630 = vsub.s32 32, %v8629
    %v8631 = vshrl.u32 683565275, %v8630
    %v8632 = vshll.u32 683565275, %v8629
    %v8633 = vshrl.u32 2475754826, %v8630
    %v8634 = vor.u32 %v8632, %v8633
    %v8635 = vshll.u32 2475754826, %v8629
    %v8636 = vshrl.u32 2131351028, %v8630
    %v8637 = vor.u32 %v8635, %v8636
    %v8638 = vshll.u32 2131351028, %v8629
    %v8639 = vshrl.u32 2102212464, %v8630
    %v8640 = vor.u32 %v8638, %v8639
    %v8641 = vshll.u32 2102212464, %v8629
    %v8642 = vshrl.u32 920167782, %v8630
    %v8643 = vor.u32 %v8641, %v8642
    %v8644 = vshll.u32 920167782, %v8629
    %v8645 = vshrl.u32 1326507024, %v8630
    %v8646 = vor.u32 %v8644, %v8645
    %vm8647 = vcmp.lt.s32.totalorder %v8628, 1
    %vm8648 = vcmp.lt.s32.totalorder %v8628, 2
    %vm8649 = vcmp.lt.s32.totalorder %v8628, 3
    %vm8650 = vcmp.lt.s32.totalorder %v8628, 4
    %v8651 = vsel %vm8647, %v8631, %v8634
    %v8652 = vsel %vm8650, %v8640, 2102212464
    %v8653 = vsel %vm8649, %v8637, %v8652
    %v8654 = vsel %vm8648, %v8651, %v8653
    %v8655 = vsel %vm8647, %v8634, %v8637
    %v8656 = vsel %vm8650, %v8643, 920167782
    %v8657 = vsel %vm8649, %v8640, %v8656
    %v8658 = vsel %vm8648, %v8655, %v8657
    %v8659 = vsel %vm8647, %v8637, %v8640
    %v8660 = vsel %vm8650, %v8646, 1326507024
    %v8661 = vsel %vm8649, %v8643, %v8660
    %v8662 = vsel %vm8648, %v8659, %v8661
    %v8663 = vshll.u32 %v8623, 8
    %v8664 = vmul.u32.u64.compose %v8663, %v8662
    %v8665 = vextract.low.u32 %v8664
    %v8666 = vextract.high.u32 %v8664
    %v8667 = vmul.u32.u64.compose %v8663, %v8658
    %v8668 = vextract.low.u32 %v8667
    %v8669 = vextract.high.u32 %v8667
    %v8670 = vmul.u32 %v8663, %v8654
    %v8671 = vadd.s32 %v8666, %v8668
    %vm8672 = vc.u32 %v8666, %v8668
    %v8673 = vadd.s32 %v8669, 1
    %v8674 = vsel %vm8672, %v8673, %v8669
    %v8675 = vadd.s32 %v8670, %v8674
    %v8676 = vadd.s32 %v8675, 536870912
    %v8677 = vshrl.u32 %v8676, 30
    %v8678 = vshll.u32 %v8677, 30
    %v8679 = vsub.s32 %v8675, %v8678
    %vm8680 = vcmp.lt.s32.totalorder %v8679, 0
    %v8681 = vsub.s32 0, %v8679
    %v8682 = vsel %vm8680, %v8681, %v8679
    %v8683 = vclz %v8682
    %v8684 = vsub.s32 %v8683, 2
    %vm8685 = vcmp.gt.s32.totalorder 0, %v8684
    %v8686 = vsel %vm8685, 0, %v8684
    %v8687 = vsub.s32 32, %v8686
    %v8688 = vshll.u32 %v8679, %v8686
    %v8689 = vshrl.u32 %v8671, %v8687
    %v8690 = vor.u32 %v8688, %v8689
    %v8691 = vsub.s32 4294967266, %v8686
    %v8692 = vadd.s32 %v8691, 127
    %v8693 = vshll.u32 %v8692, 23
    %v8694 = vor.u32 4788187, %v8693
    %v8695 = vand.u32 2147483647, %v8694
    %v8697 = vcvt.s32.f32 %v8690
    %v8698 = vmul.f32 %v8697, %v8695
    %v8699 = vxor.u32 %v8698, 2147483648
    %v8700 = vsel %vm8617, %v8699, %v8698
    %v8701 = vsub.s32 4, %v8677
    %v8702 = vsel %vm8617, %v8701, %v8677
    %v8703 = vsel %vm8616, %v7656, %v8700
    %v8704 = vsel %vm8616, 0, %v8702
    %v8705 = vcosq.f32.pop %v8703
    %v8706 = vsinq.f32.pop %v8703
    %vm8707 = vweird.f32 %v7656
    %v8708 = vadd.s32 %v8704, 3
    %v8709 = vand.u32 %v8708, 3
    %vm8710 = vcmp.lt.s32.totalorder %v8709, 2
    %vm8711 = vcmp.eq.s32.totalorder %v8709, 0
    %v8712 = vxor.u32 %v8706, 2147483648
    %v8713 = vsel %vm8711, %v8705, %v8712
    %vm8714 = vcmp.eq.s32.totalorder %v8709, 2
    %v8715 = vxor.u32 %v8705, 2147483648
    %v8716 = vsel %vm8714, %v8715, %v8706
    %v8717 = vsel %vm8710, %v8713, %v8716
    %v8718 = vsel %vm8707, nan, %v8717
    %v8719 = vand.u32 2147483647, %v7657
    %vm8720 = vcmp.le.f32.partialorder %v8719, 0.7853982
    %vm8721 = vcmp.lt.s32.totalorder %v7657, 0
    %v8722 = vand.u32 %v7657, 2139095040
    %v8723 = vshrl.u32 %v8722, 23
    %v8724 = vsub.s32 %v8723, 127
    %v8725 = vand.u32 2147483647, %v7657
    %v8726 = vand.u32 %v8725, 8388607
    %v8727 = vor.u32 %v8726, 8388608
    %v8728 = vsub.s32 0, %v8727
    %v8729 = vadd.s32 %v8724, 1
    %vm8730 = vcmp.gt.s32.totalorder %v8729, 0
    %v8731 = vsel %vm8730, %v8729, 0
    %v8732 = vshrl.u32 %v8731, 5
    %v8733 = vand.u32 %v8731, 31
    %v8734 = vsub.s32 32, %v8733
    %v8735 = vshrl.u32 683565275, %v8734
    %v8736 = vshll.u32 683565275, %v8733
    %v8737 = vshrl.u32 2475754826, %v8734
    %v8738 = vor.u32 %v8736, %v8737
    %v8739 = vshll.u32 2475754826, %v8733
    %v8740 = vshrl.u32 2131351028, %v8734
    %v8741 = vor.u32 %v8739, %v8740
    %v8742 = vshll.u32 2131351028, %v8733
    %v8743 = vshrl.u32 2102212464, %v8734
    %v8744 = vor.u32 %v8742, %v8743
    %v8745 = vshll.u32 2102212464, %v8733
    %v8746 = vshrl.u32 920167782, %v8734
    %v8747 = vor.u32 %v8745, %v8746
    %v8748 = vshll.u32 920167782, %v8733
    %v8749 = vshrl.u32 1326507024, %v8734
    %v8750 = vor.u32 %v8748, %v8749
    %vm8751 = vcmp.lt.s32.totalorder %v8732, 1
    %vm8752 = vcmp.lt.s32.totalorder %v8732, 2
    %vm8753 = vcmp.lt.s32.totalorder %v8732, 3
    %vm8754 = vcmp.lt.s32.totalorder %v8732, 4
    %v8755 = vsel %vm8751, %v8735, %v8738
    %v8756 = vsel %vm8754, %v8744, 2102212464
    %v8757 = vsel %vm8753, %v8741, %v8756
    %v8758 = vsel %vm8752, %v8755, %v8757
    %v8759 = vsel %vm8751, %v8738, %v8741
    %v8760 = vsel %vm8754, %v8747, 920167782
    %v8761 = vsel %vm8753, %v8744, %v8760
    %v8762 = vsel %vm8752, %v8759, %v8761
    %v8763 = vsel %vm8751, %v8741, %v8744
    %v8764 = vsel %vm8754, %v8750, 1326507024
    %v8765 = vsel %vm8753, %v8747, %v8764
    %v8766 = vsel %vm8752, %v8763, %v8765
    %v8767 = vshll.u32 %v8727, 8
    %v8768 = vmul.u32.u64.compose %v8767, %v8766
    %v8769 = vextract.low.u32 %v8768
    %v8770 = vextract.high.u32 %v8768
    %v8771 = vmul.u32.u64.compose %v8767, %v8762
    %v8772 = vextract.low.u32 %v8771
    %v8773 = vextract.high.u32 %v8771
    %v8774 = vmul.u32 %v8767, %v8758
    %v8775 = vadd.s32 %v8770, %v8772
    %vm8776 = vc.u32 %v8770, %v8772
    %v8777 = vadd.s32 %v8773, 1
    %v8778 = vsel %vm8776, %v8777, %v8773
    %v8779 = vadd.s32 %v8774, %v8778
    %v8780 = vadd.s32 %v8779, 536870912
    %v8781 = vshrl.u32 %v8780, 30
    %v8782 = vshll.u32 %v8781, 30
    %v8783 = vsub.s32 %v8779, %v8782
    %vm8784 = vcmp.lt.s32.totalorder %v8783, 0
    %v8785 = vsub.s32 0, %v8783
    %v8786 = vsel %vm8784, %v8785, %v8783
    %v8787 = vclz %v8786
    %v8788 = vsub.s32 %v8787, 2
    %vm8789 = vcmp.gt.s32.totalorder 0, %v8788
    %v8790 = vsel %vm8789, 0, %v8788
    %v8791 = vsub.s32 32, %v8790
    %v8792 = vshll.u32 %v8783, %v8790
    %v8793 = vshrl.u32 %v8775, %v8791
    %v8794 = vor.u32 %v8792, %v8793
    %v8795 = vsub.s32 4294967266, %v8790
    %v8796 = vadd.s32 %v8795, 127
    %v8797 = vshll.u32 %v8796, 23
    %v8798 = vor.u32 4788187, %v8797
    %v8799 = vand.u32 2147483647, %v8798
    %v8801 = vcvt.s32.f32 %v8794
    %v8802 = vmul.f32 %v8801, %v8799
    %v8803 = vxor.u32 %v8802, 2147483648
    %v8804 = vsel %vm8721, %v8803, %v8802
    %v8805 = vsub.s32 4, %v8781
    %v8806 = vsel %vm8721, %v8805, %v8781
    %v8807 = vsel %vm8720, %v7657, %v8804
    %v8808 = vsel %vm8720, 0, %v8806
    %v8809 = vcosq.f32.pop %v8807
    %v8810 = vsinq.f32.pop %v8807
    %vm8811 = vweird.f32 %v7657
    %v8812 = vadd.s32 %v8808, 3
    %v8813 = vand.u32 %v8812, 3
    %vm8814 = vcmp.lt.s32.totalorder %v8813, 2
    %vm8815 = vcmp.eq.s32.totalorder %v8813, 0
    %v8816 = vxor.u32 %v8810, 2147483648
    %v8817 = vsel %vm8815, %v8809, %v8816
    %vm8818 = vcmp.eq.s32.totalorder %v8813, 2
    %v8819 = vxor.u32 %v8809, 2147483648
    %v8820 = vsel %vm8818, %v8819, %v8810
    %v8821 = vsel %vm8814, %v8817, %v8820
    %v8822 = vsel %vm8811, nan, %v8821
    %v8823 = vand.u32 2147483647, %v7658
    %vm8824 = vcmp.le.f32.partialorder %v8823, 0.7853982
    %vm8825 = vcmp.lt.s32.totalorder %v7658, 0
    %v8826 = vand.u32 %v7658, 2139095040
    %v8827 = vshrl.u32 %v8826, 23
    %v8828 = vsub.s32 %v8827, 127
    %v8829 = vand.u32 2147483647, %v7658
    %v8830 = vand.u32 %v8829, 8388607
    %v8831 = vor.u32 %v8830, 8388608
    %v8832 = vsub.s32 0, %v8831
    %v8833 = vadd.s32 %v8828, 1
    %vm8834 = vcmp.gt.s32.totalorder %v8833, 0
    %v8835 = vsel %vm8834, %v8833, 0
    %v8836 = vshrl.u32 %v8835, 5
    %v8837 = vand.u32 %v8835, 31
    %v8838 = vsub.s32 32, %v8837
    %v8839 = vshrl.u32 683565275, %v8838
    %v8840 = vshll.u32 683565275, %v8837
    %v8841 = vshrl.u32 2475754826, %v8838
    %v8842 = vor.u32 %v8840, %v8841
    %v8843 = vshll.u32 2475754826, %v8837
    %v8844 = vshrl.u32 2131351028, %v8838
    %v8845 = vor.u32 %v8843, %v8844
    %v8846 = vshll.u32 2131351028, %v8837
    %v8847 = vshrl.u32 2102212464, %v8838
    %v8848 = vor.u32 %v8846, %v8847
    %v8849 = vshll.u32 2102212464, %v8837
    %v8850 = vshrl.u32 920167782, %v8838
    %v8851 = vor.u32 %v8849, %v8850
    %v8852 = vshll.u32 920167782, %v8837
    %v8853 = vshrl.u32 1326507024, %v8838
    %v8854 = vor.u32 %v8852, %v8853
    %vm8855 = vcmp.lt.s32.totalorder %v8836, 1
    %vm8856 = vcmp.lt.s32.totalorder %v8836, 2
    %vm8857 = vcmp.lt.s32.totalorder %v8836, 3
    %vm8858 = vcmp.lt.s32.totalorder %v8836, 4
    %v8859 = vsel %vm8855, %v8839, %v8842
    %v8860 = vsel %vm8858, %v8848, 2102212464
    %v8861 = vsel %vm8857, %v8845, %v8860
    %v8862 = vsel %vm8856, %v8859, %v8861
    %v8863 = vsel %vm8855, %v8842, %v8845
    %v8864 = vsel %vm8858, %v8851, 920167782
    %v8865 = vsel %vm8857, %v8848, %v8864
    %v8866 = vsel %vm8856, %v8863, %v8865
    %v8867 = vsel %vm8855, %v8845, %v8848
    %v8868 = vsel %vm8858, %v8854, 1326507024
    %v8869 = vsel %vm8857, %v8851, %v8868
    %v8870 = vsel %vm8856, %v8867, %v8869
    %v8871 = vshll.u32 %v8831, 8
    %v8872 = vmul.u32.u64.compose %v8871, %v8870
    %v8873 = vextract.low.u32 %v8872
    %v8874 = vextract.high.u32 %v8872
    %v8875 = vmul.u32.u64.compose %v8871, %v8866
    %v8876 = vextract.low.u32 %v8875
    %v8877 = vextract.high.u32 %v8875
    %v8878 = vmul.u32 %v8871, %v8862
    %v8879 = vadd.s32 %v8874, %v8876
    %vm8880 = vc.u32 %v8874, %v8876
    %v8881 = vadd.s32 %v8877, 1
    %v8882 = vsel %vm8880, %v8881, %v8877
    %v8883 = vadd.s32 %v8878, %v8882
    %v8884 = vadd.s32 %v8883, 536870912
    %v8885 = vshrl.u32 %v8884, 30
    %v8886 = vshll.u32 %v8885, 30
    %v8887 = vsub.s32 %v8883, %v8886
    %vm8888 = vcmp.lt.s32.totalorder %v8887, 0
    %v8889 = vsub.s32 0, %v8887
    %v8890 = vsel %vm8888, %v8889, %v8887
    %v8891 = vclz %v8890
    %v8892 = vsub.s32 %v8891, 2
    %vm8893 = vcmp.gt.s32.totalorder 0, %v8892
    %v8894 = vsel %vm8893, 0, %v8892
    %v8895 = vsub.s32 32, %v8894
    %v8896 = vshll.u32 %v8887, %v8894
    %v8897 = vshrl.u32 %v8879, %v8895
    %v8898 = vor.u32 %v8896, %v8897
    %v8899 = vsub.s32 4294967266, %v8894
    %v8900 = vadd.s32 %v8899, 127
    %v8901 = vshll.u32 %v8900, 23
    %v8902 = vor.u32 4788187, %v8901
    %v8903 = vand.u32 2147483647, %v8902
    %v8905 = vcvt.s32.f32 %v8898
    %v8906 = vmul.f32 %v8905, %v8903
    %v8907 = vxor.u32 %v8906, 2147483648
    %v8908 = vsel %vm8825, %v8907, %v8906
    %v8909 = vsub.s32 4, %v8885
    %v8910 = vsel %vm8825, %v8909, %v8885
    %v8911 = vsel %vm8824, %v7658, %v8908
    %v8912 = vsel %vm8824, 0, %v8910
    %v8913 = vcosq.f32.pop %v8911
    %v8914 = vsinq.f32.pop %v8911
    %vm8915 = vweird.f32 %v7658
    %v8916 = vadd.s32 %v8912, 3
    %v8917 = vand.u32 %v8916, 3
    %vm8918 = vcmp.lt.s32.totalorder %v8917, 2
    %vm8919 = vcmp.eq.s32.totalorder %v8917, 0
    %v8920 = vxor.u32 %v8914, 2147483648
    %v8921 = vsel %vm8919, %v8913, %v8920
    %vm8922 = vcmp.eq.s32.totalorder %v8917, 2
    %v8923 = vxor.u32 %v8913, 2147483648
    %v8924 = vsel %vm8922, %v8923, %v8914
    %v8925 = vsel %vm8918, %v8921, %v8924
    %v8926 = vsel %vm8915, nan, %v8925
    %v8927 = vand.u32 2147483647, %v7659
    %vm8928 = vcmp.le.f32.partialorder %v8927, 0.7853982
    %vm8929 = vcmp.lt.s32.totalorder %v7659, 0
    %v8930 = vand.u32 %v7659, 2139095040
    %v8931 = vshrl.u32 %v8930, 23
    %v8932 = vsub.s32 %v8931, 127
    %v8933 = vand.u32 2147483647, %v7659
    %v8934 = vand.u32 %v8933, 8388607
    %v8935 = vor.u32 %v8934, 8388608
    %v8936 = vsub.s32 0, %v8935
    %v8937 = vadd.s32 %v8932, 1
    %vm8938 = vcmp.gt.s32.totalorder %v8937, 0
    %v8939 = vsel %vm8938, %v8937, 0
    %v8940 = vshrl.u32 %v8939, 5
    %v8941 = vand.u32 %v8939, 31
    %v8942 = vsub.s32 32, %v8941
    %v8943 = vshrl.u32 683565275, %v8942
    %v8944 = vshll.u32 683565275, %v8941
    %v8945 = vshrl.u32 2475754826, %v8942
    %v8946 = vor.u32 %v8944, %v8945
    %v8947 = vshll.u32 2475754826, %v8941
    %v8948 = vshrl.u32 2131351028, %v8942
    %v8949 = vor.u32 %v8947, %v8948
    %v8950 = vshll.u32 2131351028, %v8941
    %v8951 = vshrl.u32 2102212464, %v8942
    %v8952 = vor.u32 %v8950, %v8951
    %v8953 = vshll.u32 2102212464, %v8941
    %v8954 = vshrl.u32 920167782, %v8942
    %v8955 = vor.u32 %v8953, %v8954
    %v8956 = vshll.u32 920167782, %v8941
    %v8957 = vshrl.u32 1326507024, %v8942
    %v8958 = vor.u32 %v8956, %v8957
    %vm8959 = vcmp.lt.s32.totalorder %v8940, 1
    %vm8960 = vcmp.lt.s32.totalorder %v8940, 2
    %vm8961 = vcmp.lt.s32.totalorder %v8940, 3
    %vm8962 = vcmp.lt.s32.totalorder %v8940, 4
    %v8963 = vsel %vm8959, %v8943, %v8946
    %v8964 = vsel %vm8962, %v8952, 2102212464
    %v8965 = vsel %vm8961, %v8949, %v8964
    %v8966 = vsel %vm8960, %v8963, %v8965
    %v8967 = vsel %vm8959, %v8946, %v8949
    %v8968 = vsel %vm8962, %v8955, 920167782
    %v8969 = vsel %vm8961, %v8952, %v8968
    %v8970 = vsel %vm8960, %v8967, %v8969
    %v8971 = vsel %vm8959, %v8949, %v8952
    %v8972 = vsel %vm8962, %v8958, 1326507024
    %v8973 = vsel %vm8961, %v8955, %v8972
    %v8974 = vsel %vm8960, %v8971, %v8973
    %v8975 = vshll.u32 %v8935, 8
    %v8976 = vmul.u32.u64.compose %v8975, %v8974
    %v8977 = vextract.low.u32 %v8976
    %v8978 = vextract.high.u32 %v8976
    %v8979 = vmul.u32.u64.compose %v8975, %v8970
    %v8980 = vextract.low.u32 %v8979
    %v8981 = vextract.high.u32 %v8979
    %v8982 = vmul.u32 %v8975, %v8966
    %v8983 = vadd.s32 %v8978, %v8980
    %vm8984 = vc.u32 %v8978, %v8980
    %v8985 = vadd.s32 %v8981, 1
    %v8986 = vsel %vm8984, %v8985, %v8981
    %v8987 = vadd.s32 %v8982, %v8986
    %v8988 = vadd.s32 %v8987, 536870912
    %v8989 = vshrl.u32 %v8988, 30
    %v8990 = vshll.u32 %v8989, 30
    %v8991 = vsub.s32 %v8987, %v8990
    %vm8992 = vcmp.lt.s32.totalorder %v8991, 0
    %v8993 = vsub.s32 0, %v8991
    %v8994 = vsel %vm8992, %v8993, %v8991
    %v8995 = vclz %v8994
    %v8996 = vsub.s32 %v8995, 2
    %vm8997 = vcmp.gt.s32.totalorder 0, %v8996
    %v8998 = vsel %vm8997, 0, %v8996
    %v8999 = vsub.s32 32, %v8998
    %v9000 = vshll.u32 %v8991, %v8998
    %v9001 = vshrl.u32 %v8983, %v8999
    %v9002 = vor.u32 %v9000, %v9001
    %v9003 = vsub.s32 4294967266, %v8998
    %v9004 = vadd.s32 %v9003, 127
    %v9005 = vshll.u32 %v9004, 23
    %v9006 = vor.u32 4788187, %v9005
    %v9007 = vand.u32 2147483647, %v9006
    %v9009 = vcvt.s32.f32 %v9002
    %v9010 = vmul.f32 %v9009, %v9007
    %v9011 = vxor.u32 %v9010, 2147483648
    %v9012 = vsel %vm8929, %v9011, %v9010
    %v9013 = vsub.s32 4, %v8989
    %v9014 = vsel %vm8929, %v9013, %v8989
    %v9015 = vsel %vm8928, %v7659, %v9012
    %v9016 = vsel %vm8928, 0, %v9014
    %v9017 = vcosq.f32.pop %v9015
    %v9018 = vsinq.f32.pop %v9015
    %vm9019 = vweird.f32 %v7659
    %v9020 = vadd.s32 %v9016, 3
    %v9021 = vand.u32 %v9020, 3
    %vm9022 = vcmp.lt.s32.totalorder %v9021, 2
    %vm9023 = vcmp.eq.s32.totalorder %v9021, 0
    %v9024 = vxor.u32 %v9018, 2147483648
    %v9025 = vsel %vm9023, %v9017, %v9024
    %vm9026 = vcmp.eq.s32.totalorder %v9021, 2
    %v9027 = vxor.u32 %v9017, 2147483648
    %v9028 = vsel %vm9026, %v9027, %v9018
    %v9029 = vsel %vm9022, %v9025, %v9028
    %v9030 = vsel %vm9019, nan, %v9029
    %v9031 = vand.u32 2147483647, %v7660
    %vm9032 = vcmp.le.f32.partialorder %v9031, 0.7853982
    %vm9033 = vcmp.lt.s32.totalorder %v7660, 0
    %v9034 = vand.u32 %v7660, 2139095040
    %v9035 = vshrl.u32 %v9034, 23
    %v9036 = vsub.s32 %v9035, 127
    %v9037 = vand.u32 2147483647, %v7660
    %v9038 = vand.u32 %v9037, 8388607
    %v9039 = vor.u32 %v9038, 8388608
    %v9040 = vsub.s32 0, %v9039
    %v9041 = vadd.s32 %v9036, 1
    %vm9042 = vcmp.gt.s32.totalorder %v9041, 0
    %v9043 = vsel %vm9042, %v9041, 0
    %v9044 = vshrl.u32 %v9043, 5
    %v9045 = vand.u32 %v9043, 31
    %v9046 = vsub.s32 32, %v9045
    %v9047 = vshrl.u32 683565275, %v9046
    %v9048 = vshll.u32 683565275, %v9045
    %v9049 = vshrl.u32 2475754826, %v9046
    %v9050 = vor.u32 %v9048, %v9049
    %v9051 = vshll.u32 2475754826, %v9045
    %v9052 = vshrl.u32 2131351028, %v9046
    %v9053 = vor.u32 %v9051, %v9052
    %v9054 = vshll.u32 2131351028, %v9045
    %v9055 = vshrl.u32 2102212464, %v9046
    %v9056 = vor.u32 %v9054, %v9055
    %v9057 = vshll.u32 2102212464, %v9045
    %v9058 = vshrl.u32 920167782, %v9046
    %v9059 = vor.u32 %v9057, %v9058
    %v9060 = vshll.u32 920167782, %v9045
    %v9061 = vshrl.u32 1326507024, %v9046
    %v9062 = vor.u32 %v9060, %v9061
    %vm9063 = vcmp.lt.s32.totalorder %v9044, 1
    %vm9064 = vcmp.lt.s32.totalorder %v9044, 2
    %vm9065 = vcmp.lt.s32.totalorder %v9044, 3
    %vm9066 = vcmp.lt.s32.totalorder %v9044, 4
    %v9067 = vsel %vm9063, %v9047, %v9050
    %v9068 = vsel %vm9066, %v9056, 2102212464
    %v9069 = vsel %vm9065, %v9053, %v9068
    %v9070 = vsel %vm9064, %v9067, %v9069
    %v9071 = vsel %vm9063, %v9050, %v9053
    %v9072 = vsel %vm9066, %v9059, 920167782
    %v9073 = vsel %vm9065, %v9056, %v9072
    %v9074 = vsel %vm9064, %v9071, %v9073
    %v9075 = vsel %vm9063, %v9053, %v9056
    %v9076 = vsel %vm9066, %v9062, 1326507024
    %v9077 = vsel %vm9065, %v9059, %v9076
    %v9078 = vsel %vm9064, %v9075, %v9077
    %v9079 = vshll.u32 %v9039, 8
    %v9080 = vmul.u32.u64.compose %v9079, %v9078
    %v9081 = vextract.low.u32 %v9080
    %v9082 = vextract.high.u32 %v9080
    %v9083 = vmul.u32.u64.compose %v9079, %v9074
    %v9084 = vextract.low.u32 %v9083
    %v9085 = vextract.high.u32 %v9083
    %v9086 = vmul.u32 %v9079, %v9070
    %v9087 = vadd.s32 %v9082, %v9084
    %vm9088 = vc.u32 %v9082, %v9084
    %v9089 = vadd.s32 %v9085, 1
    %v9090 = vsel %vm9088, %v9089, %v9085
    %v9091 = vadd.s32 %v9086, %v9090
    %v9092 = vadd.s32 %v9091, 536870912
    %v9093 = vshrl.u32 %v9092, 30
    %v9094 = vshll.u32 %v9093, 30
    %v9095 = vsub.s32 %v9091, %v9094
    %vm9096 = vcmp.lt.s32.totalorder %v9095, 0
    %v9097 = vsub.s32 0, %v9095
    %v9098 = vsel %vm9096, %v9097, %v9095
    %v9099 = vclz %v9098
    %v9100 = vsub.s32 %v9099, 2
    %vm9101 = vcmp.gt.s32.totalorder 0, %v9100
    %v9102 = vsel %vm9101, 0, %v9100
    %v9103 = vsub.s32 32, %v9102
    %v9104 = vshll.u32 %v9095, %v9102
    %v9105 = vshrl.u32 %v9087, %v9103
    %v9106 = vor.u32 %v9104, %v9105
    %v9107 = vsub.s32 4294967266, %v9102
    %v9108 = vadd.s32 %v9107, 127
    %v9109 = vshll.u32 %v9108, 23
    %v9110 = vor.u32 4788187, %v9109
    %v9111 = vand.u32 2147483647, %v9110
    %v9113 = vcvt.s32.f32 %v9106
    %v9114 = vmul.f32 %v9113, %v9111
    %v9115 = vxor.u32 %v9114, 2147483648
    %v9116 = vsel %vm9033, %v9115, %v9114
    %v9117 = vsub.s32 4, %v9093
    %v9118 = vsel %vm9033, %v9117, %v9093
    %v9119 = vsel %vm9032, %v7660, %v9116
    %v9120 = vsel %vm9032, 0, %v9118
    %v9121 = vcosq.f32.pop %v9119
    %v9122 = vsinq.f32.pop %v9119
    %vm9123 = vweird.f32 %v7660
    %v9124 = vadd.s32 %v9120, 3
    %v9125 = vand.u32 %v9124, 3
    %vm9126 = vcmp.lt.s32.totalorder %v9125, 2
    %vm9127 = vcmp.eq.s32.totalorder %v9125, 0
    %v9128 = vxor.u32 %v9122, 2147483648
    %v9129 = vsel %vm9127, %v9121, %v9128
    %vm9130 = vcmp.eq.s32.totalorder %v9125, 2
    %v9131 = vxor.u32 %v9121, 2147483648
    %v9132 = vsel %vm9130, %v9131, %v9122
    %v9133 = vsel %vm9126, %v9129, %v9132
    %v9134 = vsel %vm9123, nan, %v9133
    %v9135 = vand.u32 2147483647, %v7661
    %vm9136 = vcmp.le.f32.partialorder %v9135, 0.7853982
    %vm9137 = vcmp.lt.s32.totalorder %v7661, 0
    %v9138 = vand.u32 %v7661, 2139095040
    %v9139 = vshrl.u32 %v9138, 23
    %v9140 = vsub.s32 %v9139, 127
    %v9141 = vand.u32 2147483647, %v7661
    %v9142 = vand.u32 %v9141, 8388607
    %v9143 = vor.u32 %v9142, 8388608
    %v9144 = vsub.s32 0, %v9143
    %v9145 = vadd.s32 %v9140, 1
    %vm9146 = vcmp.gt.s32.totalorder %v9145, 0
    %v9147 = vsel %vm9146, %v9145, 0
    %v9148 = vshrl.u32 %v9147, 5
    %v9149 = vand.u32 %v9147, 31
    %v9150 = vsub.s32 32, %v9149
    %v9151 = vshrl.u32 683565275, %v9150
    %v9152 = vshll.u32 683565275, %v9149
    %v9153 = vshrl.u32 2475754826, %v9150
    %v9154 = vor.u32 %v9152, %v9153
    %v9155 = vshll.u32 2475754826, %v9149
    %v9156 = vshrl.u32 2131351028, %v9150
    %v9157 = vor.u32 %v9155, %v9156
    %v9158 = vshll.u32 2131351028, %v9149
    %v9159 = vshrl.u32 2102212464, %v9150
    %v9160 = vor.u32 %v9158, %v9159
    %v9161 = vshll.u32 2102212464, %v9149
    %v9162 = vshrl.u32 920167782, %v9150
    %v9163 = vor.u32 %v9161, %v9162
    %v9164 = vshll.u32 920167782, %v9149
    %v9165 = vshrl.u32 1326507024, %v9150
    %v9166 = vor.u32 %v9164, %v9165
    %vm9167 = vcmp.lt.s32.totalorder %v9148, 1
    %vm9168 = vcmp.lt.s32.totalorder %v9148, 2
    %vm9169 = vcmp.lt.s32.totalorder %v9148, 3
    %vm9170 = vcmp.lt.s32.totalorder %v9148, 4
    %v9171 = vsel %vm9167, %v9151, %v9154
    %v9172 = vsel %vm9170, %v9160, 2102212464
    %v9173 = vsel %vm9169, %v9157, %v9172
    %v9174 = vsel %vm9168, %v9171, %v9173
    %v9175 = vsel %vm9167, %v9154, %v9157
    %v9176 = vsel %vm9170, %v9163, 920167782
    %v9177 = vsel %vm9169, %v9160, %v9176
    %v9178 = vsel %vm9168, %v9175, %v9177
    %v9179 = vsel %vm9167, %v9157, %v9160
    %v9180 = vsel %vm9170, %v9166, 1326507024
    %v9181 = vsel %vm9169, %v9163, %v9180
    %v9182 = vsel %vm9168, %v9179, %v9181
    %v9183 = vshll.u32 %v9143, 8
    %v9184 = vmul.u32.u64.compose %v9183, %v9182
    %v9185 = vextract.low.u32 %v9184
    %v9186 = vextract.high.u32 %v9184
    %v9187 = vmul.u32.u64.compose %v9183, %v9178
    %v9188 = vextract.low.u32 %v9187
    %v9189 = vextract.high.u32 %v9187
    %v9190 = vmul.u32 %v9183, %v9174
    %v9191 = vadd.s32 %v9186, %v9188
    %vm9192 = vc.u32 %v9186, %v9188
    %v9193 = vadd.s32 %v9189, 1
    %v9194 = vsel %vm9192, %v9193, %v9189
    %v9195 = vadd.s32 %v9190, %v9194
    %v9196 = vadd.s32 %v9195, 536870912
    %v9197 = vshrl.u32 %v9196, 30
    %v9198 = vshll.u32 %v9197, 30
    %v9199 = vsub.s32 %v9195, %v9198
    %vm9200 = vcmp.lt.s32.totalorder %v9199, 0
    %v9201 = vsub.s32 0, %v9199
    %v9202 = vsel %vm9200, %v9201, %v9199
    %v9203 = vclz %v9202
    %v9204 = vsub.s32 %v9203, 2
    %vm9205 = vcmp.gt.s32.totalorder 0, %v9204
    %v9206 = vsel %vm9205, 0, %v9204
    %v9207 = vsub.s32 32, %v9206
    %v9208 = vshll.u32 %v9199, %v9206
    %v9209 = vshrl.u32 %v9191, %v9207
    %v9210 = vor.u32 %v9208, %v9209
    %v9211 = vsub.s32 4294967266, %v9206
    %v9212 = vadd.s32 %v9211, 127
    %v9213 = vshll.u32 %v9212, 23
    %v9214 = vor.u32 4788187, %v9213
    %v9215 = vand.u32 2147483647, %v9214
    %v9217 = vcvt.s32.f32 %v9210
    %v9218 = vmul.f32 %v9217, %v9215
    %v9219 = vxor.u32 %v9218, 2147483648
    %v9220 = vsel %vm9137, %v9219, %v9218
    %v9221 = vsub.s32 4, %v9197
    %v9222 = vsel %vm9137, %v9221, %v9197
    %v9223 = vsel %vm9136, %v7661, %v9220
    %v9224 = vsel %vm9136, 0, %v9222
    %v9225 = vcosq.f32.pop %v9223
    %v9226 = vsinq.f32.pop %v9223
    %vm9227 = vweird.f32 %v7661
    %v9228 = vadd.s32 %v9224, 3
    %v9229 = vand.u32 %v9228, 3
    %vm9230 = vcmp.lt.s32.totalorder %v9229, 2
    %vm9231 = vcmp.eq.s32.totalorder %v9229, 0
    %v9232 = vxor.u32 %v9226, 2147483648
    %v9233 = vsel %vm9231, %v9225, %v9232
    %vm9234 = vcmp.eq.s32.totalorder %v9229, 2
    %v9235 = vxor.u32 %v9225, 2147483648
    %v9236 = vsel %vm9234, %v9235, %v9226
    %v9237 = vsel %vm9230, %v9233, %v9236
    %v9238 = vsel %vm9227, nan, %v9237
    %v9239 = vand.u32 2147483647, %v7662
    %vm9240 = vcmp.le.f32.partialorder %v9239, 0.7853982
    %vm9241 = vcmp.lt.s32.totalorder %v7662, 0
    %v9242 = vand.u32 %v7662, 2139095040
    %v9243 = vshrl.u32 %v9242, 23
    %v9244 = vsub.s32 %v9243, 127
    %v9245 = vand.u32 2147483647, %v7662
    %v9246 = vand.u32 %v9245, 8388607
    %v9247 = vor.u32 %v9246, 8388608
    %v9248 = vsub.s32 0, %v9247
    %v9249 = vadd.s32 %v9244, 1
    %vm9250 = vcmp.gt.s32.totalorder %v9249, 0
    %v9251 = vsel %vm9250, %v9249, 0
    %v9252 = vshrl.u32 %v9251, 5
    %v9253 = vand.u32 %v9251, 31
    %v9254 = vsub.s32 32, %v9253
    %v9255 = vshrl.u32 683565275, %v9254
    %v9256 = vshll.u32 683565275, %v9253
    %v9257 = vshrl.u32 2475754826, %v9254
    %v9258 = vor.u32 %v9256, %v9257
    %v9259 = vshll.u32 2475754826, %v9253
    %v9260 = vshrl.u32 2131351028, %v9254
    %v9261 = vor.u32 %v9259, %v9260
    %v9262 = vshll.u32 2131351028, %v9253
    %v9263 = vshrl.u32 2102212464, %v9254
    %v9264 = vor.u32 %v9262, %v9263
    %v9265 = vshll.u32 2102212464, %v9253
    %v9266 = vshrl.u32 920167782, %v9254
    %v9267 = vor.u32 %v9265, %v9266
    %v9268 = vshll.u32 920167782, %v9253
    %v9269 = vshrl.u32 1326507024, %v9254
    %v9270 = vor.u32 %v9268, %v9269
    %vm9271 = vcmp.lt.s32.totalorder %v9252, 1
    %vm9272 = vcmp.lt.s32.totalorder %v9252, 2
    %vm9273 = vcmp.lt.s32.totalorder %v9252, 3
    %vm9274 = vcmp.lt.s32.totalorder %v9252, 4
    %v9275 = vsel %vm9271, %v9255, %v9258
    %v9276 = vsel %vm9274, %v9264, 2102212464
    %v9277 = vsel %vm9273, %v9261, %v9276
    %v9278 = vsel %vm9272, %v9275, %v9277
    %v9279 = vsel %vm9271, %v9258, %v9261
    %v9280 = vsel %vm9274, %v9267, 920167782
    %v9281 = vsel %vm9273, %v9264, %v9280
    %v9282 = vsel %vm9272, %v9279, %v9281
    %v9283 = vsel %vm9271, %v9261, %v9264
    %v9284 = vsel %vm9274, %v9270, 1326507024
    %v9285 = vsel %vm9273, %v9267, %v9284
    %v9286 = vsel %vm9272, %v9283, %v9285
    %v9287 = vshll.u32 %v9247, 8
    %v9288 = vmul.u32.u64.compose %v9287, %v9286
    %v9289 = vextract.low.u32 %v9288
    %v9290 = vextract.high.u32 %v9288
    %v9291 = vmul.u32.u64.compose %v9287, %v9282
    %v9292 = vextract.low.u32 %v9291
    %v9293 = vextract.high.u32 %v9291
    %v9294 = vmul.u32 %v9287, %v9278
    %v9295 = vadd.s32 %v9290, %v9292
    %vm9296 = vc.u32 %v9290, %v9292
    %v9297 = vadd.s32 %v9293, 1
    %v9298 = vsel %vm9296, %v9297, %v9293
    %v9299 = vadd.s32 %v9294, %v9298
    %v9300 = vadd.s32 %v9299, 536870912
    %v9301 = vshrl.u32 %v9300, 30
    %v9302 = vshll.u32 %v9301, 30
    %v9303 = vsub.s32 %v9299, %v9302
    %vm9304 = vcmp.lt.s32.totalorder %v9303, 0
    %v9305 = vsub.s32 0, %v9303
    %v9306 = vsel %vm9304, %v9305, %v9303
    %v9307 = vclz %v9306
    %v9308 = vsub.s32 %v9307, 2
    %vm9309 = vcmp.gt.s32.totalorder 0, %v9308
    %v9310 = vsel %vm9309, 0, %v9308
    %v9311 = vsub.s32 32, %v9310
    %v9312 = vshll.u32 %v9303, %v9310
    %v9313 = vshrl.u32 %v9295, %v9311
    %v9314 = vor.u32 %v9312, %v9313
    %v9315 = vsub.s32 4294967266, %v9310
    %v9316 = vadd.s32 %v9315, 127
    %v9317 = vshll.u32 %v9316, 23
    %v9318 = vor.u32 4788187, %v9317
    %v9319 = vand.u32 2147483647, %v9318
    %v9321 = vcvt.s32.f32 %v9314
    %v9322 = vmul.f32 %v9321, %v9319
    %v9323 = vxor.u32 %v9322, 2147483648
    %v9324 = vsel %vm9241, %v9323, %v9322
    %v9325 = vsub.s32 4, %v9301
    %v9326 = vsel %vm9241, %v9325, %v9301
    %v9327 = vsel %vm9240, %v7662, %v9324
    %v9328 = vsel %vm9240, 0, %v9326
    %v9329 = vcosq.f32.pop %v9327
    %v9330 = vsinq.f32.pop %v9327
    %vm9331 = vweird.f32 %v7662
    %v9332 = vadd.s32 %v9328, 3
    %v9333 = vand.u32 %v9332, 3
    %vm9334 = vcmp.lt.s32.totalorder %v9333, 2
    %vm9335 = vcmp.eq.s32.totalorder %v9333, 0
    %v9336 = vxor.u32 %v9330, 2147483648
    %v9337 = vsel %vm9335, %v9329, %v9336
    %vm9338 = vcmp.eq.s32.totalorder %v9333, 2
    %v9339 = vxor.u32 %v9329, 2147483648
    %v9340 = vsel %vm9338, %v9339, %v9330
    %v9341 = vsel %vm9334, %v9337, %v9340
    %v9342 = vsel %vm9331, nan, %v9341
    %v9343 = vand.u32 2147483647, %v7663
    %vm9344 = vcmp.le.f32.partialorder %v9343, 0.7853982
    %vm9345 = vcmp.lt.s32.totalorder %v7663, 0
    %v9346 = vand.u32 %v7663, 2139095040
    %v9347 = vshrl.u32 %v9346, 23
    %v9348 = vsub.s32 %v9347, 127
    %v9349 = vand.u32 2147483647, %v7663
    %v9350 = vand.u32 %v9349, 8388607
    %v9351 = vor.u32 %v9350, 8388608
    %v9352 = vsub.s32 0, %v9351
    %v9353 = vadd.s32 %v9348, 1
    %vm9354 = vcmp.gt.s32.totalorder %v9353, 0
    %v9355 = vsel %vm9354, %v9353, 0
    %v9356 = vshrl.u32 %v9355, 5
    %v9357 = vand.u32 %v9355, 31
    %v9358 = vsub.s32 32, %v9357
    %v9359 = vshrl.u32 683565275, %v9358
    %v9360 = vshll.u32 683565275, %v9357
    %v9361 = vshrl.u32 2475754826, %v9358
    %v9362 = vor.u32 %v9360, %v9361
    %v9363 = vshll.u32 2475754826, %v9357
    %v9364 = vshrl.u32 2131351028, %v9358
    %v9365 = vor.u32 %v9363, %v9364
    %v9366 = vshll.u32 2131351028, %v9357
    %v9367 = vshrl.u32 2102212464, %v9358
    %v9368 = vor.u32 %v9366, %v9367
    %v9369 = vshll.u32 2102212464, %v9357
    %v9370 = vshrl.u32 920167782, %v9358
    %v9371 = vor.u32 %v9369, %v9370
    %v9372 = vshll.u32 920167782, %v9357
    %v9373 = vshrl.u32 1326507024, %v9358
    %v9374 = vor.u32 %v9372, %v9373
    %vm9375 = vcmp.lt.s32.totalorder %v9356, 1
    %vm9376 = vcmp.lt.s32.totalorder %v9356, 2
    %vm9377 = vcmp.lt.s32.totalorder %v9356, 3
    %vm9378 = vcmp.lt.s32.totalorder %v9356, 4
    %v9379 = vsel %vm9375, %v9359, %v9362
    %v9380 = vsel %vm9378, %v9368, 2102212464
    %v9381 = vsel %vm9377, %v9365, %v9380
    %v9382 = vsel %vm9376, %v9379, %v9381
    %v9383 = vsel %vm9375, %v9362, %v9365
    %v9384 = vsel %vm9378, %v9371, 920167782
    %v9385 = vsel %vm9377, %v9368, %v9384
    %v9386 = vsel %vm9376, %v9383, %v9385
    %v9387 = vsel %vm9375, %v9365, %v9368
    %v9388 = vsel %vm9378, %v9374, 1326507024
    %v9389 = vsel %vm9377, %v9371, %v9388
    %v9390 = vsel %vm9376, %v9387, %v9389
    %v9391 = vshll.u32 %v9351, 8
    %v9392 = vmul.u32.u64.compose %v9391, %v9390
    %v9393 = vextract.low.u32 %v9392
    %v9394 = vextract.high.u32 %v9392
    %v9395 = vmul.u32.u64.compose %v9391, %v9386
    %v9396 = vextract.low.u32 %v9395
    %v9397 = vextract.high.u32 %v9395
    %v9398 = vmul.u32 %v9391, %v9382
    %v9399 = vadd.s32 %v9394, %v9396
    %vm9400 = vc.u32 %v9394, %v9396
    %v9401 = vadd.s32 %v9397, 1
    %v9402 = vsel %vm9400, %v9401, %v9397
    %v9403 = vadd.s32 %v9398, %v9402
    %v9404 = vadd.s32 %v9403, 536870912
    %v9405 = vshrl.u32 %v9404, 30
    %v9406 = vshll.u32 %v9405, 30
    %v9407 = vsub.s32 %v9403, %v9406
    %vm9408 = vcmp.lt.s32.totalorder %v9407, 0
    %v9409 = vsub.s32 0, %v9407
    %v9410 = vsel %vm9408, %v9409, %v9407
    %v9411 = vclz %v9410
    %v9412 = vsub.s32 %v9411, 2
    %vm9413 = vcmp.gt.s32.totalorder 0, %v9412
    %v9414 = vsel %vm9413, 0, %v9412
    %v9415 = vsub.s32 32, %v9414
    %v9416 = vshll.u32 %v9407, %v9414
    %v9417 = vshrl.u32 %v9399, %v9415
    %v9418 = vor.u32 %v9416, %v9417
    %v9419 = vsub.s32 4294967266, %v9414
    %v9420 = vadd.s32 %v9419, 127
    %v9421 = vshll.u32 %v9420, 23
    %v9422 = vor.u32 4788187, %v9421
    %v9423 = vand.u32 2147483647, %v9422
    %v9425 = vcvt.s32.f32 %v9418
    %v9426 = vmul.f32 %v9425, %v9423
    %v9427 = vxor.u32 %v9426, 2147483648
    %v9428 = vsel %vm9345, %v9427, %v9426
    %v9429 = vsub.s32 4, %v9405
    %v9430 = vsel %vm9345, %v9429, %v9405
    %v9431 = vsel %vm9344, %v7663, %v9428
    %v9432 = vsel %vm9344, 0, %v9430
    %v9433 = vcosq.f32.pop %v9431
    %v9434 = vsinq.f32.pop %v9431
    %vm9435 = vweird.f32 %v7663
    %v9436 = vadd.s32 %v9432, 3
    %v9437 = vand.u32 %v9436, 3
    %vm9438 = vcmp.lt.s32.totalorder %v9437, 2
    %vm9439 = vcmp.eq.s32.totalorder %v9437, 0
    %v9440 = vxor.u32 %v9434, 2147483648
    %v9441 = vsel %vm9439, %v9433, %v9440
    %vm9442 = vcmp.eq.s32.totalorder %v9437, 2
    %v9443 = vxor.u32 %v9433, 2147483648
    %v9444 = vsel %vm9442, %v9443, %v9434
    %v9445 = vsel %vm9438, %v9441, %v9444
    %v9446 = vsel %vm9435, nan, %v9445
    %v9447 = vand.u32 2147483647, %v7664
    %vm9448 = vcmp.le.f32.partialorder %v9447, 0.7853982
    %vm9449 = vcmp.lt.s32.totalorder %v7664, 0
    %v9450 = vand.u32 %v7664, 2139095040
    %v9451 = vshrl.u32 %v9450, 23
    %v9452 = vsub.s32 %v9451, 127
    %v9453 = vand.u32 2147483647, %v7664
    %v9454 = vand.u32 %v9453, 8388607
    %v9455 = vor.u32 %v9454, 8388608
    %v9456 = vsub.s32 0, %v9455
    %v9457 = vadd.s32 %v9452, 1
    %vm9458 = vcmp.gt.s32.totalorder %v9457, 0
    %v9459 = vsel %vm9458, %v9457, 0
    %v9460 = vshrl.u32 %v9459, 5
    %v9461 = vand.u32 %v9459, 31
    %v9462 = vsub.s32 32, %v9461
    %v9463 = vshrl.u32 683565275, %v9462
    %v9464 = vshll.u32 683565275, %v9461
    %v9465 = vshrl.u32 2475754826, %v9462
    %v9466 = vor.u32 %v9464, %v9465
    %v9467 = vshll.u32 2475754826, %v9461
    %v9468 = vshrl.u32 2131351028, %v9462
    %v9469 = vor.u32 %v9467, %v9468
    %v9470 = vshll.u32 2131351028, %v9461
    %v9471 = vshrl.u32 2102212464, %v9462
    %v9472 = vor.u32 %v9470, %v9471
    %v9473 = vshll.u32 2102212464, %v9461
    %v9474 = vshrl.u32 920167782, %v9462
    %v9475 = vor.u32 %v9473, %v9474
    %v9476 = vshll.u32 920167782, %v9461
    %v9477 = vshrl.u32 1326507024, %v9462
    %v9478 = vor.u32 %v9476, %v9477
    %vm9479 = vcmp.lt.s32.totalorder %v9460, 1
    %vm9480 = vcmp.lt.s32.totalorder %v9460, 2
    %vm9481 = vcmp.lt.s32.totalorder %v9460, 3
    %vm9482 = vcmp.lt.s32.totalorder %v9460, 4
    %v9483 = vsel %vm9479, %v9463, %v9466
    %v9484 = vsel %vm9482, %v9472, 2102212464
    %v9485 = vsel %vm9481, %v9469, %v9484
    %v9486 = vsel %vm9480, %v9483, %v9485
    %v9487 = vsel %vm9479, %v9466, %v9469
    %v9488 = vsel %vm9482, %v9475, 920167782
    %v9489 = vsel %vm9481, %v9472, %v9488
    %v9490 = vsel %vm9480, %v9487, %v9489
    %v9491 = vsel %vm9479, %v9469, %v9472
    %v9492 = vsel %vm9482, %v9478, 1326507024
    %v9493 = vsel %vm9481, %v9475, %v9492
    %v9494 = vsel %vm9480, %v9491, %v9493
    %v9495 = vshll.u32 %v9455, 8
    %v9496 = vmul.u32.u64.compose %v9495, %v9494
    %v9497 = vextract.low.u32 %v9496
    %v9498 = vextract.high.u32 %v9496
    %v9499 = vmul.u32.u64.compose %v9495, %v9490
    %v9500 = vextract.low.u32 %v9499
    %v9501 = vextract.high.u32 %v9499
    %v9502 = vmul.u32 %v9495, %v9486
    %v9503 = vadd.s32 %v9498, %v9500
    %vm9504 = vc.u32 %v9498, %v9500
    %v9505 = vadd.s32 %v9501, 1
    %v9506 = vsel %vm9504, %v9505, %v9501
    %v9507 = vadd.s32 %v9502, %v9506
    %v9508 = vadd.s32 %v9507, 536870912
    %v9509 = vshrl.u32 %v9508, 30
    %v9510 = vshll.u32 %v9509, 30
    %v9511 = vsub.s32 %v9507, %v9510
    %vm9512 = vcmp.lt.s32.totalorder %v9511, 0
    %v9513 = vsub.s32 0, %v9511
    %v9514 = vsel %vm9512, %v9513, %v9511
    %v9515 = vclz %v9514
    %v9516 = vsub.s32 %v9515, 2
    %vm9517 = vcmp.gt.s32.totalorder 0, %v9516
    %v9518 = vsel %vm9517, 0, %v9516
    %v9519 = vsub.s32 32, %v9518
    %v9520 = vshll.u32 %v9511, %v9518
    %v9521 = vshrl.u32 %v9503, %v9519
    %v9522 = vor.u32 %v9520, %v9521
    %v9523 = vsub.s32 4294967266, %v9518
    %v9524 = vadd.s32 %v9523, 127
    %v9525 = vshll.u32 %v9524, 23
    %v9526 = vor.u32 4788187, %v9525
    %v9527 = vand.u32 2147483647, %v9526
    %v9529 = vcvt.s32.f32 %v9522
    %v9530 = vmul.f32 %v9529, %v9527
    %v9531 = vxor.u32 %v9530, 2147483648
    %v9532 = vsel %vm9449, %v9531, %v9530
    %v9533 = vsub.s32 4, %v9509
    %v9534 = vsel %vm9449, %v9533, %v9509
    %v9535 = vsel %vm9448, %v7664, %v9532
    %v9536 = vsel %vm9448, 0, %v9534
    %v9537 = vcosq.f32.pop %v9535
    %v9538 = vsinq.f32.pop %v9535
    %vm9539 = vweird.f32 %v7664
    %v9540 = vadd.s32 %v9536, 3
    %v9541 = vand.u32 %v9540, 3
    %vm9542 = vcmp.lt.s32.totalorder %v9541, 2
    %vm9543 = vcmp.eq.s32.totalorder %v9541, 0
    %v9544 = vxor.u32 %v9538, 2147483648
    %v9545 = vsel %vm9543, %v9537, %v9544
    %vm9546 = vcmp.eq.s32.totalorder %v9541, 2
    %v9547 = vxor.u32 %v9537, 2147483648
    %v9548 = vsel %vm9546, %v9547, %v9538
    %v9549 = vsel %vm9542, %v9545, %v9548
    %v9550 = vsel %vm9539, nan, %v9549
    %v9551 = vand.u32 2147483647, %v7665
    %vm9552 = vcmp.le.f32.partialorder %v9551, 0.7853982
    %vm9553 = vcmp.lt.s32.totalorder %v7665, 0
    %v9554 = vand.u32 %v7665, 2139095040
    %v9555 = vshrl.u32 %v9554, 23
    %v9556 = vsub.s32 %v9555, 127
    %v9557 = vand.u32 2147483647, %v7665
    %v9558 = vand.u32 %v9557, 8388607
    %v9559 = vor.u32 %v9558, 8388608
    %v9560 = vsub.s32 0, %v9559
    %v9561 = vadd.s32 %v9556, 1
    %vm9562 = vcmp.gt.s32.totalorder %v9561, 0
    %v9563 = vsel %vm9562, %v9561, 0
    %v9564 = vshrl.u32 %v9563, 5
    %v9565 = vand.u32 %v9563, 31
    %v9566 = vsub.s32 32, %v9565
    %v9567 = vshrl.u32 683565275, %v9566
    %v9568 = vshll.u32 683565275, %v9565
    %v9569 = vshrl.u32 2475754826, %v9566
    %v9570 = vor.u32 %v9568, %v9569
    %v9571 = vshll.u32 2475754826, %v9565
    %v9572 = vshrl.u32 2131351028, %v9566
    %v9573 = vor.u32 %v9571, %v9572
    %v9574 = vshll.u32 2131351028, %v9565
    %v9575 = vshrl.u32 2102212464, %v9566
    %v9576 = vor.u32 %v9574, %v9575
    %v9577 = vshll.u32 2102212464, %v9565
    %v9578 = vshrl.u32 920167782, %v9566
    %v9579 = vor.u32 %v9577, %v9578
    %v9580 = vshll.u32 920167782, %v9565
    %v9581 = vshrl.u32 1326507024, %v9566
    %v9582 = vor.u32 %v9580, %v9581
    %vm9583 = vcmp.lt.s32.totalorder %v9564, 1
    %vm9584 = vcmp.lt.s32.totalorder %v9564, 2
    %vm9585 = vcmp.lt.s32.totalorder %v9564, 3
    %vm9586 = vcmp.lt.s32.totalorder %v9564, 4
    %v9587 = vsel %vm9583, %v9567, %v9570
    %v9588 = vsel %vm9586, %v9576, 2102212464
    %v9589 = vsel %vm9585, %v9573, %v9588
    %v9590 = vsel %vm9584, %v9587, %v9589
    %v9591 = vsel %vm9583, %v9570, %v9573
    %v9592 = vsel %vm9586, %v9579, 920167782
    %v9593 = vsel %vm9585, %v9576, %v9592
    %v9594 = vsel %vm9584, %v9591, %v9593
    %v9595 = vsel %vm9583, %v9573, %v9576
    %v9596 = vsel %vm9586, %v9582, 1326507024
    %v9597 = vsel %vm9585, %v9579, %v9596
    %v9598 = vsel %vm9584, %v9595, %v9597
    %v9599 = vshll.u32 %v9559, 8
    %v9600 = vmul.u32.u64.compose %v9599, %v9598
    %v9601 = vextract.low.u32 %v9600
    %v9602 = vextract.high.u32 %v9600
    %v9603 = vmul.u32.u64.compose %v9599, %v9594
    %v9604 = vextract.low.u32 %v9603
    %v9605 = vextract.high.u32 %v9603
    %v9606 = vmul.u32 %v9599, %v9590
    %v9607 = vadd.s32 %v9602, %v9604
    %vm9608 = vc.u32 %v9602, %v9604
    %v9609 = vadd.s32 %v9605, 1
    %v9610 = vsel %vm9608, %v9609, %v9605
    %v9611 = vadd.s32 %v9606, %v9610
    %v9612 = vadd.s32 %v9611, 536870912
    %v9613 = vshrl.u32 %v9612, 30
    %v9614 = vshll.u32 %v9613, 30
    %v9615 = vsub.s32 %v9611, %v9614
    %vm9616 = vcmp.lt.s32.totalorder %v9615, 0
    %v9617 = vsub.s32 0, %v9615
    %v9618 = vsel %vm9616, %v9617, %v9615
    %v9619 = vclz %v9618
    %v9620 = vsub.s32 %v9619, 2
    %vm9621 = vcmp.gt.s32.totalorder 0, %v9620
    %v9622 = vsel %vm9621, 0, %v9620
    %v9623 = vsub.s32 32, %v9622
    %v9624 = vshll.u32 %v9615, %v9622
    %v9625 = vshrl.u32 %v9607, %v9623
    %v9626 = vor.u32 %v9624, %v9625
    %v9627 = vsub.s32 4294967266, %v9622
    %v9628 = vadd.s32 %v9627, 127
    %v9629 = vshll.u32 %v9628, 23
    %v9630 = vor.u32 4788187, %v9629
    %v9631 = vand.u32 2147483647, %v9630
    %v9633 = vcvt.s32.f32 %v9626
    %v9634 = vmul.f32 %v9633, %v9631
    %v9635 = vxor.u32 %v9634, 2147483648
    %v9636 = vsel %vm9553, %v9635, %v9634
    %v9637 = vsub.s32 4, %v9613
    %v9638 = vsel %vm9553, %v9637, %v9613
    %v9639 = vsel %vm9552, %v7665, %v9636
    %v9640 = vsel %vm9552, 0, %v9638
    %v9641 = vcosq.f32.pop %v9639
    %v9642 = vsinq.f32.pop %v9639
    %vm9643 = vweird.f32 %v7665
    %v9644 = vadd.s32 %v9640, 3
    %v9645 = vand.u32 %v9644, 3
    %vm9646 = vcmp.lt.s32.totalorder %v9645, 2
    %vm9647 = vcmp.eq.s32.totalorder %v9645, 0
    %v9648 = vxor.u32 %v9642, 2147483648
    %v9649 = vsel %vm9647, %v9641, %v9648
    %vm9650 = vcmp.eq.s32.totalorder %v9645, 2
    %v9651 = vxor.u32 %v9641, 2147483648
    %v9652 = vsel %vm9650, %v9651, %v9642
    %v9653 = vsel %vm9646, %v9649, %v9652
    %v9654 = vsel %vm9643, nan, %v9653
    %v9655 = vand.u32 2147483647, %v7666
    %vm9656 = vcmp.le.f32.partialorder %v9655, 0.7853982
    %vm9657 = vcmp.lt.s32.totalorder %v7666, 0
    %v9658 = vand.u32 %v7666, 2139095040
    %v9659 = vshrl.u32 %v9658, 23
    %v9660 = vsub.s32 %v9659, 127
    %v9661 = vand.u32 2147483647, %v7666
    %v9662 = vand.u32 %v9661, 8388607
    %v9663 = vor.u32 %v9662, 8388608
    %v9664 = vsub.s32 0, %v9663
    %v9665 = vadd.s32 %v9660, 1
    %vm9666 = vcmp.gt.s32.totalorder %v9665, 0
    %v9667 = vsel %vm9666, %v9665, 0
    %v9668 = vshrl.u32 %v9667, 5
    %v9669 = vand.u32 %v9667, 31
    %v9670 = vsub.s32 32, %v9669
    %v9671 = vshrl.u32 683565275, %v9670
    %v9672 = vshll.u32 683565275, %v9669
    %v9673 = vshrl.u32 2475754826, %v9670
    %v9674 = vor.u32 %v9672, %v9673
    %v9675 = vshll.u32 2475754826, %v9669
    %v9676 = vshrl.u32 2131351028, %v9670
    %v9677 = vor.u32 %v9675, %v9676
    %v9678 = vshll.u32 2131351028, %v9669
    %v9679 = vshrl.u32 2102212464, %v9670
    %v9680 = vor.u32 %v9678, %v9679
    %v9681 = vshll.u32 2102212464, %v9669
    %v9682 = vshrl.u32 920167782, %v9670
    %v9683 = vor.u32 %v9681, %v9682
    %v9684 = vshll.u32 920167782, %v9669
    %v9685 = vshrl.u32 1326507024, %v9670
    %v9686 = vor.u32 %v9684, %v9685
    %vm9687 = vcmp.lt.s32.totalorder %v9668, 1
    %vm9688 = vcmp.lt.s32.totalorder %v9668, 2
    %vm9689 = vcmp.lt.s32.totalorder %v9668, 3
    %vm9690 = vcmp.lt.s32.totalorder %v9668, 4
    %v9691 = vsel %vm9687, %v9671, %v9674
    %v9692 = vsel %vm9690, %v9680, 2102212464
    %v9693 = vsel %vm9689, %v9677, %v9692
    %v9694 = vsel %vm9688, %v9691, %v9693
    %v9695 = vsel %vm9687, %v9674, %v9677
    %v9696 = vsel %vm9690, %v9683, 920167782
    %v9697 = vsel %vm9689, %v9680, %v9696
    %v9698 = vsel %vm9688, %v9695, %v9697
    %v9699 = vsel %vm9687, %v9677, %v9680
    %v9700 = vsel %vm9690, %v9686, 1326507024
    %v9701 = vsel %vm9689, %v9683, %v9700
    %v9702 = vsel %vm9688, %v9699, %v9701
    %v9703 = vshll.u32 %v9663, 8
    %v9704 = vmul.u32.u64.compose %v9703, %v9702
    %v9705 = vextract.low.u32 %v9704
    %v9706 = vextract.high.u32 %v9704
    %v9707 = vmul.u32.u64.compose %v9703, %v9698
    %v9708 = vextract.low.u32 %v9707
    %v9709 = vextract.high.u32 %v9707
    %v9710 = vmul.u32 %v9703, %v9694
    %v9711 = vadd.s32 %v9706, %v9708
    %vm9712 = vc.u32 %v9706, %v9708
    %v9713 = vadd.s32 %v9709, 1
    %v9714 = vsel %vm9712, %v9713, %v9709
    %v9715 = vadd.s32 %v9710, %v9714
    %v9716 = vadd.s32 %v9715, 536870912
    %v9717 = vshrl.u32 %v9716, 30
    %v9718 = vshll.u32 %v9717, 30
    %v9719 = vsub.s32 %v9715, %v9718
    %vm9720 = vcmp.lt.s32.totalorder %v9719, 0
    %v9721 = vsub.s32 0, %v9719
    %v9722 = vsel %vm9720, %v9721, %v9719
    %v9723 = vclz %v9722
    %v9724 = vsub.s32 %v9723, 2
    %vm9725 = vcmp.gt.s32.totalorder 0, %v9724
    %v9726 = vsel %vm9725, 0, %v9724
    %v9727 = vsub.s32 32, %v9726
    %v9728 = vshll.u32 %v9719, %v9726
    %v9729 = vshrl.u32 %v9711, %v9727
    %v9730 = vor.u32 %v9728, %v9729
    %v9731 = vsub.s32 4294967266, %v9726
    %v9732 = vadd.s32 %v9731, 127
    %v9733 = vshll.u32 %v9732, 23
    %v9734 = vor.u32 4788187, %v9733
    %v9735 = vand.u32 2147483647, %v9734
    %v9737 = vcvt.s32.f32 %v9730
    %v9738 = vmul.f32 %v9737, %v9735
    %v9739 = vxor.u32 %v9738, 2147483648
    %v9740 = vsel %vm9657, %v9739, %v9738
    %v9741 = vsub.s32 4, %v9717
    %v9742 = vsel %vm9657, %v9741, %v9717
    %v9743 = vsel %vm9656, %v7666, %v9740
    %v9744 = vsel %vm9656, 0, %v9742
    %v9745 = vcosq.f32.pop %v9743
    %v9746 = vsinq.f32.pop %v9743
    %vm9747 = vweird.f32 %v7666
    %v9748 = vadd.s32 %v9744, 3
    %v9749 = vand.u32 %v9748, 3
    %vm9750 = vcmp.lt.s32.totalorder %v9749, 2
    %vm9751 = vcmp.eq.s32.totalorder %v9749, 0
    %v9752 = vxor.u32 %v9746, 2147483648
    %v9753 = vsel %vm9751, %v9745, %v9752
    %vm9754 = vcmp.eq.s32.totalorder %v9749, 2
    %v9755 = vxor.u32 %v9745, 2147483648
    %v9756 = vsel %vm9754, %v9755, %v9746
    %v9757 = vsel %vm9750, %v9753, %v9756
    %v9758 = vsel %vm9747, nan, %v9757
    %v9759 = vand.u32 2147483647, %v7667
    %vm9760 = vcmp.le.f32.partialorder %v9759, 0.7853982
    %vm9761 = vcmp.lt.s32.totalorder %v7667, 0
    %v9762 = vand.u32 %v7667, 2139095040
    %v9763 = vshrl.u32 %v9762, 23
    %v9764 = vsub.s32 %v9763, 127
    %v9765 = vand.u32 2147483647, %v7667
    %v9766 = vand.u32 %v9765, 8388607
    %v9767 = vor.u32 %v9766, 8388608
    %v9768 = vsub.s32 0, %v9767
    %v9769 = vadd.s32 %v9764, 1
    %vm9770 = vcmp.gt.s32.totalorder %v9769, 0
    %v9771 = vsel %vm9770, %v9769, 0
    %v9772 = vshrl.u32 %v9771, 5
    %v9773 = vand.u32 %v9771, 31
    %v9774 = vsub.s32 32, %v9773
    %v9775 = vshrl.u32 683565275, %v9774
    %v9776 = vshll.u32 683565275, %v9773
    %v9777 = vshrl.u32 2475754826, %v9774
    %v9778 = vor.u32 %v9776, %v9777
    %v9779 = vshll.u32 2475754826, %v9773
    %v9780 = vshrl.u32 2131351028, %v9774
    %v9781 = vor.u32 %v9779, %v9780
    %v9782 = vshll.u32 2131351028, %v9773
    %v9783 = vshrl.u32 2102212464, %v9774
    %v9784 = vor.u32 %v9782, %v9783
    %v9785 = vshll.u32 2102212464, %v9773
    %v9786 = vshrl.u32 920167782, %v9774
    %v9787 = vor.u32 %v9785, %v9786
    %v9788 = vshll.u32 920167782, %v9773
    %v9789 = vshrl.u32 1326507024, %v9774
    %v9790 = vor.u32 %v9788, %v9789
    %vm9791 = vcmp.lt.s32.totalorder %v9772, 1
    %vm9792 = vcmp.lt.s32.totalorder %v9772, 2
    %vm9793 = vcmp.lt.s32.totalorder %v9772, 3
    %vm9794 = vcmp.lt.s32.totalorder %v9772, 4
    %v9795 = vsel %vm9791, %v9775, %v9778
    %v9796 = vsel %vm9794, %v9784, 2102212464
    %v9797 = vsel %vm9793, %v9781, %v9796
    %v9798 = vsel %vm9792, %v9795, %v9797
    %v9799 = vsel %vm9791, %v9778, %v9781
    %v9800 = vsel %vm9794, %v9787, 920167782
    %v9801 = vsel %vm9793, %v9784, %v9800
    %v9802 = vsel %vm9792, %v9799, %v9801
    %v9803 = vsel %vm9791, %v9781, %v9784
    %v9804 = vsel %vm9794, %v9790, 1326507024
    %v9805 = vsel %vm9793, %v9787, %v9804
    %v9806 = vsel %vm9792, %v9803, %v9805
    %v9807 = vshll.u32 %v9767, 8
    %v9808 = vmul.u32.u64.compose %v9807, %v9806
    %v9809 = vextract.low.u32 %v9808
    %v9810 = vextract.high.u32 %v9808
    %v9811 = vmul.u32.u64.compose %v9807, %v9802
    %v9812 = vextract.low.u32 %v9811
    %v9813 = vextract.high.u32 %v9811
    %v9814 = vmul.u32 %v9807, %v9798
    %v9815 = vadd.s32 %v9810, %v9812
    %vm9816 = vc.u32 %v9810, %v9812
    %v9817 = vadd.s32 %v9813, 1
    %v9818 = vsel %vm9816, %v9817, %v9813
    %v9819 = vadd.s32 %v9814, %v9818
    %v9820 = vadd.s32 %v9819, 536870912
    %v9821 = vshrl.u32 %v9820, 30
    %v9822 = vshll.u32 %v9821, 30
    %v9823 = vsub.s32 %v9819, %v9822
    %vm9824 = vcmp.lt.s32.totalorder %v9823, 0
    %v9825 = vsub.s32 0, %v9823
    %v9826 = vsel %vm9824, %v9825, %v9823
    %v9827 = vclz %v9826
    %v9828 = vsub.s32 %v9827, 2
    %vm9829 = vcmp.gt.s32.totalorder 0, %v9828
    %v9830 = vsel %vm9829, 0, %v9828
    %v9831 = vsub.s32 32, %v9830
    %v9832 = vshll.u32 %v9823, %v9830
    %v9833 = vshrl.u32 %v9815, %v9831
    %v9834 = vor.u32 %v9832, %v9833
    %v9835 = vsub.s32 4294967266, %v9830
    %v9836 = vadd.s32 %v9835, 127
    %v9837 = vshll.u32 %v9836, 23
    %v9838 = vor.u32 4788187, %v9837
    %v9839 = vand.u32 2147483647, %v9838
    %v9841 = vcvt.s32.f32 %v9834
    %v9842 = vmul.f32 %v9841, %v9839
    %v9843 = vxor.u32 %v9842, 2147483648
    %v9844 = vsel %vm9761, %v9843, %v9842
    %v9845 = vsub.s32 4, %v9821
    %v9846 = vsel %vm9761, %v9845, %v9821
    %v9847 = vsel %vm9760, %v7667, %v9844
    %v9848 = vsel %vm9760, 0, %v9846
    %v9849 = vcosq.f32.pop %v9847
    %v9850 = vsinq.f32.pop %v9847
    %vm9851 = vweird.f32 %v7667
    %v9852 = vadd.s32 %v9848, 3
    %v9853 = vand.u32 %v9852, 3
    %vm9854 = vcmp.lt.s32.totalorder %v9853, 2
    %vm9855 = vcmp.eq.s32.totalorder %v9853, 0
    %v9856 = vxor.u32 %v9850, 2147483648
    %v9857 = vsel %vm9855, %v9849, %v9856
    %vm9858 = vcmp.eq.s32.totalorder %v9853, 2
    %v9859 = vxor.u32 %v9849, 2147483648
    %v9860 = vsel %vm9858, %v9859, %v9850
    %v9861 = vsel %vm9854, %v9857, %v9860
    %v9862 = vsel %vm9851, nan, %v9861
    %v9863 = vand.u32 2147483647, %v7668
    %vm9864 = vcmp.le.f32.partialorder %v9863, 0.7853982
    %vm9865 = vcmp.lt.s32.totalorder %v7668, 0
    %v9866 = vand.u32 %v7668, 2139095040
    %v9867 = vshrl.u32 %v9866, 23
    %v9868 = vsub.s32 %v9867, 127
    %v9869 = vand.u32 2147483647, %v7668
    %v9870 = vand.u32 %v9869, 8388607
    %v9871 = vor.u32 %v9870, 8388608
    %v9872 = vsub.s32 0, %v9871
    %v9873 = vadd.s32 %v9868, 1
    %vm9874 = vcmp.gt.s32.totalorder %v9873, 0
    %v9875 = vsel %vm9874, %v9873, 0
    %v9876 = vshrl.u32 %v9875, 5
    %v9877 = vand.u32 %v9875, 31
    %v9878 = vsub.s32 32, %v9877
    %v9879 = vshrl.u32 683565275, %v9878
    %v9880 = vshll.u32 683565275, %v9877
    %v9881 = vshrl.u32 2475754826, %v9878
    %v9882 = vor.u32 %v9880, %v9881
    %v9883 = vshll.u32 2475754826, %v9877
    %v9884 = vshrl.u32 2131351028, %v9878
    %v9885 = vor.u32 %v9883, %v9884
    %v9886 = vshll.u32 2131351028, %v9877
    %v9887 = vshrl.u32 2102212464, %v9878
    %v9888 = vor.u32 %v9886, %v9887
    %v9889 = vshll.u32 2102212464, %v9877
    %v9890 = vshrl.u32 920167782, %v9878
    %v9891 = vor.u32 %v9889, %v9890
    %v9892 = vshll.u32 920167782, %v9877
    %v9893 = vshrl.u32 1326507024, %v9878
    %v9894 = vor.u32 %v9892, %v9893
    %vm9895 = vcmp.lt.s32.totalorder %v9876, 1
    %vm9896 = vcmp.lt.s32.totalorder %v9876, 2
    %vm9897 = vcmp.lt.s32.totalorder %v9876, 3
    %vm9898 = vcmp.lt.s32.totalorder %v9876, 4
    %v9899 = vsel %vm9895, %v9879, %v9882
    %v9900 = vsel %vm9898, %v9888, 2102212464
    %v9901 = vsel %vm9897, %v9885, %v9900
    %v9902 = vsel %vm9896, %v9899, %v9901
    %v9903 = vsel %vm9895, %v9882, %v9885
    %v9904 = vsel %vm9898, %v9891, 920167782
    %v9905 = vsel %vm9897, %v9888, %v9904
    %v9906 = vsel %vm9896, %v9903, %v9905
    %v9907 = vsel %vm9895, %v9885, %v9888
    %v9908 = vsel %vm9898, %v9894, 1326507024
    %v9909 = vsel %vm9897, %v9891, %v9908
    %v9910 = vsel %vm9896, %v9907, %v9909
    %v9911 = vshll.u32 %v9871, 8
    %v9912 = vmul.u32.u64.compose %v9911, %v9910
    %v9913 = vextract.low.u32 %v9912
    %v9914 = vextract.high.u32 %v9912
    %v9915 = vmul.u32.u64.compose %v9911, %v9906
    %v9916 = vextract.low.u32 %v9915
    %v9917 = vextract.high.u32 %v9915
    %v9918 = vmul.u32 %v9911, %v9902
    %v9919 = vadd.s32 %v9914, %v9916
    %vm9920 = vc.u32 %v9914, %v9916
    %v9921 = vadd.s32 %v9917, 1
    %v9922 = vsel %vm9920, %v9921, %v9917
    %v9923 = vadd.s32 %v9918, %v9922
    %v9924 = vadd.s32 %v9923, 536870912
    %v9925 = vshrl.u32 %v9924, 30
    %v9926 = vshll.u32 %v9925, 30
    %v9927 = vsub.s32 %v9923, %v9926
    %vm9928 = vcmp.lt.s32.totalorder %v9927, 0
    %v9929 = vsub.s32 0, %v9927
    %v9930 = vsel %vm9928, %v9929, %v9927
    %v9931 = vclz %v9930
    %v9932 = vsub.s32 %v9931, 2
    %vm9933 = vcmp.gt.s32.totalorder 0, %v9932
    %v9934 = vsel %vm9933, 0, %v9932
    %v9935 = vsub.s32 32, %v9934
    %v9936 = vshll.u32 %v9927, %v9934
    %v9937 = vshrl.u32 %v9919, %v9935
    %v9938 = vor.u32 %v9936, %v9937
    %v9939 = vsub.s32 4294967266, %v9934
    %v9940 = vadd.s32 %v9939, 127
    %v9941 = vshll.u32 %v9940, 23
    %v9942 = vor.u32 4788187, %v9941
    %v9943 = vand.u32 2147483647, %v9942
    %v9945 = vcvt.s32.f32 %v9938
    %v9946 = vmul.f32 %v9945, %v9943
    %v9947 = vxor.u32 %v9946, 2147483648
    %v9948 = vsel %vm9865, %v9947, %v9946
    %v9949 = vsub.s32 4, %v9925
    %v9950 = vsel %vm9865, %v9949, %v9925
    %v9951 = vsel %vm9864, %v7668, %v9948
    %v9952 = vsel %vm9864, 0, %v9950
    %v9953 = vcosq.f32.pop %v9951
    %v9954 = vsinq.f32.pop %v9951
    %vm9955 = vweird.f32 %v7668
    %v9956 = vadd.s32 %v9952, 3
    %v9957 = vand.u32 %v9956, 3
    %vm9958 = vcmp.lt.s32.totalorder %v9957, 2
    %vm9959 = vcmp.eq.s32.totalorder %v9957, 0
    %v9960 = vxor.u32 %v9954, 2147483648
    %v9961 = vsel %vm9959, %v9953, %v9960
    %vm9962 = vcmp.eq.s32.totalorder %v9957, 2
    %v9963 = vxor.u32 %v9953, 2147483648
    %v9964 = vsel %vm9962, %v9963, %v9954
    %v9965 = vsel %vm9958, %v9961, %v9964
    %v9966 = vsel %vm9955, nan, %v9965
    %v9967 = vand.u32 2147483647, %v7669
    %vm9968 = vcmp.le.f32.partialorder %v9967, 0.7853982
    %vm9969 = vcmp.lt.s32.totalorder %v7669, 0
    %v9970 = vand.u32 %v7669, 2139095040
    %v9971 = vshrl.u32 %v9970, 23
    %v9972 = vsub.s32 %v9971, 127
    %v9973 = vand.u32 2147483647, %v7669
    %v9974 = vand.u32 %v9973, 8388607
    %v9975 = vor.u32 %v9974, 8388608
    %v9976 = vsub.s32 0, %v9975
    %v9977 = vadd.s32 %v9972, 1
    %vm9978 = vcmp.gt.s32.totalorder %v9977, 0
    %v9979 = vsel %vm9978, %v9977, 0
    %v9980 = vshrl.u32 %v9979, 5
    %v9981 = vand.u32 %v9979, 31
    %v9982 = vsub.s32 32, %v9981
    %v9983 = vshrl.u32 683565275, %v9982
    %v9984 = vshll.u32 683565275, %v9981
    %v9985 = vshrl.u32 2475754826, %v9982
    %v9986 = vor.u32 %v9984, %v9985
    %v9987 = vshll.u32 2475754826, %v9981
    %v9988 = vshrl.u32 2131351028, %v9982
    %v9989 = vor.u32 %v9987, %v9988
    %v9990 = vshll.u32 2131351028, %v9981
    %v9991 = vshrl.u32 2102212464, %v9982
    %v9992 = vor.u32 %v9990, %v9991
    %v9993 = vshll.u32 2102212464, %v9981
    %v9994 = vshrl.u32 920167782, %v9982
    %v9995 = vor.u32 %v9993, %v9994
    %v9996 = vshll.u32 920167782, %v9981
    %v9997 = vshrl.u32 1326507024, %v9982
    %v9998 = vor.u32 %v9996, %v9997
    %vm9999 = vcmp.lt.s32.totalorder %v9980, 1
    %vm10000 = vcmp.lt.s32.totalorder %v9980, 2
    %vm10001 = vcmp.lt.s32.totalorder %v9980, 3
    %vm10002 = vcmp.lt.s32.totalorder %v9980, 4
    %v10003 = vsel %vm9999, %v9983, %v9986
    %v10004 = vsel %vm10002, %v9992, 2102212464
    %v10005 = vsel %vm10001, %v9989, %v10004
    %v10006 = vsel %vm10000, %v10003, %v10005
    %v10007 = vsel %vm9999, %v9986, %v9989
    %v10008 = vsel %vm10002, %v9995, 920167782
    %v10009 = vsel %vm10001, %v9992, %v10008
    %v10010 = vsel %vm10000, %v10007, %v10009
    %v10011 = vsel %vm9999, %v9989, %v9992
    %v10012 = vsel %vm10002, %v9998, 1326507024
    %v10013 = vsel %vm10001, %v9995, %v10012
    %v10014 = vsel %vm10000, %v10011, %v10013
    %v10015 = vshll.u32 %v9975, 8
    %v10016 = vmul.u32.u64.compose %v10015, %v10014
    %v10017 = vextract.low.u32 %v10016
    %v10018 = vextract.high.u32 %v10016
    %v10019 = vmul.u32.u64.compose %v10015, %v10010
    %v10020 = vextract.low.u32 %v10019
    %v10021 = vextract.high.u32 %v10019
    %v10022 = vmul.u32 %v10015, %v10006
    %v10023 = vadd.s32 %v10018, %v10020
    %vm10024 = vc.u32 %v10018, %v10020
    %v10025 = vadd.s32 %v10021, 1
    %v10026 = vsel %vm10024, %v10025, %v10021
    %v10027 = vadd.s32 %v10022, %v10026
    %v10028 = vadd.s32 %v10027, 536870912
    %v10029 = vshrl.u32 %v10028, 30
    %v10030 = vshll.u32 %v10029, 30
    %v10031 = vsub.s32 %v10027, %v10030
    %vm10032 = vcmp.lt.s32.totalorder %v10031, 0
    %v10033 = vsub.s32 0, %v10031
    %v10034 = vsel %vm10032, %v10033, %v10031
    %v10035 = vclz %v10034
    %v10036 = vsub.s32 %v10035, 2
    %vm10037 = vcmp.gt.s32.totalorder 0, %v10036
    %v10038 = vsel %vm10037, 0, %v10036
    %v10039 = vsub.s32 32, %v10038
    %v10040 = vshll.u32 %v10031, %v10038
    %v10041 = vshrl.u32 %v10023, %v10039
    %v10042 = vor.u32 %v10040, %v10041
    %v10043 = vsub.s32 4294967266, %v10038
    %v10044 = vadd.s32 %v10043, 127
    %v10045 = vshll.u32 %v10044, 23
    %v10046 = vor.u32 4788187, %v10045
    %v10047 = vand.u32 2147483647, %v10046
    %v10049 = vcvt.s32.f32 %v10042
    %v10050 = vmul.f32 %v10049, %v10047
    %v10051 = vxor.u32 %v10050, 2147483648
    %v10052 = vsel %vm9969, %v10051, %v10050
    %v10053 = vsub.s32 4, %v10029
    %v10054 = vsel %vm9969, %v10053, %v10029
    %v10055 = vsel %vm9968, %v7669, %v10052
    %v10056 = vsel %vm9968, 0, %v10054
    %v10057 = vcosq.f32.pop %v10055
    %v10058 = vsinq.f32.pop %v10055
    %vm10059 = vweird.f32 %v7669
    %v10060 = vadd.s32 %v10056, 3
    %v10061 = vand.u32 %v10060, 3
    %vm10062 = vcmp.lt.s32.totalorder %v10061, 2
    %vm10063 = vcmp.eq.s32.totalorder %v10061, 0
    %v10064 = vxor.u32 %v10058, 2147483648
    %v10065 = vsel %vm10063, %v10057, %v10064
    %vm10066 = vcmp.eq.s32.totalorder %v10061, 2
    %v10067 = vxor.u32 %v10057, 2147483648
    %v10068 = vsel %vm10066, %v10067, %v10058
    %v10069 = vsel %vm10062, %v10065, %v10068
    %v10070 = vsel %vm10059, nan, %v10069
    %v10071 = vand.u32 2147483647, %v7670
    %vm10072 = vcmp.le.f32.partialorder %v10071, 0.7853982
    %vm10073 = vcmp.lt.s32.totalorder %v7670, 0
    %v10074 = vand.u32 %v7670, 2139095040
    %v10075 = vshrl.u32 %v10074, 23
    %v10076 = vsub.s32 %v10075, 127
    %v10077 = vand.u32 2147483647, %v7670
    %v10078 = vand.u32 %v10077, 8388607
    %v10079 = vor.u32 %v10078, 8388608
    %v10080 = vsub.s32 0, %v10079
    %v10081 = vadd.s32 %v10076, 1
    %vm10082 = vcmp.gt.s32.totalorder %v10081, 0
    %v10083 = vsel %vm10082, %v10081, 0
    %v10084 = vshrl.u32 %v10083, 5
    %v10085 = vand.u32 %v10083, 31
    %v10086 = vsub.s32 32, %v10085
    %v10087 = vshrl.u32 683565275, %v10086
    %v10088 = vshll.u32 683565275, %v10085
    %v10089 = vshrl.u32 2475754826, %v10086
    %v10090 = vor.u32 %v10088, %v10089
    %v10091 = vshll.u32 2475754826, %v10085
    %v10092 = vshrl.u32 2131351028, %v10086
    %v10093 = vor.u32 %v10091, %v10092
    %v10094 = vshll.u32 2131351028, %v10085
    %v10095 = vshrl.u32 2102212464, %v10086
    %v10096 = vor.u32 %v10094, %v10095
    %v10097 = vshll.u32 2102212464, %v10085
    %v10098 = vshrl.u32 920167782, %v10086
    %v10099 = vor.u32 %v10097, %v10098
    %v10100 = vshll.u32 920167782, %v10085
    %v10101 = vshrl.u32 1326507024, %v10086
    %v10102 = vor.u32 %v10100, %v10101
    %vm10103 = vcmp.lt.s32.totalorder %v10084, 1
    %vm10104 = vcmp.lt.s32.totalorder %v10084, 2
    %vm10105 = vcmp.lt.s32.totalorder %v10084, 3
    %vm10106 = vcmp.lt.s32.totalorder %v10084, 4
    %v10107 = vsel %vm10103, %v10087, %v10090
    %v10108 = vsel %vm10106, %v10096, 2102212464
    %v10109 = vsel %vm10105, %v10093, %v10108
    %v10110 = vsel %vm10104, %v10107, %v10109
    %v10111 = vsel %vm10103, %v10090, %v10093
    %v10112 = vsel %vm10106, %v10099, 920167782
    %v10113 = vsel %vm10105, %v10096, %v10112
    %v10114 = vsel %vm10104, %v10111, %v10113
    %v10115 = vsel %vm10103, %v10093, %v10096
    %v10116 = vsel %vm10106, %v10102, 1326507024
    %v10117 = vsel %vm10105, %v10099, %v10116
    %v10118 = vsel %vm10104, %v10115, %v10117
    %v10119 = vshll.u32 %v10079, 8
    %v10120 = vmul.u32.u64.compose %v10119, %v10118
    %v10121 = vextract.low.u32 %v10120
    %v10122 = vextract.high.u32 %v10120
    %v10123 = vmul.u32.u64.compose %v10119, %v10114
    %v10124 = vextract.low.u32 %v10123
    %v10125 = vextract.high.u32 %v10123
    %v10126 = vmul.u32 %v10119, %v10110
    %v10127 = vadd.s32 %v10122, %v10124
    %vm10128 = vc.u32 %v10122, %v10124
    %v10129 = vadd.s32 %v10125, 1
    %v10130 = vsel %vm10128, %v10129, %v10125
    %v10131 = vadd.s32 %v10126, %v10130
    %v10132 = vadd.s32 %v10131, 536870912
    %v10133 = vshrl.u32 %v10132, 30
    %v10134 = vshll.u32 %v10133, 30
    %v10135 = vsub.s32 %v10131, %v10134
    %vm10136 = vcmp.lt.s32.totalorder %v10135, 0
    %v10137 = vsub.s32 0, %v10135
    %v10138 = vsel %vm10136, %v10137, %v10135
    %v10139 = vclz %v10138
    %v10140 = vsub.s32 %v10139, 2
    %vm10141 = vcmp.gt.s32.totalorder 0, %v10140
    %v10142 = vsel %vm10141, 0, %v10140
    %v10143 = vsub.s32 32, %v10142
    %v10144 = vshll.u32 %v10135, %v10142
    %v10145 = vshrl.u32 %v10127, %v10143
    %v10146 = vor.u32 %v10144, %v10145
    %v10147 = vsub.s32 4294967266, %v10142
    %v10148 = vadd.s32 %v10147, 127
    %v10149 = vshll.u32 %v10148, 23
    %v10150 = vor.u32 4788187, %v10149
    %v10151 = vand.u32 2147483647, %v10150
    %v10153 = vcvt.s32.f32 %v10146
    %v10154 = vmul.f32 %v10153, %v10151
    %v10155 = vxor.u32 %v10154, 2147483648
    %v10156 = vsel %vm10073, %v10155, %v10154
    %v10157 = vsub.s32 4, %v10133
    %v10158 = vsel %vm10073, %v10157, %v10133
    %v10159 = vsel %vm10072, %v7670, %v10156
    %v10160 = vsel %vm10072, 0, %v10158
    %v10161 = vcosq.f32.pop %v10159
    %v10162 = vsinq.f32.pop %v10159
    %vm10163 = vweird.f32 %v7670
    %v10164 = vadd.s32 %v10160, 3
    %v10165 = vand.u32 %v10164, 3
    %vm10166 = vcmp.lt.s32.totalorder %v10165, 2
    %vm10167 = vcmp.eq.s32.totalorder %v10165, 0
    %v10168 = vxor.u32 %v10162, 2147483648
    %v10169 = vsel %vm10167, %v10161, %v10168
    %vm10170 = vcmp.eq.s32.totalorder %v10165, 2
    %v10171 = vxor.u32 %v10161, 2147483648
    %v10172 = vsel %vm10170, %v10171, %v10162
    %v10173 = vsel %vm10166, %v10169, %v10172
    %v10174 = vsel %vm10163, nan, %v10173
    %v10175 = vand.u32 2147483647, %v7671
    %vm10176 = vcmp.le.f32.partialorder %v10175, 0.7853982
    %vm10177 = vcmp.lt.s32.totalorder %v7671, 0
    %v10178 = vand.u32 %v7671, 2139095040
    %v10179 = vshrl.u32 %v10178, 23
    %v10180 = vsub.s32 %v10179, 127
    %v10181 = vand.u32 2147483647, %v7671
    %v10182 = vand.u32 %v10181, 8388607
    %v10183 = vor.u32 %v10182, 8388608
    %v10184 = vsub.s32 0, %v10183
    %v10185 = vadd.s32 %v10180, 1
    %vm10186 = vcmp.gt.s32.totalorder %v10185, 0
    %v10187 = vsel %vm10186, %v10185, 0
    %v10188 = vshrl.u32 %v10187, 5
    %v10189 = vand.u32 %v10187, 31
    %v10190 = vsub.s32 32, %v10189
    %v10191 = vshrl.u32 683565275, %v10190
    %v10192 = vshll.u32 683565275, %v10189
    %v10193 = vshrl.u32 2475754826, %v10190
    %v10194 = vor.u32 %v10192, %v10193
    %v10195 = vshll.u32 2475754826, %v10189
    %v10196 = vshrl.u32 2131351028, %v10190
    %v10197 = vor.u32 %v10195, %v10196
    %v10198 = vshll.u32 2131351028, %v10189
    %v10199 = vshrl.u32 2102212464, %v10190
    %v10200 = vor.u32 %v10198, %v10199
    %v10201 = vshll.u32 2102212464, %v10189
    %v10202 = vshrl.u32 920167782, %v10190
    %v10203 = vor.u32 %v10201, %v10202
    %v10204 = vshll.u32 920167782, %v10189
    %v10205 = vshrl.u32 1326507024, %v10190
    %v10206 = vor.u32 %v10204, %v10205
    %vm10207 = vcmp.lt.s32.totalorder %v10188, 1
    %vm10208 = vcmp.lt.s32.totalorder %v10188, 2
    %vm10209 = vcmp.lt.s32.totalorder %v10188, 3
    %vm10210 = vcmp.lt.s32.totalorder %v10188, 4
    %v10211 = vsel %vm10207, %v10191, %v10194
    %v10212 = vsel %vm10210, %v10200, 2102212464
    %v10213 = vsel %vm10209, %v10197, %v10212
    %v10214 = vsel %vm10208, %v10211, %v10213
    %v10215 = vsel %vm10207, %v10194, %v10197
    %v10216 = vsel %vm10210, %v10203, 920167782
    %v10217 = vsel %vm10209, %v10200, %v10216
    %v10218 = vsel %vm10208, %v10215, %v10217
    %v10219 = vsel %vm10207, %v10197, %v10200
    %v10220 = vsel %vm10210, %v10206, 1326507024
    %v10221 = vsel %vm10209, %v10203, %v10220
    %v10222 = vsel %vm10208, %v10219, %v10221
    %v10223 = vshll.u32 %v10183, 8
    %v10224 = vmul.u32.u64.compose %v10223, %v10222
    %v10225 = vextract.low.u32 %v10224
    %v10226 = vextract.high.u32 %v10224
    %v10227 = vmul.u32.u64.compose %v10223, %v10218
    %v10228 = vextract.low.u32 %v10227
    %v10229 = vextract.high.u32 %v10227
    %v10230 = vmul.u32 %v10223, %v10214
    %v10231 = vadd.s32 %v10226, %v10228
    %vm10232 = vc.u32 %v10226, %v10228
    %v10233 = vadd.s32 %v10229, 1
    %v10234 = vsel %vm10232, %v10233, %v10229
    %v10235 = vadd.s32 %v10230, %v10234
    %v10236 = vadd.s32 %v10235, 536870912
    %v10237 = vshrl.u32 %v10236, 30
    %v10238 = vshll.u32 %v10237, 30
    %v10239 = vsub.s32 %v10235, %v10238
    %vm10240 = vcmp.lt.s32.totalorder %v10239, 0
    %v10241 = vsub.s32 0, %v10239
    %v10242 = vsel %vm10240, %v10241, %v10239
    %v10243 = vclz %v10242
    %v10244 = vsub.s32 %v10243, 2
    %vm10245 = vcmp.gt.s32.totalorder 0, %v10244
    %v10246 = vsel %vm10245, 0, %v10244
    %v10247 = vsub.s32 32, %v10246
    %v10248 = vshll.u32 %v10239, %v10246
    %v10249 = vshrl.u32 %v10231, %v10247
    %v10250 = vor.u32 %v10248, %v10249
    %v10251 = vsub.s32 4294967266, %v10246
    %v10252 = vadd.s32 %v10251, 127
    %v10253 = vshll.u32 %v10252, 23
    %v10254 = vor.u32 4788187, %v10253
    %v10255 = vand.u32 2147483647, %v10254
    %v10257 = vcvt.s32.f32 %v10250
    %v10258 = vmul.f32 %v10257, %v10255
    %v10259 = vxor.u32 %v10258, 2147483648
    %v10260 = vsel %vm10177, %v10259, %v10258
    %v10261 = vsub.s32 4, %v10237
    %v10262 = vsel %vm10177, %v10261, %v10237
    %v10263 = vsel %vm10176, %v7671, %v10260
    %v10264 = vsel %vm10176, 0, %v10262
    %v10265 = vcosq.f32.pop %v10263
    %v10266 = vsinq.f32.pop %v10263
    %vm10267 = vweird.f32 %v7671
    %v10268 = vadd.s32 %v10264, 3
    %v10269 = vand.u32 %v10268, 3
    %vm10270 = vcmp.lt.s32.totalorder %v10269, 2
    %vm10271 = vcmp.eq.s32.totalorder %v10269, 0
    %v10272 = vxor.u32 %v10266, 2147483648
    %v10273 = vsel %vm10271, %v10265, %v10272
    %vm10274 = vcmp.eq.s32.totalorder %v10269, 2
    %v10275 = vxor.u32 %v10265, 2147483648
    %v10276 = vsel %vm10274, %v10275, %v10266
    %v10277 = vsel %vm10270, %v10273, %v10276
    %v10278 = vsel %vm10267, nan, %v10277
    %v10279 = vand.u32 2147483647, %v7672
    %vm10280 = vcmp.le.f32.partialorder %v10279, 0.7853982
    %vm10281 = vcmp.lt.s32.totalorder %v7672, 0
    %v10282 = vand.u32 %v7672, 2139095040
    %v10283 = vshrl.u32 %v10282, 23
    %v10284 = vsub.s32 %v10283, 127
    %v10285 = vand.u32 2147483647, %v7672
    %v10286 = vand.u32 %v10285, 8388607
    %v10287 = vor.u32 %v10286, 8388608
    %v10288 = vsub.s32 0, %v10287
    %v10289 = vadd.s32 %v10284, 1
    %vm10290 = vcmp.gt.s32.totalorder %v10289, 0
    %v10291 = vsel %vm10290, %v10289, 0
    %v10292 = vshrl.u32 %v10291, 5
    %v10293 = vand.u32 %v10291, 31
    %v10294 = vsub.s32 32, %v10293
    %v10295 = vshrl.u32 683565275, %v10294
    %v10296 = vshll.u32 683565275, %v10293
    %v10297 = vshrl.u32 2475754826, %v10294
    %v10298 = vor.u32 %v10296, %v10297
    %v10299 = vshll.u32 2475754826, %v10293
    %v10300 = vshrl.u32 2131351028, %v10294
    %v10301 = vor.u32 %v10299, %v10300
    %v10302 = vshll.u32 2131351028, %v10293
    %v10303 = vshrl.u32 2102212464, %v10294
    %v10304 = vor.u32 %v10302, %v10303
    %v10305 = vshll.u32 2102212464, %v10293
    %v10306 = vshrl.u32 920167782, %v10294
    %v10307 = vor.u32 %v10305, %v10306
    %v10308 = vshll.u32 920167782, %v10293
    %v10309 = vshrl.u32 1326507024, %v10294
    %v10310 = vor.u32 %v10308, %v10309
    %vm10311 = vcmp.lt.s32.totalorder %v10292, 1
    %vm10312 = vcmp.lt.s32.totalorder %v10292, 2
    %vm10313 = vcmp.lt.s32.totalorder %v10292, 3
    %vm10314 = vcmp.lt.s32.totalorder %v10292, 4
    %v10315 = vsel %vm10311, %v10295, %v10298
    %v10316 = vsel %vm10314, %v10304, 2102212464
    %v10317 = vsel %vm10313, %v10301, %v10316
    %v10318 = vsel %vm10312, %v10315, %v10317
    %v10319 = vsel %vm10311, %v10298, %v10301
    %v10320 = vsel %vm10314, %v10307, 920167782
    %v10321 = vsel %vm10313, %v10304, %v10320
    %v10322 = vsel %vm10312, %v10319, %v10321
    %v10323 = vsel %vm10311, %v10301, %v10304
    %v10324 = vsel %vm10314, %v10310, 1326507024
    %v10325 = vsel %vm10313, %v10307, %v10324
    %v10326 = vsel %vm10312, %v10323, %v10325
    %v10327 = vshll.u32 %v10287, 8
    %v10328 = vmul.u32.u64.compose %v10327, %v10326
    %v10329 = vextract.low.u32 %v10328
    %v10330 = vextract.high.u32 %v10328
    %v10331 = vmul.u32.u64.compose %v10327, %v10322
    %v10332 = vextract.low.u32 %v10331
    %v10333 = vextract.high.u32 %v10331
    %v10334 = vmul.u32 %v10327, %v10318
    %v10335 = vadd.s32 %v10330, %v10332
    %vm10336 = vc.u32 %v10330, %v10332
    %v10337 = vadd.s32 %v10333, 1
    %v10338 = vsel %vm10336, %v10337, %v10333
    %v10339 = vadd.s32 %v10334, %v10338
    %v10340 = vadd.s32 %v10339, 536870912
    %v10341 = vshrl.u32 %v10340, 30
    %v10342 = vshll.u32 %v10341, 30
    %v10343 = vsub.s32 %v10339, %v10342
    %vm10344 = vcmp.lt.s32.totalorder %v10343, 0
    %v10345 = vsub.s32 0, %v10343
    %v10346 = vsel %vm10344, %v10345, %v10343
    %v10347 = vclz %v10346
    %v10348 = vsub.s32 %v10347, 2
    %vm10349 = vcmp.gt.s32.totalorder 0, %v10348
    %v10350 = vsel %vm10349, 0, %v10348
    %v10351 = vsub.s32 32, %v10350
    %v10352 = vshll.u32 %v10343, %v10350
    %v10353 = vshrl.u32 %v10335, %v10351
    %v10354 = vor.u32 %v10352, %v10353
    %v10355 = vsub.s32 4294967266, %v10350
    %v10356 = vadd.s32 %v10355, 127
    %v10357 = vshll.u32 %v10356, 23
    %v10358 = vor.u32 4788187, %v10357
    %v10359 = vand.u32 2147483647, %v10358
    %v10361 = vcvt.s32.f32 %v10354
    %v10362 = vmul.f32 %v10361, %v10359
    %v10363 = vxor.u32 %v10362, 2147483648
    %v10364 = vsel %vm10281, %v10363, %v10362
    %v10365 = vsub.s32 4, %v10341
    %v10366 = vsel %vm10281, %v10365, %v10341
    %v10367 = vsel %vm10280, %v7672, %v10364
    %v10368 = vsel %vm10280, 0, %v10366
    %v10369 = vcosq.f32.pop %v10367
    %v10370 = vsinq.f32.pop %v10367
    %vm10371 = vweird.f32 %v7672
    %v10372 = vadd.s32 %v10368, 3
    %v10373 = vand.u32 %v10372, 3
    %vm10374 = vcmp.lt.s32.totalorder %v10373, 2
    %vm10375 = vcmp.eq.s32.totalorder %v10373, 0
    %v10376 = vxor.u32 %v10370, 2147483648
    %v10377 = vsel %vm10375, %v10369, %v10376
    %vm10378 = vcmp.eq.s32.totalorder %v10373, 2
    %v10379 = vxor.u32 %v10369, 2147483648
    %v10380 = vsel %vm10378, %v10379, %v10370
    %v10381 = vsel %vm10374, %v10377, %v10380
    %v10382 = vsel %vm10371, nan, %v10381
    %v10383 = vand.u32 2147483647, %v7673
    %vm10384 = vcmp.le.f32.partialorder %v10383, 0.7853982
    %vm10385 = vcmp.lt.s32.totalorder %v7673, 0
    %v10386 = vand.u32 %v7673, 2139095040
    %v10387 = vshrl.u32 %v10386, 23
    %v10388 = vsub.s32 %v10387, 127
    %v10389 = vand.u32 2147483647, %v7673
    %v10390 = vand.u32 %v10389, 8388607
    %v10391 = vor.u32 %v10390, 8388608
    %v10392 = vsub.s32 0, %v10391
    %v10393 = vadd.s32 %v10388, 1
    %vm10394 = vcmp.gt.s32.totalorder %v10393, 0
    %v10395 = vsel %vm10394, %v10393, 0
    %v10396 = vshrl.u32 %v10395, 5
    %v10397 = vand.u32 %v10395, 31
    %v10398 = vsub.s32 32, %v10397
    %v10399 = vshrl.u32 683565275, %v10398
    %v10400 = vshll.u32 683565275, %v10397
    %v10401 = vshrl.u32 2475754826, %v10398
    %v10402 = vor.u32 %v10400, %v10401
    %v10403 = vshll.u32 2475754826, %v10397
    %v10404 = vshrl.u32 2131351028, %v10398
    %v10405 = vor.u32 %v10403, %v10404
    %v10406 = vshll.u32 2131351028, %v10397
    %v10407 = vshrl.u32 2102212464, %v10398
    %v10408 = vor.u32 %v10406, %v10407
    %v10409 = vshll.u32 2102212464, %v10397
    %v10410 = vshrl.u32 920167782, %v10398
    %v10411 = vor.u32 %v10409, %v10410
    %v10412 = vshll.u32 920167782, %v10397
    %v10413 = vshrl.u32 1326507024, %v10398
    %v10414 = vor.u32 %v10412, %v10413
    %vm10415 = vcmp.lt.s32.totalorder %v10396, 1
    %vm10416 = vcmp.lt.s32.totalorder %v10396, 2
    %vm10417 = vcmp.lt.s32.totalorder %v10396, 3
    %vm10418 = vcmp.lt.s32.totalorder %v10396, 4
    %v10419 = vsel %vm10415, %v10399, %v10402
    %v10420 = vsel %vm10418, %v10408, 2102212464
    %v10421 = vsel %vm10417, %v10405, %v10420
    %v10422 = vsel %vm10416, %v10419, %v10421
    %v10423 = vsel %vm10415, %v10402, %v10405
    %v10424 = vsel %vm10418, %v10411, 920167782
    %v10425 = vsel %vm10417, %v10408, %v10424
    %v10426 = vsel %vm10416, %v10423, %v10425
    %v10427 = vsel %vm10415, %v10405, %v10408
    %v10428 = vsel %vm10418, %v10414, 1326507024
    %v10429 = vsel %vm10417, %v10411, %v10428
    %v10430 = vsel %vm10416, %v10427, %v10429
    %v10431 = vshll.u32 %v10391, 8
    %v10432 = vmul.u32.u64.compose %v10431, %v10430
    %v10433 = vextract.low.u32 %v10432
    %v10434 = vextract.high.u32 %v10432
    %v10435 = vmul.u32.u64.compose %v10431, %v10426
    %v10436 = vextract.low.u32 %v10435
    %v10437 = vextract.high.u32 %v10435
    %v10438 = vmul.u32 %v10431, %v10422
    %v10439 = vadd.s32 %v10434, %v10436
    %vm10440 = vc.u32 %v10434, %v10436
    %v10441 = vadd.s32 %v10437, 1
    %v10442 = vsel %vm10440, %v10441, %v10437
    %v10443 = vadd.s32 %v10438, %v10442
    %v10444 = vadd.s32 %v10443, 536870912
    %v10445 = vshrl.u32 %v10444, 30
    %v10446 = vshll.u32 %v10445, 30
    %v10447 = vsub.s32 %v10443, %v10446
    %vm10448 = vcmp.lt.s32.totalorder %v10447, 0
    %v10449 = vsub.s32 0, %v10447
    %v10450 = vsel %vm10448, %v10449, %v10447
    %v10451 = vclz %v10450
    %v10452 = vsub.s32 %v10451, 2
    %vm10453 = vcmp.gt.s32.totalorder 0, %v10452
    %v10454 = vsel %vm10453, 0, %v10452
    %v10455 = vsub.s32 32, %v10454
    %v10456 = vshll.u32 %v10447, %v10454
    %v10457 = vshrl.u32 %v10439, %v10455
    %v10458 = vor.u32 %v10456, %v10457
    %v10459 = vsub.s32 4294967266, %v10454
    %v10460 = vadd.s32 %v10459, 127
    %v10461 = vshll.u32 %v10460, 23
    %v10462 = vor.u32 4788187, %v10461
    %v10463 = vand.u32 2147483647, %v10462
    %v10465 = vcvt.s32.f32 %v10458
    %v10466 = vmul.f32 %v10465, %v10463
    %v10467 = vxor.u32 %v10466, 2147483648
    %v10468 = vsel %vm10385, %v10467, %v10466
    %v10469 = vsub.s32 4, %v10445
    %v10470 = vsel %vm10385, %v10469, %v10445
    %v10471 = vsel %vm10384, %v7673, %v10468
    %v10472 = vsel %vm10384, 0, %v10470
    %v10473 = vcosq.f32.pop %v10471
    %v10474 = vsinq.f32.pop %v10471
    %vm10475 = vweird.f32 %v7673
    %v10476 = vadd.s32 %v10472, 3
    %v10477 = vand.u32 %v10476, 3
    %vm10478 = vcmp.lt.s32.totalorder %v10477, 2
    %vm10479 = vcmp.eq.s32.totalorder %v10477, 0
    %v10480 = vxor.u32 %v10474, 2147483648
    %v10481 = vsel %vm10479, %v10473, %v10480
    %vm10482 = vcmp.eq.s32.totalorder %v10477, 2
    %v10483 = vxor.u32 %v10473, 2147483648
    %v10484 = vsel %vm10482, %v10483, %v10474
    %v10485 = vsel %vm10478, %v10481, %v10484
    %v10486 = vsel %vm10475, nan, %v10485
    %v10487 = vand.u32 2147483647, %v7674
    %vm10488 = vcmp.le.f32.partialorder %v10487, 0.7853982
    %vm10489 = vcmp.lt.s32.totalorder %v7674, 0
    %v10490 = vand.u32 %v7674, 2139095040
    %v10491 = vshrl.u32 %v10490, 23
    %v10492 = vsub.s32 %v10491, 127
    %v10493 = vand.u32 2147483647, %v7674
    %v10494 = vand.u32 %v10493, 8388607
    %v10495 = vor.u32 %v10494, 8388608
    %v10496 = vsub.s32 0, %v10495
    %v10497 = vadd.s32 %v10492, 1
    %vm10498 = vcmp.gt.s32.totalorder %v10497, 0
    %v10499 = vsel %vm10498, %v10497, 0
    %v10500 = vshrl.u32 %v10499, 5
    %v10501 = vand.u32 %v10499, 31
    %v10502 = vsub.s32 32, %v10501
    %v10503 = vshrl.u32 683565275, %v10502
    %v10504 = vshll.u32 683565275, %v10501
    %v10505 = vshrl.u32 2475754826, %v10502
    %v10506 = vor.u32 %v10504, %v10505
    %v10507 = vshll.u32 2475754826, %v10501
    %v10508 = vshrl.u32 2131351028, %v10502
    %v10509 = vor.u32 %v10507, %v10508
    %v10510 = vshll.u32 2131351028, %v10501
    %v10511 = vshrl.u32 2102212464, %v10502
    %v10512 = vor.u32 %v10510, %v10511
    %v10513 = vshll.u32 2102212464, %v10501
    %v10514 = vshrl.u32 920167782, %v10502
    %v10515 = vor.u32 %v10513, %v10514
    %v10516 = vshll.u32 920167782, %v10501
    %v10517 = vshrl.u32 1326507024, %v10502
    %v10518 = vor.u32 %v10516, %v10517
    %vm10519 = vcmp.lt.s32.totalorder %v10500, 1
    %vm10520 = vcmp.lt.s32.totalorder %v10500, 2
    %vm10521 = vcmp.lt.s32.totalorder %v10500, 3
    %vm10522 = vcmp.lt.s32.totalorder %v10500, 4
    %v10523 = vsel %vm10519, %v10503, %v10506
    %v10524 = vsel %vm10522, %v10512, 2102212464
    %v10525 = vsel %vm10521, %v10509, %v10524
    %v10526 = vsel %vm10520, %v10523, %v10525
    %v10527 = vsel %vm10519, %v10506, %v10509
    %v10528 = vsel %vm10522, %v10515, 920167782
    %v10529 = vsel %vm10521, %v10512, %v10528
    %v10530 = vsel %vm10520, %v10527, %v10529
    %v10531 = vsel %vm10519, %v10509, %v10512
    %v10532 = vsel %vm10522, %v10518, 1326507024
    %v10533 = vsel %vm10521, %v10515, %v10532
    %v10534 = vsel %vm10520, %v10531, %v10533
    %v10535 = vshll.u32 %v10495, 8
    %v10536 = vmul.u32.u64.compose %v10535, %v10534
    %v10537 = vextract.low.u32 %v10536
    %v10538 = vextract.high.u32 %v10536
    %v10539 = vmul.u32.u64.compose %v10535, %v10530
    %v10540 = vextract.low.u32 %v10539
    %v10541 = vextract.high.u32 %v10539
    %v10542 = vmul.u32 %v10535, %v10526
    %v10543 = vadd.s32 %v10538, %v10540
    %vm10544 = vc.u32 %v10538, %v10540
    %v10545 = vadd.s32 %v10541, 1
    %v10546 = vsel %vm10544, %v10545, %v10541
    %v10547 = vadd.s32 %v10542, %v10546
    %v10548 = vadd.s32 %v10547, 536870912
    %v10549 = vshrl.u32 %v10548, 30
    %v10550 = vshll.u32 %v10549, 30
    %v10551 = vsub.s32 %v10547, %v10550
    %vm10552 = vcmp.lt.s32.totalorder %v10551, 0
    %v10553 = vsub.s32 0, %v10551
    %v10554 = vsel %vm10552, %v10553, %v10551
    %v10555 = vclz %v10554
    %v10556 = vsub.s32 %v10555, 2
    %vm10557 = vcmp.gt.s32.totalorder 0, %v10556
    %v10558 = vsel %vm10557, 0, %v10556
    %v10559 = vsub.s32 32, %v10558
    %v10560 = vshll.u32 %v10551, %v10558
    %v10561 = vshrl.u32 %v10543, %v10559
    %v10562 = vor.u32 %v10560, %v10561
    %v10563 = vsub.s32 4294967266, %v10558
    %v10564 = vadd.s32 %v10563, 127
    %v10565 = vshll.u32 %v10564, 23
    %v10566 = vor.u32 4788187, %v10565
    %v10567 = vand.u32 2147483647, %v10566
    %v10569 = vcvt.s32.f32 %v10562
    %v10570 = vmul.f32 %v10569, %v10567
    %v10571 = vxor.u32 %v10570, 2147483648
    %v10572 = vsel %vm10489, %v10571, %v10570
    %v10573 = vsub.s32 4, %v10549
    %v10574 = vsel %vm10489, %v10573, %v10549
    %v10575 = vsel %vm10488, %v7674, %v10572
    %v10576 = vsel %vm10488, 0, %v10574
    %v10577 = vcosq.f32.pop %v10575
    %v10578 = vsinq.f32.pop %v10575
    %vm10579 = vweird.f32 %v7674
    %v10580 = vadd.s32 %v10576, 3
    %v10581 = vand.u32 %v10580, 3
    %vm10582 = vcmp.lt.s32.totalorder %v10581, 2
    %vm10583 = vcmp.eq.s32.totalorder %v10581, 0
    %v10584 = vxor.u32 %v10578, 2147483648
    %v10585 = vsel %vm10583, %v10577, %v10584
    %vm10586 = vcmp.eq.s32.totalorder %v10581, 2
    %v10587 = vxor.u32 %v10577, 2147483648
    %v10588 = vsel %vm10586, %v10587, %v10578
    %v10589 = vsel %vm10582, %v10585, %v10588
    %v10590 = vsel %vm10579, nan, %v10589
    %v10591 = vand.u32 2147483647, %v7675
    %vm10592 = vcmp.le.f32.partialorder %v10591, 0.7853982
    %vm10593 = vcmp.lt.s32.totalorder %v7675, 0
    %v10594 = vand.u32 %v7675, 2139095040
    %v10595 = vshrl.u32 %v10594, 23
    %v10596 = vsub.s32 %v10595, 127
    %v10597 = vand.u32 2147483647, %v7675
    %v10598 = vand.u32 %v10597, 8388607
    %v10599 = vor.u32 %v10598, 8388608
    %v10600 = vsub.s32 0, %v10599
    %v10601 = vadd.s32 %v10596, 1
    %vm10602 = vcmp.gt.s32.totalorder %v10601, 0
    %v10603 = vsel %vm10602, %v10601, 0
    %v10604 = vshrl.u32 %v10603, 5
    %v10605 = vand.u32 %v10603, 31
    %v10606 = vsub.s32 32, %v10605
    %v10607 = vshrl.u32 683565275, %v10606
    %v10608 = vshll.u32 683565275, %v10605
    %v10609 = vshrl.u32 2475754826, %v10606
    %v10610 = vor.u32 %v10608, %v10609
    %v10611 = vshll.u32 2475754826, %v10605
    %v10612 = vshrl.u32 2131351028, %v10606
    %v10613 = vor.u32 %v10611, %v10612
    %v10614 = vshll.u32 2131351028, %v10605
    %v10615 = vshrl.u32 2102212464, %v10606
    %v10616 = vor.u32 %v10614, %v10615
    %v10617 = vshll.u32 2102212464, %v10605
    %v10618 = vshrl.u32 920167782, %v10606
    %v10619 = vor.u32 %v10617, %v10618
    %v10620 = vshll.u32 920167782, %v10605
    %v10621 = vshrl.u32 1326507024, %v10606
    %v10622 = vor.u32 %v10620, %v10621
    %vm10623 = vcmp.lt.s32.totalorder %v10604, 1
    %vm10624 = vcmp.lt.s32.totalorder %v10604, 2
    %vm10625 = vcmp.lt.s32.totalorder %v10604, 3
    %vm10626 = vcmp.lt.s32.totalorder %v10604, 4
    %v10627 = vsel %vm10623, %v10607, %v10610
    %v10628 = vsel %vm10626, %v10616, 2102212464
    %v10629 = vsel %vm10625, %v10613, %v10628
    %v10630 = vsel %vm10624, %v10627, %v10629
    %v10631 = vsel %vm10623, %v10610, %v10613
    %v10632 = vsel %vm10626, %v10619, 920167782
    %v10633 = vsel %vm10625, %v10616, %v10632
    %v10634 = vsel %vm10624, %v10631, %v10633
    %v10635 = vsel %vm10623, %v10613, %v10616
    %v10636 = vsel %vm10626, %v10622, 1326507024
    %v10637 = vsel %vm10625, %v10619, %v10636
    %v10638 = vsel %vm10624, %v10635, %v10637
    %v10639 = vshll.u32 %v10599, 8
    %v10640 = vmul.u32.u64.compose %v10639, %v10638
    %v10641 = vextract.low.u32 %v10640
    %v10642 = vextract.high.u32 %v10640
    %v10643 = vmul.u32.u64.compose %v10639, %v10634
    %v10644 = vextract.low.u32 %v10643
    %v10645 = vextract.high.u32 %v10643
    %v10646 = vmul.u32 %v10639, %v10630
    %v10647 = vadd.s32 %v10642, %v10644
    %vm10648 = vc.u32 %v10642, %v10644
    %v10649 = vadd.s32 %v10645, 1
    %v10650 = vsel %vm10648, %v10649, %v10645
    %v10651 = vadd.s32 %v10646, %v10650
    %v10652 = vadd.s32 %v10651, 536870912
    %v10653 = vshrl.u32 %v10652, 30
    %v10654 = vshll.u32 %v10653, 30
    %v10655 = vsub.s32 %v10651, %v10654
    %vm10656 = vcmp.lt.s32.totalorder %v10655, 0
    %v10657 = vsub.s32 0, %v10655
    %v10658 = vsel %vm10656, %v10657, %v10655
    %v10659 = vclz %v10658
    %v10660 = vsub.s32 %v10659, 2
    %vm10661 = vcmp.gt.s32.totalorder 0, %v10660
    %v10662 = vsel %vm10661, 0, %v10660
    %v10663 = vsub.s32 32, %v10662
    %v10664 = vshll.u32 %v10655, %v10662
    %v10665 = vshrl.u32 %v10647, %v10663
    %v10666 = vor.u32 %v10664, %v10665
    %v10667 = vsub.s32 4294967266, %v10662
    %v10668 = vadd.s32 %v10667, 127
    %v10669 = vshll.u32 %v10668, 23
    %v10670 = vor.u32 4788187, %v10669
    %v10671 = vand.u32 2147483647, %v10670
    %v10673 = vcvt.s32.f32 %v10666
    %v10674 = vmul.f32 %v10673, %v10671
    %v10675 = vxor.u32 %v10674, 2147483648
    %v10676 = vsel %vm10593, %v10675, %v10674
    %v10677 = vsub.s32 4, %v10653
    %v10678 = vsel %vm10593, %v10677, %v10653
    %v10679 = vsel %vm10592, %v7675, %v10676
    %v10680 = vsel %vm10592, 0, %v10678
    %v10681 = vcosq.f32.pop %v10679
    %v10682 = vsinq.f32.pop %v10679
    %vm10683 = vweird.f32 %v7675
    %v10684 = vadd.s32 %v10680, 3
    %v10685 = vand.u32 %v10684, 3
    %vm10686 = vcmp.lt.s32.totalorder %v10685, 2
    %vm10687 = vcmp.eq.s32.totalorder %v10685, 0
    %v10688 = vxor.u32 %v10682, 2147483648
    %v10689 = vsel %vm10687, %v10681, %v10688
    %vm10690 = vcmp.eq.s32.totalorder %v10685, 2
    %v10691 = vxor.u32 %v10681, 2147483648
    %v10692 = vsel %vm10690, %v10691, %v10682
    %v10693 = vsel %vm10686, %v10689, %v10692
    %v10694 = vsel %vm10683, nan, %v10693
    %v10695 = vand.u32 2147483647, %v7676
    %vm10696 = vcmp.le.f32.partialorder %v10695, 0.7853982
    %vm10697 = vcmp.lt.s32.totalorder %v7676, 0
    %v10698 = vand.u32 %v7676, 2139095040
    %v10699 = vshrl.u32 %v10698, 23
    %v10700 = vsub.s32 %v10699, 127
    %v10701 = vand.u32 2147483647, %v7676
    %v10702 = vand.u32 %v10701, 8388607
    %v10703 = vor.u32 %v10702, 8388608
    %v10704 = vsub.s32 0, %v10703
    %v10705 = vadd.s32 %v10700, 1
    %vm10706 = vcmp.gt.s32.totalorder %v10705, 0
    %v10707 = vsel %vm10706, %v10705, 0
    %v10708 = vshrl.u32 %v10707, 5
    %v10709 = vand.u32 %v10707, 31
    %v10710 = vsub.s32 32, %v10709
    %v10711 = vshrl.u32 683565275, %v10710
    %v10712 = vshll.u32 683565275, %v10709
    %v10713 = vshrl.u32 2475754826, %v10710
    %v10714 = vor.u32 %v10712, %v10713
    %v10715 = vshll.u32 2475754826, %v10709
    %v10716 = vshrl.u32 2131351028, %v10710
    %v10717 = vor.u32 %v10715, %v10716
    %v10718 = vshll.u32 2131351028, %v10709
    %v10719 = vshrl.u32 2102212464, %v10710
    %v10720 = vor.u32 %v10718, %v10719
    %v10721 = vshll.u32 2102212464, %v10709
    %v10722 = vshrl.u32 920167782, %v10710
    %v10723 = vor.u32 %v10721, %v10722
    %v10724 = vshll.u32 920167782, %v10709
    %v10725 = vshrl.u32 1326507024, %v10710
    %v10726 = vor.u32 %v10724, %v10725
    %vm10727 = vcmp.lt.s32.totalorder %v10708, 1
    %vm10728 = vcmp.lt.s32.totalorder %v10708, 2
    %vm10729 = vcmp.lt.s32.totalorder %v10708, 3
    %vm10730 = vcmp.lt.s32.totalorder %v10708, 4
    %v10731 = vsel %vm10727, %v10711, %v10714
    %v10732 = vsel %vm10730, %v10720, 2102212464
    %v10733 = vsel %vm10729, %v10717, %v10732
    %v10734 = vsel %vm10728, %v10731, %v10733
    %v10735 = vsel %vm10727, %v10714, %v10717
    %v10736 = vsel %vm10730, %v10723, 920167782
    %v10737 = vsel %vm10729, %v10720, %v10736
    %v10738 = vsel %vm10728, %v10735, %v10737
    %v10739 = vsel %vm10727, %v10717, %v10720
    %v10740 = vsel %vm10730, %v10726, 1326507024
    %v10741 = vsel %vm10729, %v10723, %v10740
    %v10742 = vsel %vm10728, %v10739, %v10741
    %v10743 = vshll.u32 %v10703, 8
    %v10744 = vmul.u32.u64.compose %v10743, %v10742
    %v10745 = vextract.low.u32 %v10744
    %v10746 = vextract.high.u32 %v10744
    %v10747 = vmul.u32.u64.compose %v10743, %v10738
    %v10748 = vextract.low.u32 %v10747
    %v10749 = vextract.high.u32 %v10747
    %v10750 = vmul.u32 %v10743, %v10734
    %v10751 = vadd.s32 %v10746, %v10748
    %vm10752 = vc.u32 %v10746, %v10748
    %v10753 = vadd.s32 %v10749, 1
    %v10754 = vsel %vm10752, %v10753, %v10749
    %v10755 = vadd.s32 %v10750, %v10754
    %v10756 = vadd.s32 %v10755, 536870912
    %v10757 = vshrl.u32 %v10756, 30
    %v10758 = vshll.u32 %v10757, 30
    %v10759 = vsub.s32 %v10755, %v10758
    %vm10760 = vcmp.lt.s32.totalorder %v10759, 0
    %v10761 = vsub.s32 0, %v10759
    %v10762 = vsel %vm10760, %v10761, %v10759
    %v10763 = vclz %v10762
    %v10764 = vsub.s32 %v10763, 2
    %vm10765 = vcmp.gt.s32.totalorder 0, %v10764
    %v10766 = vsel %vm10765, 0, %v10764
    %v10767 = vsub.s32 32, %v10766
    %v10768 = vshll.u32 %v10759, %v10766
    %v10769 = vshrl.u32 %v10751, %v10767
    %v10770 = vor.u32 %v10768, %v10769
    %v10771 = vsub.s32 4294967266, %v10766
    %v10772 = vadd.s32 %v10771, 127
    %v10773 = vshll.u32 %v10772, 23
    %v10774 = vor.u32 4788187, %v10773
    %v10775 = vand.u32 2147483647, %v10774
    %v10777 = vcvt.s32.f32 %v10770
    %v10778 = vmul.f32 %v10777, %v10775
    %v10779 = vxor.u32 %v10778, 2147483648
    %v10780 = vsel %vm10697, %v10779, %v10778
    %v10781 = vsub.s32 4, %v10757
    %v10782 = vsel %vm10697, %v10781, %v10757
    %v10783 = vsel %vm10696, %v7676, %v10780
    %v10784 = vsel %vm10696, 0, %v10782
    %v10785 = vcosq.f32.pop %v10783
    %v10786 = vsinq.f32.pop %v10783
    %vm10787 = vweird.f32 %v7676
    %v10788 = vadd.s32 %v10784, 3
    %v10789 = vand.u32 %v10788, 3
    %vm10790 = vcmp.lt.s32.totalorder %v10789, 2
    %vm10791 = vcmp.eq.s32.totalorder %v10789, 0
    %v10792 = vxor.u32 %v10786, 2147483648
    %v10793 = vsel %vm10791, %v10785, %v10792
    %vm10794 = vcmp.eq.s32.totalorder %v10789, 2
    %v10795 = vxor.u32 %v10785, 2147483648
    %v10796 = vsel %vm10794, %v10795, %v10786
    %v10797 = vsel %vm10790, %v10793, %v10796
    %v10798 = vsel %vm10787, nan, %v10797
    %v10799 = vand.u32 2147483647, %v7677
    %vm10800 = vcmp.le.f32.partialorder %v10799, 0.7853982
    %vm10801 = vcmp.lt.s32.totalorder %v7677, 0
    %v10802 = vand.u32 %v7677, 2139095040
    %v10803 = vshrl.u32 %v10802, 23
    %v10804 = vsub.s32 %v10803, 127
    %v10805 = vand.u32 2147483647, %v7677
    %v10806 = vand.u32 %v10805, 8388607
    %v10807 = vor.u32 %v10806, 8388608
    %v10808 = vsub.s32 0, %v10807
    %v10809 = vadd.s32 %v10804, 1
    %vm10810 = vcmp.gt.s32.totalorder %v10809, 0
    %v10811 = vsel %vm10810, %v10809, 0
    %v10812 = vshrl.u32 %v10811, 5
    %v10813 = vand.u32 %v10811, 31
    %v10814 = vsub.s32 32, %v10813
    %v10815 = vshrl.u32 683565275, %v10814
    %v10816 = vshll.u32 683565275, %v10813
    %v10817 = vshrl.u32 2475754826, %v10814
    %v10818 = vor.u32 %v10816, %v10817
    %v10819 = vshll.u32 2475754826, %v10813
    %v10820 = vshrl.u32 2131351028, %v10814
    %v10821 = vor.u32 %v10819, %v10820
    %v10822 = vshll.u32 2131351028, %v10813
    %v10823 = vshrl.u32 2102212464, %v10814
    %v10824 = vor.u32 %v10822, %v10823
    %v10825 = vshll.u32 2102212464, %v10813
    %v10826 = vshrl.u32 920167782, %v10814
    %v10827 = vor.u32 %v10825, %v10826
    %v10828 = vshll.u32 920167782, %v10813
    %v10829 = vshrl.u32 1326507024, %v10814
    %v10830 = vor.u32 %v10828, %v10829
    %vm10831 = vcmp.lt.s32.totalorder %v10812, 1
    %vm10832 = vcmp.lt.s32.totalorder %v10812, 2
    %vm10833 = vcmp.lt.s32.totalorder %v10812, 3
    %vm10834 = vcmp.lt.s32.totalorder %v10812, 4
    %v10835 = vsel %vm10831, %v10815, %v10818
    %v10836 = vsel %vm10834, %v10824, 2102212464
    %v10837 = vsel %vm10833, %v10821, %v10836
    %v10838 = vsel %vm10832, %v10835, %v10837
    %v10839 = vsel %vm10831, %v10818, %v10821
    %v10840 = vsel %vm10834, %v10827, 920167782
    %v10841 = vsel %vm10833, %v10824, %v10840
    %v10842 = vsel %vm10832, %v10839, %v10841
    %v10843 = vsel %vm10831, %v10821, %v10824
    %v10844 = vsel %vm10834, %v10830, 1326507024
    %v10845 = vsel %vm10833, %v10827, %v10844
    %v10846 = vsel %vm10832, %v10843, %v10845
    %v10847 = vshll.u32 %v10807, 8
    %v10848 = vmul.u32.u64.compose %v10847, %v10846
    %v10849 = vextract.low.u32 %v10848
    %v10850 = vextract.high.u32 %v10848
    %v10851 = vmul.u32.u64.compose %v10847, %v10842
    %v10852 = vextract.low.u32 %v10851
    %v10853 = vextract.high.u32 %v10851
    %v10854 = vmul.u32 %v10847, %v10838
    %v10855 = vadd.s32 %v10850, %v10852
    %vm10856 = vc.u32 %v10850, %v10852
    %v10857 = vadd.s32 %v10853, 1
    %v10858 = vsel %vm10856, %v10857, %v10853
    %v10859 = vadd.s32 %v10854, %v10858
    %v10860 = vadd.s32 %v10859, 536870912
    %v10861 = vshrl.u32 %v10860, 30
    %v10862 = vshll.u32 %v10861, 30
    %v10863 = vsub.s32 %v10859, %v10862
    %vm10864 = vcmp.lt.s32.totalorder %v10863, 0
    %v10865 = vsub.s32 0, %v10863
    %v10866 = vsel %vm10864, %v10865, %v10863
    %v10867 = vclz %v10866
    %v10868 = vsub.s32 %v10867, 2
    %vm10869 = vcmp.gt.s32.totalorder 0, %v10868
    %v10870 = vsel %vm10869, 0, %v10868
    %v10871 = vsub.s32 32, %v10870
    %v10872 = vshll.u32 %v10863, %v10870
    %v10873 = vshrl.u32 %v10855, %v10871
    %v10874 = vor.u32 %v10872, %v10873
    %v10875 = vsub.s32 4294967266, %v10870
    %v10876 = vadd.s32 %v10875, 127
    %v10877 = vshll.u32 %v10876, 23
    %v10878 = vor.u32 4788187, %v10877
    %v10879 = vand.u32 2147483647, %v10878
    %v10881 = vcvt.s32.f32 %v10874
    %v10882 = vmul.f32 %v10881, %v10879
    %v10883 = vxor.u32 %v10882, 2147483648
    %v10884 = vsel %vm10801, %v10883, %v10882
    %v10885 = vsub.s32 4, %v10861
    %v10886 = vsel %vm10801, %v10885, %v10861
    %v10887 = vsel %vm10800, %v7677, %v10884
    %v10888 = vsel %vm10800, 0, %v10886
    %v10889 = vcosq.f32.pop %v10887
    %v10890 = vsinq.f32.pop %v10887
    %vm10891 = vweird.f32 %v7677
    %v10892 = vadd.s32 %v10888, 3
    %v10893 = vand.u32 %v10892, 3
    %vm10894 = vcmp.lt.s32.totalorder %v10893, 2
    %vm10895 = vcmp.eq.s32.totalorder %v10893, 0
    %v10896 = vxor.u32 %v10890, 2147483648
    %v10897 = vsel %vm10895, %v10889, %v10896
    %vm10898 = vcmp.eq.s32.totalorder %v10893, 2
    %v10899 = vxor.u32 %v10889, 2147483648
    %v10900 = vsel %vm10898, %v10899, %v10890
    %v10901 = vsel %vm10894, %v10897, %v10900
    %v10902 = vsel %vm10891, nan, %v10901
    %v10903 = vand.u32 2147483647, %v7678
    %vm10904 = vcmp.le.f32.partialorder %v10903, 0.7853982
    %vm10905 = vcmp.lt.s32.totalorder %v7678, 0
    %v10906 = vand.u32 %v7678, 2139095040
    %v10907 = vshrl.u32 %v10906, 23
    %v10908 = vsub.s32 %v10907, 127
    %v10909 = vand.u32 2147483647, %v7678
    %v10910 = vand.u32 %v10909, 8388607
    %v10911 = vor.u32 %v10910, 8388608
    %v10912 = vsub.s32 0, %v10911
    %v10913 = vadd.s32 %v10908, 1
    %vm10914 = vcmp.gt.s32.totalorder %v10913, 0
    %v10915 = vsel %vm10914, %v10913, 0
    %v10916 = vshrl.u32 %v10915, 5
    %v10917 = vand.u32 %v10915, 31
    %v10918 = vsub.s32 32, %v10917
    %v10919 = vshrl.u32 683565275, %v10918
    %v10920 = vshll.u32 683565275, %v10917
    %v10921 = vshrl.u32 2475754826, %v10918
    %v10922 = vor.u32 %v10920, %v10921
    %v10923 = vshll.u32 2475754826, %v10917
    %v10924 = vshrl.u32 2131351028, %v10918
    %v10925 = vor.u32 %v10923, %v10924
    %v10926 = vshll.u32 2131351028, %v10917
    %v10927 = vshrl.u32 2102212464, %v10918
    %v10928 = vor.u32 %v10926, %v10927
    %v10929 = vshll.u32 2102212464, %v10917
    %v10930 = vshrl.u32 920167782, %v10918
    %v10931 = vor.u32 %v10929, %v10930
    %v10932 = vshll.u32 920167782, %v10917
    %v10933 = vshrl.u32 1326507024, %v10918
    %v10934 = vor.u32 %v10932, %v10933
    %vm10935 = vcmp.lt.s32.totalorder %v10916, 1
    %vm10936 = vcmp.lt.s32.totalorder %v10916, 2
    %vm10937 = vcmp.lt.s32.totalorder %v10916, 3
    %vm10938 = vcmp.lt.s32.totalorder %v10916, 4
    %v10939 = vsel %vm10935, %v10919, %v10922
    %v10940 = vsel %vm10938, %v10928, 2102212464
    %v10941 = vsel %vm10937, %v10925, %v10940
    %v10942 = vsel %vm10936, %v10939, %v10941
    %v10943 = vsel %vm10935, %v10922, %v10925
    %v10944 = vsel %vm10938, %v10931, 920167782
    %v10945 = vsel %vm10937, %v10928, %v10944
    %v10946 = vsel %vm10936, %v10943, %v10945
    %v10947 = vsel %vm10935, %v10925, %v10928
    %v10948 = vsel %vm10938, %v10934, 1326507024
    %v10949 = vsel %vm10937, %v10931, %v10948
    %v10950 = vsel %vm10936, %v10947, %v10949
    %v10951 = vshll.u32 %v10911, 8
    %v10952 = vmul.u32.u64.compose %v10951, %v10950
    %v10953 = vextract.low.u32 %v10952
    %v10954 = vextract.high.u32 %v10952
    %v10955 = vmul.u32.u64.compose %v10951, %v10946
    %v10956 = vextract.low.u32 %v10955
    %v10957 = vextract.high.u32 %v10955
    %v10958 = vmul.u32 %v10951, %v10942
    %v10959 = vadd.s32 %v10954, %v10956
    %vm10960 = vc.u32 %v10954, %v10956
    %v10961 = vadd.s32 %v10957, 1
    %v10962 = vsel %vm10960, %v10961, %v10957
    %v10963 = vadd.s32 %v10958, %v10962
    %v10964 = vadd.s32 %v10963, 536870912
    %v10965 = vshrl.u32 %v10964, 30
    %v10966 = vshll.u32 %v10965, 30
    %v10967 = vsub.s32 %v10963, %v10966
    %vm10968 = vcmp.lt.s32.totalorder %v10967, 0
    %v10969 = vsub.s32 0, %v10967
    %v10970 = vsel %vm10968, %v10969, %v10967
    %v10971 = vclz %v10970
    %v10972 = vsub.s32 %v10971, 2
    %vm10973 = vcmp.gt.s32.totalorder 0, %v10972
    %v10974 = vsel %vm10973, 0, %v10972
    %v10975 = vsub.s32 32, %v10974
    %v10976 = vshll.u32 %v10967, %v10974
    %v10977 = vshrl.u32 %v10959, %v10975
    %v10978 = vor.u32 %v10976, %v10977
    %v10979 = vsub.s32 4294967266, %v10974
    %v10980 = vadd.s32 %v10979, 127
    %v10981 = vshll.u32 %v10980, 23
    %v10982 = vor.u32 4788187, %v10981
    %v10983 = vand.u32 2147483647, %v10982
    %v10985 = vcvt.s32.f32 %v10978
    %v10986 = vmul.f32 %v10985, %v10983
    %v10987 = vxor.u32 %v10986, 2147483648
    %v10988 = vsel %vm10905, %v10987, %v10986
    %v10989 = vsub.s32 4, %v10965
    %v10990 = vsel %vm10905, %v10989, %v10965
    %v10991 = vsel %vm10904, %v7678, %v10988
    %v10992 = vsel %vm10904, 0, %v10990
    %v10993 = vcosq.f32.pop %v10991
    %v10994 = vsinq.f32.pop %v10991
    %vm10995 = vweird.f32 %v7678
    %v10996 = vadd.s32 %v10992, 3
    %v10997 = vand.u32 %v10996, 3
    %vm10998 = vcmp.lt.s32.totalorder %v10997, 2
    %vm10999 = vcmp.eq.s32.totalorder %v10997, 0
    %v11000 = vxor.u32 %v10994, 2147483648
    %v11001 = vsel %vm10999, %v10993, %v11000
    %vm11002 = vcmp.eq.s32.totalorder %v10997, 2
    %v11003 = vxor.u32 %v10993, 2147483648
    %v11004 = vsel %vm11002, %v11003, %v10994
    %v11005 = vsel %vm10998, %v11001, %v11004
    %v11006 = vsel %vm10995, nan, %v11005
    %v11007 = vld [vmem:[#allocation6] sm:$0xff]
    %v11008 = vld [vmem:[#allocation6 + $0x8] sm:$0xff]
    %v11009 = vld [vmem:[#allocation6 + $0x10] sm:$0xff]
    %v11010 = vld [vmem:[#allocation6 + $0x18] sm:$0xff]
    %v11011 = vld [vmem:[#allocation6 + $0x20] sm:$0xff]
    %v11012 = vld [vmem:[#allocation6 + $0x28] sm:$0xff]
    %v11013 = vld [vmem:[#allocation6 + $0x30] sm:$0xff]
    %v11014 = vld [vmem:[#allocation6 + $0x38] sm:$0xff]
    %v11015 = vld [vmem:[#allocation6 + $0x40] sm:$0xff]
    %v11016 = vld [vmem:[#allocation6 + $0x48] sm:$0xff]
    %v11017 = vld [vmem:[#allocation6 + $0x50] sm:$0xff]
    %v11018 = vld [vmem:[#allocation6 + $0x58] sm:$0xff]
    %v11019 = vld [vmem:[#allocation6 + $0x60] sm:$0xff]
    %v11020 = vld [vmem:[#allocation6 + $0x68] sm:$0xff]
    %v11021 = vld [vmem:[#allocation6 + $0x70] sm:$0xff]
    %v11022 = vld [vmem:[#allocation6 + $0x78] sm:$0xff]
    %v11023 = vld [vmem:[%s7] sm:$0x1]
    %v11025 = vlaneseq
    %v11026 = vshrl.u32 %v11025, 7
    %v11027 = vsub.s32 0, %v11026
    %v11028 = vrot.slane %v11023, %v11027
    %11030 = vmatprep.subr.mxu0 0.0
    %11031 = vmatpush1.msra.mxu0 %v11007
    %11032 = vmatprep.subr.mxu0 0.0
    %11033 = vmatpush1.msra.mxu0 %v11008
    %11034 = vmatprep.subr.mxu0 0.0
    %11035 = vmatpush1.msra.mxu0 %v11009
    %11036 = vmatprep.subr.mxu0 0.0
    %11037 = vmatpush1.msra.mxu0 %v11010
    %11038 = vmatprep.subr.mxu0 0.0
    %11039 = vmatpush1.msra.mxu0 %v11011
    %11040 = vmatprep.subr.mxu0 0.0
    %11041 = vmatpush1.msra.mxu0 %v11012
    %11042 = vmatprep.subr.mxu0 0.0
    %11043 = vmatpush1.msra.mxu0 %v11013
    %11044 = vmatprep.subr.mxu0 0.0
    %11045 = vmatpush1.msra.mxu0 %v11014
    %11046 = vmatprep.subr.mxu0 0.0
    %11047 = vmatpush1.msra.mxu0 %v11015
    %11048 = vmatprep.subr.mxu0 0.0
    %11049 = vmatpush1.msra.mxu0 %v11016
    %11050 = vmatprep.subr.mxu0 0.0
    %11051 = vmatpush1.msra.mxu0 %v11017
    %11052 = vmatprep.subr.mxu0 0.0
    %11053 = vmatpush1.msra.mxu0 %v11018
    %11054 = vmatprep.subr.mxu0 0.0
    %11055 = vmatpush1.msra.mxu0 %v11019
    %11056 = vmatprep.subr.mxu0 0.0
    %11057 = vmatpush1.msra.mxu0 %v11020
    %11058 = vmatprep.subr.mxu0 0.0
    %11059 = vmatpush1.msra.mxu0 %v11021
    %11060 = vmatprep.subr.mxu0 0.0
    %11061 = vmatpush1.msra.mxu0 %v11022
    %11062 = vmatprep.subr.mxu0 0.0
    %11063 = vmatpush1.msra.mxu0 0.0
    %11064 = vmatprep.subr.mxu0 0.0
    %11065 = vmatpush1.msra.mxu0 0.0
    %11066 = vmatprep.subr.mxu0 0.0
    %11067 = vmatpush1.msra.mxu0 0.0
    %11068 = vmatprep.subr.mxu0 0.0
    %11069 = vmatpush1.msra.mxu0 0.0
    %11070 = vmatprep.subr.mxu0 0.0
    %11071 = vmatpush1.msra.mxu0 0.0
    %11072 = vmatprep.subr.mxu0 0.0
    %11073 = vmatpush1.msra.mxu0 0.0
    %11074 = vmatprep.subr.mxu0 0.0
    %11075 = vmatpush1.msra.mxu0 0.0
    %11076 = vmatprep.subr.mxu0 0.0
    %11077 = vmatpush1.msra.mxu0 0.0
    %11078 = vmatprep.subr.mxu0 0.0
    %11079 = vmatpush1.msra.mxu0 0.0
    %11080 = vmatprep.subr.mxu0 0.0
    %11081 = vmatpush1.msra.mxu0 0.0
    %11082 = vmatprep.subr.mxu0 0.0
    %11083 = vmatpush1.msra.mxu0 0.0
    %11084 = vmatprep.subr.mxu0 0.0
    %11085 = vmatpush1.msra.mxu0 0.0
    %11086 = vmatprep.subr.mxu0 0.0
    %11087 = vmatpush1.msra.mxu0 0.0
    %11088 = vmatprep.subr.mxu0 0.0
    %11089 = vmatpush1.msra.mxu0 0.0
    %11090 = vmatprep.subr.mxu0 0.0
    %11091 = vmatpush1.msra.mxu0 0.0
    %11092 = vmatprep.subr.mxu0 0.0
    %11093 = vmatpush1.msra.mxu0 0.0
    %11094 = vmatprep.mubr.f32.mxu0 0.0
    %11095 = vmatmul.mubr.f32.gmra.mrb[0].mxu0 %v7782
    %v11096 = vpop.f32.mrb[0].mxu0
    %v11097 = vadd.f32 %v11028, %v11096
    %v11098 = vpop.f32.mrb[0].mxu0
    %11099 = vmatprep.mubr.f32.mxu0 0.0
    %11100 = vmatmul.mubr.f32.gmra.mrb[0].mxu0 %v7886
    %v11101 = vpop.f32.mrb[0].mxu0
    %v11102 = vadd.f32 %v11028, %v11101
    %v11103 = vpop.f32.mrb[0].mxu0
    %11104 = vmatprep.mubr.f32.mxu0 0.0
    %11105 = vmatmul.mubr.f32.gmra.mrb[0].mxu0 %v7990
    %v11106 = vpop.f32.mrb[0].mxu0
    %v11107 = vadd.f32 %v11028, %v11106
    %v11108 = vpop.f32.mrb[0].mxu0
    %11109 = vmatprep.mubr.f32.mxu0 0.0
    %11110 = vmatmul.mubr.f32.gmra.mrb[0].mxu0 %v8094
    %v11111 = vpop.f32.mrb[0].mxu0
    %v11112 = vadd.f32 %v11028, %v11111
    %v11113 = vpop.f32.mrb[0].mxu0
    %11114 = vmatprep.mubr.f32.mxu0 0.0
    %11115 = vmatmul.mubr.f32.gmra.mrb[0].mxu0 %v8198
    %v11116 = vpop.f32.mrb[0].mxu0
    %v11117 = vadd.f32 %v11028, %v11116
    %v11118 = vpop.f32.mrb[0].mxu0
    %11119 = vmatprep.mubr.f32.mxu0 0.0
    %11120 = vmatmul.mubr.f32.gmra.mrb[0].mxu0 %v8302
    %v11121 = vpop.f32.mrb[0].mxu0
    %v11122 = vadd.f32 %v11028, %v11121
    %v11123 = vpop.f32.mrb[0].mxu0
    %11124 = vmatprep.mubr.f32.mxu0 0.0
    %11125 = vmatmul.mubr.f32.gmra.mrb[0].mxu0 %v8406
    %v11126 = vpop.f32.mrb[0].mxu0
    %v11127 = vadd.f32 %v11028, %v11126
    %v11128 = vpop.f32.mrb[0].mxu0
    %11129 = vmatprep.mubr.f32.mxu0 0.0
    %11130 = vmatmul.mubr.f32.gmra.mrb[0].mxu0 %v8510
    %v11131 = vpop.f32.mrb[0].mxu0
    %v11132 = vadd.f32 %v11028, %v11131
    %v11133 = vpop.f32.mrb[0].mxu0
    %11134 = vmatprep.mubr.f32.mxu0 0.0
    %11135 = vmatmul.mubr.f32.gmra.mrb[0].mxu0 %v8614
    %v11136 = vpop.f32.mrb[0].mxu0
    %v11137 = vadd.f32 %v11028, %v11136
    %v11138 = vpop.f32.mrb[0].mxu0
    %11139 = vmatprep.mubr.f32.mxu0 0.0
    %11140 = vmatmul.mubr.f32.gmra.mrb[0].mxu0 %v8718
    %v11141 = vpop.f32.mrb[0].mxu0
    %v11142 = vadd.f32 %v11028, %v11141
    %v11143 = vpop.f32.mrb[0].mxu0
    %11144 = vmatprep.mubr.f32.mxu0 0.0
    %11145 = vmatmul.mubr.f32.gmra.mrb[0].mxu0 %v8822
    %v11146 = vpop.f32.mrb[0].mxu0
    %v11147 = vadd.f32 %v11028, %v11146
    %v11148 = vpop.f32.mrb[0].mxu0
    %11149 = vmatprep.mubr.f32.mxu0 0.0
    %11150 = vmatmul.mubr.f32.gmra.mrb[0].mxu0 %v8926
    %v11151 = vpop.f32.mrb[0].mxu0
    %v11152 = vadd.f32 %v11028, %v11151
    %v11153 = vpop.f32.mrb[0].mxu0
    %11154 = vmatprep.mubr.f32.mxu0 0.0
    %11155 = vmatmul.mubr.f32.gmra.mrb[0].mxu0 %v9030
    %v11156 = vpop.f32.mrb[0].mxu0
    %v11157 = vadd.f32 %v11028, %v11156
    %v11158 = vpop.f32.mrb[0].mxu0
    %11159 = vmatprep.mubr.f32.mxu0 0.0
    %11160 = vmatmul.mubr.f32.gmra.mrb[0].mxu0 %v9134
    %v11161 = vpop.f32.mrb[0].mxu0
    %v11162 = vadd.f32 %v11028, %v11161
    %v11163 = vpop.f32.mrb[0].mxu0
    %11164 = vmatprep.mubr.f32.mxu0 0.0
    %11165 = vmatmul.mubr.f32.gmra.mrb[0].mxu0 %v9238
    %v11166 = vpop.f32.mrb[0].mxu0
    %v11167 = vadd.f32 %v11028, %v11166
    %v11168 = vpop.f32.mrb[0].mxu0
    %11169 = vmatprep.mubr.f32.mxu0 0.0
    %11170 = vmatmul.mubr.f32.gmra.mrb[0].mxu0 %v9342
    %v11171 = vpop.f32.mrb[0].mxu0
    %v11172 = vadd.f32 %v11028, %v11171
    %v11173 = vpop.f32.mrb[0].mxu0
    %11174 = vmatprep.mubr.f32.mxu0 0.0
    %11175 = vmatmul.mubr.f32.gmra.mrb[0].mxu0 %v9446
    %v11176 = vpop.f32.mrb[0].mxu0
    %v11177 = vadd.f32 %v11028, %v11176
    %v11178 = vpop.f32.mrb[0].mxu0
    %11179 = vmatprep.mubr.f32.mxu0 0.0
    %11180 = vmatmul.mubr.f32.gmra.mrb[0].mxu0 %v9550
    %v11181 = vpop.f32.mrb[0].mxu0
    %v11182 = vadd.f32 %v11028, %v11181
    %v11183 = vpop.f32.mrb[0].mxu0
    %11184 = vmatprep.mubr.f32.mxu0 0.0
    %11185 = vmatmul.mubr.f32.gmra.mrb[0].mxu0 %v9654
    %v11186 = vpop.f32.mrb[0].mxu0
    %v11187 = vadd.f32 %v11028, %v11186
    %v11188 = vpop.f32.mrb[0].mxu0
    %11189 = vmatprep.mubr.f32.mxu0 0.0
    %11190 = vmatmul.mubr.f32.gmra.mrb[0].mxu0 %v9758
    %v11191 = vpop.f32.mrb[0].mxu0
    %v11192 = vadd.f32 %v11028, %v11191
    %v11193 = vpop.f32.mrb[0].mxu0
    %11194 = vmatprep.mubr.f32.mxu0 0.0
    %11195 = vmatmul.mubr.f32.gmra.mrb[0].mxu0 %v9862
    %v11196 = vpop.f32.mrb[0].mxu0
    %v11197 = vadd.f32 %v11028, %v11196
    %v11198 = vpop.f32.mrb[0].mxu0
    %11199 = vmatprep.mubr.f32.mxu0 0.0
    %11200 = vmatmul.mubr.f32.gmra.mrb[0].mxu0 %v9966
    %v11201 = vpop.f32.mrb[0].mxu0
    %v11202 = vadd.f32 %v11028, %v11201
    %v11203 = vpop.f32.mrb[0].mxu0
    %11204 = vmatprep.mubr.f32.mxu0 0.0
    %11205 = vmatmul.mubr.f32.gmra.mrb[0].mxu0 %v10070
    %v11206 = vpop.f32.mrb[0].mxu0
    %v11207 = vadd.f32 %v11028, %v11206
    %v11208 = vpop.f32.mrb[0].mxu0
    %11209 = vmatprep.mubr.f32.mxu0 0.0
    %11210 = vmatmul.mubr.f32.gmra.mrb[0].mxu0 %v10174
    %v11211 = vpop.f32.mrb[0].mxu0
    %v11212 = vadd.f32 %v11028, %v11211
    %v11213 = vpop.f32.mrb[0].mxu0
    %11214 = vmatprep.mubr.f32.mxu0 0.0
    %11215 = vmatmul.mubr.f32.gmra.mrb[0].mxu0 %v10278
    %v11216 = vpop.f32.mrb[0].mxu0
    %v11217 = vadd.f32 %v11028, %v11216
    %v11218 = vpop.f32.mrb[0].mxu0
    %11219 = vmatprep.mubr.f32.mxu0 0.0
    %11220 = vmatmul.mubr.f32.gmra.mrb[0].mxu0 %v10382
    %v11221 = vpop.f32.mrb[0].mxu0
    %v11222 = vadd.f32 %v11028, %v11221
    %v11223 = vpop.f32.mrb[0].mxu0
    %11224 = vmatprep.mubr.f32.mxu0 0.0
    %11225 = vmatmul.mubr.f32.gmra.mrb[0].mxu0 %v10486
    %v11226 = vpop.f32.mrb[0].mxu0
    %v11227 = vadd.f32 %v11028, %v11226
    %v11228 = vpop.f32.mrb[0].mxu0
    %11229 = vmatprep.mubr.f32.mxu0 0.0
    %11230 = vmatmul.mubr.f32.gmra.mrb[0].mxu0 %v10590
    %v11231 = vpop.f32.mrb[0].mxu0
    %v11232 = vadd.f32 %v11028, %v11231
    %v11233 = vpop.f32.mrb[0].mxu0
    %11234 = vmatprep.mubr.f32.mxu0 0.0
    %11235 = vmatmul.mubr.f32.gmra.mrb[0].mxu0 %v10694
    %v11236 = vpop.f32.mrb[0].mxu0
    %v11237 = vadd.f32 %v11028, %v11236
    %v11238 = vpop.f32.mrb[0].mxu0
    %11239 = vmatprep.mubr.f32.mxu0 0.0
    %11240 = vmatmul.mubr.f32.gmra.mrb[0].mxu0 %v10798
    %v11241 = vpop.f32.mrb[0].mxu0
    %v11242 = vadd.f32 %v11028, %v11241
    %v11243 = vpop.f32.mrb[0].mxu0
    %11244 = vmatprep.mubr.f32.mxu0 0.0
    %11245 = vmatmul.mubr.f32.gmra.mrb[0].mxu0 %v10902
    %v11246 = vpop.f32.mrb[0].mxu0
    %v11247 = vadd.f32 %v11028, %v11246
    %v11248 = vpop.f32.mrb[0].mxu0
    %11249 = vmatprep.mubr.f32.mxu0 0.0
    %11250 = vmatmul.mubr.f32.gmra.mrb[0].mxu0 %v11006
    %v11251 = vpop.f32.mrb[0].mxu0
    %v11252 = vadd.f32 %v11028, %v11251
    %v11253 = vpop.f32.mrb[0].mxu0
    %11254 = vdwg.mxu0
    %11255 = vst [vmem:[#allocation7] sm:$0xff] %v11097
    %11256 = vst [vmem:[#allocation7 + $0x8] sm:$0xff] %v11102
    %11257 = vst [vmem:[#allocation7 + $0x10] sm:$0xff] %v11107
    %11258 = vst [vmem:[#allocation7 + $0x18] sm:$0xff] %v11112
    %11259 = vst [vmem:[#allocation7 + $0x20] sm:$0xff] %v11117
    %11260 = vst [vmem:[#allocation7 + $0x28] sm:$0xff] %v11122
    %11261 = vst [vmem:[#allocation7 + $0x30] sm:$0xff] %v11127
    %11262 = vst [vmem:[#allocation7 + $0x38] sm:$0xff] %v11132
    %11263 = vst [vmem:[#allocation7 + $0x40] sm:$0xff] %v11137
    %11264 = vst [vmem:[#allocation7 + $0x48] sm:$0xff] %v11142
    %11265 = vst [vmem:[#allocation7 + $0x50] sm:$0xff] %v11147
    %11266 = vst [vmem:[#allocation7 + $0x58] sm:$0xff] %v11152
    %11267 = vst [vmem:[#allocation7 + $0x60] sm:$0xff] %v11157
    %11268 = vst [vmem:[#allocation7 + $0x68] sm:$0xff] %v11162
    %11269 = vst [vmem:[#allocation7 + $0x70] sm:$0xff] %v11167
    %11270 = vst [vmem:[#allocation7 + $0x78] sm:$0xff] %v11172
    %11271 = vst [vmem:[#allocation7 + $0x80] sm:$0xff] %v11177
    %11272 = vst [vmem:[#allocation7 + $0x88] sm:$0xff] %v11182
    %11273 = vst [vmem:[#allocation7 + $0x90] sm:$0xff] %v11187
    %11274 = vst [vmem:[#allocation7 + $0x98] sm:$0xff] %v11192
    %11275 = vst [vmem:[#allocation7 + $0xa0] sm:$0xff] %v11197
    %11276 = vst [vmem:[#allocation7 + $0xa8] sm:$0xff] %v11202
    %11277 = vst [vmem:[#allocation7 + $0xb0] sm:$0xff] %v11207
    %11278 = vst [vmem:[#allocation7 + $0xb8] sm:$0xff] %v11212
    %11279 = vst [vmem:[#allocation7 + $0xc0] sm:$0xff] %v11217
    %11280 = vst [vmem:[#allocation7 + $0xc8] sm:$0xff] %v11222
    %11281 = vst [vmem:[#allocation7 + $0xd0] sm:$0xff] %v11227
    %11282 = vst [vmem:[#allocation7 + $0xd8] sm:$0xff] %v11232
    %11283 = vst [vmem:[#allocation7 + $0xe0] sm:$0xff] %v11237
    %11284 = vst [vmem:[#allocation7 + $0xe8] sm:$0xff] %v11242
    %11285 = vst [vmem:[#allocation7 + $0xf0] sm:$0xff] %v11247
    %11286 = vst [vmem:[#allocation7 + $0xf8] sm:$0xff] %v11252
    // Predicated region
    $region42: #{tpu_custom_call.1} parent=1 // pred_check
      _
    $region43: #{tpu_custom_call.1} parent=1 // pred_check_branch
      %11288 = sbr.rel (0) target = $region45
    $region44: #{tpu_custom_call.1} parent=1 // pred_region
      %s11290 = ssub.s32 4096, 4096
      %11291 = vsyncadd [#allocation4], %s11290
      %s11292 = sshll.u32 [#allocation7], 4
      %s11293 = int_to_ptr.vmem [resolvable:$true] %s11292
      %11298 = dma.vmem_to_hbm [thread:$0]  %s11293, 4096, %s8, [#allocation4], 128, 128, 8
    $region45: #{tpu_custom_call.1} parent=1 // pred_fallthru
      _
    // Predicated region
    $region46: #{tpu_custom_call.1} parent=1 // pred_check
      _
    $region47: #{tpu_custom_call.1} parent=1 // pred_check_branch
      %11300 = sbr.rel (0) target = $region49
    $region48: #{tpu_custom_call.1} parent=1 // pred_region
      %11301 = dma.done [#allocation4], 4096
    $region49: #{tpu_custom_call.1} parent=1 // pred_fallthru
      _
    %11302 = vsyncpa [#allocation3], 1
    %11303 = vsyncpa [#allocation4], 1
    %11304 = vsyncpa [#allocation5], 1

</llo_original>
